<compile_context>
chip_gen: v7x
topology: tpu7x:2x2x1
jax: 0.10.0
libtpu: 0.0.40
codegen_flags: <defaults>
</compile_context>

<pallas_src>
import jax
import jax.numpy as jnp
from jax import lax
from jax.experimental import pallas as pl
from jax.experimental.pallas import tpu as pltpu

LANE = 128


def _round_up(n, m):
    return ((n + m - 1) // m) * m


# --------------------------------- Pallas kernel ---------------------------------

def _rescnn_kernel(xa_ref, xb_ref, w1_ref, w2_ref, w3_ref, b1_ref, b2_ref, b3_ref,
                   o_ref, pad1, pad2):
    """Fused ResCNN_block for one (batch, row-band) tile.

    xa_ref: (1, TH,   W+2, Cin_p)  bf16  main band rows of the spatially pre-padded input
    xb_ref: (1, 4,    W+2, Cin_p)  bf16  4-row halo below the main band
    w1_ref: (9, Cin_p,  Cout_p)    bf16  conv1 taps (BN1 scale folded)
    w2_ref: (9, Cout_p, Cout_p)    bf16  conv2 taps (BN2 scale folded)
    w3_ref: (Cin_p, Cout_p)        bf16  1x1 residual conv
    b1/b2 : (1, Cout_p)            f32   folded conv bias + BN shift
    b3    : (1, Cout_p)            f32   1x1 conv bias
    o_ref : (1, TH, W, Cout_p)     f32   output rows
    pad1  : (TH+4, W+2, Cin_p)     bf16  contiguous padded input band (scratch)
    pad2  : (TH+2, W+2, Cout_p)    bf16  padded conv1-output band (scratch)
    """
    _, TH, W, Cout = o_ref.shape
    Cin = xa_ref.shape[-1]
    Wp = W + 2
    R1 = TH + 2                      # conv1 output rows (TH + 1-row halo each side)

    i = pl.program_id(1)
    last = pl.num_programs(1) - 1

    # ---- assemble the contiguous (TH+4, W+2, Cin_p) padded input band ------------
    pad1[0:TH, :, :] = xa_ref[0]
    pad1[TH:TH + 4, :, :] = xb_ref[0]

    # ---- conv1: 9 shifted accumulating matmuls (bf16 x bf16 -> f32) --------------
    acc1 = None
    for dy in range(3):
        for dx in range(3):
            win = pad1[dy:dy + R1, dx:dx + W, :].reshape(R1 * W, Cin)
            d = jnp.dot(win, w1_ref[dy * 3 + dx],
                        preferred_element_type=jnp.float32)
            acc1 = d if acc1 is None else acc1 + d
    y1 = jnp.maximum(acc1 + b1_ref[...], 0.0)                      # (R1*W, Cout) f32

    # ---- stage ReLU'd conv1 output (bf16) into a W-padded band for conv2 ---------
    pad2[:, 0:1, :] = jnp.zeros((R1, 1, Cout), pad2.dtype)
    pad2[:, W + 1:W + 2, :] = jnp.zeros((R1, 1, Cout), pad2.dtype)
    pad2[:, 1:W + 1, :] = y1.reshape(R1, W, Cout).astype(pad2.dtype)

    # conv2's zero padding at the image top/bottom: the halo row that falls outside the
    # image must be 0 (PyTorch zero padding), not conv1 evaluated on the padded input.
    @pl.when(i == 0)
    def _():
        pad2[0:1, :, :] = jnp.zeros((1, Wp, Cout), pad2.dtype)

    @pl.when(i == last)
    def _():
        pad2[R1 - 1:R1, :, :] = jnp.zeros((1, Wp, Cout), pad2.dtype)

    # ---- conv2: 9 shifted accumulating matmuls ------------------------------------
    acc2 = None
    for dy in range(3):
        for dx in range(3):
            win = pad2[dy:dy + TH, dx:dx + W, :].reshape(TH * W, Cout)
            d = jnp.dot(win, w2_ref[dy * 3 + dx],
                        preferred_element_type=jnp.float32)
            acc2 = d if acc2 is None else acc2 + d

    # ---- fused epilogue: bias + ReLU, 1x1 residual, lane-dense store --------------
    xc = pad1[2:TH + 2, 1:W + 1, :].reshape(TH * W, Cin)            # original x rows
    res = jnp.dot(xc, w3_ref[...], preferred_element_type=jnp.float32) + b3_ref[...]
    out = jnp.maximum(acc2 + b2_ref[...], 0.0) + res
    o_ref[...] = out.reshape(1, TH, W, Cout).astype(o_ref.dtype)


def rescnn_block_pallas(x_padded, kp, H, W, TH):
    """Run the fused block. x_padded: (N, H+4, W+2, Cin_p) bf16 (zero-padded spatially)."""
    N = x_padded.shape[0]
    Cin_p = x_padded.shape[-1]
    Cout_p = kp["w1"].shape[-1]
    Wp = W + 2
    assert H % TH == 0 and TH % 4 == 0, (H, TH)
    nrt = H // TH

    vmem_spec = pl.BlockSpec(memory_space=pltpu.MemorySpace.VMEM)   # whole array, no 2x buf

    return pl.pallas_call(
        _rescnn_kernel,
        out_shape=jax.ShapeDtypeStruct((N, H, W, Cout_p), jnp.float32),
        grid=(N, nrt),
        in_specs=[
            # main TH-row block of the padded input
            pl.BlockSpec((1, TH, Wp, Cin_p), lambda n, i: (n, i, 0, 0)),
            # 4-row halo block directly below it
            pl.BlockSpec((1, 4, Wp, Cin_p),
                         lambda n, i: (n, (i + 1) * (TH // 4), 0, 0)),
            vmem_spec,  # w1
            vmem_spec,  # w2
            vmem_spec,  # w3
            vmem_spec,  # b1
            vmem_spec,  # b2
            vmem_spec,  # b3
        ],
        out_specs=pl.BlockSpec((1, TH, W, Cout_p), lambda n, i: (n, i, 0, 0)),
        scratch_shapes=[
            pltpu.VMEM((TH + 4, Wp, Cin_p), jnp.bfloat16),
            pltpu.VMEM((TH + 2, Wp, Cout_p), jnp.bfloat16),
        ],
        compiler_params=pltpu.CompilerParams(
            dimension_semantics=("parallel", "parallel"),
            vmem_limit_bytes=32 * 1024 * 1024,
        ),
    )(x_padded, x_padded, kp["w1"], kp["w2"], kp["w3"], kp["b1"], kp["b2"], kp["b3"])


# ----------------------------- parameter preparation -----------------------------

def prepare_rescnn_params(p, eps=1e-5):
    """Fold BN into conv weights/bias; lane-pad and cast matmul operands to bf16."""
    w1, b1 = p["conv1_w"], p["conv1_b"]
    w2, b2 = p["conv2_w"], p["conv2_b"]
    w3, b3 = p["conv1x1_w"], p["conv1x1_b"]

    Cout, Cin = w1.shape[0], w1.shape[1]
    Cin_p = max(LANE, _round_up(Cin, LANE))
    Cout_p = max(LANE, _round_up(Cout, LANE))

    def fold(w, b, gamma, beta, mean, var):
        scale = gamma / jnp.sqrt(var + eps)
        return w * scale[:, None, None, None], (b - mean) * scale + beta

    w1f, b1f = fold(w1, b1, p["bn1_gamma"], p["bn1_beta"], p["bn1_mean"], p["bn1_var"])
    w2f, b2f = fold(w2, b2, p["bn2_gamma"], p["bn2_beta"], p["bn2_mean"], p["bn2_var"])

    def conv3_to_taps(w, ci, co, ci_p, co_p):
        # OIHW -> (kh,kw,Cin,Cout) -> (9,Cin,Cout) -> pad channels -> bf16
        t = jnp.transpose(w, (2, 3, 1, 0)).reshape(9, ci, co)
        t = jnp.pad(t, ((0, 0), (0, ci_p - ci), (0, co_p - co)))
        return t.astype(jnp.bfloat16)

    def pad_vec(v, co_p):
        return jnp.pad(v, (0, co_p - v.shape[0])).reshape(1, co_p).astype(jnp.float32)

    w3m = jnp.pad(jnp.transpose(w3[:, :, 0, 0], (1, 0)),
                  ((0, Cin_p - Cin), (0, Cout_p - Cout))).astype(jnp.bfloat16)

    return {
        "cin": Cin, "cout": Cout, "cin_p": Cin_p, "cout_p": Cout_p,
        "w1": conv3_to_taps(w1f, Cin, Cout, Cin_p, Cout_p),
        "w2": conv3_to_taps(w2f, Cout, Cout, Cout_p, Cout_p),
        "w3": w3m,
        "b1": pad_vec(b1f, Cout_p),
        "b2": pad_vec(b2f, Cout_p),
        "b3": pad_vec(b3, Cout_p),
    }


def rescnn_block_forward(x_nchw, kp, th=8):
    """ResCNN_block.forward: NCHW f32 in, NCHW f32 out (BatchNorm in inference mode)."""
    N, Cin, H, W = x_nchw.shape
    x = jnp.transpose(x_nchw, (0, 2, 3, 1)).astype(jnp.bfloat16)        # NCHW -> NHWC
    # Spatial zero padding: 2 rows top/bottom (conv1 + conv2 halos), 1 col left/right
    # (conv W halo handled once here); lane-pad channels to Cin_p.
    x = jnp.pad(x, ((0, 0), (2, 2), (1, 1), (0, kp["cin_p"] - Cin)))
    out = rescnn_block_pallas(x, kp, H, W, th)
    out = out[..., :kp["cout"]]
    return jnp.transpose(out, (0, 3, 1, 2))                             # NHWC -> NCHW


# ------------------------- pure-JAX reference (for checking) -------------------------

def _ref_conv_bn_relu(x, w, b, gamma, beta, mean, var, eps):
    y = lax.conv_general_dilated(x, w, (1, 1), "SAME",
                                 dimension_numbers=("NCHW", "OIHW", "NCHW"))
    y = y + b[None, :, None, None]
    scale = gamma / jnp.sqrt(var + eps)
    y = (y - mean[None, :, None, None]) * scale[None, :, None, None] \
        + beta[None, :, None, None]
    return jnp.maximum(y, 0.0)


def _ref_rescnn_block(x, p, eps=1e-5):
    y = _ref_conv_bn_relu(x, p["conv1_w"], p["conv1_b"], p["bn1_gamma"],
                          p["bn1_beta"], p["bn1_mean"], p["bn1_var"], eps)
    y = _ref_conv_bn_relu(y, p["conv2_w"], p["conv2_b"], p["bn2_gamma"],
                          p["bn2_beta"], p["bn2_mean"], p["bn2_var"], eps)
    res = lax.conv_general_dilated(x, p["conv1x1_w"], (1, 1), "SAME",
                                   dimension_numbers=("NCHW", "OIHW", "NCHW"))
    res = res + p["conv1x1_b"][None, :, None, None]
    return y + res


# --------------------------------------- main ---------------------------------------

if __name__ == "__main__":
    key = jax.random.PRNGKey(0)
    ks = jax.random.split(key, 16)

    N, Cin, Cout, H, W = 2, 4, 4, 16, 16
    eps = 1e-5

    x = jax.random.normal(ks[0], (N, Cin, H, W), jnp.float32)

    params = {
        # conv_block: Conv3x3(ch_in->ch_out)+BN+ReLU, Conv3x3(ch_out->ch_out)+BN+ReLU
        "conv1_w": 0.1 * jax.random.normal(ks[1], (Cout, Cin, 3, 3), jnp.float32),
        "conv1_b": 0.1 * jax.random.normal(ks[2], (Cout,), jnp.float32),
        "bn1_gamma": 1.0 + 0.1 * jax.random.normal(ks[3], (Cout,), jnp.float32),
        "bn1_beta": 0.1 * jax.random.normal(ks[4], (Cout,), jnp.float32),
        "bn1_mean": 0.1 * jax.random.normal(ks[5], (Cout,), jnp.float32),
        "bn1_var": 1.0 + 0.1 * jax.random.uniform(ks[6], (Cout,), jnp.float32),
        "conv2_w": 0.1 * jax.random.normal(ks[7], (Cout, Cout, 3, 3), jnp.float32),
        "conv2_b": 0.1 * jax.random.normal(ks[8], (Cout,), jnp.float32),
        "bn2_gamma": 1.0 + 0.1 * jax.random.normal(ks[9], (Cout,), jnp.float32),
        "bn2_beta": 0.1 * jax.random.normal(ks[10], (Cout,), jnp.float32),
        "bn2_mean": 0.1 * jax.random.normal(ks[11], (Cout,), jnp.float32),
        "bn2_var": 1.0 + 0.1 * jax.random.uniform(ks[12], (Cout,), jnp.float32),
        # Conv_1x1 residual branch (bias, no BN/ReLU)
        "conv1x1_w": 0.1 * jax.random.normal(ks[13], (Cout, Cin, 1, 1), jnp.float32),
        "conv1x1_b": 0.1 * jax.random.normal(ks[14], (Cout,), jnp.float32),
    }

    kparams = prepare_rescnn_params(params, eps=eps)

    out = rescnn_block_forward(x, kparams, th=8)
    out = jax.block_until_ready(out)

    ref = _ref_rescnn_block(x, params, eps=eps)
    ref = jax.block_until_ready(ref)

    assert out.shape == (N, Cout, H, W), out.shape
    max_err = float(jnp.max(jnp.abs(out - ref)))
    # bf16 MXU operands vs. a pure-f32 reference -> relaxed tolerance.
    assert jnp.allclose(out, ref, atol=5e-2, rtol=5e-2), max_err

    print("KERNEL_OK")
</pallas_src>

<mosaic_0001>
module attributes {stable_mosaic.version = 11 : i64} {
  func.func @_rescnn_kernel(%arg0: i32, %arg1: i32, %arg2: memref<1x8x18x128xbf16, #tpu.memory_space<vmem>>, %arg3: memref<1x4x18x128xbf16, #tpu.memory_space<vmem>>, %arg4: memref<9x128x128xbf16, #tpu.memory_space<vmem>>, %arg5: memref<9x128x128xbf16, #tpu.memory_space<vmem>>, %arg6: memref<128x128xbf16, #tpu.memory_space<vmem>>, %arg7: memref<1x128xf32, #tpu.memory_space<vmem>>, %arg8: memref<1x128xf32, #tpu.memory_space<vmem>>, %arg9: memref<1x128xf32, #tpu.memory_space<vmem>>, %arg10: memref<1x8x16x128xf32, #tpu.memory_space<vmem>>, %arg11: memref<12x18x128xbf16, #tpu.memory_space<vmem>>, %arg12: memref<10x18x128xbf16, #tpu.memory_space<vmem>>) attributes {dimension_semantics = [#tpu.dimension_semantics<parallel>, #tpu.dimension_semantics<parallel>], iteration_bounds = array<i64: 2, 2>, scalar_prefetch = 0 : i64, scratch_operands = 2 : i64, tpu.core_type = #tpu.core_type<tc>, window_params = [{transform_indices = @transform_0, window_bounds = array<i64: 1, 8, 18, 128>}, {transform_indices = @transform_1, window_bounds = array<i64: 1, 4, 18, 128>}, {pipeline_mode = #tpu.pipeline_mode<synchronous>, transform_indices = @transform_2, window_bounds = array<i64: 9, 128, 128>}, {pipeline_mode = #tpu.pipeline_mode<synchronous>, transform_indices = @transform_3, window_bounds = array<i64: 9, 128, 128>}, {pipeline_mode = #tpu.pipeline_mode<synchronous>, transform_indices = @transform_4, window_bounds = array<i64: 128, 128>}, {pipeline_mode = #tpu.pipeline_mode<synchronous>, transform_indices = @transform_5, window_bounds = array<i64: 1, 128>}, {pipeline_mode = #tpu.pipeline_mode<synchronous>, transform_indices = @transform_6, window_bounds = array<i64: 1, 128>}, {pipeline_mode = #tpu.pipeline_mode<synchronous>, transform_indices = @transform_7, window_bounds = array<i64: 1, 128>}, {transform_indices = @transform_8, window_bounds = array<i64: 1, 8, 16, 128>}]} {
    %c0 = arith.constant 0 : index
    %c0_0 = arith.constant 0 : index
    %c0_1 = arith.constant 0 : index
    %c0_2 = arith.constant 0 : index
    %0 = vector.load %arg2[%c0, %c0_0, %c0_1, %c0_2] : memref<1x8x18x128xbf16, #tpu.memory_space<vmem>>, vector<1x8x18x128xbf16>
    %1 = vector.shape_cast %0 : vector<1x8x18x128xbf16> to vector<8x18x128xbf16>
    %c0_3 = arith.constant 0 : index
    %c0_4 = arith.constant 0 : index
    %c0_5 = arith.constant 0 : index
    %2 = vector.load %arg11[%c0_3, %c0_4, %c0_5] : memref<12x18x128xbf16, #tpu.memory_space<vmem>>, vector<8x18x128xbf16>
    tpu.vector_store %arg11[%c0_3, %c0_4, %c0_5], %1 {strides = array<i32>} : memref<12x18x128xbf16, #tpu.memory_space<vmem>>, vector<8x18x128xbf16>,
    %c0_6 = arith.constant 0 : index
    %c0_7 = arith.constant 0 : index
    %c0_8 = arith.constant 0 : index
    %c0_9 = arith.constant 0 : index
    %3 = vector.load %arg3[%c0_6, %c0_7, %c0_8, %c0_9] : memref<1x4x18x128xbf16, #tpu.memory_space<vmem>>, vector<1x4x18x128xbf16>
    %4 = vector.shape_cast %3 : vector<1x4x18x128xbf16> to vector<4x18x128xbf16>
    %c8 = arith.constant 8 : index
    %c0_10 = arith.constant 0 : index
    %c0_11 = arith.constant 0 : index
    %5 = vector.load %arg11[%c8, %c0_10, %c0_11] : memref<12x18x128xbf16, #tpu.memory_space<vmem>>, vector<4x18x128xbf16>
    tpu.vector_store %arg11[%c8, %c0_10, %c0_11], %4 {strides = array<i32>} : memref<12x18x128xbf16, #tpu.memory_space<vmem>>, vector<4x18x128xbf16>,
    %c0_12 = arith.constant 0 : index
    %c0_13 = arith.constant 0 : index
    %c0_14 = arith.constant 0 : index
    %6 = vector.load %arg11[%c0_12, %c0_13, %c0_14] : memref<12x18x128xbf16, #tpu.memory_space<vmem>>, vector<10x16x128xbf16>
    %7 = vector.shape_cast %6 : vector<10x16x128xbf16> to vector<160x128xbf16>
    %c0_15 = arith.constant 0 : index
    %c0_16 = arith.constant 0 : index
    %c0_17 = arith.constant 0 : index
    %8 = vector.load %arg4[%c0_15, %c0_16, %c0_17] : memref<9x128x128xbf16, #tpu.memory_space<vmem>>, vector<1x128x128xbf16>
    %9 = vector.shape_cast %8 : vector<1x128x128xbf16> to vector<128x128xbf16>
    %cst = arith.constant dense<0.000000e+00> : vector<160x128xf32>
    %10 = tpu.matmul %7, %9, %cst {dimension_numbers = #tpu.dot_dimension_numbers<[1], [0], [0], [1], [0, 0, 1, 1], [], []>} : vector<160x128xbf16>, vector<128x128xbf16>, vector<160x128xf32> -> vector<160x128xf32>
    %c0_18 = arith.constant 0 : index
    %c1 = arith.constant 1 : index
    %c0_19 = arith.constant 0 : index
    %11 = vector.load %arg11[%c0_18, %c1, %c0_19] : memref<12x18x128xbf16, #tpu.memory_space<vmem>>, vector<10x16x128xbf16>
    %12 = vector.shape_cast %11 : vector<10x16x128xbf16> to vector<160x128xbf16>
    %c1_20 = arith.constant 1 : index
    %c0_21 = arith.constant 0 : index
    %c0_22 = arith.constant 0 : index
    %13 = vector.load %arg4[%c1_20, %c0_21, %c0_22] : memref<9x128x128xbf16, #tpu.memory_space<vmem>>, vector<1x128x128xbf16>
    %14 = vector.shape_cast %13 : vector<1x128x128xbf16> to vector<128x128xbf16>
    %cst_23 = arith.constant dense<0.000000e+00> : vector<160x128xf32>
    %15 = tpu.matmul %12, %14, %cst_23 {dimension_numbers = #tpu.dot_dimension_numbers<[1], [0], [0], [1], [0, 0, 1, 1], [], []>} : vector<160x128xbf16>, vector<128x128xbf16>, vector<160x128xf32> -> vector<160x128xf32>
    %16 = arith.addf %10, %15 : vector<160x128xf32>
    %c0_24 = arith.constant 0 : index
    %c2 = arith.constant 2 : index
    %c0_25 = arith.constant 0 : index
    %17 = vector.load %arg11[%c0_24, %c2, %c0_25] : memref<12x18x128xbf16, #tpu.memory_space<vmem>>, vector<10x16x128xbf16>
    %18 = vector.shape_cast %17 : vector<10x16x128xbf16> to vector<160x128xbf16>
    %c2_26 = arith.constant 2 : index
    %c0_27 = arith.constant 0 : index
    %c0_28 = arith.constant 0 : index
    %19 = vector.load %arg4[%c2_26, %c0_27, %c0_28] : memref<9x128x128xbf16, #tpu.memory_space<vmem>>, vector<1x128x128xbf16>
    %20 = vector.shape_cast %19 : vector<1x128x128xbf16> to vector<128x128xbf16>
    %cst_29 = arith.constant dense<0.000000e+00> : vector<160x128xf32>
    %21 = tpu.matmul %18, %20, %cst_29 {dimension_numbers = #tpu.dot_dimension_numbers<[1], [0], [0], [1], [0, 0, 1, 1], [], []>} : vector<160x128xbf16>, vector<128x128xbf16>, vector<160x128xf32> -> vector<160x128xf32>
    %22 = arith.addf %16, %21 : vector<160x128xf32>
    %c1_30 = arith.constant 1 : index
    %c0_31 = arith.constant 0 : index
    %c0_32 = arith.constant 0 : index
    %23 = vector.load %arg11[%c1_30, %c0_31, %c0_32] : memref<12x18x128xbf16, #tpu.memory_space<vmem>>, vector<10x16x128xbf16>
    %24 = vector.shape_cast %23 : vector<10x16x128xbf16> to vector<160x128xbf16>
    %c3 = arith.constant 3 : index
    %c0_33 = arith.constant 0 : index
    %c0_34 = arith.constant 0 : index
    %25 = vector.load %arg4[%c3, %c0_33, %c0_34] : memref<9x128x128xbf16, #tpu.memory_space<vmem>>, vector<1x128x128xbf16>
    %26 = vector.shape_cast %25 : vector<1x128x128xbf16> to vector<128x128xbf16>
    %cst_35 = arith.constant dense<0.000000e+00> : vector<160x128xf32>
    %27 = tpu.matmul %24, %26, %cst_35 {dimension_numbers = #tpu.dot_dimension_numbers<[1], [0], [0], [1], [0, 0, 1, 1], [], []>} : vector<160x128xbf16>, vector<128x128xbf16>, vector<160x128xf32> -> vector<160x128xf32>
    %28 = arith.addf %22, %27 : vector<160x128xf32>
    %c1_36 = arith.constant 1 : index
    %c1_37 = arith.constant 1 : index
    %c0_38 = arith.constant 0 : index
    %29 = vector.load %arg11[%c1_36, %c1_37, %c0_38] : memref<12x18x128xbf16, #tpu.memory_space<vmem>>, vector<10x16x128xbf16>
    %30 = vector.shape_cast %29 : vector<10x16x128xbf16> to vector<160x128xbf16>
    %c4 = arith.constant 4 : index
    %c0_39 = arith.constant 0 : index
    %c0_40 = arith.constant 0 : index
    %31 = vector.load %arg4[%c4, %c0_39, %c0_40] : memref<9x128x128xbf16, #tpu.memory_space<vmem>>, vector<1x128x128xbf16>
    %32 = vector.shape_cast %31 : vector<1x128x128xbf16> to vector<128x128xbf16>
    %cst_41 = arith.constant dense<0.000000e+00> : vector<160x128xf32>
    %33 = tpu.matmul %30, %32, %cst_41 {dimension_numbers = #tpu.dot_dimension_numbers<[1], [0], [0], [1], [0, 0, 1, 1], [], []>} : vector<160x128xbf16>, vector<128x128xbf16>, vector<160x128xf32> -> vector<160x128xf32>
    %34 = arith.addf %28, %33 : vector<160x128xf32>
    %c1_42 = arith.constant 1 : index
    %c2_43 = arith.constant 2 : index
    %c0_44 = arith.constant 0 : index
    %35 = vector.load %arg11[%c1_42, %c2_43, %c0_44] : memref<12x18x128xbf16, #tpu.memory_space<vmem>>, vector<10x16x128xbf16>
    %36 = vector.shape_cast %35 : vector<10x16x128xbf16> to vector<160x128xbf16>
    %c5 = arith.constant 5 : index
    %c0_45 = arith.constant 0 : index
    %c0_46 = arith.constant 0 : index
    %37 = vector.load %arg4[%c5, %c0_45, %c0_46] : memref<9x128x128xbf16, #tpu.memory_space<vmem>>, vector<1x128x128xbf16>
    %38 = vector.shape_cast %37 : vector<1x128x128xbf16> to vector<128x128xbf16>
    %cst_47 = arith.constant dense<0.000000e+00> : vector<160x128xf32>
    %39 = tpu.matmul %36, %38, %cst_47 {dimension_numbers = #tpu.dot_dimension_numbers<[1], [0], [0], [1], [0, 0, 1, 1], [], []>} : vector<160x128xbf16>, vector<128x128xbf16>, vector<160x128xf32> -> vector<160x128xf32>
    %40 = arith.addf %34, %39 : vector<160x128xf32>
    %c2_48 = arith.constant 2 : index
    %c0_49 = arith.constant 0 : index
    %c0_50 = arith.constant 0 : index
    %41 = vector.load %arg11[%c2_48, %c0_49, %c0_50] : memref<12x18x128xbf16, #tpu.memory_space<vmem>>, vector<10x16x128xbf16>
    %42 = vector.shape_cast %41 : vector<10x16x128xbf16> to vector<160x128xbf16>
    %c6 = arith.constant 6 : index
    %c0_51 = arith.constant 0 : index
    %c0_52 = arith.constant 0 : index
    %43 = vector.load %arg4[%c6, %c0_51, %c0_52] : memref<9x128x128xbf16, #tpu.memory_space<vmem>>, vector<1x128x128xbf16>
    %44 = vector.shape_cast %43 : vector<1x128x128xbf16> to vector<128x128xbf16>
    %cst_53 = arith.constant dense<0.000000e+00> : vector<160x128xf32>
    %45 = tpu.matmul %42, %44, %cst_53 {dimension_numbers = #tpu.dot_dimension_numbers<[1], [0], [0], [1], [0, 0, 1, 1], [], []>} : vector<160x128xbf16>, vector<128x128xbf16>, vector<160x128xf32> -> vector<160x128xf32>
    %46 = arith.addf %40, %45 : vector<160x128xf32>
    %c2_54 = arith.constant 2 : index
    %c1_55 = arith.constant 1 : index
    %c0_56 = arith.constant 0 : index
    %47 = vector.load %arg11[%c2_54, %c1_55, %c0_56] : memref<12x18x128xbf16, #tpu.memory_space<vmem>>, vector<10x16x128xbf16>
    %48 = vector.shape_cast %47 : vector<10x16x128xbf16> to vector<160x128xbf16>
    %c7 = arith.constant 7 : index
    %c0_57 = arith.constant 0 : index
    %c0_58 = arith.constant 0 : index
    %49 = vector.load %arg4[%c7, %c0_57, %c0_58] : memref<9x128x128xbf16, #tpu.memory_space<vmem>>, vector<1x128x128xbf16>
    %50 = vector.shape_cast %49 : vector<1x128x128xbf16> to vector<128x128xbf16>
    %cst_59 = arith.constant dense<0.000000e+00> : vector<160x128xf32>
    %51 = tpu.matmul %48, %50, %cst_59 {dimension_numbers = #tpu.dot_dimension_numbers<[1], [0], [0], [1], [0, 0, 1, 1], [], []>} : vector<160x128xbf16>, vector<128x128xbf16>, vector<160x128xf32> -> vector<160x128xf32>
    %52 = arith.addf %46, %51 : vector<160x128xf32>
    %c2_60 = arith.constant 2 : index
    %c2_61 = arith.constant 2 : index
    %c0_62 = arith.constant 0 : index
    %53 = vector.load %arg11[%c2_60, %c2_61, %c0_62] : memref<12x18x128xbf16, #tpu.memory_space<vmem>>, vector<10x16x128xbf16>
    %54 = vector.shape_cast %53 : vector<10x16x128xbf16> to vector<160x128xbf16>
    %c8_63 = arith.constant 8 : index
    %c0_64 = arith.constant 0 : index
    %c0_65 = arith.constant 0 : index
    %55 = vector.load %arg4[%c8_63, %c0_64, %c0_65] : memref<9x128x128xbf16, #tpu.memory_space<vmem>>, vector<1x128x128xbf16>
    %56 = vector.shape_cast %55 : vector<1x128x128xbf16> to vector<128x128xbf16>
    %cst_66 = arith.constant dense<0.000000e+00> : vector<160x128xf32>
    %57 = tpu.matmul %54, %56, %cst_66 {dimension_numbers = #tpu.dot_dimension_numbers<[1], [0], [0], [1], [0, 0, 1, 1], [], []>} : vector<160x128xbf16>, vector<128x128xbf16>, vector<160x128xf32> -> vector<160x128xf32>
    %58 = arith.addf %52, %57 : vector<160x128xf32>
    %c0_67 = arith.constant 0 : index
    %c0_68 = arith.constant 0 : index
    %59 = vector.load %arg7[%c0_67, %c0_68] : memref<1x128xf32, #tpu.memory_space<vmem>>, vector<1x128xf32>
    %60 = vector.broadcast %59 : vector<1x128xf32> to vector<160x128xf32>
    %61 = arith.addf %58, %60 : vector<160x128xf32>
    %cst_69 = arith.constant 0.000000e+00 : f32
    %62 = vector.broadcast %cst_69 : f32 to vector<160x128xf32>
    %63 = arith.maximumf %61, %62 : vector<160x128xf32>
    %cst_70 = arith.constant 0.000000e+00 : bf16
    %64 = vector.broadcast %cst_70 : bf16 to vector<10x1x128xbf16>
    %c0_71 = arith.constant 0 : index
    %c0_72 = arith.constant 0 : index
    %c0_73 = arith.constant 0 : index
    %65 = vector.load %arg12[%c0_71, %c0_72, %c0_73] : memref<10x18x128xbf16, #tpu.memory_space<vmem>>, vector<10x1x128xbf16>
    tpu.vector_store %arg12[%c0_71, %c0_72, %c0_73], %64 {strides = array<i32>} : memref<10x18x128xbf16, #tpu.memory_space<vmem>>, vector<10x1x128xbf16>,
    %cst_74 = arith.constant 0.000000e+00 : bf16
    %66 = vector.broadcast %cst_74 : bf16 to vector<10x1x128xbf16>
    %c0_75 = arith.constant 0 : index
    %c17 = arith.constant 17 : index
    %c0_76 = arith.constant 0 : index
    %67 = vector.load %arg12[%c0_75, %c17, %c0_76] : memref<10x18x128xbf16, #tpu.memory_space<vmem>>, vector<10x1x128xbf16>
    tpu.vector_store %arg12[%c0_75, %c17, %c0_76], %66 {strides = array<i32>} : memref<10x18x128xbf16, #tpu.memory_space<vmem>>, vector<10x1x128xbf16>,
    %68 = vector.shape_cast %63 : vector<160x128xf32> to vector<10x16x128xf32>
    %69 = arith.truncf %68 : vector<10x16x128xf32> to vector<10x16x128xbf16>
    %c0_77 = arith.constant 0 : index
    %c1_78 = arith.constant 1 : index
    %c0_79 = arith.constant 0 : index
    %70 = vector.load %arg12[%c0_77, %c1_78, %c0_79] : memref<10x18x128xbf16, #tpu.memory_space<vmem>>, vector<10x16x128xbf16>
    tpu.vector_store %arg12[%c0_77, %c1_78, %c0_79], %69 {strides = array<i32>} : memref<10x18x128xbf16, #tpu.memory_space<vmem>>, vector<10x16x128xbf16>,
    %c0_i32 = arith.constant 0 : i32
    %71 = arith.cmpi eq, %arg1, %c0_i32 : i32
    %72 = arith.extui %71 : i1 to i32
    %c0_i32_80 = arith.constant 0 : i32
    %73 = arith.cmpi ne, %72, %c0_i32_80 : i32
    scf.if %73 {
      %cst_160 = arith.constant 0.000000e+00 : bf16
      %145 = vector.broadcast %cst_160 : bf16 to vector<1x18x128xbf16>
      %c0_161 = arith.constant 0 : index
      %c0_162 = arith.constant 0 : index
      %c0_163 = arith.constant 0 : index
      %146 = vector.load %arg12[%c0_161, %c0_162, %c0_163] : memref<10x18x128xbf16, #tpu.memory_space<vmem>>, vector<1x18x128xbf16>
      tpu.vector_store %arg12[%c0_161, %c0_162, %c0_163], %145 {strides = array<i32>} : memref<10x18x128xbf16, #tpu.memory_space<vmem>>, vector<1x18x128xbf16>,
    } else {
    }
    %c1_i32 = arith.constant 1 : i32
    %74 = arith.cmpi eq, %arg1, %c1_i32 : i32
    %75 = arith.extui %74 : i1 to i32
    %c0_i32_81 = arith.constant 0 : i32
    %76 = arith.cmpi ne, %75, %c0_i32_81 : i32
    scf.if %76 {
      %cst_160 = arith.constant 0.000000e+00 : bf16
      %145 = vector.broadcast %cst_160 : bf16 to vector<1x18x128xbf16>
      %c9 = arith.constant 9 : index
      %c0_161 = arith.constant 0 : index
      %c0_162 = arith.constant 0 : index
      %146 = vector.load %arg12[%c9, %c0_161, %c0_162] : memref<10x18x128xbf16, #tpu.memory_space<vmem>>, vector<1x18x128xbf16>
      tpu.vector_store %arg12[%c9, %c0_161, %c0_162], %145 {strides = array<i32>} : memref<10x18x128xbf16, #tpu.memory_space<vmem>>, vector<1x18x128xbf16>,
    } else {
    }
    %c0_82 = arith.constant 0 : index
    %c0_83 = arith.constant 0 : index
    %c0_84 = arith.constant 0 : index
    %77 = vector.load %arg12[%c0_82, %c0_83, %c0_84] : memref<10x18x128xbf16, #tpu.memory_space<vmem>>, vector<8x16x128xbf16>
    %78 = vector.shape_cast %77 : vector<8x16x128xbf16> to vector<128x128xbf16>
    %c0_85 = arith.constant 0 : index
    %c0_86 = arith.constant 0 : index
    %c0_87 = arith.constant 0 : index
    %79 = vector.load %arg5[%c0_85, %c0_86, %c0_87] : memref<9x128x128xbf16, #tpu.memory_space<vmem>>, vector<1x128x128xbf16>
    %80 = vector.shape_cast %79 : vector<1x128x128xbf16> to vector<128x128xbf16>
    %cst_88 = arith.constant dense<0.000000e+00> : vector<128x128xf32>
    %81 = tpu.matmul %78, %80, %cst_88 {dimension_numbers = #tpu.dot_dimension_numbers<[1], [0], [0], [1], [0, 0, 1, 1], [], []>} : vector<128x128xbf16>, vector<128x128xbf16>, vector<128x128xf32> -> vector<128x128xf32>
    %c0_89 = arith.constant 0 : index
    %c1_90 = arith.constant 1 : index
    %c0_91 = arith.constant 0 : index
    %82 = vector.load %arg12[%c0_89, %c1_90, %c0_91] : memref<10x18x128xbf16, #tpu.memory_space<vmem>>, vector<8x16x128xbf16>
    %83 = vector.shape_cast %82 : vector<8x16x128xbf16> to vector<128x128xbf16>
    %c1_92 = arith.constant 1 : index
    %c0_93 = arith.constant 0 : index
    %c0_94 = arith.constant 0 : index
    %84 = vector.load %arg5[%c1_92, %c0_93, %c0_94] : memref<9x128x128xbf16, #tpu.memory_space<vmem>>, vector<1x128x128xbf16>
    %85 = vector.shape_cast %84 : vector<1x128x128xbf16> to vector<128x128xbf16>
    %cst_95 = arith.constant dense<0.000000e+00> : vector<128x128xf32>
    %86 = tpu.matmul %83, %85, %cst_95 {dimension_numbers = #tpu.dot_dimension_numbers<[1], [0], [0], [1], [0, 0, 1, 1], [], []>} : vector<128x128xbf16>, vector<128x128xbf16>, vector<128x128xf32> -> vector<128x128xf32>
    %87 = arith.addf %81, %86 : vector<128x128xf32>
    %c0_96 = arith.constant 0 : index
    %c2_97 = arith.constant 2 : index
    %c0_98 = arith.constant 0 : index
    %88 = vector.load %arg12[%c0_96, %c2_97, %c0_98] : memref<10x18x128xbf16, #tpu.memory_space<vmem>>, vector<8x16x128xbf16>
    %89 = vector.shape_cast %88 : vector<8x16x128xbf16> to vector<128x128xbf16>
    %c2_99 = arith.constant 2 : index
    %c0_100 = arith.constant 0 : index
    %c0_101 = arith.constant 0 : index
    %90 = vector.load %arg5[%c2_99, %c0_100, %c0_101] : memref<9x128x128xbf16, #tpu.memory_space<vmem>>, vector<1x128x128xbf16>
    %91 = vector.shape_cast %90 : vector<1x128x128xbf16> to vector<128x128xbf16>
    %cst_102 = arith.constant dense<0.000000e+00> : vector<128x128xf32>
    %92 = tpu.matmul %89, %91, %cst_102 {dimension_numbers = #tpu.dot_dimension_numbers<[1], [0], [0], [1], [0, 0, 1, 1], [], []>} : vector<128x128xbf16>, vector<128x128xbf16>, vector<128x128xf32> -> vector<128x128xf32>
    %93 = arith.addf %87, %92 : vector<128x128xf32>
    %c1_103 = arith.constant 1 : index
    %c0_104 = arith.constant 0 : index
    %c0_105 = arith.constant 0 : index
    %94 = vector.load %arg12[%c1_103, %c0_104, %c0_105] : memref<10x18x128xbf16, #tpu.memory_space<vmem>>, vector<8x16x128xbf16>
    %95 = vector.shape_cast %94 : vector<8x16x128xbf16> to vector<128x128xbf16>
    %c3_106 = arith.constant 3 : index
    %c0_107 = arith.constant 0 : index
    %c0_108 = arith.constant 0 : index
    %96 = vector.load %arg5[%c3_106, %c0_107, %c0_108] : memref<9x128x128xbf16, #tpu.memory_space<vmem>>, vector<1x128x128xbf16>
    %97 = vector.shape_cast %96 : vector<1x128x128xbf16> to vector<128x128xbf16>
    %cst_109 = arith.constant dense<0.000000e+00> : vector<128x128xf32>
    %98 = tpu.matmul %95, %97, %cst_109 {dimension_numbers = #tpu.dot_dimension_numbers<[1], [0], [0], [1], [0, 0, 1, 1], [], []>} : vector<128x128xbf16>, vector<128x128xbf16>, vector<128x128xf32> -> vector<128x128xf32>
    %99 = arith.addf %93, %98 : vector<128x128xf32>
    %c1_110 = arith.constant 1 : index
    %c1_111 = arith.constant 1 : index
    %c0_112 = arith.constant 0 : index
    %100 = vector.load %arg12[%c1_110, %c1_111, %c0_112] : memref<10x18x128xbf16, #tpu.memory_space<vmem>>, vector<8x16x128xbf16>
    %101 = vector.shape_cast %100 : vector<8x16x128xbf16> to vector<128x128xbf16>
    %c4_113 = arith.constant 4 : index
    %c0_114 = arith.constant 0 : index
    %c0_115 = arith.constant 0 : index
    %102 = vector.load %arg5[%c4_113, %c0_114, %c0_115] : memref<9x128x128xbf16, #tpu.memory_space<vmem>>, vector<1x128x128xbf16>
    %103 = vector.shape_cast %102 : vector<1x128x128xbf16> to vector<128x128xbf16>
    %cst_116 = arith.constant dense<0.000000e+00> : vector<128x128xf32>
    %104 = tpu.matmul %101, %103, %cst_116 {dimension_numbers = #tpu.dot_dimension_numbers<[1], [0], [0], [1], [0, 0, 1, 1], [], []>} : vector<128x128xbf16>, vector<128x128xbf16>, vector<128x128xf32> -> vector<128x128xf32>
    %105 = arith.addf %99, %104 : vector<128x128xf32>
    %c1_117 = arith.constant 1 : index
    %c2_118 = arith.constant 2 : index
    %c0_119 = arith.constant 0 : index
    %106 = vector.load %arg12[%c1_117, %c2_118, %c0_119] : memref<10x18x128xbf16, #tpu.memory_space<vmem>>, vector<8x16x128xbf16>
    %107 = vector.shape_cast %106 : vector<8x16x128xbf16> to vector<128x128xbf16>
    %c5_120 = arith.constant 5 : index
    %c0_121 = arith.constant 0 : index
    %c0_122 = arith.constant 0 : index
    %108 = vector.load %arg5[%c5_120, %c0_121, %c0_122] : memref<9x128x128xbf16, #tpu.memory_space<vmem>>, vector<1x128x128xbf16>
    %109 = vector.shape_cast %108 : vector<1x128x128xbf16> to vector<128x128xbf16>
    %cst_123 = arith.constant dense<0.000000e+00> : vector<128x128xf32>
    %110 = tpu.matmul %107, %109, %cst_123 {dimension_numbers = #tpu.dot_dimension_numbers<[1], [0], [0], [1], [0, 0, 1, 1], [], []>} : vector<128x128xbf16>, vector<128x128xbf16>, vector<128x128xf32> -> vector<128x128xf32>
    %111 = arith.addf %105, %110 : vector<128x128xf32>
    %c2_124 = arith.constant 2 : index
    %c0_125 = arith.constant 0 : index
    %c0_126 = arith.constant 0 : index
    %112 = vector.load %arg12[%c2_124, %c0_125, %c0_126] : memref<10x18x128xbf16, #tpu.memory_space<vmem>>, vector<8x16x128xbf16>
    %113 = vector.shape_cast %112 : vector<8x16x128xbf16> to vector<128x128xbf16>
    %c6_127 = arith.constant 6 : index
    %c0_128 = arith.constant 0 : index
    %c0_129 = arith.constant 0 : index
    %114 = vector.load %arg5[%c6_127, %c0_128, %c0_129] : memref<9x128x128xbf16, #tpu.memory_space<vmem>>, vector<1x128x128xbf16>
    %115 = vector.shape_cast %114 : vector<1x128x128xbf16> to vector<128x128xbf16>
    %cst_130 = arith.constant dense<0.000000e+00> : vector<128x128xf32>
    %116 = tpu.matmul %113, %115, %cst_130 {dimension_numbers = #tpu.dot_dimension_numbers<[1], [0], [0], [1], [0, 0, 1, 1], [], []>} : vector<128x128xbf16>, vector<128x128xbf16>, vector<128x128xf32> -> vector<128x128xf32>
    %117 = arith.addf %111, %116 : vector<128x128xf32>
    %c2_131 = arith.constant 2 : index
    %c1_132 = arith.constant 1 : index
    %c0_133 = arith.constant 0 : index
    %118 = vector.load %arg12[%c2_131, %c1_132, %c0_133] : memref<10x18x128xbf16, #tpu.memory_space<vmem>>, vector<8x16x128xbf16>
    %119 = vector.shape_cast %118 : vector<8x16x128xbf16> to vector<128x128xbf16>
    %c7_134 = arith.constant 7 : index
    %c0_135 = arith.constant 0 : index
    %c0_136 = arith.constant 0 : index
    %120 = vector.load %arg5[%c7_134, %c0_135, %c0_136] : memref<9x128x128xbf16, #tpu.memory_space<vmem>>, vector<1x128x128xbf16>
    %121 = vector.shape_cast %120 : vector<1x128x128xbf16> to vector<128x128xbf16>
    %cst_137 = arith.constant dense<0.000000e+00> : vector<128x128xf32>
    %122 = tpu.matmul %119, %121, %cst_137 {dimension_numbers = #tpu.dot_dimension_numbers<[1], [0], [0], [1], [0, 0, 1, 1], [], []>} : vector<128x128xbf16>, vector<128x128xbf16>, vector<128x128xf32> -> vector<128x128xf32>
    %123 = arith.addf %117, %122 : vector<128x128xf32>
    %c2_138 = arith.constant 2 : index
    %c2_139 = arith.constant 2 : index
    %c0_140 = arith.constant 0 : index
    %124 = vector.load %arg12[%c2_138, %c2_139, %c0_140] : memref<10x18x128xbf16, #tpu.memory_space<vmem>>, vector<8x16x128xbf16>
    %125 = vector.shape_cast %124 : vector<8x16x128xbf16> to vector<128x128xbf16>
    %c8_141 = arith.constant 8 : index
    %c0_142 = arith.constant 0 : index
    %c0_143 = arith.constant 0 : index
    %126 = vector.load %arg5[%c8_141, %c0_142, %c0_143] : memref<9x128x128xbf16, #tpu.memory_space<vmem>>, vector<1x128x128xbf16>
    %127 = vector.shape_cast %126 : vector<1x128x128xbf16> to vector<128x128xbf16>
    %cst_144 = arith.constant dense<0.000000e+00> : vector<128x128xf32>
    %128 = tpu.matmul %125, %127, %cst_144 {dimension_numbers = #tpu.dot_dimension_numbers<[1], [0], [0], [1], [0, 0, 1, 1], [], []>} : vector<128x128xbf16>, vector<128x128xbf16>, vector<128x128xf32> -> vector<128x128xf32>
    %129 = arith.addf %123, %128 : vector<128x128xf32>
    %c2_145 = arith.constant 2 : index
    %c1_146 = arith.constant 1 : index
    %c0_147 = arith.constant 0 : index
    %130 = vector.load %arg11[%c2_145, %c1_146, %c0_147] : memref<12x18x128xbf16, #tpu.memory_space<vmem>>, vector<8x16x128xbf16>
    %131 = vector.shape_cast %130 : vector<8x16x128xbf16> to vector<128x128xbf16>
    %c0_148 = arith.constant 0 : index
    %c0_149 = arith.constant 0 : index
    %132 = vector.load %arg6[%c0_148, %c0_149] : memref<128x128xbf16, #tpu.memory_space<vmem>>, vector<128x128xbf16>
    %cst_150 = arith.constant dense<0.000000e+00> : vector<128x128xf32>
    %133 = tpu.matmul %131, %132, %cst_150 {dimension_numbers = #tpu.dot_dimension_numbers<[1], [0], [0], [1], [0, 0, 1, 1], [], []>} : vector<128x128xbf16>, vector<128x128xbf16>, vector<128x128xf32> -> vector<128x128xf32>
    %c0_151 = arith.constant 0 : index
    %c0_152 = arith.constant 0 : index
    %134 = vector.load %arg9[%c0_151, %c0_152] : memref<1x128xf32, #tpu.memory_space<vmem>>, vector<1x128xf32>
    %135 = vector.broadcast %134 : vector<1x128xf32> to vector<128x128xf32>
    %136 = arith.addf %133, %135 : vector<128x128xf32>
    %c0_153 = arith.constant 0 : index
    %c0_154 = arith.constant 0 : index
    %137 = vector.load %arg8[%c0_153, %c0_154] : memref<1x128xf32, #tpu.memory_space<vmem>>, vector<1x128xf32>
    %138 = vector.broadcast %137 : vector<1x128xf32> to vector<128x128xf32>
    %139 = arith.addf %129, %138 : vector<128x128xf32>
    %cst_155 = arith.constant 0.000000e+00 : f32
    %140 = vector.broadcast %cst_155 : f32 to vector<128x128xf32>
    %141 = arith.maximumf %139, %140 : vector<128x128xf32>
    %142 = arith.addf %141, %136 : vector<128x128xf32>
    %143 = vector.shape_cast %142 : vector<128x128xf32> to vector<1x8x16x128xf32>
    %c0_156 = arith.constant 0 : index
    %c0_157 = arith.constant 0 : index
    %c0_158 = arith.constant 0 : index
    %c0_159 = arith.constant 0 : index
    %144 = vector.load %arg10[%c0_156, %c0_157, %c0_158, %c0_159] : memref<1x8x16x128xf32, #tpu.memory_space<vmem>>, vector<1x8x16x128xf32>
    tpu.vector_store %arg10[%c0_156, %c0_157, %c0_158, %c0_159], %143 {strides = array<i32>} : memref<1x8x16x128xf32, #tpu.memory_space<vmem>>, vector<1x8x16x128xf32>,
    return
  }
  func.func @transform_0(%arg0: i32, %arg1: i32) -> (i32, i32, i32, i32) {
    %c0_i32 = arith.constant 0 : i32
    %c0_i32_0 = arith.constant 0 : i32
    %c0_i32_1 = arith.constant 0 : i32
    return %arg0, %arg1, %c0_i32, %c0_i32_0 : i32, i32, i32, i32
  }
  func.func @transform_1(%arg0: i32, %arg1: i32) -> (i32, i32, i32, i32) {
    %c1_i32 = arith.constant 1 : i32
    %0 = arith.addi %arg1, %c1_i32 : i32
    %c2_i32 = arith.constant 2 : i32
    %1 = arith.muli %0, %c2_i32 : i32
    %c0_i32 = arith.constant 0 : i32
    %c0_i32_0 = arith.constant 0 : i32
    %c0_i32_1 = arith.constant 0 : i32
    return %arg0, %1, %c0_i32, %c0_i32_0 : i32, i32, i32, i32
  }
  func.func @transform_2(%arg0: i32, %arg1: i32) -> (i32, i32, i32) {
    %c0_i32 = arith.constant 0 : i32
    %c0_i32_0 = arith.constant 0 : i32
    %c0_i32_1 = arith.constant 0 : i32
    %c0_i32_2 = arith.constant 0 : i32
    return %c0_i32, %c0_i32_0, %c0_i32_1 : i32, i32, i32
  }
  func.func @transform_3(%arg0: i32, %arg1: i32) -> (i32, i32, i32) {
    %c0_i32 = arith.constant 0 : i32
    %c0_i32_0 = arith.constant 0 : i32
    %c0_i32_1 = arith.constant 0 : i32
    %c0_i32_2 = arith.constant 0 : i32
    return %c0_i32, %c0_i32_0, %c0_i32_1 : i32, i32, i32
  }
  func.func @transform_4(%arg0: i32, %arg1: i32) -> (i32, i32) {
    %c0_i32 = arith.constant 0 : i32
    %c0_i32_0 = arith.constant 0 : i32
    %c0_i32_1 = arith.constant 0 : i32
    return %c0_i32, %c0_i32_0 : i32, i32
  }
  func.func @transform_5(%arg0: i32, %arg1: i32) -> (i32, i32) {
    %c0_i32 = arith.constant 0 : i32
    %c0_i32_0 = arith.constant 0 : i32
    %c0_i32_1 = arith.constant 0 : i32
    return %c0_i32, %c0_i32_0 : i32, i32
  }
  func.func @transform_6(%arg0: i32, %arg1: i32) -> (i32, i32) {
    %c0_i32 = arith.constant 0 : i32
    %c0_i32_0 = arith.constant 0 : i32
    %c0_i32_1 = arith.constant 0 : i32
    return %c0_i32, %c0_i32_0 : i32, i32
  }
  func.func @transform_7(%arg0: i32, %arg1: i32) -> (i32, i32) {
    %c0_i32 = arith.constant 0 : i32
    %c0_i32_0 = arith.constant 0 : i32
    %c0_i32_1 = arith.constant 0 : i32
    return %c0_i32, %c0_i32_0 : i32, i32
  }
  func.func @transform_8(%arg0: i32, %arg1: i32) -> (i32, i32, i32, i32) {
    %c0_i32 = arith.constant 0 : i32
    %c0_i32_0 = arith.constant 0 : i32
    %c0_i32_1 = arith.constant 0 : i32
    return %arg0, %arg1, %c0_i32, %c0_i32_0 : i32, i32, i32, i32
  }
}

</mosaic_0001>

<llo_original>
// kernel: tpu_custom_call.1
$region0: #{tpu_custom_call.1}
  #allocation0 [shape = 'u32[]', space=smem, size = 0x4, offset = 0x4, fixed_abs, tag = 'smem constant byte address 0x4 - core index']
  #allocation1 [shape = 'u32[144,128]{1,0:T(1,128)}', space=vmem, size = 0x12000, scoped, tag = 'internal scratch']
  #allocation2 [shape = 'bf16[12,18,128]{2,1,0:T(8,128)(2,1)}', space=vmem, size = 0x12000, scoped, tag = 'scratch operand']
  #allocation3 [shape = 'bf16[10,18,128]{2,1,0:T(8,128)(2,1)}', space=vmem, size = 0xf000, scoped, tag = 'scratch operand']
  %s0 = inlined_call_operand.vmem [shape: bf16[2,20,18,128], index: 0, kind: input, shape index: {}]
  %s1 = inlined_call_operand.vmem [shape: bf16[2,20,18,128], index: 1, kind: input, shape index: {}]
  %s2 = inlined_call_operand.vmem [shape: bf16[9,128,128], index: 2, kind: input, shape index: {}]
  %s3 = inlined_call_operand.vmem [shape: bf16[9,128,128], index: 3, kind: input, shape index: {}]
  %s4 = inlined_call_operand.vmem [shape: bf16[128,128], index: 4, kind: input, shape index: {}]
  %s5 = inlined_call_operand.vmem [shape: f32[1,128], index: 5, kind: input, shape index: {}]
  %s6 = inlined_call_operand.vmem [shape: f32[1,128], index: 6, kind: input, shape index: {}]
  %s7 = inlined_call_operand.vmem [shape: f32[1,128], index: 7, kind: input, shape index: {}]
  %s8 = inlined_call_operand.hbm [shape: f32[2,16,16,128], index: 8, kind: output, shape index: {}]
  %s9 = sld [smem:[#allocation0]]
  $region73: #{tpu_custom_call.1} parent=0
    _
  %s11 = ssub.s32 1, %s9
  %s12 = scalar_select 0, %s11, %s9
  $region1: #{tpu_custom_call.1} parent=0
    #allocation4 [shape = 'u8[131072]{0}', space=vmem, size = 0x20000, scoped, tag = 'output window, operand 0']
    #allocation5 [shape = 's32[2]{0}', space=sflag, size = 0x8, scoped, tag = 'scoped memory for tpu_custom_call.1']
    %13 = vsyncpa [#allocation5], 0
    %s14 = scalar_lea.sflag [#allocation5], 1
    %15 = vsyncpa %s14, 0
    loop: start=0, step=1, limit=6
    $region2: #{tpu_custom_call.1} parent=1 // loop_pre_header
      _
    $region3: #{tpu_custom_call.1} parent=1 // loop_header
      %s17 = sphi 0, %s21
      %p18 = scmp.ge.s32.totalorder %s17, 6
      %s24 = sphi 0, %s36
      %s25 = sphi 0, %s32
      %s26 = sphi 0, %s24
      %s27 = sphi 0, %s25
      %s28 = sphi 0, %s26
      %s29 = sphi 0, %s27
      %s41 = sphi 0, %s43
      %s44 = sphi 0, %s41
      %s45 = sphi 0, %s44
      %s61 = sphi 0, %s45
      %s73 = sphi 0, %s75
      %s76 = sphi 0, %s73
      %s77 = sphi 0, %s76
      %s93 = sphi 0, %s77
      %s97 = sphi 0, %s97
      %s99 = sphi 0, %s97
      %s100 = sphi 0, %s99
      %s114 = sphi 0, %s100
      %s118 = sphi 0, %s118
      %s120 = sphi 0, %s118
      %s121 = sphi 0, %s120
      %s135 = sphi 0, %s121
      %s139 = sphi 0, %s139
      %s141 = sphi 0, %s139
      %s142 = sphi 0, %s141
      %s156 = sphi 0, %s142
      %s160 = sphi 0, %s160
      %s162 = sphi 0, %s160
      %s163 = sphi 0, %s162
      %s177 = sphi 0, %s163
      %s181 = sphi 0, %s181
      %s183 = sphi 0, %s181
      %s184 = sphi 0, %s183
      %s198 = sphi 0, %s184
      %s202 = sphi 0, %s202
      %s204 = sphi 0, %s202
      %s205 = sphi 0, %s204
      %s219 = sphi 0, %s205
      %s227 = sphi 0, %s229
      %s230 = sphi 0, %s227
      %s231 = sphi 0, %s230
      %s247 = sphi 0, %s231
    $region4: #{tpu_custom_call.1} parent=1 // loop_header_branch
      %20 = sbr.rel (%p18) target = $region8
    $region5: #{tpu_custom_call.1} parent=1 // loop_body
      %s22 = ssub.s32 %s17, 1
      %s23 = ssub.s32 %s17, 2
      %s30 = sadd.s32 1, %s25
      %p31 = scmp.ge.s32.totalorder %s30, 2
      %s32 = scalar_select %p31, 0, %s30
      %s33 = sadd.s32 1, %s24
      %s34 = scalar_select %p31, %s33, %s24
      %p35 = scmp.ge.s32.totalorder %s34, 2
      %s36 = scalar_select %p35, 0, %s34
      %s37 = ssub.s32 %s24, %s36
      %s38 = ssub.s32 %s25, %s32
      %s39 = sor.u32 %s37, %s38
      %p40 = scmp.eq.s32.totalorder %s39, 0
      %s42 = sadd.s32 %s41, 1
      %s43 = scalar_select %p40, %s41, %s42
      %p46 = pneg %p40
      %p47 = scmp.eq.s32.totalorder %s17, 3
      %p48 = por %p46, %p47
      %p49 = scmp.ne.s32.totalorder %s41, %s44
      %p50 = scmp.eq.s32.totalorder %s17, 0
      %p51 = por %p49, %p50
      %p52 = scmp.ne.s32.totalorder %s41, %s44
      %p53 = scmp.eq.s32.totalorder %s22, 3
      %p54 = por %p52, %p53
      %p55 = scmp.ne.s32.totalorder %s44, %s45
      %p56 = scmp.eq.s32.totalorder %s22, 0
      %p57 = por %p55, %p56
      %p58 = scmp.ne.s32.totalorder %s44, %s45
      %p59 = scmp.eq.s32.totalorder %s23, 3
      %p60 = por %p58, %p59
      %p62 = scmp.ne.s32.totalorder %s45, %s61
      %p63 = scmp.eq.s32.totalorder %s23, 0
      %p64 = por %p62, %p63
      %s65 = sadd.s32 %s25, 1
      %s66 = smul.u32 %s65, 2
      %s67 = sadd.s32 %s32, 1
      %s68 = smul.u32 %s67, 2
      %s69 = ssub.s32 %s24, %s36
      %s70 = ssub.s32 %s66, %s68
      %s71 = sor.u32 %s69, %s70
      %p72 = scmp.eq.s32.totalorder %s71, 0
      %s74 = sadd.s32 %s73, 1
      %s75 = scalar_select %p72, %s73, %s74
      %p78 = pneg %p72
      %p79 = scmp.eq.s32.totalorder %s17, 3
      %p80 = por %p78, %p79
      %p81 = scmp.ne.s32.totalorder %s73, %s76
      %p82 = scmp.eq.s32.totalorder %s17, 0
      %p83 = por %p81, %p82
      %p84 = scmp.ne.s32.totalorder %s73, %s76
      %p85 = scmp.eq.s32.totalorder %s22, 3
      %p86 = por %p84, %p85
      %p87 = scmp.ne.s32.totalorder %s76, %s77
      %p88 = scmp.eq.s32.totalorder %s22, 0
      %p89 = por %p87, %p88
      %p90 = scmp.ne.s32.totalorder %s76, %s77
      %p91 = scmp.eq.s32.totalorder %s23, 3
      %p92 = por %p90, %p91
      %p94 = scmp.ne.s32.totalorder %s77, %s93
      %p95 = scmp.eq.s32.totalorder %s23, 0
      %p96 = por %p94, %p95
      %s98 = sadd.s32 %s97, 1
      %p101 = scmp.eq.s32.totalorder %s17, 3
      %p102 = scmp.ne.s32.totalorder %s97, %s99
      %p103 = scmp.eq.s32.totalorder %s17, 0
      %p104 = por %p102, %p103
      %p105 = scmp.ne.s32.totalorder %s97, %s99
      %p106 = scmp.eq.s32.totalorder %s22, 3
      %p107 = por %p105, %p106
      %p108 = scmp.ne.s32.totalorder %s99, %s100
      %p109 = scmp.eq.s32.totalorder %s22, 0
      %p110 = por %p108, %p109
      %p111 = scmp.ne.s32.totalorder %s99, %s100
      %p112 = scmp.eq.s32.totalorder %s23, 3
      %p113 = por %p111, %p112
      %p115 = scmp.ne.s32.totalorder %s100, %s114
      %p116 = scmp.eq.s32.totalorder %s23, 0
      %p117 = por %p115, %p116
      %s119 = sadd.s32 %s118, 1
      %p122 = scmp.eq.s32.totalorder %s17, 3
      %p123 = scmp.ne.s32.totalorder %s118, %s120
      %p124 = scmp.eq.s32.totalorder %s17, 0
      %p125 = por %p123, %p124
      %p126 = scmp.ne.s32.totalorder %s118, %s120
      %p127 = scmp.eq.s32.totalorder %s22, 3
      %p128 = por %p126, %p127
      %p129 = scmp.ne.s32.totalorder %s120, %s121
      %p130 = scmp.eq.s32.totalorder %s22, 0
      %p131 = por %p129, %p130
      %p132 = scmp.ne.s32.totalorder %s120, %s121
      %p133 = scmp.eq.s32.totalorder %s23, 3
      %p134 = por %p132, %p133
      %p136 = scmp.ne.s32.totalorder %s121, %s135
      %p137 = scmp.eq.s32.totalorder %s23, 0
      %p138 = por %p136, %p137
      %s140 = sadd.s32 %s139, 1
      %p143 = scmp.eq.s32.totalorder %s17, 3
      %p144 = scmp.ne.s32.totalorder %s139, %s141
      %p145 = scmp.eq.s32.totalorder %s17, 0
      %p146 = por %p144, %p145
      %p147 = scmp.ne.s32.totalorder %s139, %s141
      %p148 = scmp.eq.s32.totalorder %s22, 3
      %p149 = por %p147, %p148
      %p150 = scmp.ne.s32.totalorder %s141, %s142
      %p151 = scmp.eq.s32.totalorder %s22, 0
      %p152 = por %p150, %p151
      %p153 = scmp.ne.s32.totalorder %s141, %s142
      %p154 = scmp.eq.s32.totalorder %s23, 3
      %p155 = por %p153, %p154
      %p157 = scmp.ne.s32.totalorder %s142, %s156
      %p158 = scmp.eq.s32.totalorder %s23, 0
      %p159 = por %p157, %p158
      %s161 = sadd.s32 %s160, 1
      %p164 = scmp.eq.s32.totalorder %s17, 3
      %p165 = scmp.ne.s32.totalorder %s160, %s162
      %p166 = scmp.eq.s32.totalorder %s17, 0
      %p167 = por %p165, %p166
      %p168 = scmp.ne.s32.totalorder %s160, %s162
      %p169 = scmp.eq.s32.totalorder %s22, 3
      %p170 = por %p168, %p169
      %p171 = scmp.ne.s32.totalorder %s162, %s163
      %p172 = scmp.eq.s32.totalorder %s22, 0
      %p173 = por %p171, %p172
      %p174 = scmp.ne.s32.totalorder %s162, %s163
      %p175 = scmp.eq.s32.totalorder %s23, 3
      %p176 = por %p174, %p175
      %p178 = scmp.ne.s32.totalorder %s163, %s177
      %p179 = scmp.eq.s32.totalorder %s23, 0
      %p180 = por %p178, %p179
      %s182 = sadd.s32 %s181, 1
      %p185 = scmp.eq.s32.totalorder %s17, 3
      %p186 = scmp.ne.s32.totalorder %s181, %s183
      %p187 = scmp.eq.s32.totalorder %s17, 0
      %p188 = por %p186, %p187
      %p189 = scmp.ne.s32.totalorder %s181, %s183
      %p190 = scmp.eq.s32.totalorder %s22, 3
      %p191 = por %p189, %p190
      %p192 = scmp.ne.s32.totalorder %s183, %s184
      %p193 = scmp.eq.s32.totalorder %s22, 0
      %p194 = por %p192, %p193
      %p195 = scmp.ne.s32.totalorder %s183, %s184
      %p196 = scmp.eq.s32.totalorder %s23, 3
      %p197 = por %p195, %p196
      %p199 = scmp.ne.s32.totalorder %s184, %s198
      %p200 = scmp.eq.s32.totalorder %s23, 0
      %p201 = por %p199, %p200
      %s203 = sadd.s32 %s202, 1
      %p206 = scmp.eq.s32.totalorder %s17, 3
      %p207 = scmp.ne.s32.totalorder %s202, %s204
      %p208 = scmp.eq.s32.totalorder %s17, 0
      %p209 = por %p207, %p208
      %p210 = scmp.ne.s32.totalorder %s202, %s204
      %p211 = scmp.eq.s32.totalorder %s22, 3
      %p212 = por %p210, %p211
      %p213 = scmp.ne.s32.totalorder %s204, %s205
      %p214 = scmp.eq.s32.totalorder %s22, 0
      %p215 = por %p213, %p214
      %p216 = scmp.ne.s32.totalorder %s204, %s205
      %p217 = scmp.eq.s32.totalorder %s23, 3
      %p218 = por %p216, %p217
      %p220 = scmp.ne.s32.totalorder %s205, %s219
      %p221 = scmp.eq.s32.totalorder %s23, 0
      %p222 = por %p220, %p221
      %s223 = ssub.s32 %s24, %s36
      %s224 = ssub.s32 %s25, %s32
      %s225 = sor.u32 %s223, %s224
      %p226 = scmp.eq.s32.totalorder %s225, 0
      %s228 = sadd.s32 %s227, 1
      %s229 = scalar_select %p226, %s227, %s228
      %p232 = pneg %p226
      %p233 = scmp.eq.s32.totalorder %s17, 3
      %p234 = por %p232, %p233
      %p235 = scmp.ne.s32.totalorder %s227, %s230
      %p236 = scmp.eq.s32.totalorder %s17, 0
      %p237 = por %p235, %p236
      %p238 = scmp.ne.s32.totalorder %s227, %s230
      %p239 = scmp.eq.s32.totalorder %s22, 3
      %p240 = por %p238, %p239
      %p241 = scmp.ne.s32.totalorder %s230, %s231
      %p242 = scmp.eq.s32.totalorder %s22, 0
      %p243 = por %p241, %p242
      %p244 = scmp.ne.s32.totalorder %s230, %s231
      %p245 = scmp.eq.s32.totalorder %s23, 3
      %p246 = por %p244, %p245
      %p248 = scmp.ne.s32.totalorder %s231, %s247
      %p249 = scmp.eq.s32.totalorder %s23, 0
      %p250 = por %p248, %p249
      %p251 = scmp.le.s32.totalorder 1, %s17
      %p252 = scmp.lt.s32.totalorder %s17, 5
      %p253 = pnand %p251, %p252
      %p254 = pneg %p253
      // Predicated region
      $region9: #{tpu_custom_call.1} parent=5 // pred_check
        _
      $region10: #{tpu_custom_call.1} parent=5 // pred_check_branch
        %256 = sbr.rel (%p253) target = $region12
      $region11: #{tpu_custom_call.1} parent=5 // pred_region
        %s257 = ssub.s32 %s17, 1
        // Predicated region
        $region13: #{tpu_custom_call.1} parent=11 // pred_check
          %p258 = pneg %p110
        $region14: #{tpu_custom_call.1} parent=11 // pred_check_branch
          %260 = sbr.rel (%p258) target = $region16
        $region15: #{tpu_custom_call.1} parent=11 // pred_region
          _
        $region16: #{tpu_custom_call.1} parent=11 // pred_fallthru
          _
        // Predicated region
        $region17: #{tpu_custom_call.1} parent=11 // pred_check
          %p261 = pneg %p131
        $region18: #{tpu_custom_call.1} parent=11 // pred_check_branch
          %263 = sbr.rel (%p261) target = $region20
        $region19: #{tpu_custom_call.1} parent=11 // pred_region
          _
        $region20: #{tpu_custom_call.1} parent=11 // pred_fallthru
          _
        // Predicated region
        $region21: #{tpu_custom_call.1} parent=11 // pred_check
          %p264 = pneg %p152
        $region22: #{tpu_custom_call.1} parent=11 // pred_check_branch
          %266 = sbr.rel (%p264) target = $region24
        $region23: #{tpu_custom_call.1} parent=11 // pred_region
          _
        $region24: #{tpu_custom_call.1} parent=11 // pred_fallthru
          _
        // Predicated region
        $region25: #{tpu_custom_call.1} parent=11 // pred_check
          %p267 = pneg %p173
        $region26: #{tpu_custom_call.1} parent=11 // pred_check_branch
          %269 = sbr.rel (%p267) target = $region28
        $region27: #{tpu_custom_call.1} parent=11 // pred_region
          _
        $region28: #{tpu_custom_call.1} parent=11 // pred_fallthru
          _
        // Predicated region
        $region29: #{tpu_custom_call.1} parent=11 // pred_check
          %p270 = pneg %p194
        $region30: #{tpu_custom_call.1} parent=11 // pred_check_branch
          %272 = sbr.rel (%p270) target = $region32
        $region31: #{tpu_custom_call.1} parent=11 // pred_region
          _
        $region32: #{tpu_custom_call.1} parent=11 // pred_fallthru
          _
        // Predicated region
        $region33: #{tpu_custom_call.1} parent=11 // pred_check
          %p273 = pneg %p215
        $region34: #{tpu_custom_call.1} parent=11 // pred_check_branch
          %275 = sbr.rel (%p273) target = $region36
        $region35: #{tpu_custom_call.1} parent=11 // pred_region
          _
        $region36: #{tpu_custom_call.1} parent=11 // pred_fallthru
          _
      $region12: #{tpu_custom_call.1} parent=5 // pred_fallthru
        _
      %p276 = scmp.lt.s32.totalorder %s17, 4
      // Predicated region
      $region37: #{tpu_custom_call.1} parent=5 // pred_check
        %p277 = pneg %p276
      $region38: #{tpu_custom_call.1} parent=5 // pred_check_branch
        %279 = sbr.rel (%p277) target = $region40
      $region39: #{tpu_custom_call.1} parent=5 // pred_region
        // Predicated region
        $region41: #{tpu_custom_call.1} parent=39 // pred_check
          %p280 = pneg %p51
        $region42: #{tpu_custom_call.1} parent=39 // pred_check_branch
          %282 = sbr.rel (%p280) target = $region44
        $region43: #{tpu_custom_call.1} parent=39 // pred_region
          %s283 = smul.u32 8, %s25
          %s284 = ssub.s32 20, %s283
          %p285 = scmp.lt.s32.totalorder %s284, 8
          %s286 = scalar_select %p285, %s284, 8
          %s287 = smul.u32 64, %s286
          %s288 = smul.u32 %s287, 3
          %p289 = scmp.lt.s32.totalorder %s24, 1
          %s290 = scalar_select %p289, %s24, 1
          %p291 = scmp.lt.s32.totalorder %s283, 19
          %s292 = scalar_select %p291, %s283, 19
          %s293 = smul.addr %s292, 3
          %s294 = smul.addr %s290, 60
          %s295 = sadd.s32 %s293, %s294
          %s296 = smul.addr %s295, 4
          %s297 = scalar_lea.vmem %s0, %s296
          %s298 = smul.u32 8, %s25
          %s299 = ssub.s32 20, %s298
          %p300 = scmp.lt.s32.totalorder %s299, 8
          %s301 = scalar_select %p300, %s299, 8
          %s302 = smul.u32 64, %s301
          %s303 = smul.u32 %s302, 3
        $region44: #{tpu_custom_call.1} parent=39 // pred_fallthru
          _
        // Predicated region
        $region45: #{tpu_custom_call.1} parent=39 // pred_check
          %p304 = pneg %p83
        $region46: #{tpu_custom_call.1} parent=39 // pred_check_branch
          %306 = sbr.rel (%p304) target = $region48
        $region47: #{tpu_custom_call.1} parent=39 // pred_region
          %s307 = sadd.s32 %s25, 1
          %s308 = smul.u32 %s307, 2
          %s309 = smul.u32 4, %s308
          %p310 = scmp.lt.s32.totalorder %s24, 1
          %s311 = scalar_select %p310, %s24, 1
          %p312 = scmp.lt.s32.totalorder %s309, 19
          %s313 = scalar_select %p312, %s309, 19
          %s314 = smul.addr %s313, 3
          %s315 = smul.addr %s311, 60
          %s316 = sadd.s32 %s314, %s315
          %s317 = smul.addr %s316, 4
          %s318 = scalar_lea.vmem %s1, %s317
          %s319 = sadd.s32 %s25, 1
          %s320 = smul.u32 %s319, 2
          %s321 = smul.u32 4, %s320
        $region48: #{tpu_custom_call.1} parent=39 // pred_fallthru
          _
      $region40: #{tpu_custom_call.1} parent=5 // pred_fallthru
        _
      %p322 = scmp.le.s32.totalorder 1, %s17
      %p323 = scmp.lt.s32.totalorder %s17, 5
      %p324 = pnand %p322, %p323
      %p325 = pneg %p324
      // Predicated region
      $region49: #{tpu_custom_call.1} parent=5 // pred_check
        _
      $region50: #{tpu_custom_call.1} parent=5 // pred_check_branch
        %327 = sbr.rel (%p324) target = $region52
      $region51: #{tpu_custom_call.1} parent=5 // pred_region
        %s328 = ssub.s32 %s17, 1
        %s329 = smul.u32 8, %s27
        %s330 = ssub.s32 20, %s329
        %p331 = scmp.lt.s32.totalorder %s330, 8
        %s332 = scalar_select %p331, %s330, 8
        %s333 = smul.u32 64, %s332
        %s334 = smul.u32 %s333, 3
        %p335 = scmp.lt.s32.totalorder %s26, 1
        %s336 = scalar_select %p335, %s26, 1
        %p337 = scmp.lt.s32.totalorder %s329, 19
        %s338 = scalar_select %p337, %s329, 19
        %s339 = smul.addr %s338, 3
        %s340 = smul.addr %s336, 60
        %s341 = sadd.s32 %s339, %s340
        %s342 = smul.addr %s341, 4
        %s343 = scalar_lea.vmem %s0, %s342
        %p344 = pneg %p57
        %p345 = pneg %p54
        %s346 = sadd.s32 %s27, 1
        %s347 = smul.u32 %s346, 2
        %s348 = smul.u32 4, %s347
        %p349 = scmp.lt.s32.totalorder %s26, 1
        %s350 = scalar_select %p349, %s26, 1
        %p351 = scmp.lt.s32.totalorder %s348, 19
        %s352 = scalar_select %p351, %s348, 19
        %s353 = smul.addr %s352, 3
        %s354 = smul.addr %s350, 60
        %s355 = sadd.s32 %s353, %s354
        %s356 = smul.addr %s355, 4
        %s357 = scalar_lea.vmem %s1, %s356
        %p358 = pneg %p89
        %p359 = pneg %p86
        %p360 = pneg %p110
        %p361 = pneg %p107
        %p362 = pneg %p131
        %p363 = pneg %p128
        %p364 = pneg %p152
        %p365 = pneg %p149
        %p366 = pneg %p173
        %p367 = pneg %p170
        %p368 = pneg %p194
        %p369 = pneg %p191
        %p370 = pneg %p215
        %p371 = pneg %p212
        %p372 = pneg %p243
        %p373 = pneg %p240
        %s374 = sand.u32 %s230, 1
        %s375 = scalar_lea.sflag [#allocation5], %s374
        %s376 = sand.u32 %s230, 1
        %s377 = smul.addr %s376, 128
        %s378 = scalar_lea.vmem [#allocation4], %s377
        %s379 = smul.u32 8, %s27
        %s380 = ssub.s32 20, %s379
        %p381 = scmp.lt.s32.totalorder %s380, 8
        %s382 = scalar_select %p381, %s380, 8
        %s383 = smul.u32 64, %s382
        %s384 = smul.u32 %s383, 3
        %p385 = scmp.lt.s32.totalorder %s26, 1
        %s386 = scalar_select %p385, %s26, 1
        %p387 = scmp.lt.s32.totalorder %s379, 19
        %s388 = scalar_select %p387, %s379, 19
        %s389 = smul.addr %s388, 3
        %s390 = smul.addr %s386, 60
        %s391 = sadd.s32 %s389, %s390
        %s392 = smul.addr %s391, 4
        %s393 = scalar_lea.vmem %s0, %s392
        %s394 = smul.u32 8, %s27
        %s395 = ssub.s32 20, %s394
        %p396 = scmp.lt.s32.totalorder %s395, 8
        %s397 = scalar_select %p396, %s395, 8
        %s398 = smul.u32 64, %s397
        %s399 = smul.u32 %s398, 3
        %s400 = sadd.s32 %s27, 1
        %s401 = smul.u32 %s400, 2
        %s402 = smul.u32 4, %s401
        %p403 = scmp.lt.s32.totalorder %s26, 1
        %s404 = scalar_select %p403, %s26, 1
        %p405 = scmp.lt.s32.totalorder %s402, 19
        %s406 = scalar_select %p405, %s402, 19
        %s407 = smul.addr %s406, 3
        %s408 = smul.addr %s404, 60
        %s409 = sadd.s32 %s407, %s408
        %s410 = smul.addr %s409, 4
        %s411 = scalar_lea.vmem %s1, %s410
        %s412 = sadd.s32 %s27, 1
        %s413 = smul.u32 %s412, 2
        %s414 = smul.u32 4, %s413
        %s415 = smul.u32 8, %s27
        %v417 = vld [vmem:[%s393] sm:$0xf]
        %v418 = vld [vmem:[%s393 + $0x4] sm:$0xf]
        %v419 = vld [vmem:[%s393 + $0x8] sm:$0x1]
        %v420 = vld [vmem:[%s393 + $0xc] sm:$0xf]
        %v421 = vld [vmem:[%s393 + $0x10] sm:$0xf]
        %v422 = vld [vmem:[%s393 + $0x14] sm:$0x1]
        %v423 = vld [vmem:[%s393 + $0x18] sm:$0xf]
        %v424 = vld [vmem:[%s393 + $0x1c] sm:$0xf]
        %v425 = vld [vmem:[%s393 + $0x20] sm:$0x1]
        %v426 = vld [vmem:[%s393 + $0x24] sm:$0xf]
        %v427 = vld [vmem:[%s393 + $0x28] sm:$0xf]
        %v428 = vld [vmem:[%s393 + $0x2c] sm:$0x1]
        %v429 = vld [vmem:[%s393 + $0x30] sm:$0xf]
        %v430 = vld [vmem:[%s393 + $0x34] sm:$0xf]
        %v431 = vld [vmem:[%s393 + $0x38] sm:$0x1]
        %v432 = vld [vmem:[%s393 + $0x3c] sm:$0xf]
        %v433 = vld [vmem:[%s393 + $0x40] sm:$0xf]
        %v434 = vld [vmem:[%s393 + $0x44] sm:$0x1]
        %v435 = vld [vmem:[%s393 + $0x48] sm:$0xf]
        %v436 = vld [vmem:[%s393 + $0x4c] sm:$0xf]
        %v437 = vld [vmem:[%s393 + $0x50] sm:$0x1]
        %v438 = vld [vmem:[%s393 + $0x54] sm:$0xf]
        %v439 = vld [vmem:[%s393 + $0x58] sm:$0xf]
        %v440 = vld [vmem:[%s393 + $0x5c] sm:$0x1]
        %441 = vst [vmem:[#allocation2] sm:$0xf] %v417
        %442 = vst [vmem:[#allocation2 + $0x4] sm:$0xf] %v418
        %443 = vst [vmem:[#allocation2 + $0x8] sm:$0x1] %v419
        %444 = vst [vmem:[#allocation2 + $0xc] sm:$0xf] %v420
        %445 = vst [vmem:[#allocation2 + $0x10] sm:$0xf] %v421
        %446 = vst [vmem:[#allocation2 + $0x14] sm:$0x1] %v422
        %447 = vst [vmem:[#allocation2 + $0x18] sm:$0xf] %v423
        %448 = vst [vmem:[#allocation2 + $0x1c] sm:$0xf] %v424
        %449 = vst [vmem:[#allocation2 + $0x20] sm:$0x1] %v425
        %450 = vst [vmem:[#allocation2 + $0x24] sm:$0xf] %v426
        %451 = vst [vmem:[#allocation2 + $0x28] sm:$0xf] %v427
        %452 = vst [vmem:[#allocation2 + $0x2c] sm:$0x1] %v428
        %453 = vst [vmem:[#allocation2 + $0x30] sm:$0xf] %v429
        %454 = vst [vmem:[#allocation2 + $0x34] sm:$0xf] %v430
        %455 = vst [vmem:[#allocation2 + $0x38] sm:$0x1] %v431
        %456 = vst [vmem:[#allocation2 + $0x3c] sm:$0xf] %v432
        %457 = vst [vmem:[#allocation2 + $0x40] sm:$0xf] %v433
        %458 = vst [vmem:[#allocation2 + $0x44] sm:$0x1] %v434
        %459 = vst [vmem:[#allocation2 + $0x48] sm:$0xf] %v435
        %460 = vst [vmem:[#allocation2 + $0x4c] sm:$0xf] %v436
        %461 = vst [vmem:[#allocation2 + $0x50] sm:$0x1] %v437
        %462 = vst [vmem:[#allocation2 + $0x54] sm:$0xf] %v438
        %463 = vst [vmem:[#allocation2 + $0x58] sm:$0xf] %v439
        %464 = vst [vmem:[#allocation2 + $0x5c] sm:$0x1] %v440
        %v465 = vld [vmem:[%s411] sm:$0xf]
        %v466 = vld [vmem:[%s411 + $0x4] sm:$0xf]
        %v467 = vld [vmem:[%s411 + $0x8] sm:$0x1]
        %v468 = vld [vmem:[%s411 + $0xc] sm:$0xf]
        %v469 = vld [vmem:[%s411 + $0x10] sm:$0xf]
        %v470 = vld [vmem:[%s411 + $0x14] sm:$0x1]
        %v471 = vld [vmem:[%s411 + $0x18] sm:$0xf]
        %v472 = vld [vmem:[%s411 + $0x1c] sm:$0xf]
        %v473 = vld [vmem:[%s411 + $0x20] sm:$0x1]
        %v474 = vld [vmem:[%s411 + $0x24] sm:$0xf]
        %v475 = vld [vmem:[%s411 + $0x28] sm:$0xf]
        %v476 = vld [vmem:[%s411 + $0x2c] sm:$0x1]
        %s477 = scalar_lea.vmem [#allocation2], 96
        %478 = vst [vmem:[%s477] sm:$0xf] %v465
        %479 = vst [vmem:[%s477 + $0x4] sm:$0xf] %v466
        %480 = vst [vmem:[%s477 + $0x8] sm:$0x1] %v467
        %481 = vst [vmem:[%s477 + $0xc] sm:$0xf] %v468
        %482 = vst [vmem:[%s477 + $0x10] sm:$0xf] %v469
        %483 = vst [vmem:[%s477 + $0x14] sm:$0x1] %v470
        %484 = vst [vmem:[%s477 + $0x18] sm:$0xf] %v471
        %485 = vst [vmem:[%s477 + $0x1c] sm:$0xf] %v472
        %486 = vst [vmem:[%s477 + $0x20] sm:$0x1] %v473
        %487 = vst [vmem:[%s477 + $0x24] sm:$0xf] %v474
        %488 = vst [vmem:[%s477 + $0x28] sm:$0xf] %v475
        %489 = vst [vmem:[%s477 + $0x2c] sm:$0x1] %v476
        %v490 = vld [vmem:[#allocation2] sm:$0xf]
        %v491 = vld [vmem:[#allocation2 + $0x4] sm:$0xf]
        %v492 = vld [vmem:[#allocation2 + $0xc] sm:$0xf]
        %v493 = vld [vmem:[#allocation2 + $0x10] sm:$0xf]
        %v494 = vld [vmem:[#allocation2 + $0x18] sm:$0xf]
        %v495 = vld [vmem:[#allocation2 + $0x1c] sm:$0xf]
        %v496 = vld [vmem:[#allocation2 + $0x24] sm:$0xf]
        %v497 = vld [vmem:[#allocation2 + $0x28] sm:$0xf]
        %v498 = vld [vmem:[#allocation2 + $0x30] sm:$0xf]
        %v499 = vld [vmem:[#allocation2 + $0x34] sm:$0xf]
        %v500 = vld [vmem:[#allocation2 + $0x3c] sm:$0xf]
        %v501 = vld [vmem:[#allocation2 + $0x40] sm:$0xf]
        %v502 = vld [vmem:[#allocation2 + $0x48] sm:$0xf]
        %v503 = vld [vmem:[#allocation2 + $0x4c] sm:$0xf]
        %v504 = vld [vmem:[#allocation2 + $0x54] sm:$0xf]
        %v505 = vld [vmem:[#allocation2 + $0x58] sm:$0xf]
        %v506 = vld [vmem:[#allocation2 + $0x60] sm:$0xf]
        %v507 = vld [vmem:[#allocation2 + $0x64] sm:$0xf]
        %v508 = vld [vmem:[#allocation2 + $0x6c] sm:$0xf]
        %v509 = vld [vmem:[#allocation2 + $0x70] sm:$0xf]
        %v510 = vld [vmem:[%s2] sm:$0xf]
        %v511 = vld [vmem:[%s2 + $0x4] sm:$0xf]
        %v512 = vld [vmem:[%s2 + $0x8] sm:$0xf]
        %v513 = vld [vmem:[%s2 + $0xc] sm:$0xf]
        %v514 = vld [vmem:[%s2 + $0x10] sm:$0xf]
        %v515 = vld [vmem:[%s2 + $0x14] sm:$0xf]
        %v516 = vld [vmem:[%s2 + $0x18] sm:$0xf]
        %v517 = vld [vmem:[%s2 + $0x1c] sm:$0xf]
        %v518 = vld [vmem:[%s2 + $0x20] sm:$0xf]
        %v519 = vld [vmem:[%s2 + $0x24] sm:$0xf]
        %v520 = vld [vmem:[%s2 + $0x28] sm:$0xf]
        %v521 = vld [vmem:[%s2 + $0x2c] sm:$0xf]
        %v522 = vld [vmem:[%s2 + $0x30] sm:$0xf]
        %v523 = vld [vmem:[%s2 + $0x34] sm:$0xf]
        %v524 = vld [vmem:[%s2 + $0x38] sm:$0xf]
        %v525 = vld [vmem:[%s2 + $0x3c] sm:$0xf]
        %v526 = vld [vmem:[#allocation2 + $0x8] sm:$0x1]
        %v527 = vld [vmem:[#allocation2 + $0x14] sm:$0x1]
        %v528 = vld [vmem:[#allocation2 + $0x20] sm:$0x1]
        %v529 = vld [vmem:[#allocation2 + $0x2c] sm:$0x1]
        %v530 = vld [vmem:[#allocation2 + $0x38] sm:$0x1]
        %v531 = vld [vmem:[#allocation2 + $0x44] sm:$0x1]
        %v532 = vld [vmem:[#allocation2 + $0x50] sm:$0x1]
        %v533 = vld [vmem:[#allocation2 + $0x5c] sm:$0x1]
        %v534 = vld [vmem:[#allocation2 + $0x68] sm:$0x1]
        %v535 = vld [vmem:[#allocation2 + $0x74] sm:$0x1]
        %vm536 = vsmask.f32 3328
        %vm537 = vsmask.f32 7440
        %vm538 = vmor %vm536, %vm537
        %v540 = vshrl.u32 %v490, 16
        %v542 = vrot.slane %v540, 4
        %v543 = vshll.u32 %v490, 16
        %v545 = vrot.slane %v543, 5
        %v546 = vor.u32 %v542, %v545
        %v547 = vrot.slane %v546, 4
        %v549 = vshll.u32 %v491, 16
        %v551 = vrot.slane %v549, 5
        %v552 = vsel %vm538, %v547, %v551
        %v553 = vshrl.u32 %v491, 16
        %v555 = vrot.slane %v553, 4
        %v556 = vor.u32 %v555, %v551
        %v557 = vrot.slane %v556, 4
        %v559 = vshll.u32 %v526, 16
        %v561 = vrot.slane %v559, 5
        %v562 = vsel %vm538, %v557, %v561
        %v564 = vshrl.u32 %v492, 16
        %v566 = vrot.slane %v564, 4
        %v567 = vshll.u32 %v492, 16
        %v569 = vrot.slane %v567, 5
        %v570 = vor.u32 %v566, %v569
        %v571 = vrot.slane %v570, 4
        %v573 = vshll.u32 %v493, 16
        %v575 = vrot.slane %v573, 5
        %v576 = vsel %vm538, %v571, %v575
        %v577 = vshrl.u32 %v493, 16
        %v579 = vrot.slane %v577, 4
        %v580 = vor.u32 %v579, %v575
        %v581 = vrot.slane %v580, 4
        %v583 = vshll.u32 %v527, 16
        %v585 = vrot.slane %v583, 5
        %v586 = vsel %vm538, %v581, %v585
        %v588 = vshrl.u32 %v494, 16
        %v590 = vrot.slane %v588, 4
        %v591 = vshll.u32 %v494, 16
        %v593 = vrot.slane %v591, 5
        %v594 = vor.u32 %v590, %v593
        %v595 = vrot.slane %v594, 4
        %v597 = vshll.u32 %v495, 16
        %v599 = vrot.slane %v597, 5
        %v600 = vsel %vm538, %v595, %v599
        %v601 = vshrl.u32 %v495, 16
        %v603 = vrot.slane %v601, 4
        %v604 = vor.u32 %v603, %v599
        %v605 = vrot.slane %v604, 4
        %v607 = vshll.u32 %v528, 16
        %v609 = vrot.slane %v607, 5
        %v610 = vsel %vm538, %v605, %v609
        %v612 = vshrl.u32 %v496, 16
        %v614 = vrot.slane %v612, 4
        %v615 = vshll.u32 %v496, 16
        %v617 = vrot.slane %v615, 5
        %v618 = vor.u32 %v614, %v617
        %v619 = vrot.slane %v618, 4
        %v621 = vshll.u32 %v497, 16
        %v623 = vrot.slane %v621, 5
        %v624 = vsel %vm538, %v619, %v623
        %v625 = vshrl.u32 %v497, 16
        %v627 = vrot.slane %v625, 4
        %v628 = vor.u32 %v627, %v623
        %v629 = vrot.slane %v628, 4
        %v631 = vshll.u32 %v529, 16
        %v633 = vrot.slane %v631, 5
        %v634 = vsel %vm538, %v629, %v633
        %v636 = vshrl.u32 %v498, 16
        %v638 = vrot.slane %v636, 4
        %v639 = vshll.u32 %v498, 16
        %v641 = vrot.slane %v639, 5
        %v642 = vor.u32 %v638, %v641
        %v643 = vrot.slane %v642, 4
        %v645 = vshll.u32 %v499, 16
        %v647 = vrot.slane %v645, 5
        %v648 = vsel %vm538, %v643, %v647
        %v649 = vshrl.u32 %v499, 16
        %v651 = vrot.slane %v649, 4
        %v652 = vor.u32 %v651, %v647
        %v653 = vrot.slane %v652, 4
        %v655 = vshll.u32 %v530, 16
        %v657 = vrot.slane %v655, 5
        %v658 = vsel %vm538, %v653, %v657
        %v660 = vshrl.u32 %v500, 16
        %v662 = vrot.slane %v660, 4
        %v663 = vshll.u32 %v500, 16
        %v665 = vrot.slane %v663, 5
        %v666 = vor.u32 %v662, %v665
        %v667 = vrot.slane %v666, 4
        %v669 = vshll.u32 %v501, 16
        %v671 = vrot.slane %v669, 5
        %v672 = vsel %vm538, %v667, %v671
        %v673 = vshrl.u32 %v501, 16
        %v675 = vrot.slane %v673, 4
        %v676 = vor.u32 %v675, %v671
        %v677 = vrot.slane %v676, 4
        %v679 = vshll.u32 %v531, 16
        %v681 = vrot.slane %v679, 5
        %v682 = vsel %vm538, %v677, %v681
        %v684 = vshrl.u32 %v502, 16
        %v686 = vrot.slane %v684, 4
        %v687 = vshll.u32 %v502, 16
        %v689 = vrot.slane %v687, 5
        %v690 = vor.u32 %v686, %v689
        %v691 = vrot.slane %v690, 4
        %v693 = vshll.u32 %v503, 16
        %v695 = vrot.slane %v693, 5
        %v696 = vsel %vm538, %v691, %v695
        %v697 = vshrl.u32 %v503, 16
        %v699 = vrot.slane %v697, 4
        %v700 = vor.u32 %v699, %v695
        %v701 = vrot.slane %v700, 4
        %v703 = vshll.u32 %v532, 16
        %v705 = vrot.slane %v703, 5
        %v706 = vsel %vm538, %v701, %v705
        %v708 = vshrl.u32 %v504, 16
        %v710 = vrot.slane %v708, 4
        %v711 = vshll.u32 %v504, 16
        %v713 = vrot.slane %v711, 5
        %v714 = vor.u32 %v710, %v713
        %v715 = vrot.slane %v714, 4
        %v717 = vshll.u32 %v505, 16
        %v719 = vrot.slane %v717, 5
        %v720 = vsel %vm538, %v715, %v719
        %v721 = vshrl.u32 %v505, 16
        %v723 = vrot.slane %v721, 4
        %v724 = vor.u32 %v723, %v719
        %v725 = vrot.slane %v724, 4
        %v727 = vshll.u32 %v533, 16
        %v729 = vrot.slane %v727, 5
        %v730 = vsel %vm538, %v725, %v729
        %v732 = vshrl.u32 %v506, 16
        %v734 = vrot.slane %v732, 4
        %v735 = vshll.u32 %v506, 16
        %v737 = vrot.slane %v735, 5
        %v738 = vor.u32 %v734, %v737
        %v739 = vrot.slane %v738, 4
        %v741 = vshll.u32 %v507, 16
        %v743 = vrot.slane %v741, 5
        %v744 = vsel %vm538, %v739, %v743
        %v745 = vshrl.u32 %v507, 16
        %v747 = vrot.slane %v745, 4
        %v748 = vor.u32 %v747, %v743
        %v749 = vrot.slane %v748, 4
        %v751 = vshll.u32 %v534, 16
        %v753 = vrot.slane %v751, 5
        %v754 = vsel %vm538, %v749, %v753
        %v756 = vshrl.u32 %v508, 16
        %v758 = vrot.slane %v756, 4
        %v759 = vshll.u32 %v508, 16
        %v761 = vrot.slane %v759, 5
        %v762 = vor.u32 %v758, %v761
        %v763 = vrot.slane %v762, 4
        %v765 = vshll.u32 %v509, 16
        %v767 = vrot.slane %v765, 5
        %v768 = vsel %vm538, %v763, %v767
        %v769 = vshrl.u32 %v509, 16
        %v771 = vrot.slane %v769, 4
        %v772 = vor.u32 %v771, %v767
        %v773 = vrot.slane %v772, 4
        %v775 = vshll.u32 %v535, 16
        %v777 = vrot.slane %v775, 5
        %v778 = vsel %vm538, %v773, %v777
        %s779 = scalar_lea.vmem %s2, 64
        %v780 = vld [vmem:[%s779] sm:$0xf]
        %v781 = vld [vmem:[%s779 + $0x4] sm:$0xf]
        %v782 = vld [vmem:[%s779 + $0x8] sm:$0xf]
        %v783 = vld [vmem:[%s779 + $0xc] sm:$0xf]
        %v784 = vld [vmem:[%s779 + $0x10] sm:$0xf]
        %v785 = vld [vmem:[%s779 + $0x14] sm:$0xf]
        %v786 = vld [vmem:[%s779 + $0x18] sm:$0xf]
        %v787 = vld [vmem:[%s779 + $0x1c] sm:$0xf]
        %v788 = vld [vmem:[%s779 + $0x20] sm:$0xf]
        %v789 = vld [vmem:[%s779 + $0x24] sm:$0xf]
        %v790 = vld [vmem:[%s779 + $0x28] sm:$0xf]
        %v791 = vld [vmem:[%s779 + $0x2c] sm:$0xf]
        %v792 = vld [vmem:[%s779 + $0x30] sm:$0xf]
        %v793 = vld [vmem:[%s779 + $0x34] sm:$0xf]
        %v794 = vld [vmem:[%s779 + $0x38] sm:$0xf]
        %v795 = vld [vmem:[%s779 + $0x3c] sm:$0xf]
        %v796 = vunpack.c.l.b16 %v552
        %v797 = vunpack.c.l.b16 %v562
        %v798 = vunpack.c.l.b16 %v576
        %v799 = vunpack.c.l.b16 %v586
        %v800 = vunpack.c.l.b16 %v600
        %v801 = vunpack.c.l.b16 %v610
        %v802 = vunpack.c.l.b16 %v624
        %v803 = vunpack.c.l.b16 %v634
        %v804 = vunpack.c.l.b16 %v648
        %v805 = vunpack.c.l.b16 %v658
        %v806 = vunpack.c.l.b16 %v672
        %v807 = vunpack.c.l.b16 %v682
        %v808 = vunpack.c.l.b16 %v696
        %v809 = vunpack.c.l.b16 %v706
        %v810 = vunpack.c.l.b16 %v720
        %v811 = vunpack.c.l.b16 %v730
        %v812 = vunpack.c.l.b16 %v744
        %v813 = vunpack.c.l.b16 %v754
        %v814 = vunpack.c.l.b16 %v768
        %v815 = vunpack.c.l.b16 %v778
        %v816 = vpack.c.b16 %v797, %v796
        %v817 = vpack.c.b16 %v799, %v798
        %v818 = vpack.c.b16 %v801, %v800
        %v819 = vpack.c.b16 %v803, %v802
        %v820 = vpack.c.b16 %v805, %v804
        %v821 = vpack.c.b16 %v807, %v806
        %v822 = vpack.c.b16 %v809, %v808
        %v823 = vpack.c.b16 %v811, %v810
        %v824 = vpack.c.b16 %v813, %v812
        %v825 = vpack.c.b16 %v815, %v814
        %v852 = vunpack.c.l.b16 %v780
        %v853 = vunpack.c.l.b16 %v781
        %v854 = vunpack.c.l.b16 %v782
        %v855 = vunpack.c.l.b16 %v783
        %v856 = vunpack.c.l.b16 %v784
        %v857 = vunpack.c.l.b16 %v785
        %v858 = vunpack.c.l.b16 %v786
        %v859 = vunpack.c.l.b16 %v787
        %v860 = vunpack.c.l.b16 %v788
        %v861 = vunpack.c.l.b16 %v789
        %v862 = vunpack.c.l.b16 %v790
        %v863 = vunpack.c.l.b16 %v791
        %v864 = vunpack.c.l.b16 %v792
        %v865 = vunpack.c.l.b16 %v793
        %v866 = vunpack.c.l.b16 %v794
        %v867 = vunpack.c.l.b16 %v795
        %v868 = vpack.c.b16 %v853, %v852
        %v869 = vpack.c.b16 %v855, %v854
        %v870 = vpack.c.b16 %v857, %v856
        %v871 = vpack.c.b16 %v859, %v858
        %v872 = vpack.c.b16 %v861, %v860
        %v873 = vpack.c.b16 %v863, %v862
        %v874 = vpack.c.b16 %v865, %v864
        %v875 = vpack.c.b16 %v867, %v866
        %884 = vmatprep.subr.bf16.mxu0 0
        %885 = vmatpush1.bf16.msra.mxu0 %v868
        %886 = vmatprep.subr.bf16.mxu0 0
        %887 = vmatpush1.bf16.msra.mxu0 %v869
        %888 = vmatprep.subr.bf16.mxu0 0
        %889 = vmatpush1.bf16.msra.mxu0 %v870
        %890 = vmatprep.subr.bf16.mxu0 0
        %891 = vmatpush1.bf16.msra.mxu0 %v871
        %892 = vmatprep.subr.bf16.mxu0 0
        %893 = vmatpush1.bf16.msra.mxu0 %v872
        %894 = vmatprep.subr.bf16.mxu0 0
        %895 = vmatpush1.bf16.msra.mxu0 %v873
        %896 = vmatprep.subr.bf16.mxu0 0
        %897 = vmatpush1.bf16.msra.mxu0 %v874
        %898 = vmatprep.subr.bf16.mxu0 0
        %899 = vmatpush1.bf16.msra.mxu0 %v875
        %900 = vmatprep.subr.bf16.mxu0 0
        %901 = vmatpush1.bf16.msra.mxu0 0
        %902 = vmatprep.subr.bf16.mxu0 0
        %903 = vmatpush1.bf16.msra.mxu0 0
        %904 = vmatprep.subr.bf16.mxu0 0
        %905 = vmatpush1.bf16.msra.mxu0 0
        %906 = vmatprep.subr.bf16.mxu0 0
        %907 = vmatpush1.bf16.msra.mxu0 0
        %908 = vmatprep.subr.bf16.mxu0 0
        %909 = vmatpush1.bf16.msra.mxu0 0
        %910 = vmatprep.subr.bf16.mxu0 0
        %911 = vmatpush1.bf16.msra.mxu0 0
        %912 = vmatprep.subr.bf16.mxu0 0
        %913 = vmatpush1.bf16.msra.mxu0 0
        %914 = vmatprep.subr.bf16.mxu0 0
        %915 = vmatpush1.bf16.msra.mxu0 0
        %916 = vmatprep.mubr.bf16.mxu0 0
        %917 = vmatmul.mubr.bf16.gmra.mrb[0].mxu0 %v816
        %v918 = vpop.f32.mrb[0].mxu0
        %v919 = vadd.f32 0.0, %v918
        %v920 = vpop.f32.mrb[0].mxu0
        %v921 = vpop.f32.mrb[0].mxu0
        %v922 = vadd.f32 0.0, %v921
        %v923 = vpop.f32.mrb[0].mxu0
        %924 = vmatprep.mubr.bf16.mxu0 0
        %925 = vmatmul.mubr.bf16.gmra.mrb[0].mxu0 %v817
        %v926 = vpop.f32.mrb[0].mxu0
        %v927 = vadd.f32 0.0, %v926
        %v928 = vpop.f32.mrb[0].mxu0
        %v929 = vpop.f32.mrb[0].mxu0
        %v930 = vadd.f32 0.0, %v929
        %v931 = vpop.f32.mrb[0].mxu0
        %932 = vmatprep.mubr.bf16.mxu0 0
        %933 = vmatmul.mubr.bf16.gmra.mrb[0].mxu0 %v818
        %v934 = vpop.f32.mrb[0].mxu0
        %v935 = vadd.f32 0.0, %v934
        %v936 = vpop.f32.mrb[0].mxu0
        %v937 = vpop.f32.mrb[0].mxu0
        %v938 = vadd.f32 0.0, %v937
        %v939 = vpop.f32.mrb[0].mxu0
        %940 = vmatprep.mubr.bf16.mxu0 0
        %941 = vmatmul.mubr.bf16.gmra.mrb[0].mxu0 %v819
        %v942 = vpop.f32.mrb[0].mxu0
        %v943 = vadd.f32 0.0, %v942
        %v944 = vpop.f32.mrb[0].mxu0
        %v945 = vpop.f32.mrb[0].mxu0
        %v946 = vadd.f32 0.0, %v945
        %v947 = vpop.f32.mrb[0].mxu0
        %948 = vmatprep.mubr.bf16.mxu0 0
        %949 = vmatmul.mubr.bf16.gmra.mrb[0].mxu0 %v820
        %v950 = vpop.f32.mrb[0].mxu0
        %v951 = vadd.f32 0.0, %v950
        %v952 = vpop.f32.mrb[0].mxu0
        %v953 = vpop.f32.mrb[0].mxu0
        %v954 = vadd.f32 0.0, %v953
        %v955 = vpop.f32.mrb[0].mxu0
        %956 = vmatprep.mubr.bf16.mxu0 0
        %957 = vmatmul.mubr.bf16.gmra.mrb[0].mxu0 %v821
        %v958 = vpop.f32.mrb[0].mxu0
        %v959 = vadd.f32 0.0, %v958
        %v960 = vpop.f32.mrb[0].mxu0
        %v961 = vpop.f32.mrb[0].mxu0
        %v962 = vadd.f32 0.0, %v961
        %v963 = vpop.f32.mrb[0].mxu0
        %964 = vmatprep.mubr.bf16.mxu0 0
        %965 = vmatmul.mubr.bf16.gmra.mrb[0].mxu0 %v822
        %v966 = vpop.f32.mrb[0].mxu0
        %v967 = vadd.f32 0.0, %v966
        %v968 = vpop.f32.mrb[0].mxu0
        %v969 = vpop.f32.mrb[0].mxu0
        %v970 = vadd.f32 0.0, %v969
        %v971 = vpop.f32.mrb[0].mxu0
        %972 = vmatprep.mubr.bf16.mxu0 0
        %973 = vmatmul.mubr.bf16.gmra.mrb[0].mxu0 %v823
        %v974 = vpop.f32.mrb[0].mxu0
        %v975 = vadd.f32 0.0, %v974
        %v976 = vpop.f32.mrb[0].mxu0
        %v977 = vpop.f32.mrb[0].mxu0
        %v978 = vadd.f32 0.0, %v977
        %v979 = vpop.f32.mrb[0].mxu0
        %980 = vmatprep.mubr.bf16.mxu0 0
        %981 = vmatmul.mubr.bf16.gmra.mrb[0].mxu0 %v824
        %v982 = vpop.f32.mrb[0].mxu0
        %v983 = vadd.f32 0.0, %v982
        %v984 = vpop.f32.mrb[0].mxu0
        %v985 = vpop.f32.mrb[0].mxu0
        %v986 = vadd.f32 0.0, %v985
        %v987 = vpop.f32.mrb[0].mxu0
        %988 = vmatprep.mubr.bf16.mxu0 0
        %989 = vmatmul.mubr.bf16.gmra.mrb[0].mxu0 %v825
        %v990 = vpop.f32.mrb[0].mxu0
        %v991 = vadd.f32 0.0, %v990
        %v992 = vpop.f32.mrb[0].mxu0
        %v993 = vpop.f32.mrb[0].mxu0
        %v994 = vadd.f32 0.0, %v993
        %v995 = vpop.f32.mrb[0].mxu0
        %996 = vdwg.mxu0
        %v1017 = vunpack.c.l.b16 %v490
        %v1018 = vunpack.c.l.b16 %v491
        %v1019 = vunpack.c.l.b16 %v492
        %v1020 = vunpack.c.l.b16 %v493
        %v1021 = vunpack.c.l.b16 %v494
        %v1022 = vunpack.c.l.b16 %v495
        %v1023 = vunpack.c.l.b16 %v496
        %v1024 = vunpack.c.l.b16 %v497
        %v1025 = vunpack.c.l.b16 %v498
        %v1026 = vunpack.c.l.b16 %v499
        %v1027 = vunpack.c.l.b16 %v500
        %v1028 = vunpack.c.l.b16 %v501
        %v1029 = vunpack.c.l.b16 %v502
        %v1030 = vunpack.c.l.b16 %v503
        %v1031 = vunpack.c.l.b16 %v504
        %v1032 = vunpack.c.l.b16 %v505
        %v1033 = vunpack.c.l.b16 %v506
        %v1034 = vunpack.c.l.b16 %v507
        %v1035 = vunpack.c.l.b16 %v508
        %v1036 = vunpack.c.l.b16 %v509
        %v1037 = vpack.c.b16 %v1018, %v1017
        %v1038 = vpack.c.b16 %v1020, %v1019
        %v1039 = vpack.c.b16 %v1022, %v1021
        %v1040 = vpack.c.b16 %v1024, %v1023
        %v1041 = vpack.c.b16 %v1026, %v1025
        %v1042 = vpack.c.b16 %v1028, %v1027
        %v1043 = vpack.c.b16 %v1030, %v1029
        %v1044 = vpack.c.b16 %v1032, %v1031
        %v1045 = vpack.c.b16 %v1034, %v1033
        %v1046 = vpack.c.b16 %v1036, %v1035
        %v1073 = vunpack.c.l.b16 %v510
        %v1074 = vunpack.c.l.b16 %v511
        %v1075 = vunpack.c.l.b16 %v512
        %v1076 = vunpack.c.l.b16 %v513
        %v1077 = vunpack.c.l.b16 %v514
        %v1078 = vunpack.c.l.b16 %v515
        %v1079 = vunpack.c.l.b16 %v516
        %v1080 = vunpack.c.l.b16 %v517
        %v1081 = vunpack.c.l.b16 %v518
        %v1082 = vunpack.c.l.b16 %v519
        %v1083 = vunpack.c.l.b16 %v520
        %v1084 = vunpack.c.l.b16 %v521
        %v1085 = vunpack.c.l.b16 %v522
        %v1086 = vunpack.c.l.b16 %v523
        %v1087 = vunpack.c.l.b16 %v524
        %v1088 = vunpack.c.l.b16 %v525
        %v1089 = vpack.c.b16 %v1074, %v1073
        %v1090 = vpack.c.b16 %v1076, %v1075
        %v1091 = vpack.c.b16 %v1078, %v1077
        %v1092 = vpack.c.b16 %v1080, %v1079
        %v1093 = vpack.c.b16 %v1082, %v1081
        %v1094 = vpack.c.b16 %v1084, %v1083
        %v1095 = vpack.c.b16 %v1086, %v1085
        %v1096 = vpack.c.b16 %v1088, %v1087
        %1105 = vmatprep.subr.bf16.mxu0 0
        %1106 = vmatpush1.bf16.msra.mxu0 %v1089
        %1107 = vmatprep.subr.bf16.mxu0 0
        %1108 = vmatpush1.bf16.msra.mxu0 %v1090
        %1109 = vmatprep.subr.bf16.mxu0 0
        %1110 = vmatpush1.bf16.msra.mxu0 %v1091
        %1111 = vmatprep.subr.bf16.mxu0 0
        %1112 = vmatpush1.bf16.msra.mxu0 %v1092
        %1113 = vmatprep.subr.bf16.mxu0 0
        %1114 = vmatpush1.bf16.msra.mxu0 %v1093
        %1115 = vmatprep.subr.bf16.mxu0 0
        %1116 = vmatpush1.bf16.msra.mxu0 %v1094
        %1117 = vmatprep.subr.bf16.mxu0 0
        %1118 = vmatpush1.bf16.msra.mxu0 %v1095
        %1119 = vmatprep.subr.bf16.mxu0 0
        %1120 = vmatpush1.bf16.msra.mxu0 %v1096
        %1121 = vmatprep.subr.bf16.mxu0 0
        %1122 = vmatpush1.bf16.msra.mxu0 0
        %1123 = vmatprep.subr.bf16.mxu0 0
        %1124 = vmatpush1.bf16.msra.mxu0 0
        %1125 = vmatprep.subr.bf16.mxu0 0
        %1126 = vmatpush1.bf16.msra.mxu0 0
        %1127 = vmatprep.subr.bf16.mxu0 0
        %1128 = vmatpush1.bf16.msra.mxu0 0
        %1129 = vmatprep.subr.bf16.mxu0 0
        %1130 = vmatpush1.bf16.msra.mxu0 0
        %1131 = vmatprep.subr.bf16.mxu0 0
        %1132 = vmatpush1.bf16.msra.mxu0 0
        %1133 = vmatprep.subr.bf16.mxu0 0
        %1134 = vmatpush1.bf16.msra.mxu0 0
        %1135 = vmatprep.subr.bf16.mxu0 0
        %1136 = vmatpush1.bf16.msra.mxu0 0
        %1137 = vmatprep.mubr.bf16.mxu0 0
        %1138 = vmatmul.mubr.bf16.gmra.mrb[0].mxu0 %v1037
        %v1139 = vpop.f32.mrb[0].mxu0
        %v1140 = vadd.f32 %v919, %v1139
        %v1141 = vpop.f32.mrb[0].mxu0
        %v1142 = vpop.f32.mrb[0].mxu0
        %v1143 = vadd.f32 %v922, %v1142
        %v1144 = vpop.f32.mrb[0].mxu0
        %1145 = vmatprep.mubr.bf16.mxu0 0
        %1146 = vmatmul.mubr.bf16.gmra.mrb[0].mxu0 %v1038
        %v1147 = vpop.f32.mrb[0].mxu0
        %v1148 = vadd.f32 %v927, %v1147
        %v1149 = vpop.f32.mrb[0].mxu0
        %v1150 = vpop.f32.mrb[0].mxu0
        %v1151 = vadd.f32 %v930, %v1150
        %v1152 = vpop.f32.mrb[0].mxu0
        %1153 = vmatprep.mubr.bf16.mxu0 0
        %1154 = vmatmul.mubr.bf16.gmra.mrb[0].mxu0 %v1039
        %v1155 = vpop.f32.mrb[0].mxu0
        %v1156 = vadd.f32 %v935, %v1155
        %v1157 = vpop.f32.mrb[0].mxu0
        %v1158 = vpop.f32.mrb[0].mxu0
        %v1159 = vadd.f32 %v938, %v1158
        %v1160 = vpop.f32.mrb[0].mxu0
        %1161 = vmatprep.mubr.bf16.mxu0 0
        %1162 = vmatmul.mubr.bf16.gmra.mrb[0].mxu0 %v1040
        %v1163 = vpop.f32.mrb[0].mxu0
        %v1164 = vadd.f32 %v943, %v1163
        %v1165 = vpop.f32.mrb[0].mxu0
        %v1166 = vpop.f32.mrb[0].mxu0
        %v1167 = vadd.f32 %v946, %v1166
        %v1168 = vpop.f32.mrb[0].mxu0
        %1169 = vmatprep.mubr.bf16.mxu0 0
        %1170 = vmatmul.mubr.bf16.gmra.mrb[0].mxu0 %v1041
        %v1171 = vpop.f32.mrb[0].mxu0
        %v1172 = vadd.f32 %v951, %v1171
        %v1173 = vpop.f32.mrb[0].mxu0
        %v1174 = vpop.f32.mrb[0].mxu0
        %v1175 = vadd.f32 %v954, %v1174
        %v1176 = vpop.f32.mrb[0].mxu0
        %1177 = vmatprep.mubr.bf16.mxu0 0
        %1178 = vmatmul.mubr.bf16.gmra.mrb[0].mxu0 %v1042
        %v1179 = vpop.f32.mrb[0].mxu0
        %v1180 = vadd.f32 %v959, %v1179
        %v1181 = vpop.f32.mrb[0].mxu0
        %v1182 = vpop.f32.mrb[0].mxu0
        %v1183 = vadd.f32 %v962, %v1182
        %v1184 = vpop.f32.mrb[0].mxu0
        %1185 = vmatprep.mubr.bf16.mxu0 0
        %1186 = vmatmul.mubr.bf16.gmra.mrb[0].mxu0 %v1043
        %v1187 = vpop.f32.mrb[0].mxu0
        %v1188 = vadd.f32 %v967, %v1187
        %v1189 = vpop.f32.mrb[0].mxu0
        %v1190 = vpop.f32.mrb[0].mxu0
        %v1191 = vadd.f32 %v970, %v1190
        %v1192 = vpop.f32.mrb[0].mxu0
        %1193 = vmatprep.mubr.bf16.mxu0 0
        %1194 = vmatmul.mubr.bf16.gmra.mrb[0].mxu0 %v1044
        %v1195 = vpop.f32.mrb[0].mxu0
        %v1196 = vadd.f32 %v975, %v1195
        %v1197 = vpop.f32.mrb[0].mxu0
        %v1198 = vpop.f32.mrb[0].mxu0
        %v1199 = vadd.f32 %v978, %v1198
        %v1200 = vpop.f32.mrb[0].mxu0
        %1201 = vmatprep.mubr.bf16.mxu0 0
        %1202 = vmatmul.mubr.bf16.gmra.mrb[0].mxu0 %v1045
        %v1203 = vpop.f32.mrb[0].mxu0
        %v1204 = vadd.f32 %v983, %v1203
        %v1205 = vpop.f32.mrb[0].mxu0
        %v1206 = vpop.f32.mrb[0].mxu0
        %v1207 = vadd.f32 %v986, %v1206
        %v1208 = vpop.f32.mrb[0].mxu0
        %1209 = vmatprep.mubr.bf16.mxu0 0
        %1210 = vmatmul.mubr.bf16.gmra.mrb[0].mxu0 %v1046
        %v1211 = vpop.f32.mrb[0].mxu0
        %v1212 = vadd.f32 %v991, %v1211
        %v1213 = vpop.f32.mrb[0].mxu0
        %v1214 = vpop.f32.mrb[0].mxu0
        %v1215 = vadd.f32 %v994, %v1214
        %v1216 = vpop.f32.mrb[0].mxu0
        %1217 = vdwg.mxu0
        %v1218 = vld [vmem:[#allocation2] sm:$0xe]
        %v1219 = vld [vmem:[#allocation2 + $0xc] sm:$0xe]
        %v1220 = vld [vmem:[#allocation2 + $0x18] sm:$0xe]
        %v1221 = vld [vmem:[#allocation2 + $0x24] sm:$0xe]
        %v1222 = vld [vmem:[#allocation2 + $0x30] sm:$0xe]
        %v1223 = vld [vmem:[#allocation2 + $0x3c] sm:$0xe]
        %v1224 = vld [vmem:[#allocation2 + $0x48] sm:$0xe]
        %v1225 = vld [vmem:[#allocation2 + $0x54] sm:$0xe]
        %v1226 = vld [vmem:[#allocation2 + $0x60] sm:$0xe]
        %v1227 = vld [vmem:[#allocation2 + $0x6c] sm:$0xe]
        %vm1248 = vcmask 1042432
        %vm1249 = vcmask 1046532
        %vm1250 = vmor %vm1248, %vm1249
        %v1251 = vrot.slane %v1218, 5
        %v1252 = vrot.slane %v1251, 4
        %v1253 = vrot.slane %v491, 5
        %v1254 = vsel %vm1250, %v1252, %v1253
        %v1255 = vrot.slane %v1253, 4
        %v1256 = vrot.slane %v526, 5
        %v1257 = vsel %vm1250, %v1255, %v1256
        %v1258 = vrot.slane %v1219, 5
        %v1259 = vrot.slane %v1258, 4
        %v1260 = vrot.slane %v493, 5
        %v1261 = vsel %vm1250, %v1259, %v1260
        %v1262 = vrot.slane %v1260, 4
        %v1263 = vrot.slane %v527, 5
        %v1264 = vsel %vm1250, %v1262, %v1263
        %v1265 = vrot.slane %v1220, 5
        %v1266 = vrot.slane %v1265, 4
        %v1267 = vrot.slane %v495, 5
        %v1268 = vsel %vm1250, %v1266, %v1267
        %v1269 = vrot.slane %v1267, 4
        %v1270 = vrot.slane %v528, 5
        %v1271 = vsel %vm1250, %v1269, %v1270
        %v1272 = vrot.slane %v1221, 5
        %v1273 = vrot.slane %v1272, 4
        %v1274 = vrot.slane %v497, 5
        %v1275 = vsel %vm1250, %v1273, %v1274
        %v1276 = vrot.slane %v1274, 4
        %v1277 = vrot.slane %v529, 5
        %v1278 = vsel %vm1250, %v1276, %v1277
        %v1279 = vrot.slane %v1222, 5
        %v1280 = vrot.slane %v1279, 4
        %v1281 = vrot.slane %v499, 5
        %v1282 = vsel %vm1250, %v1280, %v1281
        %v1283 = vrot.slane %v1281, 4
        %v1284 = vrot.slane %v530, 5
        %v1285 = vsel %vm1250, %v1283, %v1284
        %v1286 = vrot.slane %v1223, 5
        %v1287 = vrot.slane %v1286, 4
        %v1288 = vrot.slane %v501, 5
        %v1289 = vsel %vm1250, %v1287, %v1288
        %v1290 = vrot.slane %v1288, 4
        %v1291 = vrot.slane %v531, 5
        %v1292 = vsel %vm1250, %v1290, %v1291
        %v1293 = vrot.slane %v1224, 5
        %v1294 = vrot.slane %v1293, 4
        %v1295 = vrot.slane %v503, 5
        %v1296 = vsel %vm1250, %v1294, %v1295
        %v1297 = vrot.slane %v1295, 4
        %v1298 = vrot.slane %v532, 5
        %v1299 = vsel %vm1250, %v1297, %v1298
        %v1300 = vrot.slane %v1225, 5
        %v1301 = vrot.slane %v1300, 4
        %v1302 = vrot.slane %v505, 5
        %v1303 = vsel %vm1250, %v1301, %v1302
        %v1304 = vrot.slane %v1302, 4
        %v1305 = vrot.slane %v533, 5
        %v1306 = vsel %vm1250, %v1304, %v1305
        %v1307 = vrot.slane %v1226, 5
        %v1308 = vrot.slane %v1307, 4
        %v1309 = vrot.slane %v507, 5
        %v1310 = vsel %vm1250, %v1308, %v1309
        %v1311 = vrot.slane %v1309, 4
        %v1312 = vrot.slane %v534, 5
        %v1313 = vsel %vm1250, %v1311, %v1312
        %v1314 = vrot.slane %v1227, 5
        %v1315 = vrot.slane %v1314, 4
        %v1316 = vrot.slane %v509, 5
        %v1317 = vsel %vm1250, %v1315, %v1316
        %v1318 = vrot.slane %v1316, 4
        %v1319 = vrot.slane %v535, 5
        %v1320 = vsel %vm1250, %v1318, %v1319
        %s1321 = scalar_lea.vmem %s2, 128
        %v1322 = vld [vmem:[%s1321] sm:$0xf]
        %v1323 = vld [vmem:[%s1321 + $0x4] sm:$0xf]
        %v1324 = vld [vmem:[%s1321 + $0x8] sm:$0xf]
        %v1325 = vld [vmem:[%s1321 + $0xc] sm:$0xf]
        %v1326 = vld [vmem:[%s1321 + $0x10] sm:$0xf]
        %v1327 = vld [vmem:[%s1321 + $0x14] sm:$0xf]
        %v1328 = vld [vmem:[%s1321 + $0x18] sm:$0xf]
        %v1329 = vld [vmem:[%s1321 + $0x1c] sm:$0xf]
        %v1330 = vld [vmem:[%s1321 + $0x20] sm:$0xf]
        %v1331 = vld [vmem:[%s1321 + $0x24] sm:$0xf]
        %v1332 = vld [vmem:[%s1321 + $0x28] sm:$0xf]
        %v1333 = vld [vmem:[%s1321 + $0x2c] sm:$0xf]
        %v1334 = vld [vmem:[%s1321 + $0x30] sm:$0xf]
        %v1335 = vld [vmem:[%s1321 + $0x34] sm:$0xf]
        %v1336 = vld [vmem:[%s1321 + $0x38] sm:$0xf]
        %v1337 = vld [vmem:[%s1321 + $0x3c] sm:$0xf]
        %v1338 = vunpack.c.l.b16 %v1254
        %v1339 = vunpack.c.l.b16 %v1257
        %v1340 = vunpack.c.l.b16 %v1261
        %v1341 = vunpack.c.l.b16 %v1264
        %v1342 = vunpack.c.l.b16 %v1268
        %v1343 = vunpack.c.l.b16 %v1271
        %v1344 = vunpack.c.l.b16 %v1275
        %v1345 = vunpack.c.l.b16 %v1278
        %v1346 = vunpack.c.l.b16 %v1282
        %v1347 = vunpack.c.l.b16 %v1285
        %v1348 = vunpack.c.l.b16 %v1289
        %v1349 = vunpack.c.l.b16 %v1292
        %v1350 = vunpack.c.l.b16 %v1296
        %v1351 = vunpack.c.l.b16 %v1299
        %v1352 = vunpack.c.l.b16 %v1303
        %v1353 = vunpack.c.l.b16 %v1306
        %v1354 = vunpack.c.l.b16 %v1310
        %v1355 = vunpack.c.l.b16 %v1313
        %v1356 = vunpack.c.l.b16 %v1317
        %v1357 = vunpack.c.l.b16 %v1320
        %v1358 = vpack.c.b16 %v1339, %v1338
        %v1359 = vpack.c.b16 %v1341, %v1340
        %v1360 = vpack.c.b16 %v1343, %v1342
        %v1361 = vpack.c.b16 %v1345, %v1344
        %v1362 = vpack.c.b16 %v1347, %v1346
        %v1363 = vpack.c.b16 %v1349, %v1348
        %v1364 = vpack.c.b16 %v1351, %v1350
        %v1365 = vpack.c.b16 %v1353, %v1352
        %v1366 = vpack.c.b16 %v1355, %v1354
        %v1367 = vpack.c.b16 %v1357, %v1356
        %v1394 = vunpack.c.l.b16 %v1322
        %v1395 = vunpack.c.l.b16 %v1323
        %v1396 = vunpack.c.l.b16 %v1324
        %v1397 = vunpack.c.l.b16 %v1325
        %v1398 = vunpack.c.l.b16 %v1326
        %v1399 = vunpack.c.l.b16 %v1327
        %v1400 = vunpack.c.l.b16 %v1328
        %v1401 = vunpack.c.l.b16 %v1329
        %v1402 = vunpack.c.l.b16 %v1330
        %v1403 = vunpack.c.l.b16 %v1331
        %v1404 = vunpack.c.l.b16 %v1332
        %v1405 = vunpack.c.l.b16 %v1333
        %v1406 = vunpack.c.l.b16 %v1334
        %v1407 = vunpack.c.l.b16 %v1335
        %v1408 = vunpack.c.l.b16 %v1336
        %v1409 = vunpack.c.l.b16 %v1337
        %v1410 = vpack.c.b16 %v1395, %v1394
        %v1411 = vpack.c.b16 %v1397, %v1396
        %v1412 = vpack.c.b16 %v1399, %v1398
        %v1413 = vpack.c.b16 %v1401, %v1400
        %v1414 = vpack.c.b16 %v1403, %v1402
        %v1415 = vpack.c.b16 %v1405, %v1404
        %v1416 = vpack.c.b16 %v1407, %v1406
        %v1417 = vpack.c.b16 %v1409, %v1408
        %1426 = vmatprep.subr.bf16.mxu0 0
        %1427 = vmatpush1.bf16.msra.mxu0 %v1410
        %1428 = vmatprep.subr.bf16.mxu0 0
        %1429 = vmatpush1.bf16.msra.mxu0 %v1411
        %1430 = vmatprep.subr.bf16.mxu0 0
        %1431 = vmatpush1.bf16.msra.mxu0 %v1412
        %1432 = vmatprep.subr.bf16.mxu0 0
        %1433 = vmatpush1.bf16.msra.mxu0 %v1413
        %1434 = vmatprep.subr.bf16.mxu0 0
        %1435 = vmatpush1.bf16.msra.mxu0 %v1414
        %1436 = vmatprep.subr.bf16.mxu0 0
        %1437 = vmatpush1.bf16.msra.mxu0 %v1415
        %1438 = vmatprep.subr.bf16.mxu0 0
        %1439 = vmatpush1.bf16.msra.mxu0 %v1416
        %1440 = vmatprep.subr.bf16.mxu0 0
        %1441 = vmatpush1.bf16.msra.mxu0 %v1417
        %1442 = vmatprep.subr.bf16.mxu0 0
        %1443 = vmatpush1.bf16.msra.mxu0 0
        %1444 = vmatprep.subr.bf16.mxu0 0
        %1445 = vmatpush1.bf16.msra.mxu0 0
        %1446 = vmatprep.subr.bf16.mxu0 0
        %1447 = vmatpush1.bf16.msra.mxu0 0
        %1448 = vmatprep.subr.bf16.mxu0 0
        %1449 = vmatpush1.bf16.msra.mxu0 0
        %1450 = vmatprep.subr.bf16.mxu0 0
        %1451 = vmatpush1.bf16.msra.mxu0 0
        %1452 = vmatprep.subr.bf16.mxu0 0
        %1453 = vmatpush1.bf16.msra.mxu0 0
        %1454 = vmatprep.subr.bf16.mxu0 0
        %1455 = vmatpush1.bf16.msra.mxu0 0
        %1456 = vmatprep.subr.bf16.mxu0 0
        %1457 = vmatpush1.bf16.msra.mxu0 0
        %1458 = vmatprep.mubr.bf16.mxu0 0
        %1459 = vmatmul.mubr.bf16.gmra.mrb[0].mxu0 %v1358
        %v1460 = vpop.f32.mrb[0].mxu0
        %v1461 = vadd.f32 0.0, %v1460
        %v1462 = vpop.f32.mrb[0].mxu0
        %v1463 = vpop.f32.mrb[0].mxu0
        %v1464 = vadd.f32 0.0, %v1463
        %v1465 = vpop.f32.mrb[0].mxu0
        %1466 = vmatprep.mubr.bf16.mxu0 0
        %1467 = vmatmul.mubr.bf16.gmra.mrb[0].mxu0 %v1359
        %v1468 = vpop.f32.mrb[0].mxu0
        %v1469 = vadd.f32 0.0, %v1468
        %v1470 = vpop.f32.mrb[0].mxu0
        %v1471 = vpop.f32.mrb[0].mxu0
        %v1472 = vadd.f32 0.0, %v1471
        %v1473 = vpop.f32.mrb[0].mxu0
        %1474 = vmatprep.mubr.bf16.mxu0 0
        %1475 = vmatmul.mubr.bf16.gmra.mrb[0].mxu0 %v1360
        %v1476 = vpop.f32.mrb[0].mxu0
        %v1477 = vadd.f32 0.0, %v1476
        %v1478 = vpop.f32.mrb[0].mxu0
        %v1479 = vpop.f32.mrb[0].mxu0
        %v1480 = vadd.f32 0.0, %v1479
        %v1481 = vpop.f32.mrb[0].mxu0
        %1482 = vmatprep.mubr.bf16.mxu0 0
        %1483 = vmatmul.mubr.bf16.gmra.mrb[0].mxu0 %v1361
        %v1484 = vpop.f32.mrb[0].mxu0
        %v1485 = vadd.f32 0.0, %v1484
        %v1486 = vpop.f32.mrb[0].mxu0
        %v1487 = vpop.f32.mrb[0].mxu0
        %v1488 = vadd.f32 0.0, %v1487
        %v1489 = vpop.f32.mrb[0].mxu0
        %1490 = vmatprep.mubr.bf16.mxu0 0
        %1491 = vmatmul.mubr.bf16.gmra.mrb[0].mxu0 %v1362
        %v1492 = vpop.f32.mrb[0].mxu0
        %v1493 = vadd.f32 0.0, %v1492
        %v1494 = vpop.f32.mrb[0].mxu0
        %v1495 = vpop.f32.mrb[0].mxu0
        %v1496 = vadd.f32 0.0, %v1495
        %v1497 = vpop.f32.mrb[0].mxu0
        %1498 = vmatprep.mubr.bf16.mxu0 0
        %1499 = vmatmul.mubr.bf16.gmra.mrb[0].mxu0 %v1363
        %v1500 = vpop.f32.mrb[0].mxu0
        %v1501 = vadd.f32 0.0, %v1500
        %v1502 = vpop.f32.mrb[0].mxu0
        %v1503 = vpop.f32.mrb[0].mxu0
        %v1504 = vadd.f32 0.0, %v1503
        %v1505 = vpop.f32.mrb[0].mxu0
        %1506 = vmatprep.mubr.bf16.mxu0 0
        %1507 = vmatmul.mubr.bf16.gmra.mrb[0].mxu0 %v1364
        %v1508 = vpop.f32.mrb[0].mxu0
        %v1509 = vadd.f32 0.0, %v1508
        %v1510 = vpop.f32.mrb[0].mxu0
        %v1511 = vpop.f32.mrb[0].mxu0
        %v1512 = vadd.f32 0.0, %v1511
        %v1513 = vpop.f32.mrb[0].mxu0
        %1514 = vmatprep.mubr.bf16.mxu0 0
        %1515 = vmatmul.mubr.bf16.gmra.mrb[0].mxu0 %v1365
        %v1516 = vpop.f32.mrb[0].mxu0
        %v1517 = vadd.f32 0.0, %v1516
        %v1518 = vpop.f32.mrb[0].mxu0
        %v1519 = vpop.f32.mrb[0].mxu0
        %v1520 = vadd.f32 0.0, %v1519
        %v1521 = vpop.f32.mrb[0].mxu0
        %1522 = vmatprep.mubr.bf16.mxu0 0
        %1523 = vmatmul.mubr.bf16.gmra.mrb[0].mxu0 %v1366
        %v1524 = vpop.f32.mrb[0].mxu0
        %v1525 = vadd.f32 0.0, %v1524
        %v1526 = vpop.f32.mrb[0].mxu0
        %v1527 = vpop.f32.mrb[0].mxu0
        %v1528 = vadd.f32 0.0, %v1527
        %v1529 = vpop.f32.mrb[0].mxu0
        %1530 = vmatprep.mubr.bf16.mxu0 0
        %1531 = vmatmul.mubr.bf16.gmra.mrb[0].mxu0 %v1367
        %v1532 = vpop.f32.mrb[0].mxu0
        %v1533 = vadd.f32 0.0, %v1532
        %v1534 = vpop.f32.mrb[0].mxu0
        %v1535 = vpop.f32.mrb[0].mxu0
        %v1536 = vadd.f32 0.0, %v1535
        %v1537 = vpop.f32.mrb[0].mxu0
        %1538 = vdwg.mxu0
        %v1539 = vadd.f32 %v1140, %v1461
        %v1540 = vadd.f32 %v1143, %v1464
        %v1541 = vadd.f32 %v1148, %v1469
        %v1542 = vadd.f32 %v1151, %v1472
        %v1543 = vadd.f32 %v1156, %v1477
        %v1544 = vadd.f32 %v1159, %v1480
        %v1545 = vadd.f32 %v1164, %v1485
        %v1546 = vadd.f32 %v1167, %v1488
        %v1547 = vadd.f32 %v1172, %v1493
        %v1548 = vadd.f32 %v1175, %v1496
        %v1549 = vadd.f32 %v1180, %v1501
        %v1550 = vadd.f32 %v1183, %v1504
        %v1551 = vadd.f32 %v1188, %v1509
        %v1552 = vadd.f32 %v1191, %v1512
        %v1553 = vadd.f32 %v1196, %v1517
        %v1554 = vadd.f32 %v1199, %v1520
        %v1555 = vadd.f32 %v1204, %v1525
        %v1556 = vadd.f32 %v1207, %v1528
        %v1557 = vadd.f32 %v1212, %v1533
        %v1558 = vadd.f32 %v1215, %v1536
        %s1559 = scalar_lea.vmem [#allocation2], 12
        %v1560 = vld [vmem:[%s1559] sm:$0xf]
        %v1561 = vld [vmem:[%s1559 + $0x4] sm:$0xf]
        %v1562 = vld [vmem:[%s1559 + $0xc] sm:$0xf]
        %v1563 = vld [vmem:[%s1559 + $0x10] sm:$0xf]
        %v1564 = vld [vmem:[%s1559 + $0x18] sm:$0xf]
        %v1565 = vld [vmem:[%s1559 + $0x1c] sm:$0xf]
        %v1566 = vld [vmem:[%s1559 + $0x24] sm:$0xf]
        %v1567 = vld [vmem:[%s1559 + $0x28] sm:$0xf]
        %v1568 = vld [vmem:[%s1559 + $0x30] sm:$0xf]
        %v1569 = vld [vmem:[%s1559 + $0x34] sm:$0xf]
        %v1570 = vld [vmem:[%s1559 + $0x3c] sm:$0xf]
        %v1571 = vld [vmem:[%s1559 + $0x40] sm:$0xf]
        %v1572 = vld [vmem:[%s1559 + $0x48] sm:$0xf]
        %v1573 = vld [vmem:[%s1559 + $0x4c] sm:$0xf]
        %v1574 = vld [vmem:[%s1559 + $0x54] sm:$0xf]
        %v1575 = vld [vmem:[%s1559 + $0x58] sm:$0xf]
        %v1576 = vld [vmem:[%s1559 + $0x60] sm:$0xf]
        %v1577 = vld [vmem:[%s1559 + $0x64] sm:$0xf]
        %v1578 = vld [vmem:[%s1559 + $0x6c] sm:$0xf]
        %v1579 = vld [vmem:[%s1559 + $0x70] sm:$0xf]
        %s1580 = scalar_lea.vmem %s2, 192
        %v1581 = vld [vmem:[%s1580] sm:$0xf]
        %v1582 = vld [vmem:[%s1580 + $0x4] sm:$0xf]
        %v1583 = vld [vmem:[%s1580 + $0x8] sm:$0xf]
        %v1584 = vld [vmem:[%s1580 + $0xc] sm:$0xf]
        %v1585 = vld [vmem:[%s1580 + $0x10] sm:$0xf]
        %v1586 = vld [vmem:[%s1580 + $0x14] sm:$0xf]
        %v1587 = vld [vmem:[%s1580 + $0x18] sm:$0xf]
        %v1588 = vld [vmem:[%s1580 + $0x1c] sm:$0xf]
        %v1589 = vld [vmem:[%s1580 + $0x20] sm:$0xf]
        %v1590 = vld [vmem:[%s1580 + $0x24] sm:$0xf]
        %v1591 = vld [vmem:[%s1580 + $0x28] sm:$0xf]
        %v1592 = vld [vmem:[%s1580 + $0x2c] sm:$0xf]
        %v1593 = vld [vmem:[%s1580 + $0x30] sm:$0xf]
        %v1594 = vld [vmem:[%s1580 + $0x34] sm:$0xf]
        %v1595 = vld [vmem:[%s1580 + $0x38] sm:$0xf]
        %v1596 = vld [vmem:[%s1580 + $0x3c] sm:$0xf]
        %v1617 = vunpack.c.l.b16 %v1560
        %v1618 = vunpack.c.l.b16 %v1561
        %v1619 = vunpack.c.l.b16 %v1562
        %v1620 = vunpack.c.l.b16 %v1563
        %v1621 = vunpack.c.l.b16 %v1564
        %v1622 = vunpack.c.l.b16 %v1565
        %v1623 = vunpack.c.l.b16 %v1566
        %v1624 = vunpack.c.l.b16 %v1567
        %v1625 = vunpack.c.l.b16 %v1568
        %v1626 = vunpack.c.l.b16 %v1569
        %v1627 = vunpack.c.l.b16 %v1570
        %v1628 = vunpack.c.l.b16 %v1571
        %v1629 = vunpack.c.l.b16 %v1572
        %v1630 = vunpack.c.l.b16 %v1573
        %v1631 = vunpack.c.l.b16 %v1574
        %v1632 = vunpack.c.l.b16 %v1575
        %v1633 = vunpack.c.l.b16 %v1576
        %v1634 = vunpack.c.l.b16 %v1577
        %v1635 = vunpack.c.l.b16 %v1578
        %v1636 = vunpack.c.l.b16 %v1579
        %v1637 = vpack.c.b16 %v1618, %v1617
        %v1638 = vpack.c.b16 %v1620, %v1619
        %v1639 = vpack.c.b16 %v1622, %v1621
        %v1640 = vpack.c.b16 %v1624, %v1623
        %v1641 = vpack.c.b16 %v1626, %v1625
        %v1642 = vpack.c.b16 %v1628, %v1627
        %v1643 = vpack.c.b16 %v1630, %v1629
        %v1644 = vpack.c.b16 %v1632, %v1631
        %v1645 = vpack.c.b16 %v1634, %v1633
        %v1646 = vpack.c.b16 %v1636, %v1635
        %v1673 = vunpack.c.l.b16 %v1581
        %v1674 = vunpack.c.l.b16 %v1582
        %v1675 = vunpack.c.l.b16 %v1583
        %v1676 = vunpack.c.l.b16 %v1584
        %v1677 = vunpack.c.l.b16 %v1585
        %v1678 = vunpack.c.l.b16 %v1586
        %v1679 = vunpack.c.l.b16 %v1587
        %v1680 = vunpack.c.l.b16 %v1588
        %v1681 = vunpack.c.l.b16 %v1589
        %v1682 = vunpack.c.l.b16 %v1590
        %v1683 = vunpack.c.l.b16 %v1591
        %v1684 = vunpack.c.l.b16 %v1592
        %v1685 = vunpack.c.l.b16 %v1593
        %v1686 = vunpack.c.l.b16 %v1594
        %v1687 = vunpack.c.l.b16 %v1595
        %v1688 = vunpack.c.l.b16 %v1596
        %v1689 = vpack.c.b16 %v1674, %v1673
        %v1690 = vpack.c.b16 %v1676, %v1675
        %v1691 = vpack.c.b16 %v1678, %v1677
        %v1692 = vpack.c.b16 %v1680, %v1679
        %v1693 = vpack.c.b16 %v1682, %v1681
        %v1694 = vpack.c.b16 %v1684, %v1683
        %v1695 = vpack.c.b16 %v1686, %v1685
        %v1696 = vpack.c.b16 %v1688, %v1687
        %1705 = vmatprep.subr.bf16.mxu0 0
        %1706 = vmatpush1.bf16.msra.mxu0 %v1689
        %1707 = vmatprep.subr.bf16.mxu0 0
        %1708 = vmatpush1.bf16.msra.mxu0 %v1690
        %1709 = vmatprep.subr.bf16.mxu0 0
        %1710 = vmatpush1.bf16.msra.mxu0 %v1691
        %1711 = vmatprep.subr.bf16.mxu0 0
        %1712 = vmatpush1.bf16.msra.mxu0 %v1692
        %1713 = vmatprep.subr.bf16.mxu0 0
        %1714 = vmatpush1.bf16.msra.mxu0 %v1693
        %1715 = vmatprep.subr.bf16.mxu0 0
        %1716 = vmatpush1.bf16.msra.mxu0 %v1694
        %1717 = vmatprep.subr.bf16.mxu0 0
        %1718 = vmatpush1.bf16.msra.mxu0 %v1695
        %1719 = vmatprep.subr.bf16.mxu0 0
        %1720 = vmatpush1.bf16.msra.mxu0 %v1696
        %1721 = vmatprep.subr.bf16.mxu0 0
        %1722 = vmatpush1.bf16.msra.mxu0 0
        %1723 = vmatprep.subr.bf16.mxu0 0
        %1724 = vmatpush1.bf16.msra.mxu0 0
        %1725 = vmatprep.subr.bf16.mxu0 0
        %1726 = vmatpush1.bf16.msra.mxu0 0
        %1727 = vmatprep.subr.bf16.mxu0 0
        %1728 = vmatpush1.bf16.msra.mxu0 0
        %1729 = vmatprep.subr.bf16.mxu0 0
        %1730 = vmatpush1.bf16.msra.mxu0 0
        %1731 = vmatprep.subr.bf16.mxu0 0
        %1732 = vmatpush1.bf16.msra.mxu0 0
        %1733 = vmatprep.subr.bf16.mxu0 0
        %1734 = vmatpush1.bf16.msra.mxu0 0
        %1735 = vmatprep.subr.bf16.mxu0 0
        %1736 = vmatpush1.bf16.msra.mxu0 0
        %1737 = vmatprep.mubr.bf16.mxu0 0
        %1738 = vmatmul.mubr.bf16.gmra.mrb[0].mxu0 %v1637
        %v1739 = vpop.f32.mrb[0].mxu0
        %v1740 = vadd.f32 0.0, %v1739
        %v1741 = vpop.f32.mrb[0].mxu0
        %v1742 = vpop.f32.mrb[0].mxu0
        %v1743 = vadd.f32 0.0, %v1742
        %v1744 = vpop.f32.mrb[0].mxu0
        %1745 = vmatprep.mubr.bf16.mxu0 0
        %1746 = vmatmul.mubr.bf16.gmra.mrb[0].mxu0 %v1638
        %v1747 = vpop.f32.mrb[0].mxu0
        %v1748 = vadd.f32 0.0, %v1747
        %v1749 = vpop.f32.mrb[0].mxu0
        %v1750 = vpop.f32.mrb[0].mxu0
        %v1751 = vadd.f32 0.0, %v1750
        %v1752 = vpop.f32.mrb[0].mxu0
        %1753 = vmatprep.mubr.bf16.mxu0 0
        %1754 = vmatmul.mubr.bf16.gmra.mrb[0].mxu0 %v1639
        %v1755 = vpop.f32.mrb[0].mxu0
        %v1756 = vadd.f32 0.0, %v1755
        %v1757 = vpop.f32.mrb[0].mxu0
        %v1758 = vpop.f32.mrb[0].mxu0
        %v1759 = vadd.f32 0.0, %v1758
        %v1760 = vpop.f32.mrb[0].mxu0
        %1761 = vmatprep.mubr.bf16.mxu0 0
        %1762 = vmatmul.mubr.bf16.gmra.mrb[0].mxu0 %v1640
        %v1763 = vpop.f32.mrb[0].mxu0
        %v1764 = vadd.f32 0.0, %v1763
        %v1765 = vpop.f32.mrb[0].mxu0
        %v1766 = vpop.f32.mrb[0].mxu0
        %v1767 = vadd.f32 0.0, %v1766
        %v1768 = vpop.f32.mrb[0].mxu0
        %1769 = vmatprep.mubr.bf16.mxu0 0
        %1770 = vmatmul.mubr.bf16.gmra.mrb[0].mxu0 %v1641
        %v1771 = vpop.f32.mrb[0].mxu0
        %v1772 = vadd.f32 0.0, %v1771
        %v1773 = vpop.f32.mrb[0].mxu0
        %v1774 = vpop.f32.mrb[0].mxu0
        %v1775 = vadd.f32 0.0, %v1774
        %v1776 = vpop.f32.mrb[0].mxu0
        %1777 = vmatprep.mubr.bf16.mxu0 0
        %1778 = vmatmul.mubr.bf16.gmra.mrb[0].mxu0 %v1642
        %v1779 = vpop.f32.mrb[0].mxu0
        %v1780 = vadd.f32 0.0, %v1779
        %v1781 = vpop.f32.mrb[0].mxu0
        %v1782 = vpop.f32.mrb[0].mxu0
        %v1783 = vadd.f32 0.0, %v1782
        %v1784 = vpop.f32.mrb[0].mxu0
        %1785 = vmatprep.mubr.bf16.mxu0 0
        %1786 = vmatmul.mubr.bf16.gmra.mrb[0].mxu0 %v1643
        %v1787 = vpop.f32.mrb[0].mxu0
        %v1788 = vadd.f32 0.0, %v1787
        %v1789 = vpop.f32.mrb[0].mxu0
        %v1790 = vpop.f32.mrb[0].mxu0
        %v1791 = vadd.f32 0.0, %v1790
        %v1792 = vpop.f32.mrb[0].mxu0
        %1793 = vmatprep.mubr.bf16.mxu0 0
        %1794 = vmatmul.mubr.bf16.gmra.mrb[0].mxu0 %v1644
        %v1795 = vpop.f32.mrb[0].mxu0
        %v1796 = vadd.f32 0.0, %v1795
        %v1797 = vpop.f32.mrb[0].mxu0
        %v1798 = vpop.f32.mrb[0].mxu0
        %v1799 = vadd.f32 0.0, %v1798
        %v1800 = vpop.f32.mrb[0].mxu0
        %1801 = vmatprep.mubr.bf16.mxu0 0
        %1802 = vmatmul.mubr.bf16.gmra.mrb[0].mxu0 %v1645
        %v1803 = vpop.f32.mrb[0].mxu0
        %v1804 = vadd.f32 0.0, %v1803
        %v1805 = vpop.f32.mrb[0].mxu0
        %v1806 = vpop.f32.mrb[0].mxu0
        %v1807 = vadd.f32 0.0, %v1806
        %v1808 = vpop.f32.mrb[0].mxu0
        %1809 = vmatprep.mubr.bf16.mxu0 0
        %1810 = vmatmul.mubr.bf16.gmra.mrb[0].mxu0 %v1646
        %v1811 = vpop.f32.mrb[0].mxu0
        %v1812 = vadd.f32 0.0, %v1811
        %v1813 = vpop.f32.mrb[0].mxu0
        %v1814 = vpop.f32.mrb[0].mxu0
        %v1815 = vadd.f32 0.0, %v1814
        %v1816 = vpop.f32.mrb[0].mxu0
        %1817 = vdwg.mxu0
        %v1818 = vadd.f32 %v1539, %v1740
        %v1819 = vadd.f32 %v1540, %v1743
        %v1820 = vadd.f32 %v1541, %v1748
        %v1821 = vadd.f32 %v1542, %v1751
        %v1822 = vadd.f32 %v1543, %v1756
        %v1823 = vadd.f32 %v1544, %v1759
        %v1824 = vadd.f32 %v1545, %v1764
        %v1825 = vadd.f32 %v1546, %v1767
        %v1826 = vadd.f32 %v1547, %v1772
        %v1827 = vadd.f32 %v1548, %v1775
        %v1828 = vadd.f32 %v1549, %v1780
        %v1829 = vadd.f32 %v1550, %v1783
        %v1830 = vadd.f32 %v1551, %v1788
        %v1831 = vadd.f32 %v1552, %v1791
        %v1832 = vadd.f32 %v1553, %v1796
        %v1833 = vadd.f32 %v1554, %v1799
        %v1834 = vadd.f32 %v1555, %v1804
        %v1835 = vadd.f32 %v1556, %v1807
        %v1836 = vadd.f32 %v1557, %v1812
        %v1837 = vadd.f32 %v1558, %v1815
        %v1838 = vld [vmem:[%s1559] sm:$0xf]
        %v1839 = vld [vmem:[%s1559 + $0x4] sm:$0xf]
        %v1840 = vld [vmem:[%s1559 + $0x8] sm:$0x1]
        %v1841 = vld [vmem:[%s1559 + $0xc] sm:$0xf]
        %v1842 = vld [vmem:[%s1559 + $0x10] sm:$0xf]
        %v1843 = vld [vmem:[%s1559 + $0x14] sm:$0x1]
        %v1844 = vld [vmem:[%s1559 + $0x18] sm:$0xf]
        %v1845 = vld [vmem:[%s1559 + $0x1c] sm:$0xf]
        %v1846 = vld [vmem:[%s1559 + $0x20] sm:$0x1]
        %v1847 = vld [vmem:[%s1559 + $0x24] sm:$0xf]
        %v1848 = vld [vmem:[%s1559 + $0x28] sm:$0xf]
        %v1849 = vld [vmem:[%s1559 + $0x2c] sm:$0x1]
        %v1850 = vld [vmem:[%s1559 + $0x30] sm:$0xf]
        %v1851 = vld [vmem:[%s1559 + $0x34] sm:$0xf]
        %v1852 = vld [vmem:[%s1559 + $0x38] sm:$0x1]
        %v1853 = vld [vmem:[%s1559 + $0x3c] sm:$0xf]
        %v1854 = vld [vmem:[%s1559 + $0x40] sm:$0xf]
        %v1855 = vld [vmem:[%s1559 + $0x44] sm:$0x1]
        %v1856 = vld [vmem:[%s1559 + $0x48] sm:$0xf]
        %v1857 = vld [vmem:[%s1559 + $0x4c] sm:$0xf]
        %v1858 = vld [vmem:[%s1559 + $0x50] sm:$0x1]
        %v1859 = vld [vmem:[%s1559 + $0x54] sm:$0xf]
        %v1860 = vld [vmem:[%s1559 + $0x58] sm:$0xf]
        %v1861 = vld [vmem:[%s1559 + $0x5c] sm:$0x1]
        %v1862 = vld [vmem:[%s1559 + $0x60] sm:$0xf]
        %v1863 = vld [vmem:[%s1559 + $0x64] sm:$0xf]
        %v1864 = vld [vmem:[%s1559 + $0x68] sm:$0x1]
        %v1865 = vld [vmem:[%s1559 + $0x6c] sm:$0xf]
        %v1866 = vld [vmem:[%s1559 + $0x70] sm:$0xf]
        %v1867 = vld [vmem:[%s1559 + $0x74] sm:$0x1]
        %v1869 = vshrl.u32 %v1838, 16
        %v1871 = vrot.slane %v1869, 4
        %v1872 = vshll.u32 %v1838, 16
        %v1874 = vrot.slane %v1872, 5
        %v1875 = vor.u32 %v1871, %v1874
        %v1876 = vrot.slane %v1875, 4
        %v1878 = vshll.u32 %v1839, 16
        %v1880 = vrot.slane %v1878, 5
        %v1881 = vsel %vm538, %v1876, %v1880
        %v1882 = vshrl.u32 %v1839, 16
        %v1884 = vrot.slane %v1882, 4
        %v1885 = vor.u32 %v1884, %v1880
        %v1886 = vrot.slane %v1885, 4
        %v1888 = vshll.u32 %v1840, 16
        %v1890 = vrot.slane %v1888, 5
        %v1891 = vsel %vm538, %v1886, %v1890
        %v1893 = vshrl.u32 %v1841, 16
        %v1895 = vrot.slane %v1893, 4
        %v1896 = vshll.u32 %v1841, 16
        %v1898 = vrot.slane %v1896, 5
        %v1899 = vor.u32 %v1895, %v1898
        %v1900 = vrot.slane %v1899, 4
        %v1902 = vshll.u32 %v1842, 16
        %v1904 = vrot.slane %v1902, 5
        %v1905 = vsel %vm538, %v1900, %v1904
        %v1906 = vshrl.u32 %v1842, 16
        %v1908 = vrot.slane %v1906, 4
        %v1909 = vor.u32 %v1908, %v1904
        %v1910 = vrot.slane %v1909, 4
        %v1912 = vshll.u32 %v1843, 16
        %v1914 = vrot.slane %v1912, 5
        %v1915 = vsel %vm538, %v1910, %v1914
        %v1917 = vshrl.u32 %v1844, 16
        %v1919 = vrot.slane %v1917, 4
        %v1920 = vshll.u32 %v1844, 16
        %v1922 = vrot.slane %v1920, 5
        %v1923 = vor.u32 %v1919, %v1922
        %v1924 = vrot.slane %v1923, 4
        %v1926 = vshll.u32 %v1845, 16
        %v1928 = vrot.slane %v1926, 5
        %v1929 = vsel %vm538, %v1924, %v1928
        %v1930 = vshrl.u32 %v1845, 16
        %v1932 = vrot.slane %v1930, 4
        %v1933 = vor.u32 %v1932, %v1928
        %v1934 = vrot.slane %v1933, 4
        %v1936 = vshll.u32 %v1846, 16
        %v1938 = vrot.slane %v1936, 5
        %v1939 = vsel %vm538, %v1934, %v1938
        %v1941 = vshrl.u32 %v1847, 16
        %v1943 = vrot.slane %v1941, 4
        %v1944 = vshll.u32 %v1847, 16
        %v1946 = vrot.slane %v1944, 5
        %v1947 = vor.u32 %v1943, %v1946
        %v1948 = vrot.slane %v1947, 4
        %v1950 = vshll.u32 %v1848, 16
        %v1952 = vrot.slane %v1950, 5
        %v1953 = vsel %vm538, %v1948, %v1952
        %v1954 = vshrl.u32 %v1848, 16
        %v1956 = vrot.slane %v1954, 4
        %v1957 = vor.u32 %v1956, %v1952
        %v1958 = vrot.slane %v1957, 4
        %v1960 = vshll.u32 %v1849, 16
        %v1962 = vrot.slane %v1960, 5
        %v1963 = vsel %vm538, %v1958, %v1962
        %v1965 = vshrl.u32 %v1850, 16
        %v1967 = vrot.slane %v1965, 4
        %v1968 = vshll.u32 %v1850, 16
        %v1970 = vrot.slane %v1968, 5
        %v1971 = vor.u32 %v1967, %v1970
        %v1972 = vrot.slane %v1971, 4
        %v1974 = vshll.u32 %v1851, 16
        %v1976 = vrot.slane %v1974, 5
        %v1977 = vsel %vm538, %v1972, %v1976
        %v1978 = vshrl.u32 %v1851, 16
        %v1980 = vrot.slane %v1978, 4
        %v1981 = vor.u32 %v1980, %v1976
        %v1982 = vrot.slane %v1981, 4
        %v1984 = vshll.u32 %v1852, 16
        %v1986 = vrot.slane %v1984, 5
        %v1987 = vsel %vm538, %v1982, %v1986
        %v1989 = vshrl.u32 %v1853, 16
        %v1991 = vrot.slane %v1989, 4
        %v1992 = vshll.u32 %v1853, 16
        %v1994 = vrot.slane %v1992, 5
        %v1995 = vor.u32 %v1991, %v1994
        %v1996 = vrot.slane %v1995, 4
        %v1998 = vshll.u32 %v1854, 16
        %v2000 = vrot.slane %v1998, 5
        %v2001 = vsel %vm538, %v1996, %v2000
        %v2002 = vshrl.u32 %v1854, 16
        %v2004 = vrot.slane %v2002, 4
        %v2005 = vor.u32 %v2004, %v2000
        %v2006 = vrot.slane %v2005, 4
        %v2008 = vshll.u32 %v1855, 16
        %v2010 = vrot.slane %v2008, 5
        %v2011 = vsel %vm538, %v2006, %v2010
        %v2013 = vshrl.u32 %v1856, 16
        %v2015 = vrot.slane %v2013, 4
        %v2016 = vshll.u32 %v1856, 16
        %v2018 = vrot.slane %v2016, 5
        %v2019 = vor.u32 %v2015, %v2018
        %v2020 = vrot.slane %v2019, 4
        %v2022 = vshll.u32 %v1857, 16
        %v2024 = vrot.slane %v2022, 5
        %v2025 = vsel %vm538, %v2020, %v2024
        %v2026 = vshrl.u32 %v1857, 16
        %v2028 = vrot.slane %v2026, 4
        %v2029 = vor.u32 %v2028, %v2024
        %v2030 = vrot.slane %v2029, 4
        %v2032 = vshll.u32 %v1858, 16
        %v2034 = vrot.slane %v2032, 5
        %v2035 = vsel %vm538, %v2030, %v2034
        %v2037 = vshrl.u32 %v1859, 16
        %v2039 = vrot.slane %v2037, 4
        %v2040 = vshll.u32 %v1859, 16
        %v2042 = vrot.slane %v2040, 5
        %v2043 = vor.u32 %v2039, %v2042
        %v2044 = vrot.slane %v2043, 4
        %v2046 = vshll.u32 %v1860, 16
        %v2048 = vrot.slane %v2046, 5
        %v2049 = vsel %vm538, %v2044, %v2048
        %v2050 = vshrl.u32 %v1860, 16
        %v2052 = vrot.slane %v2050, 4
        %v2053 = vor.u32 %v2052, %v2048
        %v2054 = vrot.slane %v2053, 4
        %v2056 = vshll.u32 %v1861, 16
        %v2058 = vrot.slane %v2056, 5
        %v2059 = vsel %vm538, %v2054, %v2058
        %v2061 = vshrl.u32 %v1862, 16
        %v2063 = vrot.slane %v2061, 4
        %v2064 = vshll.u32 %v1862, 16
        %v2066 = vrot.slane %v2064, 5
        %v2067 = vor.u32 %v2063, %v2066
        %v2068 = vrot.slane %v2067, 4
        %v2070 = vshll.u32 %v1863, 16
        %v2072 = vrot.slane %v2070, 5
        %v2073 = vsel %vm538, %v2068, %v2072
        %v2074 = vshrl.u32 %v1863, 16
        %v2076 = vrot.slane %v2074, 4
        %v2077 = vor.u32 %v2076, %v2072
        %v2078 = vrot.slane %v2077, 4
        %v2080 = vshll.u32 %v1864, 16
        %v2082 = vrot.slane %v2080, 5
        %v2083 = vsel %vm538, %v2078, %v2082
        %v2085 = vshrl.u32 %v1865, 16
        %v2087 = vrot.slane %v2085, 4
        %v2088 = vshll.u32 %v1865, 16
        %v2090 = vrot.slane %v2088, 5
        %v2091 = vor.u32 %v2087, %v2090
        %v2092 = vrot.slane %v2091, 4
        %v2094 = vshll.u32 %v1866, 16
        %v2096 = vrot.slane %v2094, 5
        %v2097 = vsel %vm538, %v2092, %v2096
        %v2098 = vshrl.u32 %v1866, 16
        %v2100 = vrot.slane %v2098, 4
        %v2101 = vor.u32 %v2100, %v2096
        %v2102 = vrot.slane %v2101, 4
        %v2104 = vshll.u32 %v1867, 16
        %v2106 = vrot.slane %v2104, 5
        %v2107 = vsel %vm538, %v2102, %v2106
        %s2108 = scalar_lea.vmem %s2, 256
        %v2109 = vld [vmem:[%s2108] sm:$0xf]
        %v2110 = vld [vmem:[%s2108 + $0x4] sm:$0xf]
        %v2111 = vld [vmem:[%s2108 + $0x8] sm:$0xf]
        %v2112 = vld [vmem:[%s2108 + $0xc] sm:$0xf]
        %v2113 = vld [vmem:[%s2108 + $0x10] sm:$0xf]
        %v2114 = vld [vmem:[%s2108 + $0x14] sm:$0xf]
        %v2115 = vld [vmem:[%s2108 + $0x18] sm:$0xf]
        %v2116 = vld [vmem:[%s2108 + $0x1c] sm:$0xf]
        %v2117 = vld [vmem:[%s2108 + $0x20] sm:$0xf]
        %v2118 = vld [vmem:[%s2108 + $0x24] sm:$0xf]
        %v2119 = vld [vmem:[%s2108 + $0x28] sm:$0xf]
        %v2120 = vld [vmem:[%s2108 + $0x2c] sm:$0xf]
        %v2121 = vld [vmem:[%s2108 + $0x30] sm:$0xf]
        %v2122 = vld [vmem:[%s2108 + $0x34] sm:$0xf]
        %v2123 = vld [vmem:[%s2108 + $0x38] sm:$0xf]
        %v2124 = vld [vmem:[%s2108 + $0x3c] sm:$0xf]
        %v2125 = vunpack.c.l.b16 %v1881
        %v2126 = vunpack.c.l.b16 %v1891
        %v2127 = vunpack.c.l.b16 %v1905
        %v2128 = vunpack.c.l.b16 %v1915
        %v2129 = vunpack.c.l.b16 %v1929
        %v2130 = vunpack.c.l.b16 %v1939
        %v2131 = vunpack.c.l.b16 %v1953
        %v2132 = vunpack.c.l.b16 %v1963
        %v2133 = vunpack.c.l.b16 %v1977
        %v2134 = vunpack.c.l.b16 %v1987
        %v2135 = vunpack.c.l.b16 %v2001
        %v2136 = vunpack.c.l.b16 %v2011
        %v2137 = vunpack.c.l.b16 %v2025
        %v2138 = vunpack.c.l.b16 %v2035
        %v2139 = vunpack.c.l.b16 %v2049
        %v2140 = vunpack.c.l.b16 %v2059
        %v2141 = vunpack.c.l.b16 %v2073
        %v2142 = vunpack.c.l.b16 %v2083
        %v2143 = vunpack.c.l.b16 %v2097
        %v2144 = vunpack.c.l.b16 %v2107
        %v2145 = vpack.c.b16 %v2126, %v2125
        %v2146 = vpack.c.b16 %v2128, %v2127
        %v2147 = vpack.c.b16 %v2130, %v2129
        %v2148 = vpack.c.b16 %v2132, %v2131
        %v2149 = vpack.c.b16 %v2134, %v2133
        %v2150 = vpack.c.b16 %v2136, %v2135
        %v2151 = vpack.c.b16 %v2138, %v2137
        %v2152 = vpack.c.b16 %v2140, %v2139
        %v2153 = vpack.c.b16 %v2142, %v2141
        %v2154 = vpack.c.b16 %v2144, %v2143
        %v2181 = vunpack.c.l.b16 %v2109
        %v2182 = vunpack.c.l.b16 %v2110
        %v2183 = vunpack.c.l.b16 %v2111
        %v2184 = vunpack.c.l.b16 %v2112
        %v2185 = vunpack.c.l.b16 %v2113
        %v2186 = vunpack.c.l.b16 %v2114
        %v2187 = vunpack.c.l.b16 %v2115
        %v2188 = vunpack.c.l.b16 %v2116
        %v2189 = vunpack.c.l.b16 %v2117
        %v2190 = vunpack.c.l.b16 %v2118
        %v2191 = vunpack.c.l.b16 %v2119
        %v2192 = vunpack.c.l.b16 %v2120
        %v2193 = vunpack.c.l.b16 %v2121
        %v2194 = vunpack.c.l.b16 %v2122
        %v2195 = vunpack.c.l.b16 %v2123
        %v2196 = vunpack.c.l.b16 %v2124
        %v2197 = vpack.c.b16 %v2182, %v2181
        %v2198 = vpack.c.b16 %v2184, %v2183
        %v2199 = vpack.c.b16 %v2186, %v2185
        %v2200 = vpack.c.b16 %v2188, %v2187
        %v2201 = vpack.c.b16 %v2190, %v2189
        %v2202 = vpack.c.b16 %v2192, %v2191
        %v2203 = vpack.c.b16 %v2194, %v2193
        %v2204 = vpack.c.b16 %v2196, %v2195
        %2213 = vmatprep.subr.bf16.mxu0 0
        %2214 = vmatpush1.bf16.msra.mxu0 %v2197
        %2215 = vmatprep.subr.bf16.mxu0 0
        %2216 = vmatpush1.bf16.msra.mxu0 %v2198
        %2217 = vmatprep.subr.bf16.mxu0 0
        %2218 = vmatpush1.bf16.msra.mxu0 %v2199
        %2219 = vmatprep.subr.bf16.mxu0 0
        %2220 = vmatpush1.bf16.msra.mxu0 %v2200
        %2221 = vmatprep.subr.bf16.mxu0 0
        %2222 = vmatpush1.bf16.msra.mxu0 %v2201
        %2223 = vmatprep.subr.bf16.mxu0 0
        %2224 = vmatpush1.bf16.msra.mxu0 %v2202
        %2225 = vmatprep.subr.bf16.mxu0 0
        %2226 = vmatpush1.bf16.msra.mxu0 %v2203
        %2227 = vmatprep.subr.bf16.mxu0 0
        %2228 = vmatpush1.bf16.msra.mxu0 %v2204
        %2229 = vmatprep.subr.bf16.mxu0 0
        %2230 = vmatpush1.bf16.msra.mxu0 0
        %2231 = vmatprep.subr.bf16.mxu0 0
        %2232 = vmatpush1.bf16.msra.mxu0 0
        %2233 = vmatprep.subr.bf16.mxu0 0
        %2234 = vmatpush1.bf16.msra.mxu0 0
        %2235 = vmatprep.subr.bf16.mxu0 0
        %2236 = vmatpush1.bf16.msra.mxu0 0
        %2237 = vmatprep.subr.bf16.mxu0 0
        %2238 = vmatpush1.bf16.msra.mxu0 0
        %2239 = vmatprep.subr.bf16.mxu0 0
        %2240 = vmatpush1.bf16.msra.mxu0 0
        %2241 = vmatprep.subr.bf16.mxu0 0
        %2242 = vmatpush1.bf16.msra.mxu0 0
        %2243 = vmatprep.subr.bf16.mxu0 0
        %2244 = vmatpush1.bf16.msra.mxu0 0
        %2245 = vmatprep.mubr.bf16.mxu0 0
        %2246 = vmatmul.mubr.bf16.gmra.mrb[0].mxu0 %v2145
        %v2247 = vpop.f32.mrb[0].mxu0
        %v2248 = vadd.f32 0.0, %v2247
        %v2249 = vpop.f32.mrb[0].mxu0
        %v2250 = vpop.f32.mrb[0].mxu0
        %v2251 = vadd.f32 0.0, %v2250
        %v2252 = vpop.f32.mrb[0].mxu0
        %2253 = vmatprep.mubr.bf16.mxu0 0
        %2254 = vmatmul.mubr.bf16.gmra.mrb[0].mxu0 %v2146
        %v2255 = vpop.f32.mrb[0].mxu0
        %v2256 = vadd.f32 0.0, %v2255
        %v2257 = vpop.f32.mrb[0].mxu0
        %v2258 = vpop.f32.mrb[0].mxu0
        %v2259 = vadd.f32 0.0, %v2258
        %v2260 = vpop.f32.mrb[0].mxu0
        %2261 = vmatprep.mubr.bf16.mxu0 0
        %2262 = vmatmul.mubr.bf16.gmra.mrb[0].mxu0 %v2147
        %v2263 = vpop.f32.mrb[0].mxu0
        %v2264 = vadd.f32 0.0, %v2263
        %v2265 = vpop.f32.mrb[0].mxu0
        %v2266 = vpop.f32.mrb[0].mxu0
        %v2267 = vadd.f32 0.0, %v2266
        %v2268 = vpop.f32.mrb[0].mxu0
        %2269 = vmatprep.mubr.bf16.mxu0 0
        %2270 = vmatmul.mubr.bf16.gmra.mrb[0].mxu0 %v2148
        %v2271 = vpop.f32.mrb[0].mxu0
        %v2272 = vadd.f32 0.0, %v2271
        %v2273 = vpop.f32.mrb[0].mxu0
        %v2274 = vpop.f32.mrb[0].mxu0
        %v2275 = vadd.f32 0.0, %v2274
        %v2276 = vpop.f32.mrb[0].mxu0
        %2277 = vmatprep.mubr.bf16.mxu0 0
        %2278 = vmatmul.mubr.bf16.gmra.mrb[0].mxu0 %v2149
        %v2279 = vpop.f32.mrb[0].mxu0
        %v2280 = vadd.f32 0.0, %v2279
        %v2281 = vpop.f32.mrb[0].mxu0
        %v2282 = vpop.f32.mrb[0].mxu0
        %v2283 = vadd.f32 0.0, %v2282
        %v2284 = vpop.f32.mrb[0].mxu0
        %2285 = vmatprep.mubr.bf16.mxu0 0
        %2286 = vmatmul.mubr.bf16.gmra.mrb[0].mxu0 %v2150
        %v2287 = vpop.f32.mrb[0].mxu0
        %v2288 = vadd.f32 0.0, %v2287
        %v2289 = vpop.f32.mrb[0].mxu0
        %v2290 = vpop.f32.mrb[0].mxu0
        %v2291 = vadd.f32 0.0, %v2290
        %v2292 = vpop.f32.mrb[0].mxu0
        %2293 = vmatprep.mubr.bf16.mxu0 0
        %2294 = vmatmul.mubr.bf16.gmra.mrb[0].mxu0 %v2151
        %v2295 = vpop.f32.mrb[0].mxu0
        %v2296 = vadd.f32 0.0, %v2295
        %v2297 = vpop.f32.mrb[0].mxu0
        %v2298 = vpop.f32.mrb[0].mxu0
        %v2299 = vadd.f32 0.0, %v2298
        %v2300 = vpop.f32.mrb[0].mxu0
        %2301 = vmatprep.mubr.bf16.mxu0 0
        %2302 = vmatmul.mubr.bf16.gmra.mrb[0].mxu0 %v2152
        %v2303 = vpop.f32.mrb[0].mxu0
        %v2304 = vadd.f32 0.0, %v2303
        %v2305 = vpop.f32.mrb[0].mxu0
        %v2306 = vpop.f32.mrb[0].mxu0
        %v2307 = vadd.f32 0.0, %v2306
        %v2308 = vpop.f32.mrb[0].mxu0
        %2309 = vmatprep.mubr.bf16.mxu0 0
        %2310 = vmatmul.mubr.bf16.gmra.mrb[0].mxu0 %v2153
        %v2311 = vpop.f32.mrb[0].mxu0
        %v2312 = vadd.f32 0.0, %v2311
        %v2313 = vpop.f32.mrb[0].mxu0
        %v2314 = vpop.f32.mrb[0].mxu0
        %v2315 = vadd.f32 0.0, %v2314
        %v2316 = vpop.f32.mrb[0].mxu0
        %2317 = vmatprep.mubr.bf16.mxu0 0
        %2318 = vmatmul.mubr.bf16.gmra.mrb[0].mxu0 %v2154
        %v2319 = vpop.f32.mrb[0].mxu0
        %v2320 = vadd.f32 0.0, %v2319
        %v2321 = vpop.f32.mrb[0].mxu0
        %v2322 = vpop.f32.mrb[0].mxu0
        %v2323 = vadd.f32 0.0, %v2322
        %v2324 = vpop.f32.mrb[0].mxu0
        %2325 = vdwg.mxu0
        %v2326 = vadd.f32 %v1818, %v2248
        %v2327 = vadd.f32 %v1819, %v2251
        %v2328 = vadd.f32 %v1820, %v2256
        %v2329 = vadd.f32 %v1821, %v2259
        %v2330 = vadd.f32 %v1822, %v2264
        %v2331 = vadd.f32 %v1823, %v2267
        %v2332 = vadd.f32 %v1824, %v2272
        %v2333 = vadd.f32 %v1825, %v2275
        %v2334 = vadd.f32 %v1826, %v2280
        %v2335 = vadd.f32 %v1827, %v2283
        %v2336 = vadd.f32 %v1828, %v2288
        %v2337 = vadd.f32 %v1829, %v2291
        %v2338 = vadd.f32 %v1830, %v2296
        %v2339 = vadd.f32 %v1831, %v2299
        %v2340 = vadd.f32 %v1832, %v2304
        %v2341 = vadd.f32 %v1833, %v2307
        %v2342 = vadd.f32 %v1834, %v2312
        %v2343 = vadd.f32 %v1835, %v2315
        %v2344 = vadd.f32 %v1836, %v2320
        %v2345 = vadd.f32 %v1837, %v2323
        %v2346 = vld [vmem:[%s1559] sm:$0xe]
        %v2347 = vld [vmem:[%s1559 + $0xc] sm:$0xe]
        %v2348 = vld [vmem:[%s1559 + $0x18] sm:$0xe]
        %v2349 = vld [vmem:[%s1559 + $0x24] sm:$0xe]
        %v2350 = vld [vmem:[%s1559 + $0x30] sm:$0xe]
        %v2351 = vld [vmem:[%s1559 + $0x3c] sm:$0xe]
        %v2352 = vld [vmem:[%s1559 + $0x48] sm:$0xe]
        %v2353 = vld [vmem:[%s1559 + $0x54] sm:$0xe]
        %v2354 = vld [vmem:[%s1559 + $0x60] sm:$0xe]
        %v2355 = vld [vmem:[%s1559 + $0x6c] sm:$0xe]
        %v2386 = vrot.slane %v2346, 5
        %v2387 = vrot.slane %v2386, 4
        %v2388 = vrot.slane %v1839, 5
        %v2389 = vsel %vm1250, %v2387, %v2388
        %v2390 = vrot.slane %v2388, 4
        %v2391 = vrot.slane %v1840, 5
        %v2392 = vsel %vm1250, %v2390, %v2391
        %v2393 = vrot.slane %v2347, 5
        %v2394 = vrot.slane %v2393, 4
        %v2395 = vrot.slane %v1842, 5
        %v2396 = vsel %vm1250, %v2394, %v2395
        %v2397 = vrot.slane %v2395, 4
        %v2398 = vrot.slane %v1843, 5
        %v2399 = vsel %vm1250, %v2397, %v2398
        %v2400 = vrot.slane %v2348, 5
        %v2401 = vrot.slane %v2400, 4
        %v2402 = vrot.slane %v1845, 5
        %v2403 = vsel %vm1250, %v2401, %v2402
        %v2404 = vrot.slane %v2402, 4
        %v2405 = vrot.slane %v1846, 5
        %v2406 = vsel %vm1250, %v2404, %v2405
        %v2407 = vrot.slane %v2349, 5
        %v2408 = vrot.slane %v2407, 4
        %v2409 = vrot.slane %v1848, 5
        %v2410 = vsel %vm1250, %v2408, %v2409
        %v2411 = vrot.slane %v2409, 4
        %v2412 = vrot.slane %v1849, 5
        %v2413 = vsel %vm1250, %v2411, %v2412
        %v2414 = vrot.slane %v2350, 5
        %v2415 = vrot.slane %v2414, 4
        %v2416 = vrot.slane %v1851, 5
        %v2417 = vsel %vm1250, %v2415, %v2416
        %v2418 = vrot.slane %v2416, 4
        %v2419 = vrot.slane %v1852, 5
        %v2420 = vsel %vm1250, %v2418, %v2419
        %v2421 = vrot.slane %v2351, 5
        %v2422 = vrot.slane %v2421, 4
        %v2423 = vrot.slane %v1854, 5
        %v2424 = vsel %vm1250, %v2422, %v2423
        %v2425 = vrot.slane %v2423, 4
        %v2426 = vrot.slane %v1855, 5
        %v2427 = vsel %vm1250, %v2425, %v2426
        %v2428 = vrot.slane %v2352, 5
        %v2429 = vrot.slane %v2428, 4
        %v2430 = vrot.slane %v1857, 5
        %v2431 = vsel %vm1250, %v2429, %v2430
        %v2432 = vrot.slane %v2430, 4
        %v2433 = vrot.slane %v1858, 5
        %v2434 = vsel %vm1250, %v2432, %v2433
        %v2435 = vrot.slane %v2353, 5
        %v2436 = vrot.slane %v2435, 4
        %v2437 = vrot.slane %v1860, 5
        %v2438 = vsel %vm1250, %v2436, %v2437
        %v2439 = vrot.slane %v2437, 4
        %v2440 = vrot.slane %v1861, 5
        %v2441 = vsel %vm1250, %v2439, %v2440
        %v2442 = vrot.slane %v2354, 5
        %v2443 = vrot.slane %v2442, 4
        %v2444 = vrot.slane %v1863, 5
        %v2445 = vsel %vm1250, %v2443, %v2444
        %v2446 = vrot.slane %v2444, 4
        %v2447 = vrot.slane %v1864, 5
        %v2448 = vsel %vm1250, %v2446, %v2447
        %v2449 = vrot.slane %v2355, 5
        %v2450 = vrot.slane %v2449, 4
        %v2451 = vrot.slane %v1866, 5
        %v2452 = vsel %vm1250, %v2450, %v2451
        %v2453 = vrot.slane %v2451, 4
        %v2454 = vrot.slane %v1867, 5
        %v2455 = vsel %vm1250, %v2453, %v2454
        %s2456 = scalar_lea.vmem %s2, 320
        %v2457 = vld [vmem:[%s2456] sm:$0xf]
        %v2458 = vld [vmem:[%s2456 + $0x4] sm:$0xf]
        %v2459 = vld [vmem:[%s2456 + $0x8] sm:$0xf]
        %v2460 = vld [vmem:[%s2456 + $0xc] sm:$0xf]
        %v2461 = vld [vmem:[%s2456 + $0x10] sm:$0xf]
        %v2462 = vld [vmem:[%s2456 + $0x14] sm:$0xf]
        %v2463 = vld [vmem:[%s2456 + $0x18] sm:$0xf]
        %v2464 = vld [vmem:[%s2456 + $0x1c] sm:$0xf]
        %v2465 = vld [vmem:[%s2456 + $0x20] sm:$0xf]
        %v2466 = vld [vmem:[%s2456 + $0x24] sm:$0xf]
        %v2467 = vld [vmem:[%s2456 + $0x28] sm:$0xf]
        %v2468 = vld [vmem:[%s2456 + $0x2c] sm:$0xf]
        %v2469 = vld [vmem:[%s2456 + $0x30] sm:$0xf]
        %v2470 = vld [vmem:[%s2456 + $0x34] sm:$0xf]
        %v2471 = vld [vmem:[%s2456 + $0x38] sm:$0xf]
        %v2472 = vld [vmem:[%s2456 + $0x3c] sm:$0xf]
        %v2473 = vunpack.c.l.b16 %v2389
        %v2474 = vunpack.c.l.b16 %v2392
        %v2475 = vunpack.c.l.b16 %v2396
        %v2476 = vunpack.c.l.b16 %v2399
        %v2477 = vunpack.c.l.b16 %v2403
        %v2478 = vunpack.c.l.b16 %v2406
        %v2479 = vunpack.c.l.b16 %v2410
        %v2480 = vunpack.c.l.b16 %v2413
        %v2481 = vunpack.c.l.b16 %v2417
        %v2482 = vunpack.c.l.b16 %v2420
        %v2483 = vunpack.c.l.b16 %v2424
        %v2484 = vunpack.c.l.b16 %v2427
        %v2485 = vunpack.c.l.b16 %v2431
        %v2486 = vunpack.c.l.b16 %v2434
        %v2487 = vunpack.c.l.b16 %v2438
        %v2488 = vunpack.c.l.b16 %v2441
        %v2489 = vunpack.c.l.b16 %v2445
        %v2490 = vunpack.c.l.b16 %v2448
        %v2491 = vunpack.c.l.b16 %v2452
        %v2492 = vunpack.c.l.b16 %v2455
        %v2493 = vpack.c.b16 %v2474, %v2473
        %v2494 = vpack.c.b16 %v2476, %v2475
        %v2495 = vpack.c.b16 %v2478, %v2477
        %v2496 = vpack.c.b16 %v2480, %v2479
        %v2497 = vpack.c.b16 %v2482, %v2481
        %v2498 = vpack.c.b16 %v2484, %v2483
        %v2499 = vpack.c.b16 %v2486, %v2485
        %v2500 = vpack.c.b16 %v2488, %v2487
        %v2501 = vpack.c.b16 %v2490, %v2489
        %v2502 = vpack.c.b16 %v2492, %v2491
        %v2529 = vunpack.c.l.b16 %v2457
        %v2530 = vunpack.c.l.b16 %v2458
        %v2531 = vunpack.c.l.b16 %v2459
        %v2532 = vunpack.c.l.b16 %v2460
        %v2533 = vunpack.c.l.b16 %v2461
        %v2534 = vunpack.c.l.b16 %v2462
        %v2535 = vunpack.c.l.b16 %v2463
        %v2536 = vunpack.c.l.b16 %v2464
        %v2537 = vunpack.c.l.b16 %v2465
        %v2538 = vunpack.c.l.b16 %v2466
        %v2539 = vunpack.c.l.b16 %v2467
        %v2540 = vunpack.c.l.b16 %v2468
        %v2541 = vunpack.c.l.b16 %v2469
        %v2542 = vunpack.c.l.b16 %v2470
        %v2543 = vunpack.c.l.b16 %v2471
        %v2544 = vunpack.c.l.b16 %v2472
        %v2545 = vpack.c.b16 %v2530, %v2529
        %v2546 = vpack.c.b16 %v2532, %v2531
        %v2547 = vpack.c.b16 %v2534, %v2533
        %v2548 = vpack.c.b16 %v2536, %v2535
        %v2549 = vpack.c.b16 %v2538, %v2537
        %v2550 = vpack.c.b16 %v2540, %v2539
        %v2551 = vpack.c.b16 %v2542, %v2541
        %v2552 = vpack.c.b16 %v2544, %v2543
        %2561 = vmatprep.subr.bf16.mxu0 0
        %2562 = vmatpush1.bf16.msra.mxu0 %v2545
        %2563 = vmatprep.subr.bf16.mxu0 0
        %2564 = vmatpush1.bf16.msra.mxu0 %v2546
        %2565 = vmatprep.subr.bf16.mxu0 0
        %2566 = vmatpush1.bf16.msra.mxu0 %v2547
        %2567 = vmatprep.subr.bf16.mxu0 0
        %2568 = vmatpush1.bf16.msra.mxu0 %v2548
        %2569 = vmatprep.subr.bf16.mxu0 0
        %2570 = vmatpush1.bf16.msra.mxu0 %v2549
        %2571 = vmatprep.subr.bf16.mxu0 0
        %2572 = vmatpush1.bf16.msra.mxu0 %v2550
        %2573 = vmatprep.subr.bf16.mxu0 0
        %2574 = vmatpush1.bf16.msra.mxu0 %v2551
        %2575 = vmatprep.subr.bf16.mxu0 0
        %2576 = vmatpush1.bf16.msra.mxu0 %v2552
        %2577 = vmatprep.subr.bf16.mxu0 0
        %2578 = vmatpush1.bf16.msra.mxu0 0
        %2579 = vmatprep.subr.bf16.mxu0 0
        %2580 = vmatpush1.bf16.msra.mxu0 0
        %2581 = vmatprep.subr.bf16.mxu0 0
        %2582 = vmatpush1.bf16.msra.mxu0 0
        %2583 = vmatprep.subr.bf16.mxu0 0
        %2584 = vmatpush1.bf16.msra.mxu0 0
        %2585 = vmatprep.subr.bf16.mxu0 0
        %2586 = vmatpush1.bf16.msra.mxu0 0
        %2587 = vmatprep.subr.bf16.mxu0 0
        %2588 = vmatpush1.bf16.msra.mxu0 0
        %2589 = vmatprep.subr.bf16.mxu0 0
        %2590 = vmatpush1.bf16.msra.mxu0 0
        %2591 = vmatprep.subr.bf16.mxu0 0
        %2592 = vmatpush1.bf16.msra.mxu0 0
        %2593 = vmatprep.mubr.bf16.mxu0 0
        %2594 = vmatmul.mubr.bf16.gmra.mrb[0].mxu0 %v2493
        %v2595 = vpop.f32.mrb[0].mxu0
        %v2596 = vadd.f32 0.0, %v2595
        %v2597 = vpop.f32.mrb[0].mxu0
        %v2598 = vpop.f32.mrb[0].mxu0
        %v2599 = vadd.f32 0.0, %v2598
        %v2600 = vpop.f32.mrb[0].mxu0
        %2601 = vmatprep.mubr.bf16.mxu0 0
        %2602 = vmatmul.mubr.bf16.gmra.mrb[0].mxu0 %v2494
        %v2603 = vpop.f32.mrb[0].mxu0
        %v2604 = vadd.f32 0.0, %v2603
        %v2605 = vpop.f32.mrb[0].mxu0
        %v2606 = vpop.f32.mrb[0].mxu0
        %v2607 = vadd.f32 0.0, %v2606
        %v2608 = vpop.f32.mrb[0].mxu0
        %2609 = vmatprep.mubr.bf16.mxu0 0
        %2610 = vmatmul.mubr.bf16.gmra.mrb[0].mxu0 %v2495
        %v2611 = vpop.f32.mrb[0].mxu0
        %v2612 = vadd.f32 0.0, %v2611
        %v2613 = vpop.f32.mrb[0].mxu0
        %v2614 = vpop.f32.mrb[0].mxu0
        %v2615 = vadd.f32 0.0, %v2614
        %v2616 = vpop.f32.mrb[0].mxu0
        %2617 = vmatprep.mubr.bf16.mxu0 0
        %2618 = vmatmul.mubr.bf16.gmra.mrb[0].mxu0 %v2496
        %v2619 = vpop.f32.mrb[0].mxu0
        %v2620 = vadd.f32 0.0, %v2619
        %v2621 = vpop.f32.mrb[0].mxu0
        %v2622 = vpop.f32.mrb[0].mxu0
        %v2623 = vadd.f32 0.0, %v2622
        %v2624 = vpop.f32.mrb[0].mxu0
        %2625 = vmatprep.mubr.bf16.mxu0 0
        %2626 = vmatmul.mubr.bf16.gmra.mrb[0].mxu0 %v2497
        %v2627 = vpop.f32.mrb[0].mxu0
        %v2628 = vadd.f32 0.0, %v2627
        %v2629 = vpop.f32.mrb[0].mxu0
        %v2630 = vpop.f32.mrb[0].mxu0
        %v2631 = vadd.f32 0.0, %v2630
        %v2632 = vpop.f32.mrb[0].mxu0
        %2633 = vmatprep.mubr.bf16.mxu0 0
        %2634 = vmatmul.mubr.bf16.gmra.mrb[0].mxu0 %v2498
        %v2635 = vpop.f32.mrb[0].mxu0
        %v2636 = vadd.f32 0.0, %v2635
        %v2637 = vpop.f32.mrb[0].mxu0
        %v2638 = vpop.f32.mrb[0].mxu0
        %v2639 = vadd.f32 0.0, %v2638
        %v2640 = vpop.f32.mrb[0].mxu0
        %2641 = vmatprep.mubr.bf16.mxu0 0
        %2642 = vmatmul.mubr.bf16.gmra.mrb[0].mxu0 %v2499
        %v2643 = vpop.f32.mrb[0].mxu0
        %v2644 = vadd.f32 0.0, %v2643
        %v2645 = vpop.f32.mrb[0].mxu0
        %v2646 = vpop.f32.mrb[0].mxu0
        %v2647 = vadd.f32 0.0, %v2646
        %v2648 = vpop.f32.mrb[0].mxu0
        %2649 = vmatprep.mubr.bf16.mxu0 0
        %2650 = vmatmul.mubr.bf16.gmra.mrb[0].mxu0 %v2500
        %v2651 = vpop.f32.mrb[0].mxu0
        %v2652 = vadd.f32 0.0, %v2651
        %v2653 = vpop.f32.mrb[0].mxu0
        %v2654 = vpop.f32.mrb[0].mxu0
        %v2655 = vadd.f32 0.0, %v2654
        %v2656 = vpop.f32.mrb[0].mxu0
        %2657 = vmatprep.mubr.bf16.mxu0 0
        %2658 = vmatmul.mubr.bf16.gmra.mrb[0].mxu0 %v2501
        %v2659 = vpop.f32.mrb[0].mxu0
        %v2660 = vadd.f32 0.0, %v2659
        %v2661 = vpop.f32.mrb[0].mxu0
        %v2662 = vpop.f32.mrb[0].mxu0
        %v2663 = vadd.f32 0.0, %v2662
        %v2664 = vpop.f32.mrb[0].mxu0
        %2665 = vmatprep.mubr.bf16.mxu0 0
        %2666 = vmatmul.mubr.bf16.gmra.mrb[0].mxu0 %v2502
        %v2667 = vpop.f32.mrb[0].mxu0
        %v2668 = vadd.f32 0.0, %v2667
        %v2669 = vpop.f32.mrb[0].mxu0
        %v2670 = vpop.f32.mrb[0].mxu0
        %v2671 = vadd.f32 0.0, %v2670
        %v2672 = vpop.f32.mrb[0].mxu0
        %2673 = vdwg.mxu0
        %v2674 = vadd.f32 %v2326, %v2596
        %v2675 = vadd.f32 %v2327, %v2599
        %v2676 = vadd.f32 %v2328, %v2604
        %v2677 = vadd.f32 %v2329, %v2607
        %v2678 = vadd.f32 %v2330, %v2612
        %v2679 = vadd.f32 %v2331, %v2615
        %v2680 = vadd.f32 %v2332, %v2620
        %v2681 = vadd.f32 %v2333, %v2623
        %v2682 = vadd.f32 %v2334, %v2628
        %v2683 = vadd.f32 %v2335, %v2631
        %v2684 = vadd.f32 %v2336, %v2636
        %v2685 = vadd.f32 %v2337, %v2639
        %v2686 = vadd.f32 %v2338, %v2644
        %v2687 = vadd.f32 %v2339, %v2647
        %v2688 = vadd.f32 %v2340, %v2652
        %v2689 = vadd.f32 %v2341, %v2655
        %v2690 = vadd.f32 %v2342, %v2660
        %v2691 = vadd.f32 %v2343, %v2663
        %v2692 = vadd.f32 %v2344, %v2668
        %v2693 = vadd.f32 %v2345, %v2671
        %s2694 = scalar_lea.vmem [#allocation2], 24
        %v2695 = vld [vmem:[%s2694] sm:$0xf]
        %v2696 = vld [vmem:[%s2694 + $0x4] sm:$0xf]
        %v2697 = vld [vmem:[%s2694 + $0xc] sm:$0xf]
        %v2698 = vld [vmem:[%s2694 + $0x10] sm:$0xf]
        %v2699 = vld [vmem:[%s2694 + $0x18] sm:$0xf]
        %v2700 = vld [vmem:[%s2694 + $0x1c] sm:$0xf]
        %v2701 = vld [vmem:[%s2694 + $0x24] sm:$0xf]
        %v2702 = vld [vmem:[%s2694 + $0x28] sm:$0xf]
        %v2703 = vld [vmem:[%s2694 + $0x30] sm:$0xf]
        %v2704 = vld [vmem:[%s2694 + $0x34] sm:$0xf]
        %v2705 = vld [vmem:[%s2694 + $0x3c] sm:$0xf]
        %v2706 = vld [vmem:[%s2694 + $0x40] sm:$0xf]
        %v2707 = vld [vmem:[%s2694 + $0x48] sm:$0xf]
        %v2708 = vld [vmem:[%s2694 + $0x4c] sm:$0xf]
        %v2709 = vld [vmem:[%s2694 + $0x54] sm:$0xf]
        %v2710 = vld [vmem:[%s2694 + $0x58] sm:$0xf]
        %v2711 = vld [vmem:[%s2694 + $0x60] sm:$0xf]
        %v2712 = vld [vmem:[%s2694 + $0x64] sm:$0xf]
        %v2713 = vld [vmem:[%s2694 + $0x6c] sm:$0xf]
        %v2714 = vld [vmem:[%s2694 + $0x70] sm:$0xf]
        %s2715 = scalar_lea.vmem %s2, 384
        %v2716 = vld [vmem:[%s2715] sm:$0xf]
        %v2717 = vld [vmem:[%s2715 + $0x4] sm:$0xf]
        %v2718 = vld [vmem:[%s2715 + $0x8] sm:$0xf]
        %v2719 = vld [vmem:[%s2715 + $0xc] sm:$0xf]
        %v2720 = vld [vmem:[%s2715 + $0x10] sm:$0xf]
        %v2721 = vld [vmem:[%s2715 + $0x14] sm:$0xf]
        %v2722 = vld [vmem:[%s2715 + $0x18] sm:$0xf]
        %v2723 = vld [vmem:[%s2715 + $0x1c] sm:$0xf]
        %v2724 = vld [vmem:[%s2715 + $0x20] sm:$0xf]
        %v2725 = vld [vmem:[%s2715 + $0x24] sm:$0xf]
        %v2726 = vld [vmem:[%s2715 + $0x28] sm:$0xf]
        %v2727 = vld [vmem:[%s2715 + $0x2c] sm:$0xf]
        %v2728 = vld [vmem:[%s2715 + $0x30] sm:$0xf]
        %v2729 = vld [vmem:[%s2715 + $0x34] sm:$0xf]
        %v2730 = vld [vmem:[%s2715 + $0x38] sm:$0xf]
        %v2731 = vld [vmem:[%s2715 + $0x3c] sm:$0xf]
        %v2752 = vunpack.c.l.b16 %v2695
        %v2753 = vunpack.c.l.b16 %v2696
        %v2754 = vunpack.c.l.b16 %v2697
        %v2755 = vunpack.c.l.b16 %v2698
        %v2756 = vunpack.c.l.b16 %v2699
        %v2757 = vunpack.c.l.b16 %v2700
        %v2758 = vunpack.c.l.b16 %v2701
        %v2759 = vunpack.c.l.b16 %v2702
        %v2760 = vunpack.c.l.b16 %v2703
        %v2761 = vunpack.c.l.b16 %v2704
        %v2762 = vunpack.c.l.b16 %v2705
        %v2763 = vunpack.c.l.b16 %v2706
        %v2764 = vunpack.c.l.b16 %v2707
        %v2765 = vunpack.c.l.b16 %v2708
        %v2766 = vunpack.c.l.b16 %v2709
        %v2767 = vunpack.c.l.b16 %v2710
        %v2768 = vunpack.c.l.b16 %v2711
        %v2769 = vunpack.c.l.b16 %v2712
        %v2770 = vunpack.c.l.b16 %v2713
        %v2771 = vunpack.c.l.b16 %v2714
        %v2772 = vpack.c.b16 %v2753, %v2752
        %v2773 = vpack.c.b16 %v2755, %v2754
        %v2774 = vpack.c.b16 %v2757, %v2756
        %v2775 = vpack.c.b16 %v2759, %v2758
        %v2776 = vpack.c.b16 %v2761, %v2760
        %v2777 = vpack.c.b16 %v2763, %v2762
        %v2778 = vpack.c.b16 %v2765, %v2764
        %v2779 = vpack.c.b16 %v2767, %v2766
        %v2780 = vpack.c.b16 %v2769, %v2768
        %v2781 = vpack.c.b16 %v2771, %v2770
        %v2808 = vunpack.c.l.b16 %v2716
        %v2809 = vunpack.c.l.b16 %v2717
        %v2810 = vunpack.c.l.b16 %v2718
        %v2811 = vunpack.c.l.b16 %v2719
        %v2812 = vunpack.c.l.b16 %v2720
        %v2813 = vunpack.c.l.b16 %v2721
        %v2814 = vunpack.c.l.b16 %v2722
        %v2815 = vunpack.c.l.b16 %v2723
        %v2816 = vunpack.c.l.b16 %v2724
        %v2817 = vunpack.c.l.b16 %v2725
        %v2818 = vunpack.c.l.b16 %v2726
        %v2819 = vunpack.c.l.b16 %v2727
        %v2820 = vunpack.c.l.b16 %v2728
        %v2821 = vunpack.c.l.b16 %v2729
        %v2822 = vunpack.c.l.b16 %v2730
        %v2823 = vunpack.c.l.b16 %v2731
        %v2824 = vpack.c.b16 %v2809, %v2808
        %v2825 = vpack.c.b16 %v2811, %v2810
        %v2826 = vpack.c.b16 %v2813, %v2812
        %v2827 = vpack.c.b16 %v2815, %v2814
        %v2828 = vpack.c.b16 %v2817, %v2816
        %v2829 = vpack.c.b16 %v2819, %v2818
        %v2830 = vpack.c.b16 %v2821, %v2820
        %v2831 = vpack.c.b16 %v2823, %v2822
        %2840 = vmatprep.subr.bf16.mxu0 0
        %2841 = vmatpush1.bf16.msra.mxu0 %v2824
        %2842 = vmatprep.subr.bf16.mxu0 0
        %2843 = vmatpush1.bf16.msra.mxu0 %v2825
        %2844 = vmatprep.subr.bf16.mxu0 0
        %2845 = vmatpush1.bf16.msra.mxu0 %v2826
        %2846 = vmatprep.subr.bf16.mxu0 0
        %2847 = vmatpush1.bf16.msra.mxu0 %v2827
        %2848 = vmatprep.subr.bf16.mxu0 0
        %2849 = vmatpush1.bf16.msra.mxu0 %v2828
        %2850 = vmatprep.subr.bf16.mxu0 0
        %2851 = vmatpush1.bf16.msra.mxu0 %v2829
        %2852 = vmatprep.subr.bf16.mxu0 0
        %2853 = vmatpush1.bf16.msra.mxu0 %v2830
        %2854 = vmatprep.subr.bf16.mxu0 0
        %2855 = vmatpush1.bf16.msra.mxu0 %v2831
        %2856 = vmatprep.subr.bf16.mxu0 0
        %2857 = vmatpush1.bf16.msra.mxu0 0
        %2858 = vmatprep.subr.bf16.mxu0 0
        %2859 = vmatpush1.bf16.msra.mxu0 0
        %2860 = vmatprep.subr.bf16.mxu0 0
        %2861 = vmatpush1.bf16.msra.mxu0 0
        %2862 = vmatprep.subr.bf16.mxu0 0
        %2863 = vmatpush1.bf16.msra.mxu0 0
        %2864 = vmatprep.subr.bf16.mxu0 0
        %2865 = vmatpush1.bf16.msra.mxu0 0
        %2866 = vmatprep.subr.bf16.mxu0 0
        %2867 = vmatpush1.bf16.msra.mxu0 0
        %2868 = vmatprep.subr.bf16.mxu0 0
        %2869 = vmatpush1.bf16.msra.mxu0 0
        %2870 = vmatprep.subr.bf16.mxu0 0
        %2871 = vmatpush1.bf16.msra.mxu0 0
        %2872 = vmatprep.mubr.bf16.mxu0 0
        %2873 = vmatmul.mubr.bf16.gmra.mrb[0].mxu0 %v2772
        %v2874 = vpop.f32.mrb[0].mxu0
        %v2875 = vadd.f32 0.0, %v2874
        %v2876 = vpop.f32.mrb[0].mxu0
        %v2877 = vpop.f32.mrb[0].mxu0
        %v2878 = vadd.f32 0.0, %v2877
        %v2879 = vpop.f32.mrb[0].mxu0
        %2880 = vmatprep.mubr.bf16.mxu0 0
        %2881 = vmatmul.mubr.bf16.gmra.mrb[0].mxu0 %v2773
        %v2882 = vpop.f32.mrb[0].mxu0
        %v2883 = vadd.f32 0.0, %v2882
        %v2884 = vpop.f32.mrb[0].mxu0
        %v2885 = vpop.f32.mrb[0].mxu0
        %v2886 = vadd.f32 0.0, %v2885
        %v2887 = vpop.f32.mrb[0].mxu0
        %2888 = vmatprep.mubr.bf16.mxu0 0
        %2889 = vmatmul.mubr.bf16.gmra.mrb[0].mxu0 %v2774
        %v2890 = vpop.f32.mrb[0].mxu0
        %v2891 = vadd.f32 0.0, %v2890
        %v2892 = vpop.f32.mrb[0].mxu0
        %v2893 = vpop.f32.mrb[0].mxu0
        %v2894 = vadd.f32 0.0, %v2893
        %v2895 = vpop.f32.mrb[0].mxu0
        %2896 = vmatprep.mubr.bf16.mxu0 0
        %2897 = vmatmul.mubr.bf16.gmra.mrb[0].mxu0 %v2775
        %v2898 = vpop.f32.mrb[0].mxu0
        %v2899 = vadd.f32 0.0, %v2898
        %v2900 = vpop.f32.mrb[0].mxu0
        %v2901 = vpop.f32.mrb[0].mxu0
        %v2902 = vadd.f32 0.0, %v2901
        %v2903 = vpop.f32.mrb[0].mxu0
        %2904 = vmatprep.mubr.bf16.mxu0 0
        %2905 = vmatmul.mubr.bf16.gmra.mrb[0].mxu0 %v2776
        %v2906 = vpop.f32.mrb[0].mxu0
        %v2907 = vadd.f32 0.0, %v2906
        %v2908 = vpop.f32.mrb[0].mxu0
        %v2909 = vpop.f32.mrb[0].mxu0
        %v2910 = vadd.f32 0.0, %v2909
        %v2911 = vpop.f32.mrb[0].mxu0
        %2912 = vmatprep.mubr.bf16.mxu0 0
        %2913 = vmatmul.mubr.bf16.gmra.mrb[0].mxu0 %v2777
        %v2914 = vpop.f32.mrb[0].mxu0
        %v2915 = vadd.f32 0.0, %v2914
        %v2916 = vpop.f32.mrb[0].mxu0
        %v2917 = vpop.f32.mrb[0].mxu0
        %v2918 = vadd.f32 0.0, %v2917
        %v2919 = vpop.f32.mrb[0].mxu0
        %2920 = vmatprep.mubr.bf16.mxu0 0
        %2921 = vmatmul.mubr.bf16.gmra.mrb[0].mxu0 %v2778
        %v2922 = vpop.f32.mrb[0].mxu0
        %v2923 = vadd.f32 0.0, %v2922
        %v2924 = vpop.f32.mrb[0].mxu0
        %v2925 = vpop.f32.mrb[0].mxu0
        %v2926 = vadd.f32 0.0, %v2925
        %v2927 = vpop.f32.mrb[0].mxu0
        %2928 = vmatprep.mubr.bf16.mxu0 0
        %2929 = vmatmul.mubr.bf16.gmra.mrb[0].mxu0 %v2779
        %v2930 = vpop.f32.mrb[0].mxu0
        %v2931 = vadd.f32 0.0, %v2930
        %v2932 = vpop.f32.mrb[0].mxu0
        %v2933 = vpop.f32.mrb[0].mxu0
        %v2934 = vadd.f32 0.0, %v2933
        %v2935 = vpop.f32.mrb[0].mxu0
        %2936 = vmatprep.mubr.bf16.mxu0 0
        %2937 = vmatmul.mubr.bf16.gmra.mrb[0].mxu0 %v2780
        %v2938 = vpop.f32.mrb[0].mxu0
        %v2939 = vadd.f32 0.0, %v2938
        %v2940 = vpop.f32.mrb[0].mxu0
        %v2941 = vpop.f32.mrb[0].mxu0
        %v2942 = vadd.f32 0.0, %v2941
        %v2943 = vpop.f32.mrb[0].mxu0
        %2944 = vmatprep.mubr.bf16.mxu0 0
        %2945 = vmatmul.mubr.bf16.gmra.mrb[0].mxu0 %v2781
        %v2946 = vpop.f32.mrb[0].mxu0
        %v2947 = vadd.f32 0.0, %v2946
        %v2948 = vpop.f32.mrb[0].mxu0
        %v2949 = vpop.f32.mrb[0].mxu0
        %v2950 = vadd.f32 0.0, %v2949
        %v2951 = vpop.f32.mrb[0].mxu0
        %2952 = vdwg.mxu0
        %v2953 = vadd.f32 %v2674, %v2875
        %v2954 = vadd.f32 %v2675, %v2878
        %v2955 = vadd.f32 %v2676, %v2883
        %v2956 = vadd.f32 %v2677, %v2886
        %v2957 = vadd.f32 %v2678, %v2891
        %v2958 = vadd.f32 %v2679, %v2894
        %v2959 = vadd.f32 %v2680, %v2899
        %v2960 = vadd.f32 %v2681, %v2902
        %v2961 = vadd.f32 %v2682, %v2907
        %v2962 = vadd.f32 %v2683, %v2910
        %v2963 = vadd.f32 %v2684, %v2915
        %v2964 = vadd.f32 %v2685, %v2918
        %v2965 = vadd.f32 %v2686, %v2923
        %v2966 = vadd.f32 %v2687, %v2926
        %v2967 = vadd.f32 %v2688, %v2931
        %v2968 = vadd.f32 %v2689, %v2934
        %v2969 = vadd.f32 %v2690, %v2939
        %v2970 = vadd.f32 %v2691, %v2942
        %v2971 = vadd.f32 %v2692, %v2947
        %v2972 = vadd.f32 %v2693, %v2950
        %v2973 = vld [vmem:[%s2694] sm:$0xf]
        %v2974 = vld [vmem:[%s2694 + $0x4] sm:$0xf]
        %v2975 = vld [vmem:[%s2694 + $0x8] sm:$0x1]
        %v2976 = vld [vmem:[%s2694 + $0xc] sm:$0xf]
        %v2977 = vld [vmem:[%s2694 + $0x10] sm:$0xf]
        %v2978 = vld [vmem:[%s2694 + $0x14] sm:$0x1]
        %v2979 = vld [vmem:[%s2694 + $0x18] sm:$0xf]
        %v2980 = vld [vmem:[%s2694 + $0x1c] sm:$0xf]
        %v2981 = vld [vmem:[%s2694 + $0x20] sm:$0x1]
        %v2982 = vld [vmem:[%s2694 + $0x24] sm:$0xf]
        %v2983 = vld [vmem:[%s2694 + $0x28] sm:$0xf]
        %v2984 = vld [vmem:[%s2694 + $0x2c] sm:$0x1]
        %v2985 = vld [vmem:[%s2694 + $0x30] sm:$0xf]
        %v2986 = vld [vmem:[%s2694 + $0x34] sm:$0xf]
        %v2987 = vld [vmem:[%s2694 + $0x38] sm:$0x1]
        %v2988 = vld [vmem:[%s2694 + $0x3c] sm:$0xf]
        %v2989 = vld [vmem:[%s2694 + $0x40] sm:$0xf]
        %v2990 = vld [vmem:[%s2694 + $0x44] sm:$0x1]
        %v2991 = vld [vmem:[%s2694 + $0x48] sm:$0xf]
        %v2992 = vld [vmem:[%s2694 + $0x4c] sm:$0xf]
        %v2993 = vld [vmem:[%s2694 + $0x50] sm:$0x1]
        %v2994 = vld [vmem:[%s2694 + $0x54] sm:$0xf]
        %v2995 = vld [vmem:[%s2694 + $0x58] sm:$0xf]
        %v2996 = vld [vmem:[%s2694 + $0x5c] sm:$0x1]
        %v2997 = vld [vmem:[%s2694 + $0x60] sm:$0xf]
        %v2998 = vld [vmem:[%s2694 + $0x64] sm:$0xf]
        %v2999 = vld [vmem:[%s2694 + $0x68] sm:$0x1]
        %v3000 = vld [vmem:[%s2694 + $0x6c] sm:$0xf]
        %v3001 = vld [vmem:[%s2694 + $0x70] sm:$0xf]
        %v3002 = vld [vmem:[%s2694 + $0x74] sm:$0x1]
        %v3004 = vshrl.u32 %v2973, 16
        %v3006 = vrot.slane %v3004, 4
        %v3007 = vshll.u32 %v2973, 16
        %v3009 = vrot.slane %v3007, 5
        %v3010 = vor.u32 %v3006, %v3009
        %v3011 = vrot.slane %v3010, 4
        %v3013 = vshll.u32 %v2974, 16
        %v3015 = vrot.slane %v3013, 5
        %v3016 = vsel %vm538, %v3011, %v3015
        %v3017 = vshrl.u32 %v2974, 16
        %v3019 = vrot.slane %v3017, 4
        %v3020 = vor.u32 %v3019, %v3015
        %v3021 = vrot.slane %v3020, 4
        %v3023 = vshll.u32 %v2975, 16
        %v3025 = vrot.slane %v3023, 5
        %v3026 = vsel %vm538, %v3021, %v3025
        %v3028 = vshrl.u32 %v2976, 16
        %v3030 = vrot.slane %v3028, 4
        %v3031 = vshll.u32 %v2976, 16
        %v3033 = vrot.slane %v3031, 5
        %v3034 = vor.u32 %v3030, %v3033
        %v3035 = vrot.slane %v3034, 4
        %v3037 = vshll.u32 %v2977, 16
        %v3039 = vrot.slane %v3037, 5
        %v3040 = vsel %vm538, %v3035, %v3039
        %v3041 = vshrl.u32 %v2977, 16
        %v3043 = vrot.slane %v3041, 4
        %v3044 = vor.u32 %v3043, %v3039
        %v3045 = vrot.slane %v3044, 4
        %v3047 = vshll.u32 %v2978, 16
        %v3049 = vrot.slane %v3047, 5
        %v3050 = vsel %vm538, %v3045, %v3049
        %v3052 = vshrl.u32 %v2979, 16
        %v3054 = vrot.slane %v3052, 4
        %v3055 = vshll.u32 %v2979, 16
        %v3057 = vrot.slane %v3055, 5
        %v3058 = vor.u32 %v3054, %v3057
        %v3059 = vrot.slane %v3058, 4
        %v3061 = vshll.u32 %v2980, 16
        %v3063 = vrot.slane %v3061, 5
        %v3064 = vsel %vm538, %v3059, %v3063
        %v3065 = vshrl.u32 %v2980, 16
        %v3067 = vrot.slane %v3065, 4
        %v3068 = vor.u32 %v3067, %v3063
        %v3069 = vrot.slane %v3068, 4
        %v3071 = vshll.u32 %v2981, 16
        %v3073 = vrot.slane %v3071, 5
        %v3074 = vsel %vm538, %v3069, %v3073
        %v3076 = vshrl.u32 %v2982, 16
        %v3078 = vrot.slane %v3076, 4
        %v3079 = vshll.u32 %v2982, 16
        %v3081 = vrot.slane %v3079, 5
        %v3082 = vor.u32 %v3078, %v3081
        %v3083 = vrot.slane %v3082, 4
        %v3085 = vshll.u32 %v2983, 16
        %v3087 = vrot.slane %v3085, 5
        %v3088 = vsel %vm538, %v3083, %v3087
        %v3089 = vshrl.u32 %v2983, 16
        %v3091 = vrot.slane %v3089, 4
        %v3092 = vor.u32 %v3091, %v3087
        %v3093 = vrot.slane %v3092, 4
        %v3095 = vshll.u32 %v2984, 16
        %v3097 = vrot.slane %v3095, 5
        %v3098 = vsel %vm538, %v3093, %v3097
        %v3100 = vshrl.u32 %v2985, 16
        %v3102 = vrot.slane %v3100, 4
        %v3103 = vshll.u32 %v2985, 16
        %v3105 = vrot.slane %v3103, 5
        %v3106 = vor.u32 %v3102, %v3105
        %v3107 = vrot.slane %v3106, 4
        %v3109 = vshll.u32 %v2986, 16
        %v3111 = vrot.slane %v3109, 5
        %v3112 = vsel %vm538, %v3107, %v3111
        %v3113 = vshrl.u32 %v2986, 16
        %v3115 = vrot.slane %v3113, 4
        %v3116 = vor.u32 %v3115, %v3111
        %v3117 = vrot.slane %v3116, 4
        %v3119 = vshll.u32 %v2987, 16
        %v3121 = vrot.slane %v3119, 5
        %v3122 = vsel %vm538, %v3117, %v3121
        %v3124 = vshrl.u32 %v2988, 16
        %v3126 = vrot.slane %v3124, 4
        %v3127 = vshll.u32 %v2988, 16
        %v3129 = vrot.slane %v3127, 5
        %v3130 = vor.u32 %v3126, %v3129
        %v3131 = vrot.slane %v3130, 4
        %v3133 = vshll.u32 %v2989, 16
        %v3135 = vrot.slane %v3133, 5
        %v3136 = vsel %vm538, %v3131, %v3135
        %v3137 = vshrl.u32 %v2989, 16
        %v3139 = vrot.slane %v3137, 4
        %v3140 = vor.u32 %v3139, %v3135
        %v3141 = vrot.slane %v3140, 4
        %v3143 = vshll.u32 %v2990, 16
        %v3145 = vrot.slane %v3143, 5
        %v3146 = vsel %vm538, %v3141, %v3145
        %v3148 = vshrl.u32 %v2991, 16
        %v3150 = vrot.slane %v3148, 4
        %v3151 = vshll.u32 %v2991, 16
        %v3153 = vrot.slane %v3151, 5
        %v3154 = vor.u32 %v3150, %v3153
        %v3155 = vrot.slane %v3154, 4
        %v3157 = vshll.u32 %v2992, 16
        %v3159 = vrot.slane %v3157, 5
        %v3160 = vsel %vm538, %v3155, %v3159
        %v3161 = vshrl.u32 %v2992, 16
        %v3163 = vrot.slane %v3161, 4
        %v3164 = vor.u32 %v3163, %v3159
        %v3165 = vrot.slane %v3164, 4
        %v3167 = vshll.u32 %v2993, 16
        %v3169 = vrot.slane %v3167, 5
        %v3170 = vsel %vm538, %v3165, %v3169
        %v3172 = vshrl.u32 %v2994, 16
        %v3174 = vrot.slane %v3172, 4
        %v3175 = vshll.u32 %v2994, 16
        %v3177 = vrot.slane %v3175, 5
        %v3178 = vor.u32 %v3174, %v3177
        %v3179 = vrot.slane %v3178, 4
        %v3181 = vshll.u32 %v2995, 16
        %v3183 = vrot.slane %v3181, 5
        %v3184 = vsel %vm538, %v3179, %v3183
        %v3185 = vshrl.u32 %v2995, 16
        %v3187 = vrot.slane %v3185, 4
        %v3188 = vor.u32 %v3187, %v3183
        %v3189 = vrot.slane %v3188, 4
        %v3191 = vshll.u32 %v2996, 16
        %v3193 = vrot.slane %v3191, 5
        %v3194 = vsel %vm538, %v3189, %v3193
        %v3196 = vshrl.u32 %v2997, 16
        %v3198 = vrot.slane %v3196, 4
        %v3199 = vshll.u32 %v2997, 16
        %v3201 = vrot.slane %v3199, 5
        %v3202 = vor.u32 %v3198, %v3201
        %v3203 = vrot.slane %v3202, 4
        %v3205 = vshll.u32 %v2998, 16
        %v3207 = vrot.slane %v3205, 5
        %v3208 = vsel %vm538, %v3203, %v3207
        %v3209 = vshrl.u32 %v2998, 16
        %v3211 = vrot.slane %v3209, 4
        %v3212 = vor.u32 %v3211, %v3207
        %v3213 = vrot.slane %v3212, 4
        %v3215 = vshll.u32 %v2999, 16
        %v3217 = vrot.slane %v3215, 5
        %v3218 = vsel %vm538, %v3213, %v3217
        %v3220 = vshrl.u32 %v3000, 16
        %v3222 = vrot.slane %v3220, 4
        %v3223 = vshll.u32 %v3000, 16
        %v3225 = vrot.slane %v3223, 5
        %v3226 = vor.u32 %v3222, %v3225
        %v3227 = vrot.slane %v3226, 4
        %v3229 = vshll.u32 %v3001, 16
        %v3231 = vrot.slane %v3229, 5
        %v3232 = vsel %vm538, %v3227, %v3231
        %v3233 = vshrl.u32 %v3001, 16
        %v3235 = vrot.slane %v3233, 4
        %v3236 = vor.u32 %v3235, %v3231
        %v3237 = vrot.slane %v3236, 4
        %v3239 = vshll.u32 %v3002, 16
        %v3241 = vrot.slane %v3239, 5
        %v3242 = vsel %vm538, %v3237, %v3241
        %s3243 = scalar_lea.vmem %s2, 448
        %v3244 = vld [vmem:[%s3243] sm:$0xf]
        %v3245 = vld [vmem:[%s3243 + $0x4] sm:$0xf]
        %v3246 = vld [vmem:[%s3243 + $0x8] sm:$0xf]
        %v3247 = vld [vmem:[%s3243 + $0xc] sm:$0xf]
        %v3248 = vld [vmem:[%s3243 + $0x10] sm:$0xf]
        %v3249 = vld [vmem:[%s3243 + $0x14] sm:$0xf]
        %v3250 = vld [vmem:[%s3243 + $0x18] sm:$0xf]
        %v3251 = vld [vmem:[%s3243 + $0x1c] sm:$0xf]
        %v3252 = vld [vmem:[%s3243 + $0x20] sm:$0xf]
        %v3253 = vld [vmem:[%s3243 + $0x24] sm:$0xf]
        %v3254 = vld [vmem:[%s3243 + $0x28] sm:$0xf]
        %v3255 = vld [vmem:[%s3243 + $0x2c] sm:$0xf]
        %v3256 = vld [vmem:[%s3243 + $0x30] sm:$0xf]
        %v3257 = vld [vmem:[%s3243 + $0x34] sm:$0xf]
        %v3258 = vld [vmem:[%s3243 + $0x38] sm:$0xf]
        %v3259 = vld [vmem:[%s3243 + $0x3c] sm:$0xf]
        %v3260 = vunpack.c.l.b16 %v3016
        %v3261 = vunpack.c.l.b16 %v3026
        %v3262 = vunpack.c.l.b16 %v3040
        %v3263 = vunpack.c.l.b16 %v3050
        %v3264 = vunpack.c.l.b16 %v3064
        %v3265 = vunpack.c.l.b16 %v3074
        %v3266 = vunpack.c.l.b16 %v3088
        %v3267 = vunpack.c.l.b16 %v3098
        %v3268 = vunpack.c.l.b16 %v3112
        %v3269 = vunpack.c.l.b16 %v3122
        %v3270 = vunpack.c.l.b16 %v3136
        %v3271 = vunpack.c.l.b16 %v3146
        %v3272 = vunpack.c.l.b16 %v3160
        %v3273 = vunpack.c.l.b16 %v3170
        %v3274 = vunpack.c.l.b16 %v3184
        %v3275 = vunpack.c.l.b16 %v3194
        %v3276 = vunpack.c.l.b16 %v3208
        %v3277 = vunpack.c.l.b16 %v3218
        %v3278 = vunpack.c.l.b16 %v3232
        %v3279 = vunpack.c.l.b16 %v3242
        %v3280 = vpack.c.b16 %v3261, %v3260
        %v3281 = vpack.c.b16 %v3263, %v3262
        %v3282 = vpack.c.b16 %v3265, %v3264
        %v3283 = vpack.c.b16 %v3267, %v3266
        %v3284 = vpack.c.b16 %v3269, %v3268
        %v3285 = vpack.c.b16 %v3271, %v3270
        %v3286 = vpack.c.b16 %v3273, %v3272
        %v3287 = vpack.c.b16 %v3275, %v3274
        %v3288 = vpack.c.b16 %v3277, %v3276
        %v3289 = vpack.c.b16 %v3279, %v3278
        %v3316 = vunpack.c.l.b16 %v3244
        %v3317 = vunpack.c.l.b16 %v3245
        %v3318 = vunpack.c.l.b16 %v3246
        %v3319 = vunpack.c.l.b16 %v3247
        %v3320 = vunpack.c.l.b16 %v3248
        %v3321 = vunpack.c.l.b16 %v3249
        %v3322 = vunpack.c.l.b16 %v3250
        %v3323 = vunpack.c.l.b16 %v3251
        %v3324 = vunpack.c.l.b16 %v3252
        %v3325 = vunpack.c.l.b16 %v3253
        %v3326 = vunpack.c.l.b16 %v3254
        %v3327 = vunpack.c.l.b16 %v3255
        %v3328 = vunpack.c.l.b16 %v3256
        %v3329 = vunpack.c.l.b16 %v3257
        %v3330 = vunpack.c.l.b16 %v3258
        %v3331 = vunpack.c.l.b16 %v3259
        %v3332 = vpack.c.b16 %v3317, %v3316
        %v3333 = vpack.c.b16 %v3319, %v3318
        %v3334 = vpack.c.b16 %v3321, %v3320
        %v3335 = vpack.c.b16 %v3323, %v3322
        %v3336 = vpack.c.b16 %v3325, %v3324
        %v3337 = vpack.c.b16 %v3327, %v3326
        %v3338 = vpack.c.b16 %v3329, %v3328
        %v3339 = vpack.c.b16 %v3331, %v3330
        %3348 = vmatprep.subr.bf16.mxu0 0
        %3349 = vmatpush1.bf16.msra.mxu0 %v3332
        %3350 = vmatprep.subr.bf16.mxu0 0
        %3351 = vmatpush1.bf16.msra.mxu0 %v3333
        %3352 = vmatprep.subr.bf16.mxu0 0
        %3353 = vmatpush1.bf16.msra.mxu0 %v3334
        %3354 = vmatprep.subr.bf16.mxu0 0
        %3355 = vmatpush1.bf16.msra.mxu0 %v3335
        %3356 = vmatprep.subr.bf16.mxu0 0
        %3357 = vmatpush1.bf16.msra.mxu0 %v3336
        %3358 = vmatprep.subr.bf16.mxu0 0
        %3359 = vmatpush1.bf16.msra.mxu0 %v3337
        %3360 = vmatprep.subr.bf16.mxu0 0
        %3361 = vmatpush1.bf16.msra.mxu0 %v3338
        %3362 = vmatprep.subr.bf16.mxu0 0
        %3363 = vmatpush1.bf16.msra.mxu0 %v3339
        %3364 = vmatprep.subr.bf16.mxu0 0
        %3365 = vmatpush1.bf16.msra.mxu0 0
        %3366 = vmatprep.subr.bf16.mxu0 0
        %3367 = vmatpush1.bf16.msra.mxu0 0
        %3368 = vmatprep.subr.bf16.mxu0 0
        %3369 = vmatpush1.bf16.msra.mxu0 0
        %3370 = vmatprep.subr.bf16.mxu0 0
        %3371 = vmatpush1.bf16.msra.mxu0 0
        %3372 = vmatprep.subr.bf16.mxu0 0
        %3373 = vmatpush1.bf16.msra.mxu0 0
        %3374 = vmatprep.subr.bf16.mxu0 0
        %3375 = vmatpush1.bf16.msra.mxu0 0
        %3376 = vmatprep.subr.bf16.mxu0 0
        %3377 = vmatpush1.bf16.msra.mxu0 0
        %3378 = vmatprep.subr.bf16.mxu0 0
        %3379 = vmatpush1.bf16.msra.mxu0 0
        %3380 = vmatprep.mubr.bf16.mxu0 0
        %3381 = vmatmul.mubr.bf16.gmra.mrb[0].mxu0 %v3280
        %v3382 = vpop.f32.mrb[0].mxu0
        %v3383 = vadd.f32 0.0, %v3382
        %v3384 = vpop.f32.mrb[0].mxu0
        %v3385 = vpop.f32.mrb[0].mxu0
        %v3386 = vadd.f32 0.0, %v3385
        %v3387 = vpop.f32.mrb[0].mxu0
        %3388 = vmatprep.mubr.bf16.mxu0 0
        %3389 = vmatmul.mubr.bf16.gmra.mrb[0].mxu0 %v3281
        %v3390 = vpop.f32.mrb[0].mxu0
        %v3391 = vadd.f32 0.0, %v3390
        %v3392 = vpop.f32.mrb[0].mxu0
        %v3393 = vpop.f32.mrb[0].mxu0
        %v3394 = vadd.f32 0.0, %v3393
        %v3395 = vpop.f32.mrb[0].mxu0
        %3396 = vmatprep.mubr.bf16.mxu0 0
        %3397 = vmatmul.mubr.bf16.gmra.mrb[0].mxu0 %v3282
        %v3398 = vpop.f32.mrb[0].mxu0
        %v3399 = vadd.f32 0.0, %v3398
        %v3400 = vpop.f32.mrb[0].mxu0
        %v3401 = vpop.f32.mrb[0].mxu0
        %v3402 = vadd.f32 0.0, %v3401
        %v3403 = vpop.f32.mrb[0].mxu0
        %3404 = vmatprep.mubr.bf16.mxu0 0
        %3405 = vmatmul.mubr.bf16.gmra.mrb[0].mxu0 %v3283
        %v3406 = vpop.f32.mrb[0].mxu0
        %v3407 = vadd.f32 0.0, %v3406
        %v3408 = vpop.f32.mrb[0].mxu0
        %v3409 = vpop.f32.mrb[0].mxu0
        %v3410 = vadd.f32 0.0, %v3409
        %v3411 = vpop.f32.mrb[0].mxu0
        %3412 = vmatprep.mubr.bf16.mxu0 0
        %3413 = vmatmul.mubr.bf16.gmra.mrb[0].mxu0 %v3284
        %v3414 = vpop.f32.mrb[0].mxu0
        %v3415 = vadd.f32 0.0, %v3414
        %v3416 = vpop.f32.mrb[0].mxu0
        %v3417 = vpop.f32.mrb[0].mxu0
        %v3418 = vadd.f32 0.0, %v3417
        %v3419 = vpop.f32.mrb[0].mxu0
        %3420 = vmatprep.mubr.bf16.mxu0 0
        %3421 = vmatmul.mubr.bf16.gmra.mrb[0].mxu0 %v3285
        %v3422 = vpop.f32.mrb[0].mxu0
        %v3423 = vadd.f32 0.0, %v3422
        %v3424 = vpop.f32.mrb[0].mxu0
        %v3425 = vpop.f32.mrb[0].mxu0
        %v3426 = vadd.f32 0.0, %v3425
        %v3427 = vpop.f32.mrb[0].mxu0
        %3428 = vmatprep.mubr.bf16.mxu0 0
        %3429 = vmatmul.mubr.bf16.gmra.mrb[0].mxu0 %v3286
        %v3430 = vpop.f32.mrb[0].mxu0
        %v3431 = vadd.f32 0.0, %v3430
        %v3432 = vpop.f32.mrb[0].mxu0
        %v3433 = vpop.f32.mrb[0].mxu0
        %v3434 = vadd.f32 0.0, %v3433
        %v3435 = vpop.f32.mrb[0].mxu0
        %3436 = vmatprep.mubr.bf16.mxu0 0
        %3437 = vmatmul.mubr.bf16.gmra.mrb[0].mxu0 %v3287
        %v3438 = vpop.f32.mrb[0].mxu0
        %v3439 = vadd.f32 0.0, %v3438
        %v3440 = vpop.f32.mrb[0].mxu0
        %v3441 = vpop.f32.mrb[0].mxu0
        %v3442 = vadd.f32 0.0, %v3441
        %v3443 = vpop.f32.mrb[0].mxu0
        %3444 = vmatprep.mubr.bf16.mxu0 0
        %3445 = vmatmul.mubr.bf16.gmra.mrb[0].mxu0 %v3288
        %v3446 = vpop.f32.mrb[0].mxu0
        %v3447 = vadd.f32 0.0, %v3446
        %v3448 = vpop.f32.mrb[0].mxu0
        %v3449 = vpop.f32.mrb[0].mxu0
        %v3450 = vadd.f32 0.0, %v3449
        %v3451 = vpop.f32.mrb[0].mxu0
        %3452 = vmatprep.mubr.bf16.mxu0 0
        %3453 = vmatmul.mubr.bf16.gmra.mrb[0].mxu0 %v3289
        %v3454 = vpop.f32.mrb[0].mxu0
        %v3455 = vadd.f32 0.0, %v3454
        %v3456 = vpop.f32.mrb[0].mxu0
        %v3457 = vpop.f32.mrb[0].mxu0
        %v3458 = vadd.f32 0.0, %v3457
        %v3459 = vpop.f32.mrb[0].mxu0
        %3460 = vdwg.mxu0
        %v3461 = vadd.f32 %v2953, %v3383
        %v3462 = vadd.f32 %v2954, %v3386
        %v3463 = vadd.f32 %v2955, %v3391
        %v3464 = vadd.f32 %v2956, %v3394
        %v3465 = vadd.f32 %v2957, %v3399
        %v3466 = vadd.f32 %v2958, %v3402
        %v3467 = vadd.f32 %v2959, %v3407
        %v3468 = vadd.f32 %v2960, %v3410
        %v3469 = vadd.f32 %v2961, %v3415
        %v3470 = vadd.f32 %v2962, %v3418
        %v3471 = vadd.f32 %v2963, %v3423
        %v3472 = vadd.f32 %v2964, %v3426
        %v3473 = vadd.f32 %v2965, %v3431
        %v3474 = vadd.f32 %v2966, %v3434
        %v3475 = vadd.f32 %v2967, %v3439
        %v3476 = vadd.f32 %v2968, %v3442
        %v3477 = vadd.f32 %v2969, %v3447
        %v3478 = vadd.f32 %v2970, %v3450
        %v3479 = vadd.f32 %v2971, %v3455
        %v3480 = vadd.f32 %v2972, %v3458
        %v3481 = vld [vmem:[%s2694] sm:$0xe]
        %v3482 = vld [vmem:[%s2694 + $0xc] sm:$0xe]
        %v3483 = vld [vmem:[%s2694 + $0x18] sm:$0xe]
        %v3484 = vld [vmem:[%s2694 + $0x24] sm:$0xe]
        %v3485 = vld [vmem:[%s2694 + $0x30] sm:$0xe]
        %v3486 = vld [vmem:[%s2694 + $0x3c] sm:$0xe]
        %v3487 = vld [vmem:[%s2694 + $0x48] sm:$0xe]
        %v3488 = vld [vmem:[%s2694 + $0x54] sm:$0xe]
        %v3489 = vld [vmem:[%s2694 + $0x60] sm:$0xe]
        %v3490 = vld [vmem:[%s2694 + $0x6c] sm:$0xe]
        %v3521 = vrot.slane %v3481, 5
        %v3522 = vrot.slane %v3521, 4
        %v3523 = vrot.slane %v2974, 5
        %v3524 = vsel %vm1250, %v3522, %v3523
        %v3525 = vrot.slane %v3523, 4
        %v3526 = vrot.slane %v2975, 5
        %v3527 = vsel %vm1250, %v3525, %v3526
        %v3528 = vrot.slane %v3482, 5
        %v3529 = vrot.slane %v3528, 4
        %v3530 = vrot.slane %v2977, 5
        %v3531 = vsel %vm1250, %v3529, %v3530
        %v3532 = vrot.slane %v3530, 4
        %v3533 = vrot.slane %v2978, 5
        %v3534 = vsel %vm1250, %v3532, %v3533
        %v3535 = vrot.slane %v3483, 5
        %v3536 = vrot.slane %v3535, 4
        %v3537 = vrot.slane %v2980, 5
        %v3538 = vsel %vm1250, %v3536, %v3537
        %v3539 = vrot.slane %v3537, 4
        %v3540 = vrot.slane %v2981, 5
        %v3541 = vsel %vm1250, %v3539, %v3540
        %v3542 = vrot.slane %v3484, 5
        %v3543 = vrot.slane %v3542, 4
        %v3544 = vrot.slane %v2983, 5
        %v3545 = vsel %vm1250, %v3543, %v3544
        %v3546 = vrot.slane %v3544, 4
        %v3547 = vrot.slane %v2984, 5
        %v3548 = vsel %vm1250, %v3546, %v3547
        %v3549 = vrot.slane %v3485, 5
        %v3550 = vrot.slane %v3549, 4
        %v3551 = vrot.slane %v2986, 5
        %v3552 = vsel %vm1250, %v3550, %v3551
        %v3553 = vrot.slane %v3551, 4
        %v3554 = vrot.slane %v2987, 5
        %v3555 = vsel %vm1250, %v3553, %v3554
        %v3556 = vrot.slane %v3486, 5
        %v3557 = vrot.slane %v3556, 4
        %v3558 = vrot.slane %v2989, 5
        %v3559 = vsel %vm1250, %v3557, %v3558
        %v3560 = vrot.slane %v3558, 4
        %v3561 = vrot.slane %v2990, 5
        %v3562 = vsel %vm1250, %v3560, %v3561
        %v3563 = vrot.slane %v3487, 5
        %v3564 = vrot.slane %v3563, 4
        %v3565 = vrot.slane %v2992, 5
        %v3566 = vsel %vm1250, %v3564, %v3565
        %v3567 = vrot.slane %v3565, 4
        %v3568 = vrot.slane %v2993, 5
        %v3569 = vsel %vm1250, %v3567, %v3568
        %v3570 = vrot.slane %v3488, 5
        %v3571 = vrot.slane %v3570, 4
        %v3572 = vrot.slane %v2995, 5
        %v3573 = vsel %vm1250, %v3571, %v3572
        %v3574 = vrot.slane %v3572, 4
        %v3575 = vrot.slane %v2996, 5
        %v3576 = vsel %vm1250, %v3574, %v3575
        %v3577 = vrot.slane %v3489, 5
        %v3578 = vrot.slane %v3577, 4
        %v3579 = vrot.slane %v2998, 5
        %v3580 = vsel %vm1250, %v3578, %v3579
        %v3581 = vrot.slane %v3579, 4
        %v3582 = vrot.slane %v2999, 5
        %v3583 = vsel %vm1250, %v3581, %v3582
        %v3584 = vrot.slane %v3490, 5
        %v3585 = vrot.slane %v3584, 4
        %v3586 = vrot.slane %v3001, 5
        %v3587 = vsel %vm1250, %v3585, %v3586
        %v3588 = vrot.slane %v3586, 4
        %v3589 = vrot.slane %v3002, 5
        %v3590 = vsel %vm1250, %v3588, %v3589
        %s3591 = scalar_lea.vmem %s2, 512
        %v3592 = vld [vmem:[%s3591] sm:$0xf]
        %v3593 = vld [vmem:[%s3591 + $0x4] sm:$0xf]
        %v3594 = vld [vmem:[%s3591 + $0x8] sm:$0xf]
        %v3595 = vld [vmem:[%s3591 + $0xc] sm:$0xf]
        %v3596 = vld [vmem:[%s3591 + $0x10] sm:$0xf]
        %v3597 = vld [vmem:[%s3591 + $0x14] sm:$0xf]
        %v3598 = vld [vmem:[%s3591 + $0x18] sm:$0xf]
        %v3599 = vld [vmem:[%s3591 + $0x1c] sm:$0xf]
        %v3600 = vld [vmem:[%s3591 + $0x20] sm:$0xf]
        %v3601 = vld [vmem:[%s3591 + $0x24] sm:$0xf]
        %v3602 = vld [vmem:[%s3591 + $0x28] sm:$0xf]
        %v3603 = vld [vmem:[%s3591 + $0x2c] sm:$0xf]
        %v3604 = vld [vmem:[%s3591 + $0x30] sm:$0xf]
        %v3605 = vld [vmem:[%s3591 + $0x34] sm:$0xf]
        %v3606 = vld [vmem:[%s3591 + $0x38] sm:$0xf]
        %v3607 = vld [vmem:[%s3591 + $0x3c] sm:$0xf]
        %v3608 = vunpack.c.l.b16 %v3524
        %v3609 = vunpack.c.l.b16 %v3527
        %v3610 = vunpack.c.l.b16 %v3531
        %v3611 = vunpack.c.l.b16 %v3534
        %v3612 = vunpack.c.l.b16 %v3538
        %v3613 = vunpack.c.l.b16 %v3541
        %v3614 = vunpack.c.l.b16 %v3545
        %v3615 = vunpack.c.l.b16 %v3548
        %v3616 = vunpack.c.l.b16 %v3552
        %v3617 = vunpack.c.l.b16 %v3555
        %v3618 = vunpack.c.l.b16 %v3559
        %v3619 = vunpack.c.l.b16 %v3562
        %v3620 = vunpack.c.l.b16 %v3566
        %v3621 = vunpack.c.l.b16 %v3569
        %v3622 = vunpack.c.l.b16 %v3573
        %v3623 = vunpack.c.l.b16 %v3576
        %v3624 = vunpack.c.l.b16 %v3580
        %v3625 = vunpack.c.l.b16 %v3583
        %v3626 = vunpack.c.l.b16 %v3587
        %v3627 = vunpack.c.l.b16 %v3590
        %v3628 = vpack.c.b16 %v3609, %v3608
        %v3629 = vpack.c.b16 %v3611, %v3610
        %v3630 = vpack.c.b16 %v3613, %v3612
        %v3631 = vpack.c.b16 %v3615, %v3614
        %v3632 = vpack.c.b16 %v3617, %v3616
        %v3633 = vpack.c.b16 %v3619, %v3618
        %v3634 = vpack.c.b16 %v3621, %v3620
        %v3635 = vpack.c.b16 %v3623, %v3622
        %v3636 = vpack.c.b16 %v3625, %v3624
        %v3637 = vpack.c.b16 %v3627, %v3626
        %v3664 = vunpack.c.l.b16 %v3592
        %v3665 = vunpack.c.l.b16 %v3593
        %v3666 = vunpack.c.l.b16 %v3594
        %v3667 = vunpack.c.l.b16 %v3595
        %v3668 = vunpack.c.l.b16 %v3596
        %v3669 = vunpack.c.l.b16 %v3597
        %v3670 = vunpack.c.l.b16 %v3598
        %v3671 = vunpack.c.l.b16 %v3599
        %v3672 = vunpack.c.l.b16 %v3600
        %v3673 = vunpack.c.l.b16 %v3601
        %v3674 = vunpack.c.l.b16 %v3602
        %v3675 = vunpack.c.l.b16 %v3603
        %v3676 = vunpack.c.l.b16 %v3604
        %v3677 = vunpack.c.l.b16 %v3605
        %v3678 = vunpack.c.l.b16 %v3606
        %v3679 = vunpack.c.l.b16 %v3607
        %v3680 = vpack.c.b16 %v3665, %v3664
        %v3681 = vpack.c.b16 %v3667, %v3666
        %v3682 = vpack.c.b16 %v3669, %v3668
        %v3683 = vpack.c.b16 %v3671, %v3670
        %v3684 = vpack.c.b16 %v3673, %v3672
        %v3685 = vpack.c.b16 %v3675, %v3674
        %v3686 = vpack.c.b16 %v3677, %v3676
        %v3687 = vpack.c.b16 %v3679, %v3678
        %3696 = vmatprep.subr.bf16.mxu0 0
        %3697 = vmatpush1.bf16.msra.mxu0 %v3680
        %3698 = vmatprep.subr.bf16.mxu0 0
        %3699 = vmatpush1.bf16.msra.mxu0 %v3681
        %3700 = vmatprep.subr.bf16.mxu0 0
        %3701 = vmatpush1.bf16.msra.mxu0 %v3682
        %3702 = vmatprep.subr.bf16.mxu0 0
        %3703 = vmatpush1.bf16.msra.mxu0 %v3683
        %3704 = vmatprep.subr.bf16.mxu0 0
        %3705 = vmatpush1.bf16.msra.mxu0 %v3684
        %3706 = vmatprep.subr.bf16.mxu0 0
        %3707 = vmatpush1.bf16.msra.mxu0 %v3685
        %3708 = vmatprep.subr.bf16.mxu0 0
        %3709 = vmatpush1.bf16.msra.mxu0 %v3686
        %3710 = vmatprep.subr.bf16.mxu0 0
        %3711 = vmatpush1.bf16.msra.mxu0 %v3687
        %3712 = vmatprep.subr.bf16.mxu0 0
        %3713 = vmatpush1.bf16.msra.mxu0 0
        %3714 = vmatprep.subr.bf16.mxu0 0
        %3715 = vmatpush1.bf16.msra.mxu0 0
        %3716 = vmatprep.subr.bf16.mxu0 0
        %3717 = vmatpush1.bf16.msra.mxu0 0
        %3718 = vmatprep.subr.bf16.mxu0 0
        %3719 = vmatpush1.bf16.msra.mxu0 0
        %3720 = vmatprep.subr.bf16.mxu0 0
        %3721 = vmatpush1.bf16.msra.mxu0 0
        %3722 = vmatprep.subr.bf16.mxu0 0
        %3723 = vmatpush1.bf16.msra.mxu0 0
        %3724 = vmatprep.subr.bf16.mxu0 0
        %3725 = vmatpush1.bf16.msra.mxu0 0
        %3726 = vmatprep.subr.bf16.mxu0 0
        %3727 = vmatpush1.bf16.msra.mxu0 0
        %3728 = vmatprep.mubr.bf16.mxu0 0
        %3729 = vmatmul.mubr.bf16.gmra.mrb[0].mxu0 %v3628
        %v3730 = vpop.f32.mrb[0].mxu0
        %v3731 = vadd.f32 0.0, %v3730
        %v3732 = vpop.f32.mrb[0].mxu0
        %v3733 = vpop.f32.mrb[0].mxu0
        %v3734 = vadd.f32 0.0, %v3733
        %v3735 = vpop.f32.mrb[0].mxu0
        %3736 = vmatprep.mubr.bf16.mxu0 0
        %3737 = vmatmul.mubr.bf16.gmra.mrb[0].mxu0 %v3629
        %v3738 = vpop.f32.mrb[0].mxu0
        %v3739 = vadd.f32 0.0, %v3738
        %v3740 = vpop.f32.mrb[0].mxu0
        %v3741 = vpop.f32.mrb[0].mxu0
        %v3742 = vadd.f32 0.0, %v3741
        %v3743 = vpop.f32.mrb[0].mxu0
        %3744 = vmatprep.mubr.bf16.mxu0 0
        %3745 = vmatmul.mubr.bf16.gmra.mrb[0].mxu0 %v3630
        %v3746 = vpop.f32.mrb[0].mxu0
        %v3747 = vadd.f32 0.0, %v3746
        %v3748 = vpop.f32.mrb[0].mxu0
        %v3749 = vpop.f32.mrb[0].mxu0
        %v3750 = vadd.f32 0.0, %v3749
        %v3751 = vpop.f32.mrb[0].mxu0
        %3752 = vmatprep.mubr.bf16.mxu0 0
        %3753 = vmatmul.mubr.bf16.gmra.mrb[0].mxu0 %v3631
        %v3754 = vpop.f32.mrb[0].mxu0
        %v3755 = vadd.f32 0.0, %v3754
        %v3756 = vpop.f32.mrb[0].mxu0
        %v3757 = vpop.f32.mrb[0].mxu0
        %v3758 = vadd.f32 0.0, %v3757
        %v3759 = vpop.f32.mrb[0].mxu0
        %3760 = vmatprep.mubr.bf16.mxu0 0
        %3761 = vmatmul.mubr.bf16.gmra.mrb[0].mxu0 %v3632
        %v3762 = vpop.f32.mrb[0].mxu0
        %v3763 = vadd.f32 0.0, %v3762
        %v3764 = vpop.f32.mrb[0].mxu0
        %v3765 = vpop.f32.mrb[0].mxu0
        %v3766 = vadd.f32 0.0, %v3765
        %v3767 = vpop.f32.mrb[0].mxu0
        %3768 = vmatprep.mubr.bf16.mxu0 0
        %3769 = vmatmul.mubr.bf16.gmra.mrb[0].mxu0 %v3633
        %v3770 = vpop.f32.mrb[0].mxu0
        %v3771 = vadd.f32 0.0, %v3770
        %v3772 = vpop.f32.mrb[0].mxu0
        %v3773 = vpop.f32.mrb[0].mxu0
        %v3774 = vadd.f32 0.0, %v3773
        %v3775 = vpop.f32.mrb[0].mxu0
        %3776 = vmatprep.mubr.bf16.mxu0 0
        %3777 = vmatmul.mubr.bf16.gmra.mrb[0].mxu0 %v3634
        %v3778 = vpop.f32.mrb[0].mxu0
        %v3779 = vadd.f32 0.0, %v3778
        %v3780 = vpop.f32.mrb[0].mxu0
        %v3781 = vpop.f32.mrb[0].mxu0
        %v3782 = vadd.f32 0.0, %v3781
        %v3783 = vpop.f32.mrb[0].mxu0
        %3784 = vmatprep.mubr.bf16.mxu0 0
        %3785 = vmatmul.mubr.bf16.gmra.mrb[0].mxu0 %v3635
        %v3786 = vpop.f32.mrb[0].mxu0
        %v3787 = vadd.f32 0.0, %v3786
        %v3788 = vpop.f32.mrb[0].mxu0
        %v3789 = vpop.f32.mrb[0].mxu0
        %v3790 = vadd.f32 0.0, %v3789
        %v3791 = vpop.f32.mrb[0].mxu0
        %3792 = vmatprep.mubr.bf16.mxu0 0
        %3793 = vmatmul.mubr.bf16.gmra.mrb[0].mxu0 %v3636
        %v3794 = vpop.f32.mrb[0].mxu0
        %v3795 = vadd.f32 0.0, %v3794
        %v3796 = vpop.f32.mrb[0].mxu0
        %v3797 = vpop.f32.mrb[0].mxu0
        %v3798 = vadd.f32 0.0, %v3797
        %v3799 = vpop.f32.mrb[0].mxu0
        %3800 = vmatprep.mubr.bf16.mxu0 0
        %3801 = vmatmul.mubr.bf16.gmra.mrb[0].mxu0 %v3637
        %v3802 = vpop.f32.mrb[0].mxu0
        %v3803 = vadd.f32 0.0, %v3802
        %v3804 = vpop.f32.mrb[0].mxu0
        %v3805 = vpop.f32.mrb[0].mxu0
        %v3806 = vadd.f32 0.0, %v3805
        %v3807 = vpop.f32.mrb[0].mxu0
        %3808 = vdwg.mxu0
        %v3809 = vadd.f32 %v3461, %v3731
        %v3810 = vadd.f32 %v3462, %v3734
        %v3811 = vadd.f32 %v3463, %v3739
        %v3812 = vadd.f32 %v3464, %v3742
        %v3813 = vadd.f32 %v3465, %v3747
        %v3814 = vadd.f32 %v3466, %v3750
        %v3815 = vadd.f32 %v3467, %v3755
        %v3816 = vadd.f32 %v3468, %v3758
        %v3817 = vadd.f32 %v3469, %v3763
        %v3818 = vadd.f32 %v3470, %v3766
        %v3819 = vadd.f32 %v3471, %v3771
        %v3820 = vadd.f32 %v3472, %v3774
        %v3821 = vadd.f32 %v3473, %v3779
        %v3822 = vadd.f32 %v3474, %v3782
        %v3823 = vadd.f32 %v3475, %v3787
        %v3824 = vadd.f32 %v3476, %v3790
        %v3825 = vadd.f32 %v3477, %v3795
        %v3826 = vadd.f32 %v3478, %v3798
        %v3827 = vadd.f32 %v3479, %v3803
        %v3828 = vadd.f32 %v3480, %v3806
        %v3829 = vld [vmem:[%s5] sm:$0x1]
        %v3831 = vlaneseq
        %v3832 = vshrl.u32 %v3831, 7
        %v3833 = vsub.s32 0, %v3832
        %v3834 = vrot.slane %v3829, %v3833
        %v3836 = vadd.f32 %v3809, %v3834
        %v3837 = vadd.f32 %v3810, %v3834
        %v3838 = vadd.f32 %v3811, %v3834
        %v3839 = vadd.f32 %v3812, %v3834
        %v3840 = vadd.f32 %v3813, %v3834
        %v3841 = vadd.f32 %v3814, %v3834
        %v3842 = vadd.f32 %v3815, %v3834
        %v3843 = vadd.f32 %v3816, %v3834
        %v3844 = vadd.f32 %v3817, %v3834
        %v3845 = vadd.f32 %v3818, %v3834
        %v3846 = vadd.f32 %v3819, %v3834
        %v3847 = vadd.f32 %v3820, %v3834
        %v3848 = vadd.f32 %v3821, %v3834
        %v3849 = vadd.f32 %v3822, %v3834
        %v3850 = vadd.f32 %v3823, %v3834
        %v3851 = vadd.f32 %v3824, %v3834
        %v3852 = vadd.f32 %v3825, %v3834
        %v3853 = vadd.f32 %v3826, %v3834
        %v3854 = vadd.f32 %v3827, %v3834
        %v3855 = vadd.f32 %v3828, %v3834
        %v3856 = vmax.f32 %v3836, 0.0
        %v3857 = vmax.f32 %v3837, 0.0
        %v3858 = vmax.f32 %v3838, 0.0
        %v3859 = vmax.f32 %v3839, 0.0
        %v3860 = vmax.f32 %v3840, 0.0
        %v3861 = vmax.f32 %v3841, 0.0
        %v3862 = vmax.f32 %v3842, 0.0
        %v3863 = vmax.f32 %v3843, 0.0
        %v3864 = vmax.f32 %v3844, 0.0
        %v3865 = vmax.f32 %v3845, 0.0
        %v3866 = vmax.f32 %v3846, 0.0
        %v3867 = vmax.f32 %v3847, 0.0
        %v3868 = vmax.f32 %v3848, 0.0
        %v3869 = vmax.f32 %v3849, 0.0
        %v3870 = vmax.f32 %v3850, 0.0
        %v3871 = vmax.f32 %v3851, 0.0
        %v3872 = vmax.f32 %v3852, 0.0
        %v3873 = vmax.f32 %v3853, 0.0
        %v3874 = vmax.f32 %v3854, 0.0
        %v3875 = vmax.f32 %v3855, 0.0
        %vm3876 = vcmask 1040384
        %vm3877 = vsmask.f32 256
        %vm3878 = vmand %vm3876, %vm3877
        %v3879 = vld [vmem:[#allocation3] sm:$0x1]
        %v3880 = vsel %vm3878, 0, %v3879
        %3881 = vst [vmem:[#allocation3] sm:$0x1] %v3880
        %v3882 = vld [vmem:[#allocation3 + $0xc] sm:$0x1]
        %v3883 = vsel %vm3878, 0, %v3882
        %3884 = vst [vmem:[#allocation3 + $0xc] sm:$0x1] %v3883
        %v3885 = vld [vmem:[#allocation3 + $0x18] sm:$0x1]
        %v3886 = vsel %vm3878, 0, %v3885
        %3887 = vst [vmem:[#allocation3 + $0x18] sm:$0x1] %v3886
        %v3888 = vld [vmem:[#allocation3 + $0x24] sm:$0x1]
        %v3889 = vsel %vm3878, 0, %v3888
        %3890 = vst [vmem:[#allocation3 + $0x24] sm:$0x1] %v3889
        %v3891 = vld [vmem:[#allocation3 + $0x30] sm:$0x1]
        %v3892 = vsel %vm3878, 0, %v3891
        %3893 = vst [vmem:[#allocation3 + $0x30] sm:$0x1] %v3892
        %v3894 = vld [vmem:[#allocation3 + $0x3c] sm:$0x1]
        %v3895 = vsel %vm3878, 0, %v3894
        %3896 = vst [vmem:[#allocation3 + $0x3c] sm:$0x1] %v3895
        %v3897 = vld [vmem:[#allocation3 + $0x48] sm:$0x1]
        %v3898 = vsel %vm3878, 0, %v3897
        %3899 = vst [vmem:[#allocation3 + $0x48] sm:$0x1] %v3898
        %v3900 = vld [vmem:[#allocation3 + $0x54] sm:$0x1]
        %v3901 = vsel %vm3878, 0, %v3900
        %3902 = vst [vmem:[#allocation3 + $0x54] sm:$0x1] %v3901
        %v3903 = vld [vmem:[#allocation3 + $0x60] sm:$0x1]
        %v3904 = vsel %vm3878, 0, %v3903
        %3905 = vst [vmem:[#allocation3 + $0x60] sm:$0x1] %v3904
        %v3906 = vld [vmem:[#allocation3 + $0x6c] sm:$0x1]
        %v3907 = vsel %vm3878, 0, %v3906
        %3908 = vst [vmem:[#allocation3 + $0x6c] sm:$0x1] %v3907
        %vm3909 = vsmask.f32 7938
        %vm3910 = vmand %vm3876, %vm3909
        %v3911 = vld [vmem:[#allocation3 + $0x8] sm:$0x1]
        %v3912 = vsel %vm3910, 0, %v3911
        %3913 = vst [vmem:[#allocation3 + $0x8] sm:$0x1] %v3912
        %v3914 = vld [vmem:[#allocation3 + $0x14] sm:$0x1]
        %v3915 = vsel %vm3910, 0, %v3914
        %3916 = vst [vmem:[#allocation3 + $0x14] sm:$0x1] %v3915
        %v3917 = vld [vmem:[#allocation3 + $0x20] sm:$0x1]
        %v3918 = vsel %vm3910, 0, %v3917
        %3919 = vst [vmem:[#allocation3 + $0x20] sm:$0x1] %v3918
        %v3920 = vld [vmem:[#allocation3 + $0x2c] sm:$0x1]
        %v3921 = vsel %vm3910, 0, %v3920
        %3922 = vst [vmem:[#allocation3 + $0x2c] sm:$0x1] %v3921
        %v3923 = vld [vmem:[#allocation3 + $0x38] sm:$0x1]
        %v3924 = vsel %vm3910, 0, %v3923
        %3925 = vst [vmem:[#allocation3 + $0x38] sm:$0x1] %v3924
        %v3926 = vld [vmem:[#allocation3 + $0x44] sm:$0x1]
        %v3927 = vsel %vm3910, 0, %v3926
        %3928 = vst [vmem:[#allocation3 + $0x44] sm:$0x1] %v3927
        %v3929 = vld [vmem:[#allocation3 + $0x50] sm:$0x1]
        %v3930 = vsel %vm3910, 0, %v3929
        %3931 = vst [vmem:[#allocation3 + $0x50] sm:$0x1] %v3930
        %v3932 = vld [vmem:[#allocation3 + $0x5c] sm:$0x1]
        %v3933 = vsel %vm3910, 0, %v3932
        %3934 = vst [vmem:[#allocation3 + $0x5c] sm:$0x1] %v3933
        %v3935 = vld [vmem:[#allocation3 + $0x68] sm:$0x1]
        %v3936 = vsel %vm3910, 0, %v3935
        %3937 = vst [vmem:[#allocation3 + $0x68] sm:$0x1] %v3936
        %v3938 = vld [vmem:[#allocation3 + $0x74] sm:$0x1]
        %v3939 = vsel %vm3910, 0, %v3938
        %3940 = vst [vmem:[#allocation3 + $0x74] sm:$0x1] %v3939
        %v3941 = vpack.c.bf16 %v3857, %v3856
        %v3942 = vpack.c.bf16 %v3859, %v3858
        %v3943 = vpack.c.bf16 %v3861, %v3860
        %v3944 = vpack.c.bf16 %v3863, %v3862
        %v3945 = vpack.c.bf16 %v3865, %v3864
        %v3946 = vpack.c.bf16 %v3867, %v3866
        %v3947 = vpack.c.bf16 %v3869, %v3868
        %v3948 = vpack.c.bf16 %v3871, %v3870
        %v3949 = vpack.c.bf16 %v3873, %v3872
        %v3950 = vpack.c.bf16 %v3875, %v3874
        %v3961 = vunpack.c.l.b16 %v3941
        %v3962 = vunpack.c.h.b16 %v3941
        %v3963 = vunpack.c.l.b16 %v3942
        %v3964 = vunpack.c.h.b16 %v3942
        %v3965 = vunpack.c.l.b16 %v3943
        %v3966 = vunpack.c.h.b16 %v3943
        %v3967 = vunpack.c.l.b16 %v3944
        %v3968 = vunpack.c.h.b16 %v3944
        %v3969 = vunpack.c.l.b16 %v3945
        %v3970 = vunpack.c.h.b16 %v3945
        %v3971 = vunpack.c.l.b16 %v3946
        %v3972 = vunpack.c.h.b16 %v3946
        %v3973 = vunpack.c.l.b16 %v3947
        %v3974 = vunpack.c.h.b16 %v3947
        %v3975 = vunpack.c.l.b16 %v3948
        %v3976 = vunpack.c.h.b16 %v3948
        %v3977 = vunpack.c.l.b16 %v3949
        %v3978 = vunpack.c.h.b16 %v3949
        %v3979 = vunpack.c.l.b16 %v3950
        %v3980 = vunpack.c.h.b16 %v3950
        %v3981 = vpack.c.b16 %v3961, %v3961
        %v3982 = vpack.c.b16 %v3962, %v3962
        %v3983 = vpack.c.b16 %v3963, %v3963
        %v3984 = vpack.c.b16 %v3964, %v3964
        %v3985 = vpack.c.b16 %v3965, %v3965
        %v3986 = vpack.c.b16 %v3966, %v3966
        %v3987 = vpack.c.b16 %v3967, %v3967
        %v3988 = vpack.c.b16 %v3968, %v3968
        %v3989 = vpack.c.b16 %v3969, %v3969
        %v3990 = vpack.c.b16 %v3970, %v3970
        %v3991 = vpack.c.b16 %v3971, %v3971
        %v3992 = vpack.c.b16 %v3972, %v3972
        %v3993 = vpack.c.b16 %v3973, %v3973
        %v3994 = vpack.c.b16 %v3974, %v3974
        %v3995 = vpack.c.b16 %v3975, %v3975
        %v3996 = vpack.c.b16 %v3976, %v3976
        %v3997 = vpack.c.b16 %v3977, %v3977
        %v3998 = vpack.c.b16 %v3978, %v3978
        %v3999 = vpack.c.b16 %v3979, %v3979
        %v4000 = vpack.c.b16 %v3980, %v3980
        %vm4001 = vsmask.f32 4368
        %vm4002 = vmor %vm3877, %vm4001
        %v4004 = vshrl.u32 %v3981, 16
        %v4006 = vrot.slane %v4004, 7
        %v4007 = vshll.u32 %v3981, 16
        %v4009 = vor.u32 %v4006, %v4007
        %v4010 = vrot.slane %v4006, 4
        %v4012 = vshrl.u32 %v3982, 16
        %v4014 = vrot.slane %v4012, 7
        %v4015 = vshll.u32 %v3982, 16
        %v4017 = vor.u32 %v4014, %v4015
        %v4018 = vsel %vm4002, %v4010, %v4017
        %v4019 = vrot.slane %v4014, 4
        %v4021 = vshrl.u32 %v3983, 16
        %v4023 = vrot.slane %v4021, 7
        %v4024 = vshll.u32 %v3983, 16
        %v4026 = vor.u32 %v4023, %v4024
        %v4027 = vrot.slane %v4023, 4
        %v4029 = vshrl.u32 %v3984, 16
        %v4031 = vrot.slane %v4029, 7
        %v4032 = vshll.u32 %v3984, 16
        %v4034 = vor.u32 %v4031, %v4032
        %v4035 = vsel %vm4002, %v4027, %v4034
        %v4036 = vrot.slane %v4031, 4
        %v4038 = vshrl.u32 %v3985, 16
        %v4040 = vrot.slane %v4038, 7
        %v4041 = vshll.u32 %v3985, 16
        %v4043 = vor.u32 %v4040, %v4041
        %v4044 = vrot.slane %v4040, 4
        %v4046 = vshrl.u32 %v3986, 16
        %v4048 = vrot.slane %v4046, 7
        %v4049 = vshll.u32 %v3986, 16
        %v4051 = vor.u32 %v4048, %v4049
        %v4052 = vsel %vm4002, %v4044, %v4051
        %v4053 = vrot.slane %v4048, 4
        %v4055 = vshrl.u32 %v3987, 16
        %v4057 = vrot.slane %v4055, 7
        %v4058 = vshll.u32 %v3987, 16
        %v4060 = vor.u32 %v4057, %v4058
        %v4061 = vrot.slane %v4057, 4
        %v4063 = vshrl.u32 %v3988, 16
        %v4065 = vrot.slane %v4063, 7
        %v4066 = vshll.u32 %v3988, 16
        %v4068 = vor.u32 %v4065, %v4066
        %v4069 = vsel %vm4002, %v4061, %v4068
        %v4070 = vrot.slane %v4065, 4
        %v4072 = vshrl.u32 %v3989, 16
        %v4074 = vrot.slane %v4072, 7
        %v4075 = vshll.u32 %v3989, 16
        %v4077 = vor.u32 %v4074, %v4075
        %v4078 = vrot.slane %v4074, 4
        %v4080 = vshrl.u32 %v3990, 16
        %v4082 = vrot.slane %v4080, 7
        %v4083 = vshll.u32 %v3990, 16
        %v4085 = vor.u32 %v4082, %v4083
        %v4086 = vsel %vm4002, %v4078, %v4085
        %v4087 = vrot.slane %v4082, 4
        %v4089 = vshrl.u32 %v3991, 16
        %v4091 = vrot.slane %v4089, 7
        %v4092 = vshll.u32 %v3991, 16
        %v4094 = vor.u32 %v4091, %v4092
        %v4095 = vrot.slane %v4091, 4
        %v4097 = vshrl.u32 %v3992, 16
        %v4099 = vrot.slane %v4097, 7
        %v4100 = vshll.u32 %v3992, 16
        %v4102 = vor.u32 %v4099, %v4100
        %v4103 = vsel %vm4002, %v4095, %v4102
        %v4104 = vrot.slane %v4099, 4
        %v4106 = vshrl.u32 %v3993, 16
        %v4108 = vrot.slane %v4106, 7
        %v4109 = vshll.u32 %v3993, 16
        %v4111 = vor.u32 %v4108, %v4109
        %v4112 = vrot.slane %v4108, 4
        %v4114 = vshrl.u32 %v3994, 16
        %v4116 = vrot.slane %v4114, 7
        %v4117 = vshll.u32 %v3994, 16
        %v4119 = vor.u32 %v4116, %v4117
        %v4120 = vsel %vm4002, %v4112, %v4119
        %v4121 = vrot.slane %v4116, 4
        %v4123 = vshrl.u32 %v3995, 16
        %v4125 = vrot.slane %v4123, 7
        %v4126 = vshll.u32 %v3995, 16
        %v4128 = vor.u32 %v4125, %v4126
        %v4129 = vrot.slane %v4125, 4
        %v4131 = vshrl.u32 %v3996, 16
        %v4133 = vrot.slane %v4131, 7
        %v4134 = vshll.u32 %v3996, 16
        %v4136 = vor.u32 %v4133, %v4134
        %v4137 = vsel %vm4002, %v4129, %v4136
        %v4138 = vrot.slane %v4133, 4
        %v4140 = vshrl.u32 %v3997, 16
        %v4142 = vrot.slane %v4140, 7
        %v4143 = vshll.u32 %v3997, 16
        %v4145 = vor.u32 %v4142, %v4143
        %v4146 = vrot.slane %v4142, 4
        %v4148 = vshrl.u32 %v3998, 16
        %v4150 = vrot.slane %v4148, 7
        %v4151 = vshll.u32 %v3998, 16
        %v4153 = vor.u32 %v4150, %v4151
        %v4154 = vsel %vm4002, %v4146, %v4153
        %v4155 = vrot.slane %v4150, 4
        %v4157 = vshrl.u32 %v3999, 16
        %v4159 = vrot.slane %v4157, 7
        %v4160 = vshll.u32 %v3999, 16
        %v4162 = vor.u32 %v4159, %v4160
        %v4163 = vrot.slane %v4159, 4
        %v4165 = vshrl.u32 %v4000, 16
        %v4167 = vrot.slane %v4165, 7
        %v4168 = vshll.u32 %v4000, 16
        %v4170 = vor.u32 %v4167, %v4168
        %v4171 = vsel %vm4002, %v4163, %v4170
        %v4172 = vrot.slane %v4167, 4
        %vm4203 = vcmask 1043456
        %vm4204 = vmand %vm4203, %vm3909
        %v4205 = vld [vmem:[#allocation3] sm:$0xf]
        %v4206 = vsel %vm4204, %v4009, %v4205
        %4207 = vst [vmem:[#allocation3] sm:$0xf] %v4206
        %4208 = vst [vmem:[#allocation3 + $0x4] sm:$0xf] %v4018
        %v4209 = vld [vmem:[#allocation3 + $0x8] sm:$0x1]
        %v4210 = vsel %vm3878, %v4019, %v4209
        %4211 = vst [vmem:[#allocation3 + $0x8] sm:$0x1] %v4210
        %v4212 = vld [vmem:[#allocation3 + $0xc] sm:$0xf]
        %v4213 = vsel %vm4204, %v4026, %v4212
        %4214 = vst [vmem:[#allocation3 + $0xc] sm:$0xf] %v4213
        %4215 = vst [vmem:[#allocation3 + $0x10] sm:$0xf] %v4035
        %v4216 = vld [vmem:[#allocation3 + $0x14] sm:$0x1]
        %v4217 = vsel %vm3878, %v4036, %v4216
        %4218 = vst [vmem:[#allocation3 + $0x14] sm:$0x1] %v4217
        %v4219 = vld [vmem:[#allocation3 + $0x18] sm:$0xf]
        %v4220 = vsel %vm4204, %v4043, %v4219
        %4221 = vst [vmem:[#allocation3 + $0x18] sm:$0xf] %v4220
        %4222 = vst [vmem:[#allocation3 + $0x1c] sm:$0xf] %v4052
        %v4223 = vld [vmem:[#allocation3 + $0x20] sm:$0x1]
        %v4224 = vsel %vm3878, %v4053, %v4223
        %4225 = vst [vmem:[#allocation3 + $0x20] sm:$0x1] %v4224
        %v4226 = vld [vmem:[#allocation3 + $0x24] sm:$0xf]
        %v4227 = vsel %vm4204, %v4060, %v4226
        %4228 = vst [vmem:[#allocation3 + $0x24] sm:$0xf] %v4227
        %4229 = vst [vmem:[#allocation3 + $0x28] sm:$0xf] %v4069
        %v4230 = vld [vmem:[#allocation3 + $0x2c] sm:$0x1]
        %v4231 = vsel %vm3878, %v4070, %v4230
        %4232 = vst [vmem:[#allocation3 + $0x2c] sm:$0x1] %v4231
        %v4233 = vld [vmem:[#allocation3 + $0x30] sm:$0xf]
        %v4234 = vsel %vm4204, %v4077, %v4233
        %4235 = vst [vmem:[#allocation3 + $0x30] sm:$0xf] %v4234
        %4236 = vst [vmem:[#allocation3 + $0x34] sm:$0xf] %v4086
        %v4237 = vld [vmem:[#allocation3 + $0x38] sm:$0x1]
        %v4238 = vsel %vm3878, %v4087, %v4237
        %4239 = vst [vmem:[#allocation3 + $0x38] sm:$0x1] %v4238
        %v4240 = vld [vmem:[#allocation3 + $0x3c] sm:$0xf]
        %v4241 = vsel %vm4204, %v4094, %v4240
        %4242 = vst [vmem:[#allocation3 + $0x3c] sm:$0xf] %v4241
        %4243 = vst [vmem:[#allocation3 + $0x40] sm:$0xf] %v4103
        %v4244 = vld [vmem:[#allocation3 + $0x44] sm:$0x1]
        %v4245 = vsel %vm3878, %v4104, %v4244
        %4246 = vst [vmem:[#allocation3 + $0x44] sm:$0x1] %v4245
        %v4247 = vld [vmem:[#allocation3 + $0x48] sm:$0xf]
        %v4248 = vsel %vm4204, %v4111, %v4247
        %4249 = vst [vmem:[#allocation3 + $0x48] sm:$0xf] %v4248
        %4250 = vst [vmem:[#allocation3 + $0x4c] sm:$0xf] %v4120
        %v4251 = vld [vmem:[#allocation3 + $0x50] sm:$0x1]
        %v4252 = vsel %vm3878, %v4121, %v4251
        %4253 = vst [vmem:[#allocation3 + $0x50] sm:$0x1] %v4252
        %v4254 = vld [vmem:[#allocation3 + $0x54] sm:$0xf]
        %v4255 = vsel %vm4204, %v4128, %v4254
        %4256 = vst [vmem:[#allocation3 + $0x54] sm:$0xf] %v4255
        %4257 = vst [vmem:[#allocation3 + $0x58] sm:$0xf] %v4137
        %v4258 = vld [vmem:[#allocation3 + $0x5c] sm:$0x1]
        %v4259 = vsel %vm3878, %v4138, %v4258
        %4260 = vst [vmem:[#allocation3 + $0x5c] sm:$0x1] %v4259
        %v4261 = vld [vmem:[#allocation3 + $0x60] sm:$0xf]
        %v4262 = vsel %vm4204, %v4145, %v4261
        %4263 = vst [vmem:[#allocation3 + $0x60] sm:$0xf] %v4262
        %4264 = vst [vmem:[#allocation3 + $0x64] sm:$0xf] %v4154
        %v4265 = vld [vmem:[#allocation3 + $0x68] sm:$0x1]
        %v4266 = vsel %vm3878, %v4155, %v4265
        %4267 = vst [vmem:[#allocation3 + $0x68] sm:$0x1] %v4266
        %v4268 = vld [vmem:[#allocation3 + $0x6c] sm:$0xf]
        %v4269 = vsel %vm4204, %v4162, %v4268
        %4270 = vst [vmem:[#allocation3 + $0x6c] sm:$0xf] %v4269
        %4271 = vst [vmem:[#allocation3 + $0x70] sm:$0xf] %v4171
        %v4272 = vld [vmem:[#allocation3 + $0x74] sm:$0x1]
        %v4273 = vsel %vm3878, %v4172, %v4272
        %4274 = vst [vmem:[#allocation3 + $0x74] sm:$0x1] %v4273
        %p4275 = scmp.eq.s32.totalorder %s27, 0
        // Predicated region
        $region53: #{tpu_custom_call.1} parent=51 // pred_check
          %p4276 = pneg %p4275
        $region54: #{tpu_custom_call.1} parent=51 // pred_check_branch
          %4278 = sbr.rel (%p4276) target = $region56
        $region55: #{tpu_custom_call.1} parent=51 // pred_region
          %4279 = vst [vmem:[#allocation3] sm:$0xf] 0
          %4280 = vst [vmem:[#allocation3 + $0x4] sm:$0xf] 0
          %4281 = vst [vmem:[#allocation3 + $0x8] sm:$0x1] 0
        $region56: #{tpu_custom_call.1} parent=51 // pred_fallthru
          _
        %p4282 = scmp.eq.s32.totalorder %s27, 1
        // Predicated region
        $region57: #{tpu_custom_call.1} parent=51 // pred_check
          %p4283 = pneg %p4282
        $region58: #{tpu_custom_call.1} parent=51 // pred_check_branch
          %4285 = sbr.rel (%p4283) target = $region60
        $region59: #{tpu_custom_call.1} parent=51 // pred_region
          %s4286 = scalar_lea.vmem [#allocation3], 108
          %4287 = vst [vmem:[%s4286] sm:$0xf] 0
          %4288 = vst [vmem:[%s4286 + $0x4] sm:$0xf] 0
          %4289 = vst [vmem:[%s4286 + $0x8] sm:$0x1] 0
        $region60: #{tpu_custom_call.1} parent=51 // pred_fallthru
          _
        %v4290 = vld [vmem:[#allocation3] sm:$0xf]
        %v4291 = vld [vmem:[#allocation3 + $0x4] sm:$0xf]
        %v4292 = vld [vmem:[#allocation3 + $0xc] sm:$0xf]
        %v4293 = vld [vmem:[#allocation3 + $0x10] sm:$0xf]
        %v4294 = vld [vmem:[#allocation3 + $0x18] sm:$0xf]
        %v4295 = vld [vmem:[#allocation3 + $0x1c] sm:$0xf]
        %v4296 = vld [vmem:[#allocation3 + $0x24] sm:$0xf]
        %v4297 = vld [vmem:[#allocation3 + $0x28] sm:$0xf]
        %v4298 = vld [vmem:[#allocation3 + $0x30] sm:$0xf]
        %v4299 = vld [vmem:[#allocation3 + $0x34] sm:$0xf]
        %v4300 = vld [vmem:[#allocation3 + $0x3c] sm:$0xf]
        %v4301 = vld [vmem:[#allocation3 + $0x40] sm:$0xf]
        %v4302 = vld [vmem:[#allocation3 + $0x48] sm:$0xf]
        %v4303 = vld [vmem:[#allocation3 + $0x4c] sm:$0xf]
        %v4304 = vld [vmem:[#allocation3 + $0x54] sm:$0xf]
        %v4305 = vld [vmem:[#allocation3 + $0x58] sm:$0xf]
        %v4306 = vld [vmem:[%s3] sm:$0xf]
        %v4307 = vld [vmem:[%s3 + $0x4] sm:$0xf]
        %v4308 = vld [vmem:[%s3 + $0x8] sm:$0xf]
        %v4309 = vld [vmem:[%s3 + $0xc] sm:$0xf]
        %v4310 = vld [vmem:[%s3 + $0x10] sm:$0xf]
        %v4311 = vld [vmem:[%s3 + $0x14] sm:$0xf]
        %v4312 = vld [vmem:[%s3 + $0x18] sm:$0xf]
        %v4313 = vld [vmem:[%s3 + $0x1c] sm:$0xf]
        %v4314 = vld [vmem:[%s3 + $0x20] sm:$0xf]
        %v4315 = vld [vmem:[%s3 + $0x24] sm:$0xf]
        %v4316 = vld [vmem:[%s3 + $0x28] sm:$0xf]
        %v4317 = vld [vmem:[%s3 + $0x2c] sm:$0xf]
        %v4318 = vld [vmem:[%s3 + $0x30] sm:$0xf]
        %v4319 = vld [vmem:[%s3 + $0x34] sm:$0xf]
        %v4320 = vld [vmem:[%s3 + $0x38] sm:$0xf]
        %v4321 = vld [vmem:[%s3 + $0x3c] sm:$0xf]
        %v4322 = vld [vmem:[#allocation3 + $0x8] sm:$0x1]
        %v4323 = vld [vmem:[#allocation3 + $0x14] sm:$0x1]
        %v4324 = vld [vmem:[#allocation3 + $0x20] sm:$0x1]
        %v4325 = vld [vmem:[#allocation3 + $0x2c] sm:$0x1]
        %v4326 = vld [vmem:[#allocation3 + $0x38] sm:$0x1]
        %v4327 = vld [vmem:[#allocation3 + $0x44] sm:$0x1]
        %v4328 = vld [vmem:[#allocation3 + $0x50] sm:$0x1]
        %v4329 = vld [vmem:[#allocation3 + $0x5c] sm:$0x1]
        %v4331 = vshrl.u32 %v4290, 16
        %v4333 = vrot.slane %v4331, 4
        %v4334 = vshll.u32 %v4290, 16
        %v4336 = vrot.slane %v4334, 5
        %v4337 = vor.u32 %v4333, %v4336
        %v4338 = vrot.slane %v4337, 4
        %v4340 = vshll.u32 %v4291, 16
        %v4342 = vrot.slane %v4340, 5
        %v4343 = vsel %vm538, %v4338, %v4342
        %v4344 = vshrl.u32 %v4291, 16
        %v4346 = vrot.slane %v4344, 4
        %v4347 = vor.u32 %v4346, %v4342
        %v4348 = vrot.slane %v4347, 4
        %v4350 = vshll.u32 %v4322, 16
        %v4352 = vrot.slane %v4350, 5
        %v4353 = vsel %vm538, %v4348, %v4352
        %v4355 = vshrl.u32 %v4292, 16
        %v4357 = vrot.slane %v4355, 4
        %v4358 = vshll.u32 %v4292, 16
        %v4360 = vrot.slane %v4358, 5
        %v4361 = vor.u32 %v4357, %v4360
        %v4362 = vrot.slane %v4361, 4
        %v4364 = vshll.u32 %v4293, 16
        %v4366 = vrot.slane %v4364, 5
        %v4367 = vsel %vm538, %v4362, %v4366
        %v4368 = vshrl.u32 %v4293, 16
        %v4370 = vrot.slane %v4368, 4
        %v4371 = vor.u32 %v4370, %v4366
        %v4372 = vrot.slane %v4371, 4
        %v4374 = vshll.u32 %v4323, 16
        %v4376 = vrot.slane %v4374, 5
        %v4377 = vsel %vm538, %v4372, %v4376
        %v4379 = vshrl.u32 %v4294, 16
        %v4381 = vrot.slane %v4379, 4
        %v4382 = vshll.u32 %v4294, 16
        %v4384 = vrot.slane %v4382, 5
        %v4385 = vor.u32 %v4381, %v4384
        %v4386 = vrot.slane %v4385, 4
        %v4388 = vshll.u32 %v4295, 16
        %v4390 = vrot.slane %v4388, 5
        %v4391 = vsel %vm538, %v4386, %v4390
        %v4392 = vshrl.u32 %v4295, 16
        %v4394 = vrot.slane %v4392, 4
        %v4395 = vor.u32 %v4394, %v4390
        %v4396 = vrot.slane %v4395, 4
        %v4398 = vshll.u32 %v4324, 16
        %v4400 = vrot.slane %v4398, 5
        %v4401 = vsel %vm538, %v4396, %v4400
        %v4403 = vshrl.u32 %v4296, 16
        %v4405 = vrot.slane %v4403, 4
        %v4406 = vshll.u32 %v4296, 16
        %v4408 = vrot.slane %v4406, 5
        %v4409 = vor.u32 %v4405, %v4408
        %v4410 = vrot.slane %v4409, 4
        %v4412 = vshll.u32 %v4297, 16
        %v4414 = vrot.slane %v4412, 5
        %v4415 = vsel %vm538, %v4410, %v4414
        %v4416 = vshrl.u32 %v4297, 16
        %v4418 = vrot.slane %v4416, 4
        %v4419 = vor.u32 %v4418, %v4414
        %v4420 = vrot.slane %v4419, 4
        %v4422 = vshll.u32 %v4325, 16
        %v4424 = vrot.slane %v4422, 5
        %v4425 = vsel %vm538, %v4420, %v4424
        %v4427 = vshrl.u32 %v4298, 16
        %v4429 = vrot.slane %v4427, 4
        %v4430 = vshll.u32 %v4298, 16
        %v4432 = vrot.slane %v4430, 5
        %v4433 = vor.u32 %v4429, %v4432
        %v4434 = vrot.slane %v4433, 4
        %v4436 = vshll.u32 %v4299, 16
        %v4438 = vrot.slane %v4436, 5
        %v4439 = vsel %vm538, %v4434, %v4438
        %v4440 = vshrl.u32 %v4299, 16
        %v4442 = vrot.slane %v4440, 4
        %v4443 = vor.u32 %v4442, %v4438
        %v4444 = vrot.slane %v4443, 4
        %v4446 = vshll.u32 %v4326, 16
        %v4448 = vrot.slane %v4446, 5
        %v4449 = vsel %vm538, %v4444, %v4448
        %v4451 = vshrl.u32 %v4300, 16
        %v4453 = vrot.slane %v4451, 4
        %v4454 = vshll.u32 %v4300, 16
        %v4456 = vrot.slane %v4454, 5
        %v4457 = vor.u32 %v4453, %v4456
        %v4458 = vrot.slane %v4457, 4
        %v4460 = vshll.u32 %v4301, 16
        %v4462 = vrot.slane %v4460, 5
        %v4463 = vsel %vm538, %v4458, %v4462
        %v4464 = vshrl.u32 %v4301, 16
        %v4466 = vrot.slane %v4464, 4
        %v4467 = vor.u32 %v4466, %v4462
        %v4468 = vrot.slane %v4467, 4
        %v4470 = vshll.u32 %v4327, 16
        %v4472 = vrot.slane %v4470, 5
        %v4473 = vsel %vm538, %v4468, %v4472
        %v4475 = vshrl.u32 %v4302, 16
        %v4477 = vrot.slane %v4475, 4
        %v4478 = vshll.u32 %v4302, 16
        %v4480 = vrot.slane %v4478, 5
        %v4481 = vor.u32 %v4477, %v4480
        %v4482 = vrot.slane %v4481, 4
        %v4484 = vshll.u32 %v4303, 16
        %v4486 = vrot.slane %v4484, 5
        %v4487 = vsel %vm538, %v4482, %v4486
        %v4488 = vshrl.u32 %v4303, 16
        %v4490 = vrot.slane %v4488, 4
        %v4491 = vor.u32 %v4490, %v4486
        %v4492 = vrot.slane %v4491, 4
        %v4494 = vshll.u32 %v4328, 16
        %v4496 = vrot.slane %v4494, 5
        %v4497 = vsel %vm538, %v4492, %v4496
        %v4499 = vshrl.u32 %v4304, 16
        %v4501 = vrot.slane %v4499, 4
        %v4502 = vshll.u32 %v4304, 16
        %v4504 = vrot.slane %v4502, 5
        %v4505 = vor.u32 %v4501, %v4504
        %v4506 = vrot.slane %v4505, 4
        %v4508 = vshll.u32 %v4305, 16
        %v4510 = vrot.slane %v4508, 5
        %v4511 = vsel %vm538, %v4506, %v4510
        %v4512 = vshrl.u32 %v4305, 16
        %v4514 = vrot.slane %v4512, 4
        %v4515 = vor.u32 %v4514, %v4510
        %v4516 = vrot.slane %v4515, 4
        %v4518 = vshll.u32 %v4329, 16
        %v4520 = vrot.slane %v4518, 5
        %v4521 = vsel %vm538, %v4516, %v4520
        %s4522 = scalar_lea.vmem %s3, 64
        %v4523 = vld [vmem:[%s4522] sm:$0xf]
        %v4524 = vld [vmem:[%s4522 + $0x4] sm:$0xf]
        %v4525 = vld [vmem:[%s4522 + $0x8] sm:$0xf]
        %v4526 = vld [vmem:[%s4522 + $0xc] sm:$0xf]
        %v4527 = vld [vmem:[%s4522 + $0x10] sm:$0xf]
        %v4528 = vld [vmem:[%s4522 + $0x14] sm:$0xf]
        %v4529 = vld [vmem:[%s4522 + $0x18] sm:$0xf]
        %v4530 = vld [vmem:[%s4522 + $0x1c] sm:$0xf]
        %v4531 = vld [vmem:[%s4522 + $0x20] sm:$0xf]
        %v4532 = vld [vmem:[%s4522 + $0x24] sm:$0xf]
        %v4533 = vld [vmem:[%s4522 + $0x28] sm:$0xf]
        %v4534 = vld [vmem:[%s4522 + $0x2c] sm:$0xf]
        %v4535 = vld [vmem:[%s4522 + $0x30] sm:$0xf]
        %v4536 = vld [vmem:[%s4522 + $0x34] sm:$0xf]
        %v4537 = vld [vmem:[%s4522 + $0x38] sm:$0xf]
        %v4538 = vld [vmem:[%s4522 + $0x3c] sm:$0xf]
        %v4539 = vunpack.c.l.b16 %v4343
        %v4540 = vunpack.c.l.b16 %v4353
        %v4541 = vunpack.c.l.b16 %v4367
        %v4542 = vunpack.c.l.b16 %v4377
        %v4543 = vunpack.c.l.b16 %v4391
        %v4544 = vunpack.c.l.b16 %v4401
        %v4545 = vunpack.c.l.b16 %v4415
        %v4546 = vunpack.c.l.b16 %v4425
        %v4547 = vunpack.c.l.b16 %v4439
        %v4548 = vunpack.c.l.b16 %v4449
        %v4549 = vunpack.c.l.b16 %v4463
        %v4550 = vunpack.c.l.b16 %v4473
        %v4551 = vunpack.c.l.b16 %v4487
        %v4552 = vunpack.c.l.b16 %v4497
        %v4553 = vunpack.c.l.b16 %v4511
        %v4554 = vunpack.c.l.b16 %v4521
        %v4555 = vpack.c.b16 %v4540, %v4539
        %v4556 = vpack.c.b16 %v4542, %v4541
        %v4557 = vpack.c.b16 %v4544, %v4543
        %v4558 = vpack.c.b16 %v4546, %v4545
        %v4559 = vpack.c.b16 %v4548, %v4547
        %v4560 = vpack.c.b16 %v4550, %v4549
        %v4561 = vpack.c.b16 %v4552, %v4551
        %v4562 = vpack.c.b16 %v4554, %v4553
        %v4587 = vunpack.c.l.b16 %v4523
        %v4588 = vunpack.c.l.b16 %v4524
        %v4589 = vunpack.c.l.b16 %v4525
        %v4590 = vunpack.c.l.b16 %v4526
        %v4591 = vunpack.c.l.b16 %v4527
        %v4592 = vunpack.c.l.b16 %v4528
        %v4593 = vunpack.c.l.b16 %v4529
        %v4594 = vunpack.c.l.b16 %v4530
        %v4595 = vunpack.c.l.b16 %v4531
        %v4596 = vunpack.c.l.b16 %v4532
        %v4597 = vunpack.c.l.b16 %v4533
        %v4598 = vunpack.c.l.b16 %v4534
        %v4599 = vunpack.c.l.b16 %v4535
        %v4600 = vunpack.c.l.b16 %v4536
        %v4601 = vunpack.c.l.b16 %v4537
        %v4602 = vunpack.c.l.b16 %v4538
        %v4603 = vpack.c.b16 %v4588, %v4587
        %v4604 = vpack.c.b16 %v4590, %v4589
        %v4605 = vpack.c.b16 %v4592, %v4591
        %v4606 = vpack.c.b16 %v4594, %v4593
        %v4607 = vpack.c.b16 %v4596, %v4595
        %v4608 = vpack.c.b16 %v4598, %v4597
        %v4609 = vpack.c.b16 %v4600, %v4599
        %v4610 = vpack.c.b16 %v4602, %v4601
        %4619 = vmatprep.subr.bf16.mxu0 0
        %4620 = vmatpush1.bf16.msra.mxu0 %v4603
        %4621 = vmatprep.subr.bf16.mxu0 0
        %4622 = vmatpush1.bf16.msra.mxu0 %v4604
        %4623 = vmatprep.subr.bf16.mxu0 0
        %4624 = vmatpush1.bf16.msra.mxu0 %v4605
        %4625 = vmatprep.subr.bf16.mxu0 0
        %4626 = vmatpush1.bf16.msra.mxu0 %v4606
        %4627 = vmatprep.subr.bf16.mxu0 0
        %4628 = vmatpush1.bf16.msra.mxu0 %v4607
        %4629 = vmatprep.subr.bf16.mxu0 0
        %4630 = vmatpush1.bf16.msra.mxu0 %v4608
        %4631 = vmatprep.subr.bf16.mxu0 0
        %4632 = vmatpush1.bf16.msra.mxu0 %v4609
        %4633 = vmatprep.subr.bf16.mxu0 0
        %4634 = vmatpush1.bf16.msra.mxu0 %v4610
        %4635 = vmatprep.subr.bf16.mxu0 0
        %4636 = vmatpush1.bf16.msra.mxu0 0
        %4637 = vmatprep.subr.bf16.mxu0 0
        %4638 = vmatpush1.bf16.msra.mxu0 0
        %4639 = vmatprep.subr.bf16.mxu0 0
        %4640 = vmatpush1.bf16.msra.mxu0 0
        %4641 = vmatprep.subr.bf16.mxu0 0
        %4642 = vmatpush1.bf16.msra.mxu0 0
        %4643 = vmatprep.subr.bf16.mxu0 0
        %4644 = vmatpush1.bf16.msra.mxu0 0
        %4645 = vmatprep.subr.bf16.mxu0 0
        %4646 = vmatpush1.bf16.msra.mxu0 0
        %4647 = vmatprep.subr.bf16.mxu0 0
        %4648 = vmatpush1.bf16.msra.mxu0 0
        %4649 = vmatprep.subr.bf16.mxu0 0
        %4650 = vmatpush1.bf16.msra.mxu0 0
        %4651 = vmatprep.mubr.bf16.mxu0 0
        %4652 = vmatmul.mubr.bf16.gmra.mrb[0].mxu0 %v4555
        %v4653 = vpop.f32.mrb[0].mxu0
        %v4654 = vadd.f32 0.0, %v4653
        %v4655 = vpop.f32.mrb[0].mxu0
        %v4656 = vpop.f32.mrb[0].mxu0
        %v4657 = vadd.f32 0.0, %v4656
        %v4658 = vpop.f32.mrb[0].mxu0
        %4659 = vmatprep.mubr.bf16.mxu0 0
        %4660 = vmatmul.mubr.bf16.gmra.mrb[0].mxu0 %v4556
        %v4661 = vpop.f32.mrb[0].mxu0
        %v4662 = vadd.f32 0.0, %v4661
        %v4663 = vpop.f32.mrb[0].mxu0
        %v4664 = vpop.f32.mrb[0].mxu0
        %v4665 = vadd.f32 0.0, %v4664
        %v4666 = vpop.f32.mrb[0].mxu0
        %4667 = vmatprep.mubr.bf16.mxu0 0
        %4668 = vmatmul.mubr.bf16.gmra.mrb[0].mxu0 %v4557
        %v4669 = vpop.f32.mrb[0].mxu0
        %v4670 = vadd.f32 0.0, %v4669
        %v4671 = vpop.f32.mrb[0].mxu0
        %v4672 = vpop.f32.mrb[0].mxu0
        %v4673 = vadd.f32 0.0, %v4672
        %v4674 = vpop.f32.mrb[0].mxu0
        %4675 = vmatprep.mubr.bf16.mxu0 0
        %4676 = vmatmul.mubr.bf16.gmra.mrb[0].mxu0 %v4558
        %v4677 = vpop.f32.mrb[0].mxu0
        %v4678 = vadd.f32 0.0, %v4677
        %v4679 = vpop.f32.mrb[0].mxu0
        %v4680 = vpop.f32.mrb[0].mxu0
        %v4681 = vadd.f32 0.0, %v4680
        %v4682 = vpop.f32.mrb[0].mxu0
        %4683 = vmatprep.mubr.bf16.mxu0 0
        %4684 = vmatmul.mubr.bf16.gmra.mrb[0].mxu0 %v4559
        %v4685 = vpop.f32.mrb[0].mxu0
        %v4686 = vadd.f32 0.0, %v4685
        %v4687 = vpop.f32.mrb[0].mxu0
        %v4688 = vpop.f32.mrb[0].mxu0
        %v4689 = vadd.f32 0.0, %v4688
        %v4690 = vpop.f32.mrb[0].mxu0
        %4691 = vmatprep.mubr.bf16.mxu0 0
        %4692 = vmatmul.mubr.bf16.gmra.mrb[0].mxu0 %v4560
        %v4693 = vpop.f32.mrb[0].mxu0
        %v4694 = vadd.f32 0.0, %v4693
        %v4695 = vpop.f32.mrb[0].mxu0
        %v4696 = vpop.f32.mrb[0].mxu0
        %v4697 = vadd.f32 0.0, %v4696
        %v4698 = vpop.f32.mrb[0].mxu0
        %4699 = vmatprep.mubr.bf16.mxu0 0
        %4700 = vmatmul.mubr.bf16.gmra.mrb[0].mxu0 %v4561
        %v4701 = vpop.f32.mrb[0].mxu0
        %v4702 = vadd.f32 0.0, %v4701
        %v4703 = vpop.f32.mrb[0].mxu0
        %v4704 = vpop.f32.mrb[0].mxu0
        %v4705 = vadd.f32 0.0, %v4704
        %v4706 = vpop.f32.mrb[0].mxu0
        %4707 = vmatprep.mubr.bf16.mxu0 0
        %4708 = vmatmul.mubr.bf16.gmra.mrb[0].mxu0 %v4562
        %v4709 = vpop.f32.mrb[0].mxu0
        %v4710 = vadd.f32 0.0, %v4709
        %v4711 = vpop.f32.mrb[0].mxu0
        %v4712 = vpop.f32.mrb[0].mxu0
        %v4713 = vadd.f32 0.0, %v4712
        %v4714 = vpop.f32.mrb[0].mxu0
        %4715 = vdwg.mxu0
        %v4732 = vunpack.c.l.b16 %v4290
        %v4733 = vunpack.c.l.b16 %v4291
        %v4734 = vunpack.c.l.b16 %v4292
        %v4735 = vunpack.c.l.b16 %v4293
        %v4736 = vunpack.c.l.b16 %v4294
        %v4737 = vunpack.c.l.b16 %v4295
        %v4738 = vunpack.c.l.b16 %v4296
        %v4739 = vunpack.c.l.b16 %v4297
        %v4740 = vunpack.c.l.b16 %v4298
        %v4741 = vunpack.c.l.b16 %v4299
        %v4742 = vunpack.c.l.b16 %v4300
        %v4743 = vunpack.c.l.b16 %v4301
        %v4744 = vunpack.c.l.b16 %v4302
        %v4745 = vunpack.c.l.b16 %v4303
        %v4746 = vunpack.c.l.b16 %v4304
        %v4747 = vunpack.c.l.b16 %v4305
        %v4748 = vpack.c.b16 %v4733, %v4732
        %v4749 = vpack.c.b16 %v4735, %v4734
        %v4750 = vpack.c.b16 %v4737, %v4736
        %v4751 = vpack.c.b16 %v4739, %v4738
        %v4752 = vpack.c.b16 %v4741, %v4740
        %v4753 = vpack.c.b16 %v4743, %v4742
        %v4754 = vpack.c.b16 %v4745, %v4744
        %v4755 = vpack.c.b16 %v4747, %v4746
        %v4780 = vunpack.c.l.b16 %v4306
        %v4781 = vunpack.c.l.b16 %v4307
        %v4782 = vunpack.c.l.b16 %v4308
        %v4783 = vunpack.c.l.b16 %v4309
        %v4784 = vunpack.c.l.b16 %v4310
        %v4785 = vunpack.c.l.b16 %v4311
        %v4786 = vunpack.c.l.b16 %v4312
        %v4787 = vunpack.c.l.b16 %v4313
        %v4788 = vunpack.c.l.b16 %v4314
        %v4789 = vunpack.c.l.b16 %v4315
        %v4790 = vunpack.c.l.b16 %v4316
        %v4791 = vunpack.c.l.b16 %v4317
        %v4792 = vunpack.c.l.b16 %v4318
        %v4793 = vunpack.c.l.b16 %v4319
        %v4794 = vunpack.c.l.b16 %v4320
        %v4795 = vunpack.c.l.b16 %v4321
        %v4796 = vpack.c.b16 %v4781, %v4780
        %v4797 = vpack.c.b16 %v4783, %v4782
        %v4798 = vpack.c.b16 %v4785, %v4784
        %v4799 = vpack.c.b16 %v4787, %v4786
        %v4800 = vpack.c.b16 %v4789, %v4788
        %v4801 = vpack.c.b16 %v4791, %v4790
        %v4802 = vpack.c.b16 %v4793, %v4792
        %v4803 = vpack.c.b16 %v4795, %v4794
        %4812 = vmatprep.subr.bf16.mxu0 0
        %4813 = vmatpush1.bf16.msra.mxu0 %v4796
        %4814 = vmatprep.subr.bf16.mxu0 0
        %4815 = vmatpush1.bf16.msra.mxu0 %v4797
        %4816 = vmatprep.subr.bf16.mxu0 0
        %4817 = vmatpush1.bf16.msra.mxu0 %v4798
        %4818 = vmatprep.subr.bf16.mxu0 0
        %4819 = vmatpush1.bf16.msra.mxu0 %v4799
        %4820 = vmatprep.subr.bf16.mxu0 0
        %4821 = vmatpush1.bf16.msra.mxu0 %v4800
        %4822 = vmatprep.subr.bf16.mxu0 0
        %4823 = vmatpush1.bf16.msra.mxu0 %v4801
        %4824 = vmatprep.subr.bf16.mxu0 0
        %4825 = vmatpush1.bf16.msra.mxu0 %v4802
        %4826 = vmatprep.subr.bf16.mxu0 0
        %4827 = vmatpush1.bf16.msra.mxu0 %v4803
        %4828 = vmatprep.subr.bf16.mxu0 0
        %4829 = vmatpush1.bf16.msra.mxu0 0
        %4830 = vmatprep.subr.bf16.mxu0 0
        %4831 = vmatpush1.bf16.msra.mxu0 0
        %4832 = vmatprep.subr.bf16.mxu0 0
        %4833 = vmatpush1.bf16.msra.mxu0 0
        %4834 = vmatprep.subr.bf16.mxu0 0
        %4835 = vmatpush1.bf16.msra.mxu0 0
        %4836 = vmatprep.subr.bf16.mxu0 0
        %4837 = vmatpush1.bf16.msra.mxu0 0
        %4838 = vmatprep.subr.bf16.mxu0 0
        %4839 = vmatpush1.bf16.msra.mxu0 0
        %4840 = vmatprep.subr.bf16.mxu0 0
        %4841 = vmatpush1.bf16.msra.mxu0 0
        %4842 = vmatprep.subr.bf16.mxu0 0
        %4843 = vmatpush1.bf16.msra.mxu0 0
        %4844 = vmatprep.mubr.bf16.mxu0 0
        %4845 = vmatmul.mubr.bf16.gmra.mrb[0].mxu0 %v4748
        %v4846 = vpop.f32.mrb[0].mxu0
        %v4847 = vadd.f32 %v4654, %v4846
        %v4848 = vpop.f32.mrb[0].mxu0
        %v4849 = vpop.f32.mrb[0].mxu0
        %v4850 = vadd.f32 %v4657, %v4849
        %v4851 = vpop.f32.mrb[0].mxu0
        %4852 = vmatprep.mubr.bf16.mxu0 0
        %4853 = vmatmul.mubr.bf16.gmra.mrb[0].mxu0 %v4749
        %v4854 = vpop.f32.mrb[0].mxu0
        %v4855 = vadd.f32 %v4662, %v4854
        %v4856 = vpop.f32.mrb[0].mxu0
        %v4857 = vpop.f32.mrb[0].mxu0
        %v4858 = vadd.f32 %v4665, %v4857
        %v4859 = vpop.f32.mrb[0].mxu0
        %4860 = vmatprep.mubr.bf16.mxu0 0
        %4861 = vmatmul.mubr.bf16.gmra.mrb[0].mxu0 %v4750
        %v4862 = vpop.f32.mrb[0].mxu0
        %v4863 = vadd.f32 %v4670, %v4862
        %v4864 = vpop.f32.mrb[0].mxu0
        %v4865 = vpop.f32.mrb[0].mxu0
        %v4866 = vadd.f32 %v4673, %v4865
        %v4867 = vpop.f32.mrb[0].mxu0
        %4868 = vmatprep.mubr.bf16.mxu0 0
        %4869 = vmatmul.mubr.bf16.gmra.mrb[0].mxu0 %v4751
        %v4870 = vpop.f32.mrb[0].mxu0
        %v4871 = vadd.f32 %v4678, %v4870
        %v4872 = vpop.f32.mrb[0].mxu0
        %v4873 = vpop.f32.mrb[0].mxu0
        %v4874 = vadd.f32 %v4681, %v4873
        %v4875 = vpop.f32.mrb[0].mxu0
        %4876 = vmatprep.mubr.bf16.mxu0 0
        %4877 = vmatmul.mubr.bf16.gmra.mrb[0].mxu0 %v4752
        %v4878 = vpop.f32.mrb[0].mxu0
        %v4879 = vadd.f32 %v4686, %v4878
        %v4880 = vpop.f32.mrb[0].mxu0
        %v4881 = vpop.f32.mrb[0].mxu0
        %v4882 = vadd.f32 %v4689, %v4881
        %v4883 = vpop.f32.mrb[0].mxu0
        %4884 = vmatprep.mubr.bf16.mxu0 0
        %4885 = vmatmul.mubr.bf16.gmra.mrb[0].mxu0 %v4753
        %v4886 = vpop.f32.mrb[0].mxu0
        %v4887 = vadd.f32 %v4694, %v4886
        %v4888 = vpop.f32.mrb[0].mxu0
        %v4889 = vpop.f32.mrb[0].mxu0
        %v4890 = vadd.f32 %v4697, %v4889
        %v4891 = vpop.f32.mrb[0].mxu0
        %4892 = vmatprep.mubr.bf16.mxu0 0
        %4893 = vmatmul.mubr.bf16.gmra.mrb[0].mxu0 %v4754
        %v4894 = vpop.f32.mrb[0].mxu0
        %v4895 = vadd.f32 %v4702, %v4894
        %v4896 = vpop.f32.mrb[0].mxu0
        %v4897 = vpop.f32.mrb[0].mxu0
        %v4898 = vadd.f32 %v4705, %v4897
        %v4899 = vpop.f32.mrb[0].mxu0
        %4900 = vmatprep.mubr.bf16.mxu0 0
        %4901 = vmatmul.mubr.bf16.gmra.mrb[0].mxu0 %v4755
        %v4902 = vpop.f32.mrb[0].mxu0
        %v4903 = vadd.f32 %v4710, %v4902
        %v4904 = vpop.f32.mrb[0].mxu0
        %v4905 = vpop.f32.mrb[0].mxu0
        %v4906 = vadd.f32 %v4713, %v4905
        %v4907 = vpop.f32.mrb[0].mxu0
        %4908 = vdwg.mxu0
        %v4909 = vld [vmem:[#allocation3] sm:$0xe]
        %v4910 = vld [vmem:[#allocation3 + $0xc] sm:$0xe]
        %v4911 = vld [vmem:[#allocation3 + $0x18] sm:$0xe]
        %v4912 = vld [vmem:[#allocation3 + $0x24] sm:$0xe]
        %v4913 = vld [vmem:[#allocation3 + $0x30] sm:$0xe]
        %v4914 = vld [vmem:[#allocation3 + $0x3c] sm:$0xe]
        %v4915 = vld [vmem:[#allocation3 + $0x48] sm:$0xe]
        %v4916 = vld [vmem:[#allocation3 + $0x54] sm:$0xe]
        %v4933 = vrot.slane %v4909, 5
        %v4934 = vrot.slane %v4933, 4
        %v4935 = vrot.slane %v4291, 5
        %v4936 = vsel %vm1250, %v4934, %v4935
        %v4937 = vrot.slane %v4935, 4
        %v4938 = vrot.slane %v4322, 5
        %v4939 = vsel %vm1250, %v4937, %v4938
        %v4940 = vrot.slane %v4910, 5
        %v4941 = vrot.slane %v4940, 4
        %v4942 = vrot.slane %v4293, 5
        %v4943 = vsel %vm1250, %v4941, %v4942
        %v4944 = vrot.slane %v4942, 4
        %v4945 = vrot.slane %v4323, 5
        %v4946 = vsel %vm1250, %v4944, %v4945
        %v4947 = vrot.slane %v4911, 5
        %v4948 = vrot.slane %v4947, 4
        %v4949 = vrot.slane %v4295, 5
        %v4950 = vsel %vm1250, %v4948, %v4949
        %v4951 = vrot.slane %v4949, 4
        %v4952 = vrot.slane %v4324, 5
        %v4953 = vsel %vm1250, %v4951, %v4952
        %v4954 = vrot.slane %v4912, 5
        %v4955 = vrot.slane %v4954, 4
        %v4956 = vrot.slane %v4297, 5
        %v4957 = vsel %vm1250, %v4955, %v4956
        %v4958 = vrot.slane %v4956, 4
        %v4959 = vrot.slane %v4325, 5
        %v4960 = vsel %vm1250, %v4958, %v4959
        %v4961 = vrot.slane %v4913, 5
        %v4962 = vrot.slane %v4961, 4
        %v4963 = vrot.slane %v4299, 5
        %v4964 = vsel %vm1250, %v4962, %v4963
        %v4965 = vrot.slane %v4963, 4
        %v4966 = vrot.slane %v4326, 5
        %v4967 = vsel %vm1250, %v4965, %v4966
        %v4968 = vrot.slane %v4914, 5
        %v4969 = vrot.slane %v4968, 4
        %v4970 = vrot.slane %v4301, 5
        %v4971 = vsel %vm1250, %v4969, %v4970
        %v4972 = vrot.slane %v4970, 4
        %v4973 = vrot.slane %v4327, 5
        %v4974 = vsel %vm1250, %v4972, %v4973
        %v4975 = vrot.slane %v4915, 5
        %v4976 = vrot.slane %v4975, 4
        %v4977 = vrot.slane %v4303, 5
        %v4978 = vsel %vm1250, %v4976, %v4977
        %v4979 = vrot.slane %v4977, 4
        %v4980 = vrot.slane %v4328, 5
        %v4981 = vsel %vm1250, %v4979, %v4980
        %v4982 = vrot.slane %v4916, 5
        %v4983 = vrot.slane %v4982, 4
        %v4984 = vrot.slane %v4305, 5
        %v4985 = vsel %vm1250, %v4983, %v4984
        %v4986 = vrot.slane %v4984, 4
        %v4987 = vrot.slane %v4329, 5
        %v4988 = vsel %vm1250, %v4986, %v4987
        %s4989 = scalar_lea.vmem %s3, 128
        %v4990 = vld [vmem:[%s4989] sm:$0xf]
        %v4991 = vld [vmem:[%s4989 + $0x4] sm:$0xf]
        %v4992 = vld [vmem:[%s4989 + $0x8] sm:$0xf]
        %v4993 = vld [vmem:[%s4989 + $0xc] sm:$0xf]
        %v4994 = vld [vmem:[%s4989 + $0x10] sm:$0xf]
        %v4995 = vld [vmem:[%s4989 + $0x14] sm:$0xf]
        %v4996 = vld [vmem:[%s4989 + $0x18] sm:$0xf]
        %v4997 = vld [vmem:[%s4989 + $0x1c] sm:$0xf]
        %v4998 = vld [vmem:[%s4989 + $0x20] sm:$0xf]
        %v4999 = vld [vmem:[%s4989 + $0x24] sm:$0xf]
        %v5000 = vld [vmem:[%s4989 + $0x28] sm:$0xf]
        %v5001 = vld [vmem:[%s4989 + $0x2c] sm:$0xf]
        %v5002 = vld [vmem:[%s4989 + $0x30] sm:$0xf]
        %v5003 = vld [vmem:[%s4989 + $0x34] sm:$0xf]
        %v5004 = vld [vmem:[%s4989 + $0x38] sm:$0xf]
        %v5005 = vld [vmem:[%s4989 + $0x3c] sm:$0xf]
        %v5006 = vunpack.c.l.b16 %v4936
        %v5007 = vunpack.c.l.b16 %v4939
        %v5008 = vunpack.c.l.b16 %v4943
        %v5009 = vunpack.c.l.b16 %v4946
        %v5010 = vunpack.c.l.b16 %v4950
        %v5011 = vunpack.c.l.b16 %v4953
        %v5012 = vunpack.c.l.b16 %v4957
        %v5013 = vunpack.c.l.b16 %v4960
        %v5014 = vunpack.c.l.b16 %v4964
        %v5015 = vunpack.c.l.b16 %v4967
        %v5016 = vunpack.c.l.b16 %v4971
        %v5017 = vunpack.c.l.b16 %v4974
        %v5018 = vunpack.c.l.b16 %v4978
        %v5019 = vunpack.c.l.b16 %v4981
        %v5020 = vunpack.c.l.b16 %v4985
        %v5021 = vunpack.c.l.b16 %v4988
        %v5022 = vpack.c.b16 %v5007, %v5006
        %v5023 = vpack.c.b16 %v5009, %v5008
        %v5024 = vpack.c.b16 %v5011, %v5010
        %v5025 = vpack.c.b16 %v5013, %v5012
        %v5026 = vpack.c.b16 %v5015, %v5014
        %v5027 = vpack.c.b16 %v5017, %v5016
        %v5028 = vpack.c.b16 %v5019, %v5018
        %v5029 = vpack.c.b16 %v5021, %v5020
        %v5054 = vunpack.c.l.b16 %v4990
        %v5055 = vunpack.c.l.b16 %v4991
        %v5056 = vunpack.c.l.b16 %v4992
        %v5057 = vunpack.c.l.b16 %v4993
        %v5058 = vunpack.c.l.b16 %v4994
        %v5059 = vunpack.c.l.b16 %v4995
        %v5060 = vunpack.c.l.b16 %v4996
        %v5061 = vunpack.c.l.b16 %v4997
        %v5062 = vunpack.c.l.b16 %v4998
        %v5063 = vunpack.c.l.b16 %v4999
        %v5064 = vunpack.c.l.b16 %v5000
        %v5065 = vunpack.c.l.b16 %v5001
        %v5066 = vunpack.c.l.b16 %v5002
        %v5067 = vunpack.c.l.b16 %v5003
        %v5068 = vunpack.c.l.b16 %v5004
        %v5069 = vunpack.c.l.b16 %v5005
        %v5070 = vpack.c.b16 %v5055, %v5054
        %v5071 = vpack.c.b16 %v5057, %v5056
        %v5072 = vpack.c.b16 %v5059, %v5058
        %v5073 = vpack.c.b16 %v5061, %v5060
        %v5074 = vpack.c.b16 %v5063, %v5062
        %v5075 = vpack.c.b16 %v5065, %v5064
        %v5076 = vpack.c.b16 %v5067, %v5066
        %v5077 = vpack.c.b16 %v5069, %v5068
        %5086 = vmatprep.subr.bf16.mxu0 0
        %5087 = vmatpush1.bf16.msra.mxu0 %v5070
        %5088 = vmatprep.subr.bf16.mxu0 0
        %5089 = vmatpush1.bf16.msra.mxu0 %v5071
        %5090 = vmatprep.subr.bf16.mxu0 0
        %5091 = vmatpush1.bf16.msra.mxu0 %v5072
        %5092 = vmatprep.subr.bf16.mxu0 0
        %5093 = vmatpush1.bf16.msra.mxu0 %v5073
        %5094 = vmatprep.subr.bf16.mxu0 0
        %5095 = vmatpush1.bf16.msra.mxu0 %v5074
        %5096 = vmatprep.subr.bf16.mxu0 0
        %5097 = vmatpush1.bf16.msra.mxu0 %v5075
        %5098 = vmatprep.subr.bf16.mxu0 0
        %5099 = vmatpush1.bf16.msra.mxu0 %v5076
        %5100 = vmatprep.subr.bf16.mxu0 0
        %5101 = vmatpush1.bf16.msra.mxu0 %v5077
        %5102 = vmatprep.subr.bf16.mxu0 0
        %5103 = vmatpush1.bf16.msra.mxu0 0
        %5104 = vmatprep.subr.bf16.mxu0 0
        %5105 = vmatpush1.bf16.msra.mxu0 0
        %5106 = vmatprep.subr.bf16.mxu0 0
        %5107 = vmatpush1.bf16.msra.mxu0 0
        %5108 = vmatprep.subr.bf16.mxu0 0
        %5109 = vmatpush1.bf16.msra.mxu0 0
        %5110 = vmatprep.subr.bf16.mxu0 0
        %5111 = vmatpush1.bf16.msra.mxu0 0
        %5112 = vmatprep.subr.bf16.mxu0 0
        %5113 = vmatpush1.bf16.msra.mxu0 0
        %5114 = vmatprep.subr.bf16.mxu0 0
        %5115 = vmatpush1.bf16.msra.mxu0 0
        %5116 = vmatprep.subr.bf16.mxu0 0
        %5117 = vmatpush1.bf16.msra.mxu0 0
        %5118 = vmatprep.mubr.bf16.mxu0 0
        %5119 = vmatmul.mubr.bf16.gmra.mrb[0].mxu0 %v5022
        %v5120 = vpop.f32.mrb[0].mxu0
        %v5121 = vadd.f32 0.0, %v5120
        %v5122 = vpop.f32.mrb[0].mxu0
        %v5123 = vpop.f32.mrb[0].mxu0
        %v5124 = vadd.f32 0.0, %v5123
        %v5125 = vpop.f32.mrb[0].mxu0
        %5126 = vmatprep.mubr.bf16.mxu0 0
        %5127 = vmatmul.mubr.bf16.gmra.mrb[0].mxu0 %v5023
        %v5128 = vpop.f32.mrb[0].mxu0
        %v5129 = vadd.f32 0.0, %v5128
        %v5130 = vpop.f32.mrb[0].mxu0
        %v5131 = vpop.f32.mrb[0].mxu0
        %v5132 = vadd.f32 0.0, %v5131
        %v5133 = vpop.f32.mrb[0].mxu0
        %5134 = vmatprep.mubr.bf16.mxu0 0
        %5135 = vmatmul.mubr.bf16.gmra.mrb[0].mxu0 %v5024
        %v5136 = vpop.f32.mrb[0].mxu0
        %v5137 = vadd.f32 0.0, %v5136
        %v5138 = vpop.f32.mrb[0].mxu0
        %v5139 = vpop.f32.mrb[0].mxu0
        %v5140 = vadd.f32 0.0, %v5139
        %v5141 = vpop.f32.mrb[0].mxu0
        %5142 = vmatprep.mubr.bf16.mxu0 0
        %5143 = vmatmul.mubr.bf16.gmra.mrb[0].mxu0 %v5025
        %v5144 = vpop.f32.mrb[0].mxu0
        %v5145 = vadd.f32 0.0, %v5144
        %v5146 = vpop.f32.mrb[0].mxu0
        %v5147 = vpop.f32.mrb[0].mxu0
        %v5148 = vadd.f32 0.0, %v5147
        %v5149 = vpop.f32.mrb[0].mxu0
        %5150 = vmatprep.mubr.bf16.mxu0 0
        %5151 = vmatmul.mubr.bf16.gmra.mrb[0].mxu0 %v5026
        %v5152 = vpop.f32.mrb[0].mxu0
        %v5153 = vadd.f32 0.0, %v5152
        %v5154 = vpop.f32.mrb[0].mxu0
        %v5155 = vpop.f32.mrb[0].mxu0
        %v5156 = vadd.f32 0.0, %v5155
        %v5157 = vpop.f32.mrb[0].mxu0
        %5158 = vmatprep.mubr.bf16.mxu0 0
        %5159 = vmatmul.mubr.bf16.gmra.mrb[0].mxu0 %v5027
        %v5160 = vpop.f32.mrb[0].mxu0
        %v5161 = vadd.f32 0.0, %v5160
        %v5162 = vpop.f32.mrb[0].mxu0
        %v5163 = vpop.f32.mrb[0].mxu0
        %v5164 = vadd.f32 0.0, %v5163
        %v5165 = vpop.f32.mrb[0].mxu0
        %5166 = vmatprep.mubr.bf16.mxu0 0
        %5167 = vmatmul.mubr.bf16.gmra.mrb[0].mxu0 %v5028
        %v5168 = vpop.f32.mrb[0].mxu0
        %v5169 = vadd.f32 0.0, %v5168
        %v5170 = vpop.f32.mrb[0].mxu0
        %v5171 = vpop.f32.mrb[0].mxu0
        %v5172 = vadd.f32 0.0, %v5171
        %v5173 = vpop.f32.mrb[0].mxu0
        %5174 = vmatprep.mubr.bf16.mxu0 0
        %5175 = vmatmul.mubr.bf16.gmra.mrb[0].mxu0 %v5029
        %v5176 = vpop.f32.mrb[0].mxu0
        %v5177 = vadd.f32 0.0, %v5176
        %v5178 = vpop.f32.mrb[0].mxu0
        %v5179 = vpop.f32.mrb[0].mxu0
        %v5180 = vadd.f32 0.0, %v5179
        %v5181 = vpop.f32.mrb[0].mxu0
        %5182 = vdwg.mxu0
        %v5183 = vadd.f32 %v4847, %v5121
        %v5184 = vadd.f32 %v4850, %v5124
        %v5185 = vadd.f32 %v4855, %v5129
        %v5186 = vadd.f32 %v4858, %v5132
        %v5187 = vadd.f32 %v4863, %v5137
        %v5188 = vadd.f32 %v4866, %v5140
        %v5189 = vadd.f32 %v4871, %v5145
        %v5190 = vadd.f32 %v4874, %v5148
        %v5191 = vadd.f32 %v4879, %v5153
        %v5192 = vadd.f32 %v4882, %v5156
        %v5193 = vadd.f32 %v4887, %v5161
        %v5194 = vadd.f32 %v4890, %v5164
        %v5195 = vadd.f32 %v4895, %v5169
        %v5196 = vadd.f32 %v4898, %v5172
        %v5197 = vadd.f32 %v4903, %v5177
        %v5198 = vadd.f32 %v4906, %v5180
        %s5199 = scalar_lea.vmem [#allocation3], 12
        %v5200 = vld [vmem:[%s5199] sm:$0xf]
        %v5201 = vld [vmem:[%s5199 + $0x4] sm:$0xf]
        %v5202 = vld [vmem:[%s5199 + $0xc] sm:$0xf]
        %v5203 = vld [vmem:[%s5199 + $0x10] sm:$0xf]
        %v5204 = vld [vmem:[%s5199 + $0x18] sm:$0xf]
        %v5205 = vld [vmem:[%s5199 + $0x1c] sm:$0xf]
        %v5206 = vld [vmem:[%s5199 + $0x24] sm:$0xf]
        %v5207 = vld [vmem:[%s5199 + $0x28] sm:$0xf]
        %v5208 = vld [vmem:[%s5199 + $0x30] sm:$0xf]
        %v5209 = vld [vmem:[%s5199 + $0x34] sm:$0xf]
        %v5210 = vld [vmem:[%s5199 + $0x3c] sm:$0xf]
        %v5211 = vld [vmem:[%s5199 + $0x40] sm:$0xf]
        %v5212 = vld [vmem:[%s5199 + $0x48] sm:$0xf]
        %v5213 = vld [vmem:[%s5199 + $0x4c] sm:$0xf]
        %v5214 = vld [vmem:[%s5199 + $0x54] sm:$0xf]
        %v5215 = vld [vmem:[%s5199 + $0x58] sm:$0xf]
        %s5216 = scalar_lea.vmem %s3, 192
        %v5217 = vld [vmem:[%s5216] sm:$0xf]
        %v5218 = vld [vmem:[%s5216 + $0x4] sm:$0xf]
        %v5219 = vld [vmem:[%s5216 + $0x8] sm:$0xf]
        %v5220 = vld [vmem:[%s5216 + $0xc] sm:$0xf]
        %v5221 = vld [vmem:[%s5216 + $0x10] sm:$0xf]
        %v5222 = vld [vmem:[%s5216 + $0x14] sm:$0xf]
        %v5223 = vld [vmem:[%s5216 + $0x18] sm:$0xf]
        %v5224 = vld [vmem:[%s5216 + $0x1c] sm:$0xf]
        %v5225 = vld [vmem:[%s5216 + $0x20] sm:$0xf]
        %v5226 = vld [vmem:[%s5216 + $0x24] sm:$0xf]
        %v5227 = vld [vmem:[%s5216 + $0x28] sm:$0xf]
        %v5228 = vld [vmem:[%s5216 + $0x2c] sm:$0xf]
        %v5229 = vld [vmem:[%s5216 + $0x30] sm:$0xf]
        %v5230 = vld [vmem:[%s5216 + $0x34] sm:$0xf]
        %v5231 = vld [vmem:[%s5216 + $0x38] sm:$0xf]
        %v5232 = vld [vmem:[%s5216 + $0x3c] sm:$0xf]
        %v5249 = vunpack.c.l.b16 %v5200
        %v5250 = vunpack.c.l.b16 %v5201
        %v5251 = vunpack.c.l.b16 %v5202
        %v5252 = vunpack.c.l.b16 %v5203
        %v5253 = vunpack.c.l.b16 %v5204
        %v5254 = vunpack.c.l.b16 %v5205
        %v5255 = vunpack.c.l.b16 %v5206
        %v5256 = vunpack.c.l.b16 %v5207
        %v5257 = vunpack.c.l.b16 %v5208
        %v5258 = vunpack.c.l.b16 %v5209
        %v5259 = vunpack.c.l.b16 %v5210
        %v5260 = vunpack.c.l.b16 %v5211
        %v5261 = vunpack.c.l.b16 %v5212
        %v5262 = vunpack.c.l.b16 %v5213
        %v5263 = vunpack.c.l.b16 %v5214
        %v5264 = vunpack.c.l.b16 %v5215
        %v5265 = vpack.c.b16 %v5250, %v5249
        %v5266 = vpack.c.b16 %v5252, %v5251
        %v5267 = vpack.c.b16 %v5254, %v5253
        %v5268 = vpack.c.b16 %v5256, %v5255
        %v5269 = vpack.c.b16 %v5258, %v5257
        %v5270 = vpack.c.b16 %v5260, %v5259
        %v5271 = vpack.c.b16 %v5262, %v5261
        %v5272 = vpack.c.b16 %v5264, %v5263
        %v5297 = vunpack.c.l.b16 %v5217
        %v5298 = vunpack.c.l.b16 %v5218
        %v5299 = vunpack.c.l.b16 %v5219
        %v5300 = vunpack.c.l.b16 %v5220
        %v5301 = vunpack.c.l.b16 %v5221
        %v5302 = vunpack.c.l.b16 %v5222
        %v5303 = vunpack.c.l.b16 %v5223
        %v5304 = vunpack.c.l.b16 %v5224
        %v5305 = vunpack.c.l.b16 %v5225
        %v5306 = vunpack.c.l.b16 %v5226
        %v5307 = vunpack.c.l.b16 %v5227
        %v5308 = vunpack.c.l.b16 %v5228
        %v5309 = vunpack.c.l.b16 %v5229
        %v5310 = vunpack.c.l.b16 %v5230
        %v5311 = vunpack.c.l.b16 %v5231
        %v5312 = vunpack.c.l.b16 %v5232
        %v5313 = vpack.c.b16 %v5298, %v5297
        %v5314 = vpack.c.b16 %v5300, %v5299
        %v5315 = vpack.c.b16 %v5302, %v5301
        %v5316 = vpack.c.b16 %v5304, %v5303
        %v5317 = vpack.c.b16 %v5306, %v5305
        %v5318 = vpack.c.b16 %v5308, %v5307
        %v5319 = vpack.c.b16 %v5310, %v5309
        %v5320 = vpack.c.b16 %v5312, %v5311
        %5329 = vmatprep.subr.bf16.mxu0 0
        %5330 = vmatpush1.bf16.msra.mxu0 %v5313
        %5331 = vmatprep.subr.bf16.mxu0 0
        %5332 = vmatpush1.bf16.msra.mxu0 %v5314
        %5333 = vmatprep.subr.bf16.mxu0 0
        %5334 = vmatpush1.bf16.msra.mxu0 %v5315
        %5335 = vmatprep.subr.bf16.mxu0 0
        %5336 = vmatpush1.bf16.msra.mxu0 %v5316
        %5337 = vmatprep.subr.bf16.mxu0 0
        %5338 = vmatpush1.bf16.msra.mxu0 %v5317
        %5339 = vmatprep.subr.bf16.mxu0 0
        %5340 = vmatpush1.bf16.msra.mxu0 %v5318
        %5341 = vmatprep.subr.bf16.mxu0 0
        %5342 = vmatpush1.bf16.msra.mxu0 %v5319
        %5343 = vmatprep.subr.bf16.mxu0 0
        %5344 = vmatpush1.bf16.msra.mxu0 %v5320
        %5345 = vmatprep.subr.bf16.mxu0 0
        %5346 = vmatpush1.bf16.msra.mxu0 0
        %5347 = vmatprep.subr.bf16.mxu0 0
        %5348 = vmatpush1.bf16.msra.mxu0 0
        %5349 = vmatprep.subr.bf16.mxu0 0
        %5350 = vmatpush1.bf16.msra.mxu0 0
        %5351 = vmatprep.subr.bf16.mxu0 0
        %5352 = vmatpush1.bf16.msra.mxu0 0
        %5353 = vmatprep.subr.bf16.mxu0 0
        %5354 = vmatpush1.bf16.msra.mxu0 0
        %5355 = vmatprep.subr.bf16.mxu0 0
        %5356 = vmatpush1.bf16.msra.mxu0 0
        %5357 = vmatprep.subr.bf16.mxu0 0
        %5358 = vmatpush1.bf16.msra.mxu0 0
        %5359 = vmatprep.subr.bf16.mxu0 0
        %5360 = vmatpush1.bf16.msra.mxu0 0
        %5361 = vmatprep.mubr.bf16.mxu0 0
        %5362 = vmatmul.mubr.bf16.gmra.mrb[0].mxu0 %v5265
        %v5363 = vpop.f32.mrb[0].mxu0
        %v5364 = vadd.f32 0.0, %v5363
        %v5365 = vpop.f32.mrb[0].mxu0
        %v5366 = vpop.f32.mrb[0].mxu0
        %v5367 = vadd.f32 0.0, %v5366
        %v5368 = vpop.f32.mrb[0].mxu0
        %5369 = vmatprep.mubr.bf16.mxu0 0
        %5370 = vmatmul.mubr.bf16.gmra.mrb[0].mxu0 %v5266
        %v5371 = vpop.f32.mrb[0].mxu0
        %v5372 = vadd.f32 0.0, %v5371
        %v5373 = vpop.f32.mrb[0].mxu0
        %v5374 = vpop.f32.mrb[0].mxu0
        %v5375 = vadd.f32 0.0, %v5374
        %v5376 = vpop.f32.mrb[0].mxu0
        %5377 = vmatprep.mubr.bf16.mxu0 0
        %5378 = vmatmul.mubr.bf16.gmra.mrb[0].mxu0 %v5267
        %v5379 = vpop.f32.mrb[0].mxu0
        %v5380 = vadd.f32 0.0, %v5379
        %v5381 = vpop.f32.mrb[0].mxu0
        %v5382 = vpop.f32.mrb[0].mxu0
        %v5383 = vadd.f32 0.0, %v5382
        %v5384 = vpop.f32.mrb[0].mxu0
        %5385 = vmatprep.mubr.bf16.mxu0 0
        %5386 = vmatmul.mubr.bf16.gmra.mrb[0].mxu0 %v5268
        %v5387 = vpop.f32.mrb[0].mxu0
        %v5388 = vadd.f32 0.0, %v5387
        %v5389 = vpop.f32.mrb[0].mxu0
        %v5390 = vpop.f32.mrb[0].mxu0
        %v5391 = vadd.f32 0.0, %v5390
        %v5392 = vpop.f32.mrb[0].mxu0
        %5393 = vmatprep.mubr.bf16.mxu0 0
        %5394 = vmatmul.mubr.bf16.gmra.mrb[0].mxu0 %v5269
        %v5395 = vpop.f32.mrb[0].mxu0
        %v5396 = vadd.f32 0.0, %v5395
        %v5397 = vpop.f32.mrb[0].mxu0
        %v5398 = vpop.f32.mrb[0].mxu0
        %v5399 = vadd.f32 0.0, %v5398
        %v5400 = vpop.f32.mrb[0].mxu0
        %5401 = vmatprep.mubr.bf16.mxu0 0
        %5402 = vmatmul.mubr.bf16.gmra.mrb[0].mxu0 %v5270
        %v5403 = vpop.f32.mrb[0].mxu0
        %v5404 = vadd.f32 0.0, %v5403
        %v5405 = vpop.f32.mrb[0].mxu0
        %v5406 = vpop.f32.mrb[0].mxu0
        %v5407 = vadd.f32 0.0, %v5406
        %v5408 = vpop.f32.mrb[0].mxu0
        %5409 = vmatprep.mubr.bf16.mxu0 0
        %5410 = vmatmul.mubr.bf16.gmra.mrb[0].mxu0 %v5271
        %v5411 = vpop.f32.mrb[0].mxu0
        %v5412 = vadd.f32 0.0, %v5411
        %v5413 = vpop.f32.mrb[0].mxu0
        %v5414 = vpop.f32.mrb[0].mxu0
        %v5415 = vadd.f32 0.0, %v5414
        %v5416 = vpop.f32.mrb[0].mxu0
        %5417 = vmatprep.mubr.bf16.mxu0 0
        %5418 = vmatmul.mubr.bf16.gmra.mrb[0].mxu0 %v5272
        %v5419 = vpop.f32.mrb[0].mxu0
        %v5420 = vadd.f32 0.0, %v5419
        %v5421 = vpop.f32.mrb[0].mxu0
        %v5422 = vpop.f32.mrb[0].mxu0
        %v5423 = vadd.f32 0.0, %v5422
        %v5424 = vpop.f32.mrb[0].mxu0
        %5425 = vdwg.mxu0
        %v5426 = vadd.f32 %v5183, %v5364
        %v5427 = vadd.f32 %v5184, %v5367
        %v5428 = vadd.f32 %v5185, %v5372
        %v5429 = vadd.f32 %v5186, %v5375
        %v5430 = vadd.f32 %v5187, %v5380
        %v5431 = vadd.f32 %v5188, %v5383
        %v5432 = vadd.f32 %v5189, %v5388
        %v5433 = vadd.f32 %v5190, %v5391
        %v5434 = vadd.f32 %v5191, %v5396
        %v5435 = vadd.f32 %v5192, %v5399
        %v5436 = vadd.f32 %v5193, %v5404
        %v5437 = vadd.f32 %v5194, %v5407
        %v5438 = vadd.f32 %v5195, %v5412
        %v5439 = vadd.f32 %v5196, %v5415
        %v5440 = vadd.f32 %v5197, %v5420
        %v5441 = vadd.f32 %v5198, %v5423
        %v5442 = vld [vmem:[%s5199] sm:$0xf]
        %v5443 = vld [vmem:[%s5199 + $0x4] sm:$0xf]
        %v5444 = vld [vmem:[%s5199 + $0x8] sm:$0x1]
        %v5445 = vld [vmem:[%s5199 + $0xc] sm:$0xf]
        %v5446 = vld [vmem:[%s5199 + $0x10] sm:$0xf]
        %v5447 = vld [vmem:[%s5199 + $0x14] sm:$0x1]
        %v5448 = vld [vmem:[%s5199 + $0x18] sm:$0xf]
        %v5449 = vld [vmem:[%s5199 + $0x1c] sm:$0xf]
        %v5450 = vld [vmem:[%s5199 + $0x20] sm:$0x1]
        %v5451 = vld [vmem:[%s5199 + $0x24] sm:$0xf]
        %v5452 = vld [vmem:[%s5199 + $0x28] sm:$0xf]
        %v5453 = vld [vmem:[%s5199 + $0x2c] sm:$0x1]
        %v5454 = vld [vmem:[%s5199 + $0x30] sm:$0xf]
        %v5455 = vld [vmem:[%s5199 + $0x34] sm:$0xf]
        %v5456 = vld [vmem:[%s5199 + $0x38] sm:$0x1]
        %v5457 = vld [vmem:[%s5199 + $0x3c] sm:$0xf]
        %v5458 = vld [vmem:[%s5199 + $0x40] sm:$0xf]
        %v5459 = vld [vmem:[%s5199 + $0x44] sm:$0x1]
        %v5460 = vld [vmem:[%s5199 + $0x48] sm:$0xf]
        %v5461 = vld [vmem:[%s5199 + $0x4c] sm:$0xf]
        %v5462 = vld [vmem:[%s5199 + $0x50] sm:$0x1]
        %v5463 = vld [vmem:[%s5199 + $0x54] sm:$0xf]
        %v5464 = vld [vmem:[%s5199 + $0x58] sm:$0xf]
        %v5465 = vld [vmem:[%s5199 + $0x5c] sm:$0x1]
        %v5467 = vshrl.u32 %v5442, 16
        %v5469 = vrot.slane %v5467, 4
        %v5470 = vshll.u32 %v5442, 16
        %v5472 = vrot.slane %v5470, 5
        %v5473 = vor.u32 %v5469, %v5472
        %v5474 = vrot.slane %v5473, 4
        %v5476 = vshll.u32 %v5443, 16
        %v5478 = vrot.slane %v5476, 5
        %v5479 = vsel %vm538, %v5474, %v5478
        %v5480 = vshrl.u32 %v5443, 16
        %v5482 = vrot.slane %v5480, 4
        %v5483 = vor.u32 %v5482, %v5478
        %v5484 = vrot.slane %v5483, 4
        %v5486 = vshll.u32 %v5444, 16
        %v5488 = vrot.slane %v5486, 5
        %v5489 = vsel %vm538, %v5484, %v5488
        %v5491 = vshrl.u32 %v5445, 16
        %v5493 = vrot.slane %v5491, 4
        %v5494 = vshll.u32 %v5445, 16
        %v5496 = vrot.slane %v5494, 5
        %v5497 = vor.u32 %v5493, %v5496
        %v5498 = vrot.slane %v5497, 4
        %v5500 = vshll.u32 %v5446, 16
        %v5502 = vrot.slane %v5500, 5
        %v5503 = vsel %vm538, %v5498, %v5502
        %v5504 = vshrl.u32 %v5446, 16
        %v5506 = vrot.slane %v5504, 4
        %v5507 = vor.u32 %v5506, %v5502
        %v5508 = vrot.slane %v5507, 4
        %v5510 = vshll.u32 %v5447, 16
        %v5512 = vrot.slane %v5510, 5
        %v5513 = vsel %vm538, %v5508, %v5512
        %v5515 = vshrl.u32 %v5448, 16
        %v5517 = vrot.slane %v5515, 4
        %v5518 = vshll.u32 %v5448, 16
        %v5520 = vrot.slane %v5518, 5
        %v5521 = vor.u32 %v5517, %v5520
        %v5522 = vrot.slane %v5521, 4
        %v5524 = vshll.u32 %v5449, 16
        %v5526 = vrot.slane %v5524, 5
        %v5527 = vsel %vm538, %v5522, %v5526
        %v5528 = vshrl.u32 %v5449, 16
        %v5530 = vrot.slane %v5528, 4
        %v5531 = vor.u32 %v5530, %v5526
        %v5532 = vrot.slane %v5531, 4
        %v5534 = vshll.u32 %v5450, 16
        %v5536 = vrot.slane %v5534, 5
        %v5537 = vsel %vm538, %v5532, %v5536
        %v5539 = vshrl.u32 %v5451, 16
        %v5541 = vrot.slane %v5539, 4
        %v5542 = vshll.u32 %v5451, 16
        %v5544 = vrot.slane %v5542, 5
        %v5545 = vor.u32 %v5541, %v5544
        %v5546 = vrot.slane %v5545, 4
        %v5548 = vshll.u32 %v5452, 16
        %v5550 = vrot.slane %v5548, 5
        %v5551 = vsel %vm538, %v5546, %v5550
        %v5552 = vshrl.u32 %v5452, 16
        %v5554 = vrot.slane %v5552, 4
        %v5555 = vor.u32 %v5554, %v5550
        %v5556 = vrot.slane %v5555, 4
        %v5558 = vshll.u32 %v5453, 16
        %v5560 = vrot.slane %v5558, 5
        %v5561 = vsel %vm538, %v5556, %v5560
        %v5563 = vshrl.u32 %v5454, 16
        %v5565 = vrot.slane %v5563, 4
        %v5566 = vshll.u32 %v5454, 16
        %v5568 = vrot.slane %v5566, 5
        %v5569 = vor.u32 %v5565, %v5568
        %v5570 = vrot.slane %v5569, 4
        %v5572 = vshll.u32 %v5455, 16
        %v5574 = vrot.slane %v5572, 5
        %v5575 = vsel %vm538, %v5570, %v5574
        %v5576 = vshrl.u32 %v5455, 16
        %v5578 = vrot.slane %v5576, 4
        %v5579 = vor.u32 %v5578, %v5574
        %v5580 = vrot.slane %v5579, 4
        %v5582 = vshll.u32 %v5456, 16
        %v5584 = vrot.slane %v5582, 5
        %v5585 = vsel %vm538, %v5580, %v5584
        %v5587 = vshrl.u32 %v5457, 16
        %v5589 = vrot.slane %v5587, 4
        %v5590 = vshll.u32 %v5457, 16
        %v5592 = vrot.slane %v5590, 5
        %v5593 = vor.u32 %v5589, %v5592
        %v5594 = vrot.slane %v5593, 4
        %v5596 = vshll.u32 %v5458, 16
        %v5598 = vrot.slane %v5596, 5
        %v5599 = vsel %vm538, %v5594, %v5598
        %v5600 = vshrl.u32 %v5458, 16
        %v5602 = vrot.slane %v5600, 4
        %v5603 = vor.u32 %v5602, %v5598
        %v5604 = vrot.slane %v5603, 4
        %v5606 = vshll.u32 %v5459, 16
        %v5608 = vrot.slane %v5606, 5
        %v5609 = vsel %vm538, %v5604, %v5608
        %v5611 = vshrl.u32 %v5460, 16
        %v5613 = vrot.slane %v5611, 4
        %v5614 = vshll.u32 %v5460, 16
        %v5616 = vrot.slane %v5614, 5
        %v5617 = vor.u32 %v5613, %v5616
        %v5618 = vrot.slane %v5617, 4
        %v5620 = vshll.u32 %v5461, 16
        %v5622 = vrot.slane %v5620, 5
        %v5623 = vsel %vm538, %v5618, %v5622
        %v5624 = vshrl.u32 %v5461, 16
        %v5626 = vrot.slane %v5624, 4
        %v5627 = vor.u32 %v5626, %v5622
        %v5628 = vrot.slane %v5627, 4
        %v5630 = vshll.u32 %v5462, 16
        %v5632 = vrot.slane %v5630, 5
        %v5633 = vsel %vm538, %v5628, %v5632
        %v5635 = vshrl.u32 %v5463, 16
        %v5637 = vrot.slane %v5635, 4
        %v5638 = vshll.u32 %v5463, 16
        %v5640 = vrot.slane %v5638, 5
        %v5641 = vor.u32 %v5637, %v5640
        %v5642 = vrot.slane %v5641, 4
        %v5644 = vshll.u32 %v5464, 16
        %v5646 = vrot.slane %v5644, 5
        %v5647 = vsel %vm538, %v5642, %v5646
        %v5648 = vshrl.u32 %v5464, 16
        %v5650 = vrot.slane %v5648, 4
        %v5651 = vor.u32 %v5650, %v5646
        %v5652 = vrot.slane %v5651, 4
        %v5654 = vshll.u32 %v5465, 16
        %v5656 = vrot.slane %v5654, 5
        %v5657 = vsel %vm538, %v5652, %v5656
        %s5658 = scalar_lea.vmem %s3, 256
        %v5659 = vld [vmem:[%s5658] sm:$0xf]
        %v5660 = vld [vmem:[%s5658 + $0x4] sm:$0xf]
        %v5661 = vld [vmem:[%s5658 + $0x8] sm:$0xf]
        %v5662 = vld [vmem:[%s5658 + $0xc] sm:$0xf]
        %v5663 = vld [vmem:[%s5658 + $0x10] sm:$0xf]
        %v5664 = vld [vmem:[%s5658 + $0x14] sm:$0xf]
        %v5665 = vld [vmem:[%s5658 + $0x18] sm:$0xf]
        %v5666 = vld [vmem:[%s5658 + $0x1c] sm:$0xf]
        %v5667 = vld [vmem:[%s5658 + $0x20] sm:$0xf]
        %v5668 = vld [vmem:[%s5658 + $0x24] sm:$0xf]
        %v5669 = vld [vmem:[%s5658 + $0x28] sm:$0xf]
        %v5670 = vld [vmem:[%s5658 + $0x2c] sm:$0xf]
        %v5671 = vld [vmem:[%s5658 + $0x30] sm:$0xf]
        %v5672 = vld [vmem:[%s5658 + $0x34] sm:$0xf]
        %v5673 = vld [vmem:[%s5658 + $0x38] sm:$0xf]
        %v5674 = vld [vmem:[%s5658 + $0x3c] sm:$0xf]
        %v5675 = vunpack.c.l.b16 %v5479
        %v5676 = vunpack.c.l.b16 %v5489
        %v5677 = vunpack.c.l.b16 %v5503
        %v5678 = vunpack.c.l.b16 %v5513
        %v5679 = vunpack.c.l.b16 %v5527
        %v5680 = vunpack.c.l.b16 %v5537
        %v5681 = vunpack.c.l.b16 %v5551
        %v5682 = vunpack.c.l.b16 %v5561
        %v5683 = vunpack.c.l.b16 %v5575
        %v5684 = vunpack.c.l.b16 %v5585
        %v5685 = vunpack.c.l.b16 %v5599
        %v5686 = vunpack.c.l.b16 %v5609
        %v5687 = vunpack.c.l.b16 %v5623
        %v5688 = vunpack.c.l.b16 %v5633
        %v5689 = vunpack.c.l.b16 %v5647
        %v5690 = vunpack.c.l.b16 %v5657
        %v5691 = vpack.c.b16 %v5676, %v5675
        %v5692 = vpack.c.b16 %v5678, %v5677
        %v5693 = vpack.c.b16 %v5680, %v5679
        %v5694 = vpack.c.b16 %v5682, %v5681
        %v5695 = vpack.c.b16 %v5684, %v5683
        %v5696 = vpack.c.b16 %v5686, %v5685
        %v5697 = vpack.c.b16 %v5688, %v5687
        %v5698 = vpack.c.b16 %v5690, %v5689
        %v5723 = vunpack.c.l.b16 %v5659
        %v5724 = vunpack.c.l.b16 %v5660
        %v5725 = vunpack.c.l.b16 %v5661
        %v5726 = vunpack.c.l.b16 %v5662
        %v5727 = vunpack.c.l.b16 %v5663
        %v5728 = vunpack.c.l.b16 %v5664
        %v5729 = vunpack.c.l.b16 %v5665
        %v5730 = vunpack.c.l.b16 %v5666
        %v5731 = vunpack.c.l.b16 %v5667
        %v5732 = vunpack.c.l.b16 %v5668
        %v5733 = vunpack.c.l.b16 %v5669
        %v5734 = vunpack.c.l.b16 %v5670
        %v5735 = vunpack.c.l.b16 %v5671
        %v5736 = vunpack.c.l.b16 %v5672
        %v5737 = vunpack.c.l.b16 %v5673
        %v5738 = vunpack.c.l.b16 %v5674
        %v5739 = vpack.c.b16 %v5724, %v5723
        %v5740 = vpack.c.b16 %v5726, %v5725
        %v5741 = vpack.c.b16 %v5728, %v5727
        %v5742 = vpack.c.b16 %v5730, %v5729
        %v5743 = vpack.c.b16 %v5732, %v5731
        %v5744 = vpack.c.b16 %v5734, %v5733
        %v5745 = vpack.c.b16 %v5736, %v5735
        %v5746 = vpack.c.b16 %v5738, %v5737
        %5755 = vmatprep.subr.bf16.mxu0 0
        %5756 = vmatpush1.bf16.msra.mxu0 %v5739
        %5757 = vmatprep.subr.bf16.mxu0 0
        %5758 = vmatpush1.bf16.msra.mxu0 %v5740
        %5759 = vmatprep.subr.bf16.mxu0 0
        %5760 = vmatpush1.bf16.msra.mxu0 %v5741
        %5761 = vmatprep.subr.bf16.mxu0 0
        %5762 = vmatpush1.bf16.msra.mxu0 %v5742
        %5763 = vmatprep.subr.bf16.mxu0 0
        %5764 = vmatpush1.bf16.msra.mxu0 %v5743
        %5765 = vmatprep.subr.bf16.mxu0 0
        %5766 = vmatpush1.bf16.msra.mxu0 %v5744
        %5767 = vmatprep.subr.bf16.mxu0 0
        %5768 = vmatpush1.bf16.msra.mxu0 %v5745
        %5769 = vmatprep.subr.bf16.mxu0 0
        %5770 = vmatpush1.bf16.msra.mxu0 %v5746
        %5771 = vmatprep.subr.bf16.mxu0 0
        %5772 = vmatpush1.bf16.msra.mxu0 0
        %5773 = vmatprep.subr.bf16.mxu0 0
        %5774 = vmatpush1.bf16.msra.mxu0 0
        %5775 = vmatprep.subr.bf16.mxu0 0
        %5776 = vmatpush1.bf16.msra.mxu0 0
        %5777 = vmatprep.subr.bf16.mxu0 0
        %5778 = vmatpush1.bf16.msra.mxu0 0
        %5779 = vmatprep.subr.bf16.mxu0 0
        %5780 = vmatpush1.bf16.msra.mxu0 0
        %5781 = vmatprep.subr.bf16.mxu0 0
        %5782 = vmatpush1.bf16.msra.mxu0 0
        %5783 = vmatprep.subr.bf16.mxu0 0
        %5784 = vmatpush1.bf16.msra.mxu0 0
        %5785 = vmatprep.subr.bf16.mxu0 0
        %5786 = vmatpush1.bf16.msra.mxu0 0
        %5787 = vmatprep.mubr.bf16.mxu0 0
        %5788 = vmatmul.mubr.bf16.gmra.mrb[0].mxu0 %v5691
        %v5789 = vpop.f32.mrb[0].mxu0
        %v5790 = vadd.f32 0.0, %v5789
        %v5791 = vpop.f32.mrb[0].mxu0
        %v5792 = vpop.f32.mrb[0].mxu0
        %v5793 = vadd.f32 0.0, %v5792
        %v5794 = vpop.f32.mrb[0].mxu0
        %5795 = vmatprep.mubr.bf16.mxu0 0
        %5796 = vmatmul.mubr.bf16.gmra.mrb[0].mxu0 %v5692
        %v5797 = vpop.f32.mrb[0].mxu0
        %v5798 = vadd.f32 0.0, %v5797
        %v5799 = vpop.f32.mrb[0].mxu0
        %v5800 = vpop.f32.mrb[0].mxu0
        %v5801 = vadd.f32 0.0, %v5800
        %v5802 = vpop.f32.mrb[0].mxu0
        %5803 = vmatprep.mubr.bf16.mxu0 0
        %5804 = vmatmul.mubr.bf16.gmra.mrb[0].mxu0 %v5693
        %v5805 = vpop.f32.mrb[0].mxu0
        %v5806 = vadd.f32 0.0, %v5805
        %v5807 = vpop.f32.mrb[0].mxu0
        %v5808 = vpop.f32.mrb[0].mxu0
        %v5809 = vadd.f32 0.0, %v5808
        %v5810 = vpop.f32.mrb[0].mxu0
        %5811 = vmatprep.mubr.bf16.mxu0 0
        %5812 = vmatmul.mubr.bf16.gmra.mrb[0].mxu0 %v5694
        %v5813 = vpop.f32.mrb[0].mxu0
        %v5814 = vadd.f32 0.0, %v5813
        %v5815 = vpop.f32.mrb[0].mxu0
        %v5816 = vpop.f32.mrb[0].mxu0
        %v5817 = vadd.f32 0.0, %v5816
        %v5818 = vpop.f32.mrb[0].mxu0
        %5819 = vmatprep.mubr.bf16.mxu0 0
        %5820 = vmatmul.mubr.bf16.gmra.mrb[0].mxu0 %v5695
        %v5821 = vpop.f32.mrb[0].mxu0
        %v5822 = vadd.f32 0.0, %v5821
        %v5823 = vpop.f32.mrb[0].mxu0
        %v5824 = vpop.f32.mrb[0].mxu0
        %v5825 = vadd.f32 0.0, %v5824
        %v5826 = vpop.f32.mrb[0].mxu0
        %5827 = vmatprep.mubr.bf16.mxu0 0
        %5828 = vmatmul.mubr.bf16.gmra.mrb[0].mxu0 %v5696
        %v5829 = vpop.f32.mrb[0].mxu0
        %v5830 = vadd.f32 0.0, %v5829
        %v5831 = vpop.f32.mrb[0].mxu0
        %v5832 = vpop.f32.mrb[0].mxu0
        %v5833 = vadd.f32 0.0, %v5832
        %v5834 = vpop.f32.mrb[0].mxu0
        %5835 = vmatprep.mubr.bf16.mxu0 0
        %5836 = vmatmul.mubr.bf16.gmra.mrb[0].mxu0 %v5697
        %v5837 = vpop.f32.mrb[0].mxu0
        %v5838 = vadd.f32 0.0, %v5837
        %v5839 = vpop.f32.mrb[0].mxu0
        %v5840 = vpop.f32.mrb[0].mxu0
        %v5841 = vadd.f32 0.0, %v5840
        %v5842 = vpop.f32.mrb[0].mxu0
        %5843 = vmatprep.mubr.bf16.mxu0 0
        %5844 = vmatmul.mubr.bf16.gmra.mrb[0].mxu0 %v5698
        %v5845 = vpop.f32.mrb[0].mxu0
        %v5846 = vadd.f32 0.0, %v5845
        %v5847 = vpop.f32.mrb[0].mxu0
        %v5848 = vpop.f32.mrb[0].mxu0
        %v5849 = vadd.f32 0.0, %v5848
        %v5850 = vpop.f32.mrb[0].mxu0
        %5851 = vdwg.mxu0
        %v5852 = vadd.f32 %v5426, %v5790
        %v5853 = vadd.f32 %v5427, %v5793
        %v5854 = vadd.f32 %v5428, %v5798
        %v5855 = vadd.f32 %v5429, %v5801
        %v5856 = vadd.f32 %v5430, %v5806
        %v5857 = vadd.f32 %v5431, %v5809
        %v5858 = vadd.f32 %v5432, %v5814
        %v5859 = vadd.f32 %v5433, %v5817
        %v5860 = vadd.f32 %v5434, %v5822
        %v5861 = vadd.f32 %v5435, %v5825
        %v5862 = vadd.f32 %v5436, %v5830
        %v5863 = vadd.f32 %v5437, %v5833
        %v5864 = vadd.f32 %v5438, %v5838
        %v5865 = vadd.f32 %v5439, %v5841
        %v5866 = vadd.f32 %v5440, %v5846
        %v5867 = vadd.f32 %v5441, %v5849
        %v5868 = vld [vmem:[%s5199] sm:$0xe]
        %v5869 = vld [vmem:[%s5199 + $0xc] sm:$0xe]
        %v5870 = vld [vmem:[%s5199 + $0x18] sm:$0xe]
        %v5871 = vld [vmem:[%s5199 + $0x24] sm:$0xe]
        %v5872 = vld [vmem:[%s5199 + $0x30] sm:$0xe]
        %v5873 = vld [vmem:[%s5199 + $0x3c] sm:$0xe]
        %v5874 = vld [vmem:[%s5199 + $0x48] sm:$0xe]
        %v5875 = vld [vmem:[%s5199 + $0x54] sm:$0xe]
        %v5900 = vrot.slane %v5868, 5
        %v5901 = vrot.slane %v5900, 4
        %v5902 = vrot.slane %v5443, 5
        %v5903 = vsel %vm1250, %v5901, %v5902
        %v5904 = vrot.slane %v5902, 4
        %v5905 = vrot.slane %v5444, 5
        %v5906 = vsel %vm1250, %v5904, %v5905
        %v5907 = vrot.slane %v5869, 5
        %v5908 = vrot.slane %v5907, 4
        %v5909 = vrot.slane %v5446, 5
        %v5910 = vsel %vm1250, %v5908, %v5909
        %v5911 = vrot.slane %v5909, 4
        %v5912 = vrot.slane %v5447, 5
        %v5913 = vsel %vm1250, %v5911, %v5912
        %v5914 = vrot.slane %v5870, 5
        %v5915 = vrot.slane %v5914, 4
        %v5916 = vrot.slane %v5449, 5
        %v5917 = vsel %vm1250, %v5915, %v5916
        %v5918 = vrot.slane %v5916, 4
        %v5919 = vrot.slane %v5450, 5
        %v5920 = vsel %vm1250, %v5918, %v5919
        %v5921 = vrot.slane %v5871, 5
        %v5922 = vrot.slane %v5921, 4
        %v5923 = vrot.slane %v5452, 5
        %v5924 = vsel %vm1250, %v5922, %v5923
        %v5925 = vrot.slane %v5923, 4
        %v5926 = vrot.slane %v5453, 5
        %v5927 = vsel %vm1250, %v5925, %v5926
        %v5928 = vrot.slane %v5872, 5
        %v5929 = vrot.slane %v5928, 4
        %v5930 = vrot.slane %v5455, 5
        %v5931 = vsel %vm1250, %v5929, %v5930
        %v5932 = vrot.slane %v5930, 4
        %v5933 = vrot.slane %v5456, 5
        %v5934 = vsel %vm1250, %v5932, %v5933
        %v5935 = vrot.slane %v5873, 5
        %v5936 = vrot.slane %v5935, 4
        %v5937 = vrot.slane %v5458, 5
        %v5938 = vsel %vm1250, %v5936, %v5937
        %v5939 = vrot.slane %v5937, 4
        %v5940 = vrot.slane %v5459, 5
        %v5941 = vsel %vm1250, %v5939, %v5940
        %v5942 = vrot.slane %v5874, 5
        %v5943 = vrot.slane %v5942, 4
        %v5944 = vrot.slane %v5461, 5
        %v5945 = vsel %vm1250, %v5943, %v5944
        %v5946 = vrot.slane %v5944, 4
        %v5947 = vrot.slane %v5462, 5
        %v5948 = vsel %vm1250, %v5946, %v5947
        %v5949 = vrot.slane %v5875, 5
        %v5950 = vrot.slane %v5949, 4
        %v5951 = vrot.slane %v5464, 5
        %v5952 = vsel %vm1250, %v5950, %v5951
        %v5953 = vrot.slane %v5951, 4
        %v5954 = vrot.slane %v5465, 5
        %v5955 = vsel %vm1250, %v5953, %v5954
        %s5956 = scalar_lea.vmem %s3, 320
        %v5957 = vld [vmem:[%s5956] sm:$0xf]
        %v5958 = vld [vmem:[%s5956 + $0x4] sm:$0xf]
        %v5959 = vld [vmem:[%s5956 + $0x8] sm:$0xf]
        %v5960 = vld [vmem:[%s5956 + $0xc] sm:$0xf]
        %v5961 = vld [vmem:[%s5956 + $0x10] sm:$0xf]
        %v5962 = vld [vmem:[%s5956 + $0x14] sm:$0xf]
        %v5963 = vld [vmem:[%s5956 + $0x18] sm:$0xf]
        %v5964 = vld [vmem:[%s5956 + $0x1c] sm:$0xf]
        %v5965 = vld [vmem:[%s5956 + $0x20] sm:$0xf]
        %v5966 = vld [vmem:[%s5956 + $0x24] sm:$0xf]
        %v5967 = vld [vmem:[%s5956 + $0x28] sm:$0xf]
        %v5968 = vld [vmem:[%s5956 + $0x2c] sm:$0xf]
        %v5969 = vld [vmem:[%s5956 + $0x30] sm:$0xf]
        %v5970 = vld [vmem:[%s5956 + $0x34] sm:$0xf]
        %v5971 = vld [vmem:[%s5956 + $0x38] sm:$0xf]
        %v5972 = vld [vmem:[%s5956 + $0x3c] sm:$0xf]
        %v5973 = vunpack.c.l.b16 %v5903
        %v5974 = vunpack.c.l.b16 %v5906
        %v5975 = vunpack.c.l.b16 %v5910
        %v5976 = vunpack.c.l.b16 %v5913
        %v5977 = vunpack.c.l.b16 %v5917
        %v5978 = vunpack.c.l.b16 %v5920
        %v5979 = vunpack.c.l.b16 %v5924
        %v5980 = vunpack.c.l.b16 %v5927
        %v5981 = vunpack.c.l.b16 %v5931
        %v5982 = vunpack.c.l.b16 %v5934
        %v5983 = vunpack.c.l.b16 %v5938
        %v5984 = vunpack.c.l.b16 %v5941
        %v5985 = vunpack.c.l.b16 %v5945
        %v5986 = vunpack.c.l.b16 %v5948
        %v5987 = vunpack.c.l.b16 %v5952
        %v5988 = vunpack.c.l.b16 %v5955
        %v5989 = vpack.c.b16 %v5974, %v5973
        %v5990 = vpack.c.b16 %v5976, %v5975
        %v5991 = vpack.c.b16 %v5978, %v5977
        %v5992 = vpack.c.b16 %v5980, %v5979
        %v5993 = vpack.c.b16 %v5982, %v5981
        %v5994 = vpack.c.b16 %v5984, %v5983
        %v5995 = vpack.c.b16 %v5986, %v5985
        %v5996 = vpack.c.b16 %v5988, %v5987
        %v6021 = vunpack.c.l.b16 %v5957
        %v6022 = vunpack.c.l.b16 %v5958
        %v6023 = vunpack.c.l.b16 %v5959
        %v6024 = vunpack.c.l.b16 %v5960
        %v6025 = vunpack.c.l.b16 %v5961
        %v6026 = vunpack.c.l.b16 %v5962
        %v6027 = vunpack.c.l.b16 %v5963
        %v6028 = vunpack.c.l.b16 %v5964
        %v6029 = vunpack.c.l.b16 %v5965
        %v6030 = vunpack.c.l.b16 %v5966
        %v6031 = vunpack.c.l.b16 %v5967
        %v6032 = vunpack.c.l.b16 %v5968
        %v6033 = vunpack.c.l.b16 %v5969
        %v6034 = vunpack.c.l.b16 %v5970
        %v6035 = vunpack.c.l.b16 %v5971
        %v6036 = vunpack.c.l.b16 %v5972
        %v6037 = vpack.c.b16 %v6022, %v6021
        %v6038 = vpack.c.b16 %v6024, %v6023
        %v6039 = vpack.c.b16 %v6026, %v6025
        %v6040 = vpack.c.b16 %v6028, %v6027
        %v6041 = vpack.c.b16 %v6030, %v6029
        %v6042 = vpack.c.b16 %v6032, %v6031
        %v6043 = vpack.c.b16 %v6034, %v6033
        %v6044 = vpack.c.b16 %v6036, %v6035
        %6053 = vmatprep.subr.bf16.mxu0 0
        %6054 = vmatpush1.bf16.msra.mxu0 %v6037
        %6055 = vmatprep.subr.bf16.mxu0 0
        %6056 = vmatpush1.bf16.msra.mxu0 %v6038
        %6057 = vmatprep.subr.bf16.mxu0 0
        %6058 = vmatpush1.bf16.msra.mxu0 %v6039
        %6059 = vmatprep.subr.bf16.mxu0 0
        %6060 = vmatpush1.bf16.msra.mxu0 %v6040
        %6061 = vmatprep.subr.bf16.mxu0 0
        %6062 = vmatpush1.bf16.msra.mxu0 %v6041
        %6063 = vmatprep.subr.bf16.mxu0 0
        %6064 = vmatpush1.bf16.msra.mxu0 %v6042
        %6065 = vmatprep.subr.bf16.mxu0 0
        %6066 = vmatpush1.bf16.msra.mxu0 %v6043
        %6067 = vmatprep.subr.bf16.mxu0 0
        %6068 = vmatpush1.bf16.msra.mxu0 %v6044
        %6069 = vmatprep.subr.bf16.mxu0 0
        %6070 = vmatpush1.bf16.msra.mxu0 0
        %6071 = vmatprep.subr.bf16.mxu0 0
        %6072 = vmatpush1.bf16.msra.mxu0 0
        %6073 = vmatprep.subr.bf16.mxu0 0
        %6074 = vmatpush1.bf16.msra.mxu0 0
        %6075 = vmatprep.subr.bf16.mxu0 0
        %6076 = vmatpush1.bf16.msra.mxu0 0
        %6077 = vmatprep.subr.bf16.mxu0 0
        %6078 = vmatpush1.bf16.msra.mxu0 0
        %6079 = vmatprep.subr.bf16.mxu0 0
        %6080 = vmatpush1.bf16.msra.mxu0 0
        %6081 = vmatprep.subr.bf16.mxu0 0
        %6082 = vmatpush1.bf16.msra.mxu0 0
        %6083 = vmatprep.subr.bf16.mxu0 0
        %6084 = vmatpush1.bf16.msra.mxu0 0
        %6085 = vmatprep.mubr.bf16.mxu0 0
        %6086 = vmatmul.mubr.bf16.gmra.mrb[0].mxu0 %v5989
        %v6087 = vpop.f32.mrb[0].mxu0
        %v6088 = vadd.f32 0.0, %v6087
        %v6089 = vpop.f32.mrb[0].mxu0
        %v6090 = vpop.f32.mrb[0].mxu0
        %v6091 = vadd.f32 0.0, %v6090
        %v6092 = vpop.f32.mrb[0].mxu0
        %6093 = vmatprep.mubr.bf16.mxu0 0
        %6094 = vmatmul.mubr.bf16.gmra.mrb[0].mxu0 %v5990
        %v6095 = vpop.f32.mrb[0].mxu0
        %v6096 = vadd.f32 0.0, %v6095
        %v6097 = vpop.f32.mrb[0].mxu0
        %v6098 = vpop.f32.mrb[0].mxu0
        %v6099 = vadd.f32 0.0, %v6098
        %v6100 = vpop.f32.mrb[0].mxu0
        %6101 = vmatprep.mubr.bf16.mxu0 0
        %6102 = vmatmul.mubr.bf16.gmra.mrb[0].mxu0 %v5991
        %v6103 = vpop.f32.mrb[0].mxu0
        %v6104 = vadd.f32 0.0, %v6103
        %v6105 = vpop.f32.mrb[0].mxu0
        %v6106 = vpop.f32.mrb[0].mxu0
        %v6107 = vadd.f32 0.0, %v6106
        %v6108 = vpop.f32.mrb[0].mxu0
        %6109 = vmatprep.mubr.bf16.mxu0 0
        %6110 = vmatmul.mubr.bf16.gmra.mrb[0].mxu0 %v5992
        %v6111 = vpop.f32.mrb[0].mxu0
        %v6112 = vadd.f32 0.0, %v6111
        %v6113 = vpop.f32.mrb[0].mxu0
        %v6114 = vpop.f32.mrb[0].mxu0
        %v6115 = vadd.f32 0.0, %v6114
        %v6116 = vpop.f32.mrb[0].mxu0
        %6117 = vmatprep.mubr.bf16.mxu0 0
        %6118 = vmatmul.mubr.bf16.gmra.mrb[0].mxu0 %v5993
        %v6119 = vpop.f32.mrb[0].mxu0
        %v6120 = vadd.f32 0.0, %v6119
        %v6121 = vpop.f32.mrb[0].mxu0
        %v6122 = vpop.f32.mrb[0].mxu0
        %v6123 = vadd.f32 0.0, %v6122
        %v6124 = vpop.f32.mrb[0].mxu0
        %6125 = vmatprep.mubr.bf16.mxu0 0
        %6126 = vmatmul.mubr.bf16.gmra.mrb[0].mxu0 %v5994
        %v6127 = vpop.f32.mrb[0].mxu0
        %v6128 = vadd.f32 0.0, %v6127
        %v6129 = vpop.f32.mrb[0].mxu0
        %v6130 = vpop.f32.mrb[0].mxu0
        %v6131 = vadd.f32 0.0, %v6130
        %v6132 = vpop.f32.mrb[0].mxu0
        %6133 = vmatprep.mubr.bf16.mxu0 0
        %6134 = vmatmul.mubr.bf16.gmra.mrb[0].mxu0 %v5995
        %v6135 = vpop.f32.mrb[0].mxu0
        %v6136 = vadd.f32 0.0, %v6135
        %v6137 = vpop.f32.mrb[0].mxu0
        %v6138 = vpop.f32.mrb[0].mxu0
        %v6139 = vadd.f32 0.0, %v6138
        %v6140 = vpop.f32.mrb[0].mxu0
        %6141 = vmatprep.mubr.bf16.mxu0 0
        %6142 = vmatmul.mubr.bf16.gmra.mrb[0].mxu0 %v5996
        %v6143 = vpop.f32.mrb[0].mxu0
        %v6144 = vadd.f32 0.0, %v6143
        %v6145 = vpop.f32.mrb[0].mxu0
        %v6146 = vpop.f32.mrb[0].mxu0
        %v6147 = vadd.f32 0.0, %v6146
        %v6148 = vpop.f32.mrb[0].mxu0
        %6149 = vdwg.mxu0
        %v6150 = vadd.f32 %v5852, %v6088
        %v6151 = vadd.f32 %v5853, %v6091
        %v6152 = vadd.f32 %v5854, %v6096
        %v6153 = vadd.f32 %v5855, %v6099
        %v6154 = vadd.f32 %v5856, %v6104
        %v6155 = vadd.f32 %v5857, %v6107
        %v6156 = vadd.f32 %v5858, %v6112
        %v6157 = vadd.f32 %v5859, %v6115
        %v6158 = vadd.f32 %v5860, %v6120
        %v6159 = vadd.f32 %v5861, %v6123
        %v6160 = vadd.f32 %v5862, %v6128
        %v6161 = vadd.f32 %v5863, %v6131
        %v6162 = vadd.f32 %v5864, %v6136
        %v6163 = vadd.f32 %v5865, %v6139
        %v6164 = vadd.f32 %v5866, %v6144
        %v6165 = vadd.f32 %v5867, %v6147
        %s6166 = scalar_lea.vmem [#allocation3], 24
        %v6167 = vld [vmem:[%s6166] sm:$0xf]
        %v6168 = vld [vmem:[%s6166 + $0x4] sm:$0xf]
        %v6169 = vld [vmem:[%s6166 + $0xc] sm:$0xf]
        %v6170 = vld [vmem:[%s6166 + $0x10] sm:$0xf]
        %v6171 = vld [vmem:[%s6166 + $0x18] sm:$0xf]
        %v6172 = vld [vmem:[%s6166 + $0x1c] sm:$0xf]
        %v6173 = vld [vmem:[%s6166 + $0x24] sm:$0xf]
        %v6174 = vld [vmem:[%s6166 + $0x28] sm:$0xf]
        %v6175 = vld [vmem:[%s6166 + $0x30] sm:$0xf]
        %v6176 = vld [vmem:[%s6166 + $0x34] sm:$0xf]
        %v6177 = vld [vmem:[%s6166 + $0x3c] sm:$0xf]
        %v6178 = vld [vmem:[%s6166 + $0x40] sm:$0xf]
        %v6179 = vld [vmem:[%s6166 + $0x48] sm:$0xf]
        %v6180 = vld [vmem:[%s6166 + $0x4c] sm:$0xf]
        %v6181 = vld [vmem:[%s6166 + $0x54] sm:$0xf]
        %v6182 = vld [vmem:[%s6166 + $0x58] sm:$0xf]
        %s6183 = scalar_lea.vmem %s3, 384
        %v6184 = vld [vmem:[%s6183] sm:$0xf]
        %v6185 = vld [vmem:[%s6183 + $0x4] sm:$0xf]
        %v6186 = vld [vmem:[%s6183 + $0x8] sm:$0xf]
        %v6187 = vld [vmem:[%s6183 + $0xc] sm:$0xf]
        %v6188 = vld [vmem:[%s6183 + $0x10] sm:$0xf]
        %v6189 = vld [vmem:[%s6183 + $0x14] sm:$0xf]
        %v6190 = vld [vmem:[%s6183 + $0x18] sm:$0xf]
        %v6191 = vld [vmem:[%s6183 + $0x1c] sm:$0xf]
        %v6192 = vld [vmem:[%s6183 + $0x20] sm:$0xf]
        %v6193 = vld [vmem:[%s6183 + $0x24] sm:$0xf]
        %v6194 = vld [vmem:[%s6183 + $0x28] sm:$0xf]
        %v6195 = vld [vmem:[%s6183 + $0x2c] sm:$0xf]
        %v6196 = vld [vmem:[%s6183 + $0x30] sm:$0xf]
        %v6197 = vld [vmem:[%s6183 + $0x34] sm:$0xf]
        %v6198 = vld [vmem:[%s6183 + $0x38] sm:$0xf]
        %v6199 = vld [vmem:[%s6183 + $0x3c] sm:$0xf]
        %v6216 = vunpack.c.l.b16 %v6167
        %v6217 = vunpack.c.l.b16 %v6168
        %v6218 = vunpack.c.l.b16 %v6169
        %v6219 = vunpack.c.l.b16 %v6170
        %v6220 = vunpack.c.l.b16 %v6171
        %v6221 = vunpack.c.l.b16 %v6172
        %v6222 = vunpack.c.l.b16 %v6173
        %v6223 = vunpack.c.l.b16 %v6174
        %v6224 = vunpack.c.l.b16 %v6175
        %v6225 = vunpack.c.l.b16 %v6176
        %v6226 = vunpack.c.l.b16 %v6177
        %v6227 = vunpack.c.l.b16 %v6178
        %v6228 = vunpack.c.l.b16 %v6179
        %v6229 = vunpack.c.l.b16 %v6180
        %v6230 = vunpack.c.l.b16 %v6181
        %v6231 = vunpack.c.l.b16 %v6182
        %v6232 = vpack.c.b16 %v6217, %v6216
        %v6233 = vpack.c.b16 %v6219, %v6218
        %v6234 = vpack.c.b16 %v6221, %v6220
        %v6235 = vpack.c.b16 %v6223, %v6222
        %v6236 = vpack.c.b16 %v6225, %v6224
        %v6237 = vpack.c.b16 %v6227, %v6226
        %v6238 = vpack.c.b16 %v6229, %v6228
        %v6239 = vpack.c.b16 %v6231, %v6230
        %v6264 = vunpack.c.l.b16 %v6184
        %v6265 = vunpack.c.l.b16 %v6185
        %v6266 = vunpack.c.l.b16 %v6186
        %v6267 = vunpack.c.l.b16 %v6187
        %v6268 = vunpack.c.l.b16 %v6188
        %v6269 = vunpack.c.l.b16 %v6189
        %v6270 = vunpack.c.l.b16 %v6190
        %v6271 = vunpack.c.l.b16 %v6191
        %v6272 = vunpack.c.l.b16 %v6192
        %v6273 = vunpack.c.l.b16 %v6193
        %v6274 = vunpack.c.l.b16 %v6194
        %v6275 = vunpack.c.l.b16 %v6195
        %v6276 = vunpack.c.l.b16 %v6196
        %v6277 = vunpack.c.l.b16 %v6197
        %v6278 = vunpack.c.l.b16 %v6198
        %v6279 = vunpack.c.l.b16 %v6199
        %v6280 = vpack.c.b16 %v6265, %v6264
        %v6281 = vpack.c.b16 %v6267, %v6266
        %v6282 = vpack.c.b16 %v6269, %v6268
        %v6283 = vpack.c.b16 %v6271, %v6270
        %v6284 = vpack.c.b16 %v6273, %v6272
        %v6285 = vpack.c.b16 %v6275, %v6274
        %v6286 = vpack.c.b16 %v6277, %v6276
        %v6287 = vpack.c.b16 %v6279, %v6278
        %6296 = vmatprep.subr.bf16.mxu0 0
        %6297 = vmatpush1.bf16.msra.mxu0 %v6280
        %6298 = vmatprep.subr.bf16.mxu0 0
        %6299 = vmatpush1.bf16.msra.mxu0 %v6281
        %6300 = vmatprep.subr.bf16.mxu0 0
        %6301 = vmatpush1.bf16.msra.mxu0 %v6282
        %6302 = vmatprep.subr.bf16.mxu0 0
        %6303 = vmatpush1.bf16.msra.mxu0 %v6283
        %6304 = vmatprep.subr.bf16.mxu0 0
        %6305 = vmatpush1.bf16.msra.mxu0 %v6284
        %6306 = vmatprep.subr.bf16.mxu0 0
        %6307 = vmatpush1.bf16.msra.mxu0 %v6285
        %6308 = vmatprep.subr.bf16.mxu0 0
        %6309 = vmatpush1.bf16.msra.mxu0 %v6286
        %6310 = vmatprep.subr.bf16.mxu0 0
        %6311 = vmatpush1.bf16.msra.mxu0 %v6287
        %6312 = vmatprep.subr.bf16.mxu0 0
        %6313 = vmatpush1.bf16.msra.mxu0 0
        %6314 = vmatprep.subr.bf16.mxu0 0
        %6315 = vmatpush1.bf16.msra.mxu0 0
        %6316 = vmatprep.subr.bf16.mxu0 0
        %6317 = vmatpush1.bf16.msra.mxu0 0
        %6318 = vmatprep.subr.bf16.mxu0 0
        %6319 = vmatpush1.bf16.msra.mxu0 0
        %6320 = vmatprep.subr.bf16.mxu0 0
        %6321 = vmatpush1.bf16.msra.mxu0 0
        %6322 = vmatprep.subr.bf16.mxu0 0
        %6323 = vmatpush1.bf16.msra.mxu0 0
        %6324 = vmatprep.subr.bf16.mxu0 0
        %6325 = vmatpush1.bf16.msra.mxu0 0
        %6326 = vmatprep.subr.bf16.mxu0 0
        %6327 = vmatpush1.bf16.msra.mxu0 0
        %6328 = vmatprep.mubr.bf16.mxu0 0
        %6329 = vmatmul.mubr.bf16.gmra.mrb[0].mxu0 %v6232
        %v6330 = vpop.f32.mrb[0].mxu0
        %v6331 = vadd.f32 0.0, %v6330
        %v6332 = vpop.f32.mrb[0].mxu0
        %v6333 = vpop.f32.mrb[0].mxu0
        %v6334 = vadd.f32 0.0, %v6333
        %v6335 = vpop.f32.mrb[0].mxu0
        %6336 = vmatprep.mubr.bf16.mxu0 0
        %6337 = vmatmul.mubr.bf16.gmra.mrb[0].mxu0 %v6233
        %v6338 = vpop.f32.mrb[0].mxu0
        %v6339 = vadd.f32 0.0, %v6338
        %v6340 = vpop.f32.mrb[0].mxu0
        %v6341 = vpop.f32.mrb[0].mxu0
        %v6342 = vadd.f32 0.0, %v6341
        %v6343 = vpop.f32.mrb[0].mxu0
        %6344 = vmatprep.mubr.bf16.mxu0 0
        %6345 = vmatmul.mubr.bf16.gmra.mrb[0].mxu0 %v6234
        %v6346 = vpop.f32.mrb[0].mxu0
        %v6347 = vadd.f32 0.0, %v6346
        %v6348 = vpop.f32.mrb[0].mxu0
        %v6349 = vpop.f32.mrb[0].mxu0
        %v6350 = vadd.f32 0.0, %v6349
        %v6351 = vpop.f32.mrb[0].mxu0
        %6352 = vmatprep.mubr.bf16.mxu0 0
        %6353 = vmatmul.mubr.bf16.gmra.mrb[0].mxu0 %v6235
        %v6354 = vpop.f32.mrb[0].mxu0
        %v6355 = vadd.f32 0.0, %v6354
        %v6356 = vpop.f32.mrb[0].mxu0
        %v6357 = vpop.f32.mrb[0].mxu0
        %v6358 = vadd.f32 0.0, %v6357
        %v6359 = vpop.f32.mrb[0].mxu0
        %6360 = vmatprep.mubr.bf16.mxu0 0
        %6361 = vmatmul.mubr.bf16.gmra.mrb[0].mxu0 %v6236
        %v6362 = vpop.f32.mrb[0].mxu0
        %v6363 = vadd.f32 0.0, %v6362
        %v6364 = vpop.f32.mrb[0].mxu0
        %v6365 = vpop.f32.mrb[0].mxu0
        %v6366 = vadd.f32 0.0, %v6365
        %v6367 = vpop.f32.mrb[0].mxu0
        %6368 = vmatprep.mubr.bf16.mxu0 0
        %6369 = vmatmul.mubr.bf16.gmra.mrb[0].mxu0 %v6237
        %v6370 = vpop.f32.mrb[0].mxu0
        %v6371 = vadd.f32 0.0, %v6370
        %v6372 = vpop.f32.mrb[0].mxu0
        %v6373 = vpop.f32.mrb[0].mxu0
        %v6374 = vadd.f32 0.0, %v6373
        %v6375 = vpop.f32.mrb[0].mxu0
        %6376 = vmatprep.mubr.bf16.mxu0 0
        %6377 = vmatmul.mubr.bf16.gmra.mrb[0].mxu0 %v6238
        %v6378 = vpop.f32.mrb[0].mxu0
        %v6379 = vadd.f32 0.0, %v6378
        %v6380 = vpop.f32.mrb[0].mxu0
        %v6381 = vpop.f32.mrb[0].mxu0
        %v6382 = vadd.f32 0.0, %v6381
        %v6383 = vpop.f32.mrb[0].mxu0
        %6384 = vmatprep.mubr.bf16.mxu0 0
        %6385 = vmatmul.mubr.bf16.gmra.mrb[0].mxu0 %v6239
        %v6386 = vpop.f32.mrb[0].mxu0
        %v6387 = vadd.f32 0.0, %v6386
        %v6388 = vpop.f32.mrb[0].mxu0
        %v6389 = vpop.f32.mrb[0].mxu0
        %v6390 = vadd.f32 0.0, %v6389
        %v6391 = vpop.f32.mrb[0].mxu0
        %6392 = vdwg.mxu0
        %v6393 = vadd.f32 %v6150, %v6331
        %v6394 = vadd.f32 %v6151, %v6334
        %v6395 = vadd.f32 %v6152, %v6339
        %v6396 = vadd.f32 %v6153, %v6342
        %v6397 = vadd.f32 %v6154, %v6347
        %v6398 = vadd.f32 %v6155, %v6350
        %v6399 = vadd.f32 %v6156, %v6355
        %v6400 = vadd.f32 %v6157, %v6358
        %v6401 = vadd.f32 %v6158, %v6363
        %v6402 = vadd.f32 %v6159, %v6366
        %v6403 = vadd.f32 %v6160, %v6371
        %v6404 = vadd.f32 %v6161, %v6374
        %v6405 = vadd.f32 %v6162, %v6379
        %v6406 = vadd.f32 %v6163, %v6382
        %v6407 = vadd.f32 %v6164, %v6387
        %v6408 = vadd.f32 %v6165, %v6390
        %v6409 = vld [vmem:[%s6166] sm:$0xf]
        %v6410 = vld [vmem:[%s6166 + $0x4] sm:$0xf]
        %v6411 = vld [vmem:[%s6166 + $0x8] sm:$0x1]
        %v6412 = vld [vmem:[%s6166 + $0xc] sm:$0xf]
        %v6413 = vld [vmem:[%s6166 + $0x10] sm:$0xf]
        %v6414 = vld [vmem:[%s6166 + $0x14] sm:$0x1]
        %v6415 = vld [vmem:[%s6166 + $0x18] sm:$0xf]
        %v6416 = vld [vmem:[%s6166 + $0x1c] sm:$0xf]
        %v6417 = vld [vmem:[%s6166 + $0x20] sm:$0x1]
        %v6418 = vld [vmem:[%s6166 + $0x24] sm:$0xf]
        %v6419 = vld [vmem:[%s6166 + $0x28] sm:$0xf]
        %v6420 = vld [vmem:[%s6166 + $0x2c] sm:$0x1]
        %v6421 = vld [vmem:[%s6166 + $0x30] sm:$0xf]
        %v6422 = vld [vmem:[%s6166 + $0x34] sm:$0xf]
        %v6423 = vld [vmem:[%s6166 + $0x38] sm:$0x1]
        %v6424 = vld [vmem:[%s6166 + $0x3c] sm:$0xf]
        %v6425 = vld [vmem:[%s6166 + $0x40] sm:$0xf]
        %v6426 = vld [vmem:[%s6166 + $0x44] sm:$0x1]
        %v6427 = vld [vmem:[%s6166 + $0x48] sm:$0xf]
        %v6428 = vld [vmem:[%s6166 + $0x4c] sm:$0xf]
        %v6429 = vld [vmem:[%s6166 + $0x50] sm:$0x1]
        %v6430 = vld [vmem:[%s6166 + $0x54] sm:$0xf]
        %v6431 = vld [vmem:[%s6166 + $0x58] sm:$0xf]
        %v6432 = vld [vmem:[%s6166 + $0x5c] sm:$0x1]
        %v6434 = vshrl.u32 %v6409, 16
        %v6436 = vrot.slane %v6434, 4
        %v6437 = vshll.u32 %v6409, 16
        %v6439 = vrot.slane %v6437, 5
        %v6440 = vor.u32 %v6436, %v6439
        %v6441 = vrot.slane %v6440, 4
        %v6443 = vshll.u32 %v6410, 16
        %v6445 = vrot.slane %v6443, 5
        %v6446 = vsel %vm538, %v6441, %v6445
        %v6447 = vshrl.u32 %v6410, 16
        %v6449 = vrot.slane %v6447, 4
        %v6450 = vor.u32 %v6449, %v6445
        %v6451 = vrot.slane %v6450, 4
        %v6453 = vshll.u32 %v6411, 16
        %v6455 = vrot.slane %v6453, 5
        %v6456 = vsel %vm538, %v6451, %v6455
        %v6458 = vshrl.u32 %v6412, 16
        %v6460 = vrot.slane %v6458, 4
        %v6461 = vshll.u32 %v6412, 16
        %v6463 = vrot.slane %v6461, 5
        %v6464 = vor.u32 %v6460, %v6463
        %v6465 = vrot.slane %v6464, 4
        %v6467 = vshll.u32 %v6413, 16
        %v6469 = vrot.slane %v6467, 5
        %v6470 = vsel %vm538, %v6465, %v6469
        %v6471 = vshrl.u32 %v6413, 16
        %v6473 = vrot.slane %v6471, 4
        %v6474 = vor.u32 %v6473, %v6469
        %v6475 = vrot.slane %v6474, 4
        %v6477 = vshll.u32 %v6414, 16
        %v6479 = vrot.slane %v6477, 5
        %v6480 = vsel %vm538, %v6475, %v6479
        %v6482 = vshrl.u32 %v6415, 16
        %v6484 = vrot.slane %v6482, 4
        %v6485 = vshll.u32 %v6415, 16
        %v6487 = vrot.slane %v6485, 5
        %v6488 = vor.u32 %v6484, %v6487
        %v6489 = vrot.slane %v6488, 4
        %v6491 = vshll.u32 %v6416, 16
        %v6493 = vrot.slane %v6491, 5
        %v6494 = vsel %vm538, %v6489, %v6493
        %v6495 = vshrl.u32 %v6416, 16
        %v6497 = vrot.slane %v6495, 4
        %v6498 = vor.u32 %v6497, %v6493
        %v6499 = vrot.slane %v6498, 4
        %v6501 = vshll.u32 %v6417, 16
        %v6503 = vrot.slane %v6501, 5
        %v6504 = vsel %vm538, %v6499, %v6503
        %v6506 = vshrl.u32 %v6418, 16
        %v6508 = vrot.slane %v6506, 4
        %v6509 = vshll.u32 %v6418, 16
        %v6511 = vrot.slane %v6509, 5
        %v6512 = vor.u32 %v6508, %v6511
        %v6513 = vrot.slane %v6512, 4
        %v6515 = vshll.u32 %v6419, 16
        %v6517 = vrot.slane %v6515, 5
        %v6518 = vsel %vm538, %v6513, %v6517
        %v6519 = vshrl.u32 %v6419, 16
        %v6521 = vrot.slane %v6519, 4
        %v6522 = vor.u32 %v6521, %v6517
        %v6523 = vrot.slane %v6522, 4
        %v6525 = vshll.u32 %v6420, 16
        %v6527 = vrot.slane %v6525, 5
        %v6528 = vsel %vm538, %v6523, %v6527
        %v6530 = vshrl.u32 %v6421, 16
        %v6532 = vrot.slane %v6530, 4
        %v6533 = vshll.u32 %v6421, 16
        %v6535 = vrot.slane %v6533, 5
        %v6536 = vor.u32 %v6532, %v6535
        %v6537 = vrot.slane %v6536, 4
        %v6539 = vshll.u32 %v6422, 16
        %v6541 = vrot.slane %v6539, 5
        %v6542 = vsel %vm538, %v6537, %v6541
        %v6543 = vshrl.u32 %v6422, 16
        %v6545 = vrot.slane %v6543, 4
        %v6546 = vor.u32 %v6545, %v6541
        %v6547 = vrot.slane %v6546, 4
        %v6549 = vshll.u32 %v6423, 16
        %v6551 = vrot.slane %v6549, 5
        %v6552 = vsel %vm538, %v6547, %v6551
        %v6554 = vshrl.u32 %v6424, 16
        %v6556 = vrot.slane %v6554, 4
        %v6557 = vshll.u32 %v6424, 16
        %v6559 = vrot.slane %v6557, 5
        %v6560 = vor.u32 %v6556, %v6559
        %v6561 = vrot.slane %v6560, 4
        %v6563 = vshll.u32 %v6425, 16
        %v6565 = vrot.slane %v6563, 5
        %v6566 = vsel %vm538, %v6561, %v6565
        %v6567 = vshrl.u32 %v6425, 16
        %v6569 = vrot.slane %v6567, 4
        %v6570 = vor.u32 %v6569, %v6565
        %v6571 = vrot.slane %v6570, 4
        %v6573 = vshll.u32 %v6426, 16
        %v6575 = vrot.slane %v6573, 5
        %v6576 = vsel %vm538, %v6571, %v6575
        %v6578 = vshrl.u32 %v6427, 16
        %v6580 = vrot.slane %v6578, 4
        %v6581 = vshll.u32 %v6427, 16
        %v6583 = vrot.slane %v6581, 5
        %v6584 = vor.u32 %v6580, %v6583
        %v6585 = vrot.slane %v6584, 4
        %v6587 = vshll.u32 %v6428, 16
        %v6589 = vrot.slane %v6587, 5
        %v6590 = vsel %vm538, %v6585, %v6589
        %v6591 = vshrl.u32 %v6428, 16
        %v6593 = vrot.slane %v6591, 4
        %v6594 = vor.u32 %v6593, %v6589
        %v6595 = vrot.slane %v6594, 4
        %v6597 = vshll.u32 %v6429, 16
        %v6599 = vrot.slane %v6597, 5
        %v6600 = vsel %vm538, %v6595, %v6599
        %v6602 = vshrl.u32 %v6430, 16
        %v6604 = vrot.slane %v6602, 4
        %v6605 = vshll.u32 %v6430, 16
        %v6607 = vrot.slane %v6605, 5
        %v6608 = vor.u32 %v6604, %v6607
        %v6609 = vrot.slane %v6608, 4
        %v6611 = vshll.u32 %v6431, 16
        %v6613 = vrot.slane %v6611, 5
        %v6614 = vsel %vm538, %v6609, %v6613
        %v6615 = vshrl.u32 %v6431, 16
        %v6617 = vrot.slane %v6615, 4
        %v6618 = vor.u32 %v6617, %v6613
        %v6619 = vrot.slane %v6618, 4
        %v6621 = vshll.u32 %v6432, 16
        %v6623 = vrot.slane %v6621, 5
        %v6624 = vsel %vm538, %v6619, %v6623
        %s6625 = scalar_lea.vmem %s3, 448
        %v6626 = vld [vmem:[%s6625] sm:$0xf]
        %v6627 = vld [vmem:[%s6625 + $0x4] sm:$0xf]
        %v6628 = vld [vmem:[%s6625 + $0x8] sm:$0xf]
        %v6629 = vld [vmem:[%s6625 + $0xc] sm:$0xf]
        %v6630 = vld [vmem:[%s6625 + $0x10] sm:$0xf]
        %v6631 = vld [vmem:[%s6625 + $0x14] sm:$0xf]
        %v6632 = vld [vmem:[%s6625 + $0x18] sm:$0xf]
        %v6633 = vld [vmem:[%s6625 + $0x1c] sm:$0xf]
        %v6634 = vld [vmem:[%s6625 + $0x20] sm:$0xf]
        %v6635 = vld [vmem:[%s6625 + $0x24] sm:$0xf]
        %v6636 = vld [vmem:[%s6625 + $0x28] sm:$0xf]
        %v6637 = vld [vmem:[%s6625 + $0x2c] sm:$0xf]
        %v6638 = vld [vmem:[%s6625 + $0x30] sm:$0xf]
        %v6639 = vld [vmem:[%s6625 + $0x34] sm:$0xf]
        %v6640 = vld [vmem:[%s6625 + $0x38] sm:$0xf]
        %v6641 = vld [vmem:[%s6625 + $0x3c] sm:$0xf]
        %v6642 = vunpack.c.l.b16 %v6446
        %v6643 = vunpack.c.l.b16 %v6456
        %v6644 = vunpack.c.l.b16 %v6470
        %v6645 = vunpack.c.l.b16 %v6480
        %v6646 = vunpack.c.l.b16 %v6494
        %v6647 = vunpack.c.l.b16 %v6504
        %v6648 = vunpack.c.l.b16 %v6518
        %v6649 = vunpack.c.l.b16 %v6528
        %v6650 = vunpack.c.l.b16 %v6542
        %v6651 = vunpack.c.l.b16 %v6552
        %v6652 = vunpack.c.l.b16 %v6566
        %v6653 = vunpack.c.l.b16 %v6576
        %v6654 = vunpack.c.l.b16 %v6590
        %v6655 = vunpack.c.l.b16 %v6600
        %v6656 = vunpack.c.l.b16 %v6614
        %v6657 = vunpack.c.l.b16 %v6624
        %v6658 = vpack.c.b16 %v6643, %v6642
        %v6659 = vpack.c.b16 %v6645, %v6644
        %v6660 = vpack.c.b16 %v6647, %v6646
        %v6661 = vpack.c.b16 %v6649, %v6648
        %v6662 = vpack.c.b16 %v6651, %v6650
        %v6663 = vpack.c.b16 %v6653, %v6652
        %v6664 = vpack.c.b16 %v6655, %v6654
        %v6665 = vpack.c.b16 %v6657, %v6656
        %v6690 = vunpack.c.l.b16 %v6626
        %v6691 = vunpack.c.l.b16 %v6627
        %v6692 = vunpack.c.l.b16 %v6628
        %v6693 = vunpack.c.l.b16 %v6629
        %v6694 = vunpack.c.l.b16 %v6630
        %v6695 = vunpack.c.l.b16 %v6631
        %v6696 = vunpack.c.l.b16 %v6632
        %v6697 = vunpack.c.l.b16 %v6633
        %v6698 = vunpack.c.l.b16 %v6634
        %v6699 = vunpack.c.l.b16 %v6635
        %v6700 = vunpack.c.l.b16 %v6636
        %v6701 = vunpack.c.l.b16 %v6637
        %v6702 = vunpack.c.l.b16 %v6638
        %v6703 = vunpack.c.l.b16 %v6639
        %v6704 = vunpack.c.l.b16 %v6640
        %v6705 = vunpack.c.l.b16 %v6641
        %v6706 = vpack.c.b16 %v6691, %v6690
        %v6707 = vpack.c.b16 %v6693, %v6692
        %v6708 = vpack.c.b16 %v6695, %v6694
        %v6709 = vpack.c.b16 %v6697, %v6696
        %v6710 = vpack.c.b16 %v6699, %v6698
        %v6711 = vpack.c.b16 %v6701, %v6700
        %v6712 = vpack.c.b16 %v6703, %v6702
        %v6713 = vpack.c.b16 %v6705, %v6704
        %6722 = vmatprep.subr.bf16.mxu0 0
        %6723 = vmatpush1.bf16.msra.mxu0 %v6706
        %6724 = vmatprep.subr.bf16.mxu0 0
        %6725 = vmatpush1.bf16.msra.mxu0 %v6707
        %6726 = vmatprep.subr.bf16.mxu0 0
        %6727 = vmatpush1.bf16.msra.mxu0 %v6708
        %6728 = vmatprep.subr.bf16.mxu0 0
        %6729 = vmatpush1.bf16.msra.mxu0 %v6709
        %6730 = vmatprep.subr.bf16.mxu0 0
        %6731 = vmatpush1.bf16.msra.mxu0 %v6710
        %6732 = vmatprep.subr.bf16.mxu0 0
        %6733 = vmatpush1.bf16.msra.mxu0 %v6711
        %6734 = vmatprep.subr.bf16.mxu0 0
        %6735 = vmatpush1.bf16.msra.mxu0 %v6712
        %6736 = vmatprep.subr.bf16.mxu0 0
        %6737 = vmatpush1.bf16.msra.mxu0 %v6713
        %6738 = vmatprep.subr.bf16.mxu0 0
        %6739 = vmatpush1.bf16.msra.mxu0 0
        %6740 = vmatprep.subr.bf16.mxu0 0
        %6741 = vmatpush1.bf16.msra.mxu0 0
        %6742 = vmatprep.subr.bf16.mxu0 0
        %6743 = vmatpush1.bf16.msra.mxu0 0
        %6744 = vmatprep.subr.bf16.mxu0 0
        %6745 = vmatpush1.bf16.msra.mxu0 0
        %6746 = vmatprep.subr.bf16.mxu0 0
        %6747 = vmatpush1.bf16.msra.mxu0 0
        %6748 = vmatprep.subr.bf16.mxu0 0
        %6749 = vmatpush1.bf16.msra.mxu0 0
        %6750 = vmatprep.subr.bf16.mxu0 0
        %6751 = vmatpush1.bf16.msra.mxu0 0
        %6752 = vmatprep.subr.bf16.mxu0 0
        %6753 = vmatpush1.bf16.msra.mxu0 0
        %6754 = vmatprep.mubr.bf16.mxu0 0
        %6755 = vmatmul.mubr.bf16.gmra.mrb[0].mxu0 %v6658
        %v6756 = vpop.f32.mrb[0].mxu0
        %v6757 = vadd.f32 0.0, %v6756
        %v6758 = vpop.f32.mrb[0].mxu0
        %v6759 = vpop.f32.mrb[0].mxu0
        %v6760 = vadd.f32 0.0, %v6759
        %v6761 = vpop.f32.mrb[0].mxu0
        %6762 = vmatprep.mubr.bf16.mxu0 0
        %6763 = vmatmul.mubr.bf16.gmra.mrb[0].mxu0 %v6659
        %v6764 = vpop.f32.mrb[0].mxu0
        %v6765 = vadd.f32 0.0, %v6764
        %v6766 = vpop.f32.mrb[0].mxu0
        %v6767 = vpop.f32.mrb[0].mxu0
        %v6768 = vadd.f32 0.0, %v6767
        %v6769 = vpop.f32.mrb[0].mxu0
        %6770 = vmatprep.mubr.bf16.mxu0 0
        %6771 = vmatmul.mubr.bf16.gmra.mrb[0].mxu0 %v6660
        %v6772 = vpop.f32.mrb[0].mxu0
        %v6773 = vadd.f32 0.0, %v6772
        %v6774 = vpop.f32.mrb[0].mxu0
        %v6775 = vpop.f32.mrb[0].mxu0
        %v6776 = vadd.f32 0.0, %v6775
        %v6777 = vpop.f32.mrb[0].mxu0
        %6778 = vmatprep.mubr.bf16.mxu0 0
        %6779 = vmatmul.mubr.bf16.gmra.mrb[0].mxu0 %v6661
        %v6780 = vpop.f32.mrb[0].mxu0
        %v6781 = vadd.f32 0.0, %v6780
        %v6782 = vpop.f32.mrb[0].mxu0
        %v6783 = vpop.f32.mrb[0].mxu0
        %v6784 = vadd.f32 0.0, %v6783
        %v6785 = vpop.f32.mrb[0].mxu0
        %6786 = vmatprep.mubr.bf16.mxu0 0
        %6787 = vmatmul.mubr.bf16.gmra.mrb[0].mxu0 %v6662
        %v6788 = vpop.f32.mrb[0].mxu0
        %v6789 = vadd.f32 0.0, %v6788
        %v6790 = vpop.f32.mrb[0].mxu0
        %v6791 = vpop.f32.mrb[0].mxu0
        %v6792 = vadd.f32 0.0, %v6791
        %v6793 = vpop.f32.mrb[0].mxu0
        %6794 = vmatprep.mubr.bf16.mxu0 0
        %6795 = vmatmul.mubr.bf16.gmra.mrb[0].mxu0 %v6663
        %v6796 = vpop.f32.mrb[0].mxu0
        %v6797 = vadd.f32 0.0, %v6796
        %v6798 = vpop.f32.mrb[0].mxu0
        %v6799 = vpop.f32.mrb[0].mxu0
        %v6800 = vadd.f32 0.0, %v6799
        %v6801 = vpop.f32.mrb[0].mxu0
        %6802 = vmatprep.mubr.bf16.mxu0 0
        %6803 = vmatmul.mubr.bf16.gmra.mrb[0].mxu0 %v6664
        %v6804 = vpop.f32.mrb[0].mxu0
        %v6805 = vadd.f32 0.0, %v6804
        %v6806 = vpop.f32.mrb[0].mxu0
        %v6807 = vpop.f32.mrb[0].mxu0
        %v6808 = vadd.f32 0.0, %v6807
        %v6809 = vpop.f32.mrb[0].mxu0
        %6810 = vmatprep.mubr.bf16.mxu0 0
        %6811 = vmatmul.mubr.bf16.gmra.mrb[0].mxu0 %v6665
        %v6812 = vpop.f32.mrb[0].mxu0
        %v6813 = vadd.f32 0.0, %v6812
        %v6814 = vpop.f32.mrb[0].mxu0
        %v6815 = vpop.f32.mrb[0].mxu0
        %v6816 = vadd.f32 0.0, %v6815
        %v6817 = vpop.f32.mrb[0].mxu0
        %6818 = vdwg.mxu0
        %v6819 = vadd.f32 %v6393, %v6757
        %v6820 = vadd.f32 %v6394, %v6760
        %v6821 = vadd.f32 %v6395, %v6765
        %v6822 = vadd.f32 %v6396, %v6768
        %v6823 = vadd.f32 %v6397, %v6773
        %v6824 = vadd.f32 %v6398, %v6776
        %v6825 = vadd.f32 %v6399, %v6781
        %v6826 = vadd.f32 %v6400, %v6784
        %v6827 = vadd.f32 %v6401, %v6789
        %v6828 = vadd.f32 %v6402, %v6792
        %v6829 = vadd.f32 %v6403, %v6797
        %v6830 = vadd.f32 %v6404, %v6800
        %v6831 = vadd.f32 %v6405, %v6805
        %v6832 = vadd.f32 %v6406, %v6808
        %v6833 = vadd.f32 %v6407, %v6813
        %v6834 = vadd.f32 %v6408, %v6816
        %v6835 = vld [vmem:[%s6166] sm:$0xe]
        %v6836 = vld [vmem:[%s6166 + $0xc] sm:$0xe]
        %v6837 = vld [vmem:[%s6166 + $0x18] sm:$0xe]
        %v6838 = vld [vmem:[%s6166 + $0x24] sm:$0xe]
        %v6839 = vld [vmem:[%s6166 + $0x30] sm:$0xe]
        %v6840 = vld [vmem:[%s6166 + $0x3c] sm:$0xe]
        %v6841 = vld [vmem:[%s6166 + $0x48] sm:$0xe]
        %v6842 = vld [vmem:[%s6166 + $0x54] sm:$0xe]
        %v6867 = vrot.slane %v6835, 5
        %v6868 = vrot.slane %v6867, 4
        %v6869 = vrot.slane %v6410, 5
        %v6870 = vsel %vm1250, %v6868, %v6869
        %v6871 = vrot.slane %v6869, 4
        %v6872 = vrot.slane %v6411, 5
        %v6873 = vsel %vm1250, %v6871, %v6872
        %v6874 = vrot.slane %v6836, 5
        %v6875 = vrot.slane %v6874, 4
        %v6876 = vrot.slane %v6413, 5
        %v6877 = vsel %vm1250, %v6875, %v6876
        %v6878 = vrot.slane %v6876, 4
        %v6879 = vrot.slane %v6414, 5
        %v6880 = vsel %vm1250, %v6878, %v6879
        %v6881 = vrot.slane %v6837, 5
        %v6882 = vrot.slane %v6881, 4
        %v6883 = vrot.slane %v6416, 5
        %v6884 = vsel %vm1250, %v6882, %v6883
        %v6885 = vrot.slane %v6883, 4
        %v6886 = vrot.slane %v6417, 5
        %v6887 = vsel %vm1250, %v6885, %v6886
        %v6888 = vrot.slane %v6838, 5
        %v6889 = vrot.slane %v6888, 4
        %v6890 = vrot.slane %v6419, 5
        %v6891 = vsel %vm1250, %v6889, %v6890
        %v6892 = vrot.slane %v6890, 4
        %v6893 = vrot.slane %v6420, 5
        %v6894 = vsel %vm1250, %v6892, %v6893
        %v6895 = vrot.slane %v6839, 5
        %v6896 = vrot.slane %v6895, 4
        %v6897 = vrot.slane %v6422, 5
        %v6898 = vsel %vm1250, %v6896, %v6897
        %v6899 = vrot.slane %v6897, 4
        %v6900 = vrot.slane %v6423, 5
        %v6901 = vsel %vm1250, %v6899, %v6900
        %v6902 = vrot.slane %v6840, 5
        %v6903 = vrot.slane %v6902, 4
        %v6904 = vrot.slane %v6425, 5
        %v6905 = vsel %vm1250, %v6903, %v6904
        %v6906 = vrot.slane %v6904, 4
        %v6907 = vrot.slane %v6426, 5
        %v6908 = vsel %vm1250, %v6906, %v6907
        %v6909 = vrot.slane %v6841, 5
        %v6910 = vrot.slane %v6909, 4
        %v6911 = vrot.slane %v6428, 5
        %v6912 = vsel %vm1250, %v6910, %v6911
        %v6913 = vrot.slane %v6911, 4
        %v6914 = vrot.slane %v6429, 5
        %v6915 = vsel %vm1250, %v6913, %v6914
        %v6916 = vrot.slane %v6842, 5
        %v6917 = vrot.slane %v6916, 4
        %v6918 = vrot.slane %v6431, 5
        %v6919 = vsel %vm1250, %v6917, %v6918
        %v6920 = vrot.slane %v6918, 4
        %v6921 = vrot.slane %v6432, 5
        %v6922 = vsel %vm1250, %v6920, %v6921
        %s6923 = scalar_lea.vmem %s3, 512
        %v6924 = vld [vmem:[%s6923] sm:$0xf]
        %v6925 = vld [vmem:[%s6923 + $0x4] sm:$0xf]
        %v6926 = vld [vmem:[%s6923 + $0x8] sm:$0xf]
        %v6927 = vld [vmem:[%s6923 + $0xc] sm:$0xf]
        %v6928 = vld [vmem:[%s6923 + $0x10] sm:$0xf]
        %v6929 = vld [vmem:[%s6923 + $0x14] sm:$0xf]
        %v6930 = vld [vmem:[%s6923 + $0x18] sm:$0xf]
        %v6931 = vld [vmem:[%s6923 + $0x1c] sm:$0xf]
        %v6932 = vld [vmem:[%s6923 + $0x20] sm:$0xf]
        %v6933 = vld [vmem:[%s6923 + $0x24] sm:$0xf]
        %v6934 = vld [vmem:[%s6923 + $0x28] sm:$0xf]
        %v6935 = vld [vmem:[%s6923 + $0x2c] sm:$0xf]
        %v6936 = vld [vmem:[%s6923 + $0x30] sm:$0xf]
        %v6937 = vld [vmem:[%s6923 + $0x34] sm:$0xf]
        %v6938 = vld [vmem:[%s6923 + $0x38] sm:$0xf]
        %v6939 = vld [vmem:[%s6923 + $0x3c] sm:$0xf]
        %v6940 = vunpack.c.l.b16 %v6870
        %v6941 = vunpack.c.l.b16 %v6873
        %v6942 = vunpack.c.l.b16 %v6877
        %v6943 = vunpack.c.l.b16 %v6880
        %v6944 = vunpack.c.l.b16 %v6884
        %v6945 = vunpack.c.l.b16 %v6887
        %v6946 = vunpack.c.l.b16 %v6891
        %v6947 = vunpack.c.l.b16 %v6894
        %v6948 = vunpack.c.l.b16 %v6898
        %v6949 = vunpack.c.l.b16 %v6901
        %v6950 = vunpack.c.l.b16 %v6905
        %v6951 = vunpack.c.l.b16 %v6908
        %v6952 = vunpack.c.l.b16 %v6912
        %v6953 = vunpack.c.l.b16 %v6915
        %v6954 = vunpack.c.l.b16 %v6919
        %v6955 = vunpack.c.l.b16 %v6922
        %v6956 = vpack.c.b16 %v6941, %v6940
        %v6957 = vpack.c.b16 %v6943, %v6942
        %v6958 = vpack.c.b16 %v6945, %v6944
        %v6959 = vpack.c.b16 %v6947, %v6946
        %v6960 = vpack.c.b16 %v6949, %v6948
        %v6961 = vpack.c.b16 %v6951, %v6950
        %v6962 = vpack.c.b16 %v6953, %v6952
        %v6963 = vpack.c.b16 %v6955, %v6954
        %v6988 = vunpack.c.l.b16 %v6924
        %v6989 = vunpack.c.l.b16 %v6925
        %v6990 = vunpack.c.l.b16 %v6926
        %v6991 = vunpack.c.l.b16 %v6927
        %v6992 = vunpack.c.l.b16 %v6928
        %v6993 = vunpack.c.l.b16 %v6929
        %v6994 = vunpack.c.l.b16 %v6930
        %v6995 = vunpack.c.l.b16 %v6931
        %v6996 = vunpack.c.l.b16 %v6932
        %v6997 = vunpack.c.l.b16 %v6933
        %v6998 = vunpack.c.l.b16 %v6934
        %v6999 = vunpack.c.l.b16 %v6935
        %v7000 = vunpack.c.l.b16 %v6936
        %v7001 = vunpack.c.l.b16 %v6937
        %v7002 = vunpack.c.l.b16 %v6938
        %v7003 = vunpack.c.l.b16 %v6939
        %v7004 = vpack.c.b16 %v6989, %v6988
        %v7005 = vpack.c.b16 %v6991, %v6990
        %v7006 = vpack.c.b16 %v6993, %v6992
        %v7007 = vpack.c.b16 %v6995, %v6994
        %v7008 = vpack.c.b16 %v6997, %v6996
        %v7009 = vpack.c.b16 %v6999, %v6998
        %v7010 = vpack.c.b16 %v7001, %v7000
        %v7011 = vpack.c.b16 %v7003, %v7002
        %7020 = vmatprep.subr.bf16.mxu0 0
        %7021 = vmatpush1.bf16.msra.mxu0 %v7004
        %7022 = vmatprep.subr.bf16.mxu0 0
        %7023 = vmatpush1.bf16.msra.mxu0 %v7005
        %7024 = vmatprep.subr.bf16.mxu0 0
        %7025 = vmatpush1.bf16.msra.mxu0 %v7006
        %7026 = vmatprep.subr.bf16.mxu0 0
        %7027 = vmatpush1.bf16.msra.mxu0 %v7007
        %7028 = vmatprep.subr.bf16.mxu0 0
        %7029 = vmatpush1.bf16.msra.mxu0 %v7008
        %7030 = vmatprep.subr.bf16.mxu0 0
        %7031 = vmatpush1.bf16.msra.mxu0 %v7009
        %7032 = vmatprep.subr.bf16.mxu0 0
        %7033 = vmatpush1.bf16.msra.mxu0 %v7010
        %7034 = vmatprep.subr.bf16.mxu0 0
        %7035 = vmatpush1.bf16.msra.mxu0 %v7011
        %7036 = vmatprep.subr.bf16.mxu0 0
        %7037 = vmatpush1.bf16.msra.mxu0 0
        %7038 = vmatprep.subr.bf16.mxu0 0
        %7039 = vmatpush1.bf16.msra.mxu0 0
        %7040 = vmatprep.subr.bf16.mxu0 0
        %7041 = vmatpush1.bf16.msra.mxu0 0
        %7042 = vmatprep.subr.bf16.mxu0 0
        %7043 = vmatpush1.bf16.msra.mxu0 0
        %7044 = vmatprep.subr.bf16.mxu0 0
        %7045 = vmatpush1.bf16.msra.mxu0 0
        %7046 = vmatprep.subr.bf16.mxu0 0
        %7047 = vmatpush1.bf16.msra.mxu0 0
        %7048 = vmatprep.subr.bf16.mxu0 0
        %7049 = vmatpush1.bf16.msra.mxu0 0
        %7050 = vmatprep.subr.bf16.mxu0 0
        %7051 = vmatpush1.bf16.msra.mxu0 0
        %7052 = vmatprep.mubr.bf16.mxu0 0
        %7053 = vmatmul.mubr.bf16.gmra.mrb[0].mxu0 %v6956
        %v7054 = vpop.f32.mrb[0].mxu0
        %v7055 = vadd.f32 0.0, %v7054
        %v7056 = vpop.f32.mrb[0].mxu0
        %v7057 = vpop.f32.mrb[0].mxu0
        %v7058 = vadd.f32 0.0, %v7057
        %v7059 = vpop.f32.mrb[0].mxu0
        %7060 = vmatprep.mubr.bf16.mxu0 0
        %7061 = vmatmul.mubr.bf16.gmra.mrb[0].mxu0 %v6957
        %v7062 = vpop.f32.mrb[0].mxu0
        %v7063 = vadd.f32 0.0, %v7062
        %v7064 = vpop.f32.mrb[0].mxu0
        %v7065 = vpop.f32.mrb[0].mxu0
        %v7066 = vadd.f32 0.0, %v7065
        %v7067 = vpop.f32.mrb[0].mxu0
        %7068 = vmatprep.mubr.bf16.mxu0 0
        %7069 = vmatmul.mubr.bf16.gmra.mrb[0].mxu0 %v6958
        %v7070 = vpop.f32.mrb[0].mxu0
        %v7071 = vadd.f32 0.0, %v7070
        %v7072 = vpop.f32.mrb[0].mxu0
        %v7073 = vpop.f32.mrb[0].mxu0
        %v7074 = vadd.f32 0.0, %v7073
        %v7075 = vpop.f32.mrb[0].mxu0
        %7076 = vmatprep.mubr.bf16.mxu0 0
        %7077 = vmatmul.mubr.bf16.gmra.mrb[0].mxu0 %v6959
        %v7078 = vpop.f32.mrb[0].mxu0
        %v7079 = vadd.f32 0.0, %v7078
        %v7080 = vpop.f32.mrb[0].mxu0
        %v7081 = vpop.f32.mrb[0].mxu0
        %v7082 = vadd.f32 0.0, %v7081
        %v7083 = vpop.f32.mrb[0].mxu0
        %7084 = vmatprep.mubr.bf16.mxu0 0
        %7085 = vmatmul.mubr.bf16.gmra.mrb[0].mxu0 %v6960
        %v7086 = vpop.f32.mrb[0].mxu0
        %v7087 = vadd.f32 0.0, %v7086
        %v7088 = vpop.f32.mrb[0].mxu0
        %v7089 = vpop.f32.mrb[0].mxu0
        %v7090 = vadd.f32 0.0, %v7089
        %v7091 = vpop.f32.mrb[0].mxu0
        %7092 = vmatprep.mubr.bf16.mxu0 0
        %7093 = vmatmul.mubr.bf16.gmra.mrb[0].mxu0 %v6961
        %v7094 = vpop.f32.mrb[0].mxu0
        %v7095 = vadd.f32 0.0, %v7094
        %v7096 = vpop.f32.mrb[0].mxu0
        %v7097 = vpop.f32.mrb[0].mxu0
        %v7098 = vadd.f32 0.0, %v7097
        %v7099 = vpop.f32.mrb[0].mxu0
        %7100 = vmatprep.mubr.bf16.mxu0 0
        %7101 = vmatmul.mubr.bf16.gmra.mrb[0].mxu0 %v6962
        %v7102 = vpop.f32.mrb[0].mxu0
        %v7103 = vadd.f32 0.0, %v7102
        %v7104 = vpop.f32.mrb[0].mxu0
        %v7105 = vpop.f32.mrb[0].mxu0
        %v7106 = vadd.f32 0.0, %v7105
        %v7107 = vpop.f32.mrb[0].mxu0
        %7108 = vmatprep.mubr.bf16.mxu0 0
        %7109 = vmatmul.mubr.bf16.gmra.mrb[0].mxu0 %v6963
        %v7110 = vpop.f32.mrb[0].mxu0
        %v7111 = vadd.f32 0.0, %v7110
        %v7112 = vpop.f32.mrb[0].mxu0
        %v7113 = vpop.f32.mrb[0].mxu0
        %v7114 = vadd.f32 0.0, %v7113
        %v7115 = vpop.f32.mrb[0].mxu0
        %7116 = vdwg.mxu0
        %v7117 = vadd.f32 %v6819, %v7055
        %v7118 = vadd.f32 %v6820, %v7058
        %v7119 = vadd.f32 %v6821, %v7063
        %v7120 = vadd.f32 %v6822, %v7066
        %v7121 = vadd.f32 %v6823, %v7071
        %v7122 = vadd.f32 %v6824, %v7074
        %v7123 = vadd.f32 %v6825, %v7079
        %v7124 = vadd.f32 %v6826, %v7082
        %v7125 = vadd.f32 %v6827, %v7087
        %v7126 = vadd.f32 %v6828, %v7090
        %v7127 = vadd.f32 %v6829, %v7095
        %v7128 = vadd.f32 %v6830, %v7098
        %v7129 = vadd.f32 %v6831, %v7103
        %v7130 = vadd.f32 %v6832, %v7106
        %v7131 = vadd.f32 %v6833, %v7111
        %v7132 = vadd.f32 %v6834, %v7114
        %v7133 = vld [vmem:[%s2694] sm:$0xf]
        %v7134 = vld [vmem:[%s2694 + $0x4] sm:$0xf]
        %v7135 = vld [vmem:[%s2694 + $0x8] sm:$0x1]
        %v7136 = vld [vmem:[%s2694 + $0xc] sm:$0xf]
        %v7137 = vld [vmem:[%s2694 + $0x10] sm:$0xf]
        %v7138 = vld [vmem:[%s2694 + $0x14] sm:$0x1]
        %v7139 = vld [vmem:[%s2694 + $0x18] sm:$0xf]
        %v7140 = vld [vmem:[%s2694 + $0x1c] sm:$0xf]
        %v7141 = vld [vmem:[%s2694 + $0x20] sm:$0x1]
        %v7142 = vld [vmem:[%s2694 + $0x24] sm:$0xf]
        %v7143 = vld [vmem:[%s2694 + $0x28] sm:$0xf]
        %v7144 = vld [vmem:[%s2694 + $0x2c] sm:$0x1]
        %v7145 = vld [vmem:[%s2694 + $0x30] sm:$0xf]
        %v7146 = vld [vmem:[%s2694 + $0x34] sm:$0xf]
        %v7147 = vld [vmem:[%s2694 + $0x38] sm:$0x1]
        %v7148 = vld [vmem:[%s2694 + $0x3c] sm:$0xf]
        %v7149 = vld [vmem:[%s2694 + $0x40] sm:$0xf]
        %v7150 = vld [vmem:[%s2694 + $0x44] sm:$0x1]
        %v7151 = vld [vmem:[%s2694 + $0x48] sm:$0xf]
        %v7152 = vld [vmem:[%s2694 + $0x4c] sm:$0xf]
        %v7153 = vld [vmem:[%s2694 + $0x50] sm:$0x1]
        %v7154 = vld [vmem:[%s2694 + $0x54] sm:$0xf]
        %v7155 = vld [vmem:[%s2694 + $0x58] sm:$0xf]
        %v7156 = vld [vmem:[%s2694 + $0x5c] sm:$0x1]
        %v7158 = vshrl.u32 %v7133, 16
        %v7160 = vrot.slane %v7158, 4
        %v7161 = vshll.u32 %v7133, 16
        %v7163 = vrot.slane %v7161, 5
        %v7164 = vor.u32 %v7160, %v7163
        %v7165 = vrot.slane %v7164, 4
        %v7167 = vshll.u32 %v7134, 16
        %v7169 = vrot.slane %v7167, 5
        %v7170 = vsel %vm538, %v7165, %v7169
        %v7171 = vshrl.u32 %v7134, 16
        %v7173 = vrot.slane %v7171, 4
        %v7174 = vor.u32 %v7173, %v7169
        %v7175 = vrot.slane %v7174, 4
        %v7177 = vshll.u32 %v7135, 16
        %v7179 = vrot.slane %v7177, 5
        %v7180 = vsel %vm538, %v7175, %v7179
        %v7182 = vshrl.u32 %v7136, 16
        %v7184 = vrot.slane %v7182, 4
        %v7185 = vshll.u32 %v7136, 16
        %v7187 = vrot.slane %v7185, 5
        %v7188 = vor.u32 %v7184, %v7187
        %v7189 = vrot.slane %v7188, 4
        %v7191 = vshll.u32 %v7137, 16
        %v7193 = vrot.slane %v7191, 5
        %v7194 = vsel %vm538, %v7189, %v7193
        %v7195 = vshrl.u32 %v7137, 16
        %v7197 = vrot.slane %v7195, 4
        %v7198 = vor.u32 %v7197, %v7193
        %v7199 = vrot.slane %v7198, 4
        %v7201 = vshll.u32 %v7138, 16
        %v7203 = vrot.slane %v7201, 5
        %v7204 = vsel %vm538, %v7199, %v7203
        %v7206 = vshrl.u32 %v7139, 16
        %v7208 = vrot.slane %v7206, 4
        %v7209 = vshll.u32 %v7139, 16
        %v7211 = vrot.slane %v7209, 5
        %v7212 = vor.u32 %v7208, %v7211
        %v7213 = vrot.slane %v7212, 4
        %v7215 = vshll.u32 %v7140, 16
        %v7217 = vrot.slane %v7215, 5
        %v7218 = vsel %vm538, %v7213, %v7217
        %v7219 = vshrl.u32 %v7140, 16
        %v7221 = vrot.slane %v7219, 4
        %v7222 = vor.u32 %v7221, %v7217
        %v7223 = vrot.slane %v7222, 4
        %v7225 = vshll.u32 %v7141, 16
        %v7227 = vrot.slane %v7225, 5
        %v7228 = vsel %vm538, %v7223, %v7227
        %v7230 = vshrl.u32 %v7142, 16
        %v7232 = vrot.slane %v7230, 4
        %v7233 = vshll.u32 %v7142, 16
        %v7235 = vrot.slane %v7233, 5
        %v7236 = vor.u32 %v7232, %v7235
        %v7237 = vrot.slane %v7236, 4
        %v7239 = vshll.u32 %v7143, 16
        %v7241 = vrot.slane %v7239, 5
        %v7242 = vsel %vm538, %v7237, %v7241
        %v7243 = vshrl.u32 %v7143, 16
        %v7245 = vrot.slane %v7243, 4
        %v7246 = vor.u32 %v7245, %v7241
        %v7247 = vrot.slane %v7246, 4
        %v7249 = vshll.u32 %v7144, 16
        %v7251 = vrot.slane %v7249, 5
        %v7252 = vsel %vm538, %v7247, %v7251
        %v7254 = vshrl.u32 %v7145, 16
        %v7256 = vrot.slane %v7254, 4
        %v7257 = vshll.u32 %v7145, 16
        %v7259 = vrot.slane %v7257, 5
        %v7260 = vor.u32 %v7256, %v7259
        %v7261 = vrot.slane %v7260, 4
        %v7263 = vshll.u32 %v7146, 16
        %v7265 = vrot.slane %v7263, 5
        %v7266 = vsel %vm538, %v7261, %v7265
        %v7267 = vshrl.u32 %v7146, 16
        %v7269 = vrot.slane %v7267, 4
        %v7270 = vor.u32 %v7269, %v7265
        %v7271 = vrot.slane %v7270, 4
        %v7273 = vshll.u32 %v7147, 16
        %v7275 = vrot.slane %v7273, 5
        %v7276 = vsel %vm538, %v7271, %v7275
        %v7278 = vshrl.u32 %v7148, 16
        %v7280 = vrot.slane %v7278, 4
        %v7281 = vshll.u32 %v7148, 16
        %v7283 = vrot.slane %v7281, 5
        %v7284 = vor.u32 %v7280, %v7283
        %v7285 = vrot.slane %v7284, 4
        %v7287 = vshll.u32 %v7149, 16
        %v7289 = vrot.slane %v7287, 5
        %v7290 = vsel %vm538, %v7285, %v7289
        %v7291 = vshrl.u32 %v7149, 16
        %v7293 = vrot.slane %v7291, 4
        %v7294 = vor.u32 %v7293, %v7289
        %v7295 = vrot.slane %v7294, 4
        %v7297 = vshll.u32 %v7150, 16
        %v7299 = vrot.slane %v7297, 5
        %v7300 = vsel %vm538, %v7295, %v7299
        %v7302 = vshrl.u32 %v7151, 16
        %v7304 = vrot.slane %v7302, 4
        %v7305 = vshll.u32 %v7151, 16
        %v7307 = vrot.slane %v7305, 5
        %v7308 = vor.u32 %v7304, %v7307
        %v7309 = vrot.slane %v7308, 4
        %v7311 = vshll.u32 %v7152, 16
        %v7313 = vrot.slane %v7311, 5
        %v7314 = vsel %vm538, %v7309, %v7313
        %v7315 = vshrl.u32 %v7152, 16
        %v7317 = vrot.slane %v7315, 4
        %v7318 = vor.u32 %v7317, %v7313
        %v7319 = vrot.slane %v7318, 4
        %v7321 = vshll.u32 %v7153, 16
        %v7323 = vrot.slane %v7321, 5
        %v7324 = vsel %vm538, %v7319, %v7323
        %v7326 = vshrl.u32 %v7154, 16
        %v7328 = vrot.slane %v7326, 4
        %v7329 = vshll.u32 %v7154, 16
        %v7331 = vrot.slane %v7329, 5
        %v7332 = vor.u32 %v7328, %v7331
        %v7333 = vrot.slane %v7332, 4
        %v7335 = vshll.u32 %v7155, 16
        %v7337 = vrot.slane %v7335, 5
        %v7338 = vsel %vm538, %v7333, %v7337
        %v7339 = vshrl.u32 %v7155, 16
        %v7341 = vrot.slane %v7339, 4
        %v7342 = vor.u32 %v7341, %v7337
        %v7343 = vrot.slane %v7342, 4
        %v7345 = vshll.u32 %v7156, 16
        %v7347 = vrot.slane %v7345, 5
        %v7348 = vsel %vm538, %v7343, %v7347
        %v7349 = vld [vmem:[%s4] sm:$0xf]
        %v7350 = vld [vmem:[%s4 + $0x4] sm:$0xf]
        %v7351 = vld [vmem:[%s4 + $0x8] sm:$0xf]
        %v7352 = vld [vmem:[%s4 + $0xc] sm:$0xf]
        %v7353 = vld [vmem:[%s4 + $0x10] sm:$0xf]
        %v7354 = vld [vmem:[%s4 + $0x14] sm:$0xf]
        %v7355 = vld [vmem:[%s4 + $0x18] sm:$0xf]
        %v7356 = vld [vmem:[%s4 + $0x1c] sm:$0xf]
        %v7357 = vld [vmem:[%s4 + $0x20] sm:$0xf]
        %v7358 = vld [vmem:[%s4 + $0x24] sm:$0xf]
        %v7359 = vld [vmem:[%s4 + $0x28] sm:$0xf]
        %v7360 = vld [vmem:[%s4 + $0x2c] sm:$0xf]
        %v7361 = vld [vmem:[%s4 + $0x30] sm:$0xf]
        %v7362 = vld [vmem:[%s4 + $0x34] sm:$0xf]
        %v7363 = vld [vmem:[%s4 + $0x38] sm:$0xf]
        %v7364 = vld [vmem:[%s4 + $0x3c] sm:$0xf]
        %v7365 = vld [vmem:[%s7] sm:$0x1]
        %v7367 = vlaneseq
        %v7368 = vshrl.u32 %v7367, 7
        %v7369 = vsub.s32 0, %v7368
        %v7370 = vrot.slane %v7365, %v7369
        %v7372 = vunpack.c.l.b16 %v7170
        %v7373 = vunpack.c.l.b16 %v7180
        %v7374 = vunpack.c.l.b16 %v7194
        %v7375 = vunpack.c.l.b16 %v7204
        %v7376 = vunpack.c.l.b16 %v7218
        %v7377 = vunpack.c.l.b16 %v7228
        %v7378 = vunpack.c.l.b16 %v7242
        %v7379 = vunpack.c.l.b16 %v7252
        %v7380 = vunpack.c.l.b16 %v7266
        %v7381 = vunpack.c.l.b16 %v7276
        %v7382 = vunpack.c.l.b16 %v7290
        %v7383 = vunpack.c.l.b16 %v7300
        %v7384 = vunpack.c.l.b16 %v7314
        %v7385 = vunpack.c.l.b16 %v7324
        %v7386 = vunpack.c.l.b16 %v7338
        %v7387 = vunpack.c.l.b16 %v7348
        %v7388 = vpack.c.b16 %v7373, %v7372
        %v7389 = vpack.c.b16 %v7375, %v7374
        %v7390 = vpack.c.b16 %v7377, %v7376
        %v7391 = vpack.c.b16 %v7379, %v7378
        %v7392 = vpack.c.b16 %v7381, %v7380
        %v7393 = vpack.c.b16 %v7383, %v7382
        %v7394 = vpack.c.b16 %v7385, %v7384
        %v7395 = vpack.c.b16 %v7387, %v7386
        %v7420 = vunpack.c.l.b16 %v7349
        %v7421 = vunpack.c.l.b16 %v7350
        %v7422 = vunpack.c.l.b16 %v7351
        %v7423 = vunpack.c.l.b16 %v7352
        %v7424 = vunpack.c.l.b16 %v7353
        %v7425 = vunpack.c.l.b16 %v7354
        %v7426 = vunpack.c.l.b16 %v7355
        %v7427 = vunpack.c.l.b16 %v7356
        %v7428 = vunpack.c.l.b16 %v7357
        %v7429 = vunpack.c.l.b16 %v7358
        %v7430 = vunpack.c.l.b16 %v7359
        %v7431 = vunpack.c.l.b16 %v7360
        %v7432 = vunpack.c.l.b16 %v7361
        %v7433 = vunpack.c.l.b16 %v7362
        %v7434 = vunpack.c.l.b16 %v7363
        %v7435 = vunpack.c.l.b16 %v7364
        %v7436 = vpack.c.b16 %v7421, %v7420
        %v7437 = vpack.c.b16 %v7423, %v7422
        %v7438 = vpack.c.b16 %v7425, %v7424
        %v7439 = vpack.c.b16 %v7427, %v7426
        %v7440 = vpack.c.b16 %v7429, %v7428
        %v7441 = vpack.c.b16 %v7431, %v7430
        %v7442 = vpack.c.b16 %v7433, %v7432
        %v7443 = vpack.c.b16 %v7435, %v7434
        %7452 = vmatprep.subr.bf16.mxu0 0
        %7453 = vmatpush1.bf16.msra.mxu0 %v7436
        %7454 = vmatprep.subr.bf16.mxu0 0
        %7455 = vmatpush1.bf16.msra.mxu0 %v7437
        %7456 = vmatprep.subr.bf16.mxu0 0
        %7457 = vmatpush1.bf16.msra.mxu0 %v7438
        %7458 = vmatprep.subr.bf16.mxu0 0
        %7459 = vmatpush1.bf16.msra.mxu0 %v7439
        %7460 = vmatprep.subr.bf16.mxu0 0
        %7461 = vmatpush1.bf16.msra.mxu0 %v7440
        %7462 = vmatprep.subr.bf16.mxu0 0
        %7463 = vmatpush1.bf16.msra.mxu0 %v7441
        %7464 = vmatprep.subr.bf16.mxu0 0
        %7465 = vmatpush1.bf16.msra.mxu0 %v7442
        %7466 = vmatprep.subr.bf16.mxu0 0
        %7467 = vmatpush1.bf16.msra.mxu0 %v7443
        %7468 = vmatprep.subr.bf16.mxu0 0
        %7469 = vmatpush1.bf16.msra.mxu0 0
        %7470 = vmatprep.subr.bf16.mxu0 0
        %7471 = vmatpush1.bf16.msra.mxu0 0
        %7472 = vmatprep.subr.bf16.mxu0 0
        %7473 = vmatpush1.bf16.msra.mxu0 0
        %7474 = vmatprep.subr.bf16.mxu0 0
        %7475 = vmatpush1.bf16.msra.mxu0 0
        %7476 = vmatprep.subr.bf16.mxu0 0
        %7477 = vmatpush1.bf16.msra.mxu0 0
        %7478 = vmatprep.subr.bf16.mxu0 0
        %7479 = vmatpush1.bf16.msra.mxu0 0
        %7480 = vmatprep.subr.bf16.mxu0 0
        %7481 = vmatpush1.bf16.msra.mxu0 0
        %7482 = vmatprep.subr.bf16.mxu0 0
        %7483 = vmatpush1.bf16.msra.mxu0 0
        %7484 = vmatprep.mubr.bf16.mxu0 0
        %7485 = vmatmul.mubr.bf16.gmra.mrb[0].mxu0 %v7388
        %v7486 = vpop.f32.mrb[0].mxu0
        %v7487 = vadd.f32 %v7370, %v7486
        %v7488 = vpop.f32.mrb[0].mxu0
        %v7489 = vpop.f32.mrb[0].mxu0
        %v7490 = vadd.f32 %v7370, %v7489
        %v7491 = vpop.f32.mrb[0].mxu0
        %7492 = vmatprep.mubr.bf16.mxu0 0
        %7493 = vmatmul.mubr.bf16.gmra.mrb[0].mxu0 %v7389
        %v7494 = vpop.f32.mrb[0].mxu0
        %v7495 = vadd.f32 %v7370, %v7494
        %v7496 = vpop.f32.mrb[0].mxu0
        %v7497 = vpop.f32.mrb[0].mxu0
        %v7498 = vadd.f32 %v7370, %v7497
        %v7499 = vpop.f32.mrb[0].mxu0
        %7500 = vmatprep.mubr.bf16.mxu0 0
        %7501 = vmatmul.mubr.bf16.gmra.mrb[0].mxu0 %v7390
        %v7502 = vpop.f32.mrb[0].mxu0
        %v7503 = vadd.f32 %v7370, %v7502
        %v7504 = vpop.f32.mrb[0].mxu0
        %v7505 = vpop.f32.mrb[0].mxu0
        %v7506 = vadd.f32 %v7370, %v7505
        %v7507 = vpop.f32.mrb[0].mxu0
        %7508 = vmatprep.mubr.bf16.mxu0 0
        %7509 = vmatmul.mubr.bf16.gmra.mrb[0].mxu0 %v7391
        %v7510 = vpop.f32.mrb[0].mxu0
        %v7511 = vadd.f32 %v7370, %v7510
        %v7512 = vpop.f32.mrb[0].mxu0
        %v7513 = vpop.f32.mrb[0].mxu0
        %v7514 = vadd.f32 %v7370, %v7513
        %v7515 = vpop.f32.mrb[0].mxu0
        %7516 = vmatprep.mubr.bf16.mxu0 0
        %7517 = vmatmul.mubr.bf16.gmra.mrb[0].mxu0 %v7392
        %v7518 = vpop.f32.mrb[0].mxu0
        %v7519 = vadd.f32 %v7370, %v7518
        %v7520 = vpop.f32.mrb[0].mxu0
        %v7521 = vpop.f32.mrb[0].mxu0
        %v7522 = vadd.f32 %v7370, %v7521
        %v7523 = vpop.f32.mrb[0].mxu0
        %7524 = vmatprep.mubr.bf16.mxu0 0
        %7525 = vmatmul.mubr.bf16.gmra.mrb[0].mxu0 %v7393
        %v7526 = vpop.f32.mrb[0].mxu0
        %v7527 = vadd.f32 %v7370, %v7526
        %v7528 = vpop.f32.mrb[0].mxu0
        %v7529 = vpop.f32.mrb[0].mxu0
        %v7530 = vadd.f32 %v7370, %v7529
        %v7531 = vpop.f32.mrb[0].mxu0
        %7532 = vmatprep.mubr.bf16.mxu0 0
        %7533 = vmatmul.mubr.bf16.gmra.mrb[0].mxu0 %v7394
        %v7534 = vpop.f32.mrb[0].mxu0
        %v7535 = vadd.f32 %v7370, %v7534
        %v7536 = vpop.f32.mrb[0].mxu0
        %v7537 = vpop.f32.mrb[0].mxu0
        %v7538 = vadd.f32 %v7370, %v7537
        %v7539 = vpop.f32.mrb[0].mxu0
        %7540 = vmatprep.mubr.bf16.mxu0 0
        %7541 = vmatmul.mubr.bf16.gmra.mrb[0].mxu0 %v7395
        %v7542 = vpop.f32.mrb[0].mxu0
        %v7543 = vadd.f32 %v7370, %v7542
        %v7544 = vpop.f32.mrb[0].mxu0
        %v7545 = vpop.f32.mrb[0].mxu0
        %v7546 = vadd.f32 %v7370, %v7545
        %v7547 = vpop.f32.mrb[0].mxu0
        %7548 = vdwg.mxu0
        %v7549 = vld [vmem:[%s6] sm:$0x1]
        %v7551 = vlaneseq
        %v7552 = vshrl.u32 %v7551, 7
        %v7553 = vsub.s32 0, %v7552
        %v7554 = vrot.slane %v7549, %v7553
        %v7556 = vadd.f32 %v7117, %v7554
        %v7557 = vadd.f32 %v7118, %v7554
        %v7558 = vadd.f32 %v7119, %v7554
        %v7559 = vadd.f32 %v7120, %v7554
        %v7560 = vadd.f32 %v7121, %v7554
        %v7561 = vadd.f32 %v7122, %v7554
        %v7562 = vadd.f32 %v7123, %v7554
        %v7563 = vadd.f32 %v7124, %v7554
        %v7564 = vadd.f32 %v7125, %v7554
        %v7565 = vadd.f32 %v7126, %v7554
        %v7566 = vadd.f32 %v7127, %v7554
        %v7567 = vadd.f32 %v7128, %v7554
        %v7568 = vadd.f32 %v7129, %v7554
        %v7569 = vadd.f32 %v7130, %v7554
        %v7570 = vadd.f32 %v7131, %v7554
        %v7571 = vadd.f32 %v7132, %v7554
        %v7572 = vmax.f32 %v7556, 0.0
        %v7573 = vmax.f32 %v7557, 0.0
        %v7574 = vmax.f32 %v7558, 0.0
        %v7575 = vmax.f32 %v7559, 0.0
        %v7576 = vmax.f32 %v7560, 0.0
        %v7577 = vmax.f32 %v7561, 0.0
        %v7578 = vmax.f32 %v7562, 0.0
        %v7579 = vmax.f32 %v7563, 0.0
        %v7580 = vmax.f32 %v7564, 0.0
        %v7581 = vmax.f32 %v7565, 0.0
        %v7582 = vmax.f32 %v7566, 0.0
        %v7583 = vmax.f32 %v7567, 0.0
        %v7584 = vmax.f32 %v7568, 0.0
        %v7585 = vmax.f32 %v7569, 0.0
        %v7586 = vmax.f32 %v7570, 0.0
        %v7587 = vmax.f32 %v7571, 0.0
        %v7588 = vadd.f32 %v7572, %v7487
        %v7589 = vadd.f32 %v7573, %v7490
        %v7590 = vadd.f32 %v7574, %v7495
        %v7591 = vadd.f32 %v7575, %v7498
        %v7592 = vadd.f32 %v7576, %v7503
        %v7593 = vadd.f32 %v7577, %v7506
        %v7594 = vadd.f32 %v7578, %v7511
        %v7595 = vadd.f32 %v7579, %v7514
        %v7596 = vadd.f32 %v7580, %v7519
        %v7597 = vadd.f32 %v7581, %v7522
        %v7598 = vadd.f32 %v7582, %v7527
        %v7599 = vadd.f32 %v7583, %v7530
        %v7600 = vadd.f32 %v7584, %v7535
        %v7601 = vadd.f32 %v7585, %v7538
        %v7602 = vadd.f32 %v7586, %v7543
        %v7603 = vadd.f32 %v7587, %v7546
        %7604 = vst [vmem:[%s378] sm:$0xff] %v7588
        %7605 = vst [vmem:[%s378 + $0x8] sm:$0xff] %v7589
        %7606 = vst [vmem:[%s378 + $0x10] sm:$0xff] %v7590
        %7607 = vst [vmem:[%s378 + $0x18] sm:$0xff] %v7591
        %7608 = vst [vmem:[%s378 + $0x20] sm:$0xff] %v7592
        %7609 = vst [vmem:[%s378 + $0x28] sm:$0xff] %v7593
        %7610 = vst [vmem:[%s378 + $0x30] sm:$0xff] %v7594
        %7611 = vst [vmem:[%s378 + $0x38] sm:$0xff] %v7595
        %7612 = vst [vmem:[%s378 + $0x40] sm:$0xff] %v7596
        %7613 = vst [vmem:[%s378 + $0x48] sm:$0xff] %v7597
        %7614 = vst [vmem:[%s378 + $0x50] sm:$0xff] %v7598
        %7615 = vst [vmem:[%s378 + $0x58] sm:$0xff] %v7599
        %7616 = vst [vmem:[%s378 + $0x60] sm:$0xff] %v7600
        %7617 = vst [vmem:[%s378 + $0x68] sm:$0xff] %v7601
        %7618 = vst [vmem:[%s378 + $0x70] sm:$0xff] %v7602
        %7619 = vst [vmem:[%s378 + $0x78] sm:$0xff] %v7603
        %s7620 = sand.u32 %s230, 1
        %s7621 = scalar_lea.sflag [#allocation5], %s7620
        %s7622 = sand.u32 %s230, 1
        %s7623 = smul.addr %s7622, 128
        %s7624 = scalar_lea.vmem [#allocation4], %s7623
        // Predicated region
        $region61: #{tpu_custom_call.1} parent=51 // pred_check
          %p7625 = pneg %p240
        $region62: #{tpu_custom_call.1} parent=51 // pred_check_branch
          %7627 = sbr.rel (%p7625) target = $region64
        $region63: #{tpu_custom_call.1} parent=51 // pred_region
          %s7628 = smul.u32 8, %s27
          %s7630 = ssub.s32 2048, 2048
          %7631 = vsyncadd %s7621, %s7630
          %s7632 = smul.addr %s7628, 2
          %s7633 = smul.addr %s26, 32
          %s7634 = sadd.s32 %s7632, %s7633
          %s7635 = smul.addr %s7634, 128
          %s7636 = scalar_lea.hbm %s8, %s7635
          %s7637 = sshll.u32 %s7624, 4
          %s7638 = int_to_ptr.vmem [resolvable:$true] %s7637
          %7643 = dma.vmem_to_hbm [thread:$0]  %s7638, 2048, %s7636, %s7621, 128, 128, 8
        $region64: #{tpu_custom_call.1} parent=51 // pred_fallthru
          _
      $region52: #{tpu_custom_call.1} parent=5 // pred_fallthru
        _
      %p7644 = scmp.le.s32.totalorder 2, %s17
      // Predicated region
      $region65: #{tpu_custom_call.1} parent=5 // pred_check
        %p7645 = pneg %p7644
      $region66: #{tpu_custom_call.1} parent=5 // pred_check_branch
        %7647 = sbr.rel (%p7645) target = $region68
      $region67: #{tpu_custom_call.1} parent=5 // pred_region
        %s7648 = ssub.s32 %s17, 2
        // Predicated region
        $region69: #{tpu_custom_call.1} parent=67 // pred_check
          %p7649 = pneg %p246
        $region70: #{tpu_custom_call.1} parent=67 // pred_check_branch
          %7651 = sbr.rel (%p7649) target = $region72
        $region71: #{tpu_custom_call.1} parent=67 // pred_region
          %s7652 = sand.u32 %s231, 1
          %s7653 = scalar_lea.sflag [#allocation5], %s7652
          %s7654 = sand.u32 %s231, 1
          %s7655 = smul.addr %s7654, 128
          %s7656 = scalar_lea.vmem [#allocation4], %s7655
          %7657 = dma.done %s7653, 2048
        $region72: #{tpu_custom_call.1} parent=67 // pred_fallthru
          _
      $region68: #{tpu_custom_call.1} parent=5 // pred_fallthru
        _
    $region6: #{tpu_custom_call.1} parent=1 // loop_footer
      %s21 = sadd.s32 1, %s17
    $region7: #{tpu_custom_call.1} parent=1 // loop_footer_branch
      %16 = sbr.rel target = $region3
    $region8: #{tpu_custom_call.1} parent=1 // loop_exit
      _
    %7658 = vsyncpa [#allocation5], 1
    %s7659 = scalar_lea.sflag [#allocation5], 1
    %7660 = vsyncpa %s7659, 1

</llo_original>
